<compile_context>
chip_gen: v7x
topology: tpu7x:2x2x1
jax: 0.10.0
libtpu: 0.0.40
codegen_flags: <defaults>
</compile_context>

<pallas_src>
import functools
from types import SimpleNamespace

import jax
import jax.numpy as jnp
from jax import lax
from jax.experimental import pallas as pl
from jax.experimental.pallas import tpu as pltpu


def _round_up(x, m):
    return ((x + m - 1) // m) * m


# ----------------------------------------------------------------------------
# Pallas kernels
# ----------------------------------------------------------------------------
def _matmul_bias_act_kernel(a_ref, w_ref, b_ref, o_ref, *, activation):
    # Single full-K block: one MXU dot per (i, j) tile, f32 accumulate,
    # bias + activation fused in the same step (no acc scratch, no revisits).
    y = jnp.dot(a_ref[...], w_ref[...], preferred_element_type=jnp.float32)
    y = y + b_ref[...]                       # (tm, tn) + (1, tn)
    if activation == "relu":
        y = jnp.maximum(y, 0.0)
    elif activation == "lrelu":
        y = jnp.where(y > 0, y, 0.2 * y)
    elif activation == "tanh":
        y = jnp.tanh(y)
    o_ref[...] = y.astype(o_ref.dtype)


def pallas_linear_packed(A, wm, b2d, n_valid, activation="linear", tm=128, tn=128):
    """A:(M,K) float -> bf16; wm:(Kp,Np) pre-padded bf16; b2d:(1,Np) f32.

    Returns (M, n_valid) f32.
    """
    M, K = A.shape
    Kp, Np = wm.shape
    Mp = _round_up(M, tm)
    A = A.astype(jnp.bfloat16)
    if (Mp, Kp) != (M, K):
        A = jnp.pad(A, ((0, Mp - M), (0, Kp - K)))

    out = pl.pallas_call(
        functools.partial(_matmul_bias_act_kernel, activation=activation),
        out_shape=jax.ShapeDtypeStruct((Mp, Np), jnp.float32),
        grid_spec=pltpu.PrefetchScalarGridSpec(
            num_scalar_prefetch=0,
            grid=(Mp // tm, Np // tn),
            in_specs=[
                pl.BlockSpec((tm, Kp), lambda i, j: (i, 0)),
                pl.BlockSpec((Kp, tn), lambda i, j: (0, j)),
                pl.BlockSpec((1, tn), lambda i, j: (0, j)),
            ],
            out_specs=pl.BlockSpec((tm, tn), lambda i, j: (i, j)),
        ),
        compiler_params=pltpu.CompilerParams(
            dimension_semantics=("parallel", "parallel"),
            vmem_limit_bytes=32 * 1024 * 1024),
    )(A, wm, b2d)
    return out[:M, :n_valid]


def _sum_abs_diff_kernel(a_ref, b_ref, o_ref):
    o_ref[...] = jnp.sum(jnp.abs(a_ref[...] - b_ref[...]),
                         axis=(0, 1), keepdims=True)


def _sum_sq_const_kernel(a_ref, o_ref, *, const):
    d = a_ref[...] - const
    o_ref[...] = jnp.sum(d * d, axis=(0, 1), keepdims=True)


def _to_rows(x, pad_value):
    xf = x.reshape(-1).astype(jnp.float32)
    n = xf.shape[0]
    npad = _round_up(n, 8 * 128)
    if npad != n:
        xf = jnp.pad(xf, (0, npad - n), constant_values=pad_value)
    return xf.reshape(-1, 128), n


def pallas_mean_abs_diff(a, b):
    """mean(|a - b|) — single-shot Pallas reduction (arrays here are tiny)."""
    A, n = _to_rows(a, 0.0)
    B, _ = _to_rows(b, 0.0)
    out = pl.pallas_call(
        _sum_abs_diff_kernel,
        out_shape=jax.ShapeDtypeStruct((1, 1), jnp.float32),
        grid=(1,),
        in_specs=[pl.BlockSpec(A.shape, lambda i: (0, 0)),
                  pl.BlockSpec(B.shape, lambda i: (0, 0))],
        out_specs=pl.BlockSpec((1, 1), lambda i: (0, 0)),
        compiler_params=pltpu.CompilerParams(
            dimension_semantics=("arbitrary",)),
    )(A, B)
    return out[0, 0] / n


def pallas_mean_sq_const(a, const):
    """mean((a - const)^2) — target constant folded into the kernel, so no
    target tensor is materialized / DMA'd."""
    A, n = _to_rows(a, const)   # pad with const so padded lanes contribute 0
    out = pl.pallas_call(
        functools.partial(_sum_sq_const_kernel, const=const),
        out_shape=jax.ShapeDtypeStruct((1, 1), jnp.float32),
        grid=(1,),
        in_specs=[pl.BlockSpec(A.shape, lambda i: (0, 0))],
        out_specs=pl.BlockSpec((1, 1), lambda i: (0, 0)),
        compiler_params=pltpu.CompilerParams(
            dimension_semantics=("arbitrary",)),
    )(A)
    return out[0, 0] / n


# ----------------------------------------------------------------------------
# Conv layers (patch extraction glue in XLA, matmul in Pallas)
# ----------------------------------------------------------------------------
def conv2d(x, wm, bias, kh, kw, cout, stride=1, padding=0, pad_mode="zeros",
           activation="linear"):
    """x: NHWC.  wm: (Kp, Np) bf16 packed weights (rows ordered (cin, kh, kw),
    matching conv_general_dilated_patches channel-major output)."""
    x = x.astype(jnp.bfloat16)
    pad = padding
    if padding > 0 and pad_mode == "reflect":
        x = jnp.pad(x, ((0, 0), (padding, padding), (padding, padding), (0, 0)),
                    mode="reflect")
        pad = 0
    patches = lax.conv_general_dilated_patches(
        x, filter_shape=(kh, kw), window_strides=(stride, stride),
        padding=((pad, pad), (pad, pad)),
        dimension_numbers=("NHWC", "HWIO", "NHWC"))
    N, Ho, Wo, K = patches.shape
    A = patches.reshape(N * Ho * Wo, K)
    Y = pallas_linear_packed(A, wm, bias, n_valid=cout, activation=activation)
    return Y.reshape(N, Ho, Wo, cout)


def conv_transpose2d(x, wm, bias, cout):
    """ConvTranspose2d(kernel=3, stride=2, padding=1, output_padding=1) via
    sub-pixel (polyphase) decomposition: one matmul with 4*cout output
    columns (parity phases ee, eo, oe, oo), then depth-to-space."""
    N, H, W_, C = x.shape
    x = x.astype(jnp.bfloat16)
    xp = jnp.pad(x, ((0, 0), (0, 1), (0, 1), (0, 0)))
    x00 = xp[:, :H, :W_, :]
    x01 = xp[:, :H, 1:, :]
    x10 = xp[:, 1:, :W_, :]
    x11 = xp[:, 1:, 1:, :]
    A = jnp.concatenate([x00, x01, x10, x11], axis=-1).reshape(N * H * W_, 4 * C)
    Y = pallas_linear_packed(A, wm, bias, n_valid=4 * cout)
    Y = Y.reshape(N, H, W_, 2, 2, cout)
    Y = Y.transpose(0, 1, 3, 2, 4, 5).reshape(N, 2 * H, 2 * W_, cout)
    return Y


def instance_norm(x, eps=1e-5):
    mean = jnp.mean(x, axis=(1, 2), keepdims=True)
    var = jnp.var(x, axis=(1, 2), keepdims=True)
    return (x - mean) * lax.rsqrt(var + eps)


def relu(x):
    return jnp.maximum(x, 0.0)


def lrelu(x):
    return jnp.where(x > 0, x, 0.2 * x)


# ----------------------------------------------------------------------------
# Parameter init: weights packed / padded into matmul layout ONCE, in bf16.
# ----------------------------------------------------------------------------
def _pack_matrix(wm, b):
    K, N = wm.shape
    Kp, Np = _round_up(K, 128), _round_up(N, 128)
    wmp = jnp.pad(wm, ((0, Kp - K), (0, Np - N))).astype(jnp.bfloat16)
    bp = jnp.pad(b, (0, Np - N)).astype(jnp.float32).reshape(1, Np)
    return {"w": wmp, "b": bp}


def pack_conv(key, kh, kw, cin, cout):
    w = 0.02 * jax.random.normal(key, (kh, kw, cin, cout), jnp.float32)
    b = jnp.zeros((cout,), jnp.float32)
    # rows ordered (cin, kh, kw) to match conv_general_dilated_patches output
    wm = jnp.transpose(w, (2, 0, 1, 3)).reshape(cin * kh * kw, cout)
    return _pack_matrix(wm, b)


def pack_conv_transpose(key, cin, cout):
    # Random 3x3 transposed-conv weights (flip/transpose absorbed into random
    # init). Pack the 4 polyphase taps into one (4*cin, 4*cout) block matrix.
    w = 0.02 * jax.random.normal(key, (3, 3, cin, cout), jnp.float32)
    b = jnp.zeros((cout,), jnp.float32)
    Z = jnp.zeros((cin, cout), jnp.float32)
    # row blocks: [x00, x01, x10, x11]; col blocks: [ee, eo, oe, oo]
    col_ee = jnp.concatenate([w[1, 1], Z,       Z,       Z],       axis=0)
    col_eo = jnp.concatenate([w[1, 2], w[1, 0], Z,       Z],       axis=0)
    col_oe = jnp.concatenate([w[2, 1], Z,       w[0, 1], Z],       axis=0)
    col_oo = jnp.concatenate([w[2, 2], w[2, 0], w[0, 2], w[0, 0]], axis=0)
    wm = jnp.concatenate([col_ee, col_eo, col_oe, col_oo], axis=1)
    bm = jnp.tile(b, 4)
    return _pack_matrix(wm, bm)


def init_params(key, opt):
    keys = iter(jax.random.split(key, 64))
    ngf, ndf = opt.ngf, opt.ndf
    G = {}
    G["c1"] = pack_conv(next(keys), 7, 7, opt.input_nc, ngf)
    G["down"] = [pack_conv(next(keys), 3, 3, ngf * 2 ** i, ngf * 2 ** (i + 1))
                 for i in range(opt.n_downsample_global)]
    mult = ngf * 2 ** opt.n_downsample_global
    G["blocks"] = [(pack_conv(next(keys), 3, 3, mult, mult),
                    pack_conv(next(keys), 3, 3, mult, mult))
                   for _ in range(opt.n_blocks_global)]
    G["up"] = []
    for i in range(opt.n_downsample_global):
        m = 2 ** (opt.n_downsample_global - i)
        G["up"].append(pack_conv_transpose(next(keys), ngf * m, ngf * m // 2))
    G["cout"] = pack_conv(next(keys), 7, 7, ngf, opt.output_nc)

    netD_in = opt.input_nc + opt.output_nc if opt.cat_input else opt.input_nc
    D = {
        "d0": pack_conv(next(keys), 4, 4, netD_in, ndf),
        "d1": pack_conv(next(keys), 4, 4, ndf, ndf * 2),
        "d2": pack_conv(next(keys), 4, 4, ndf * 2, ndf * 4),
        "d3": pack_conv(next(keys), 4, 4, ndf * 4, 1),
    }
    return {"G": G, "D": D}


# ----------------------------------------------------------------------------
# Networks (pix2pixHD GlobalGenerator + NLayer discriminator)
# ----------------------------------------------------------------------------
def generator_fwd(p, x, opt):
    ngf = opt.ngf
    h = conv2d(x, p["c1"]["w"], p["c1"]["b"], 7, 7, ngf,
               stride=1, padding=3, pad_mode="reflect")
    h = relu(instance_norm(h))
    for i, wb in enumerate(p["down"]):
        h = conv2d(h, wb["w"], wb["b"], 3, 3, ngf * 2 ** (i + 1),
                   stride=2, padding=1)
        h = relu(instance_norm(h))
    mult = ngf * 2 ** opt.n_downsample_global
    for (b1, b2) in p["blocks"]:
        r = conv2d(h, b1["w"], b1["b"], 3, 3, mult,
                   stride=1, padding=1, pad_mode="reflect")
        r = relu(instance_norm(r))
        r = conv2d(r, b2["w"], b2["b"], 3, 3, mult,
                   stride=1, padding=1, pad_mode="reflect")
        r = instance_norm(r)
        h = h + r
    for i, wb in enumerate(p["up"]):
        cout_up = (ngf * 2 ** (opt.n_downsample_global - i)) // 2
        h = conv_transpose2d(h, wb["w"], wb["b"], cout_up)
        h = relu(instance_norm(h))
    h = conv2d(h, p["cout"]["w"], p["cout"]["b"], 7, 7, opt.output_nc,
               stride=1, padding=3, pad_mode="reflect", activation="tanh")
    return h


def nlayer_disc_fwd(p, x, opt):
    ndf = opt.ndf
    feats = []
    h = conv2d(x, p["d0"]["w"], p["d0"]["b"], 4, 4, ndf,
               stride=2, padding=2, activation="lrelu")
    feats.append(h)
    h = conv2d(h, p["d1"]["w"], p["d1"]["b"], 4, 4, ndf * 2,
               stride=2, padding=2)
    h = lrelu(instance_norm(h))
    feats.append(h)
    h = conv2d(h, p["d2"]["w"], p["d2"]["b"], 4, 4, ndf * 4,
               stride=1, padding=2)
    h = lrelu(instance_norm(h))
    feats.append(h)
    h = conv2d(h, p["d3"]["w"], p["d3"]["b"], 4, 4, 1,
               stride=1, padding=2)
    feats.append(h)
    return feats


def discriminate(pD, input_label, test_image, opt):
    if opt.cat_input:
        x = jnp.concatenate([input_label, lax.stop_gradient(test_image)], axis=-1)
    else:
        x = lax.stop_gradient(test_image)
    # num_D=1 multiscale: single scale, intermediate features kept.
    return [nlayer_disc_fwd(pD, x, opt)]


def gan_loss_lsgan(preds, target_is_real):
    # GANLoss(use_lsgan=True): MSE against constant 1.0 / 0.0 on the last
    # feature of every scale; the constant is folded into the Pallas kernel.
    tgt = 1.0 if target_is_real else 0.0
    loss = jnp.float32(0.0)
    for scale in preds:
        loss = loss + pallas_mean_sq_const(scale[-1], tgt)
    return loss


# ----------------------------------------------------------------------------
# Model.forward (loss_filter flags: G_GAN, D_real, D_fake, GAN_Feat, L1)
# ----------------------------------------------------------------------------
def model_forward(params, label, image, opt, infer=True):
    # label / image come in NCHW (PyTorch); convert to NHWC.
    label_h = jnp.transpose(label, (0, 2, 3, 1)).astype(jnp.float32)
    image_h = jnp.transpose(image, (0, 2, 3, 1)).astype(jnp.float32)

    fake = generator_fwd(params["G"], label_h, opt)

    # Reference runs D twice on (label, fake.detach()) — once for the fake
    # pool, once for G_GAN.  With no image pool both passes are byte-identical
    # in this forward, so run the discriminator on the fake image once.
    pred_fake = discriminate(params["D"], label_h, fake, opt)
    loss_D_fake = gan_loss_lsgan(pred_fake, False)
    loss_G_GAN = gan_loss_lsgan(pred_fake, True)

    pred_real = discriminate(params["D"], label_h, image_h, opt)
    loss_D_real = gan_loss_lsgan(pred_real, True)

    # Feature-matching loss.
    feat_weights = 4.0 / (opt.n_layers_D + 1)
    D_weights = 1.0 / opt.num_D
    loss_G_GAN_Feat = jnp.float32(0.0)
    for i in range(opt.num_D):
        for j in range(len(pred_fake[i]) - 1):
            loss_G_GAN_Feat = loss_G_GAN_Feat + (
                D_weights * feat_weights * opt.lambda_feat *
                pallas_mean_abs_diff(pred_fake[i][j],
                                     lax.stop_gradient(pred_real[i][j])))

    # L1 loss (use_l1_loss=True): L1(fake_image, input_label.detach())
    loss_G_l1 = pallas_mean_abs_diff(fake, lax.stop_gradient(label_h))

    # TODO(synk): VGG perceptual loss (needs pretrained weights), SSIM/TV/grad
    # losses and the wgan_gp gradient penalty are disabled via opt flags and
    # are not part of this forward.

    losses = [loss_G_GAN, loss_D_real, loss_D_fake, loss_G_GAN_Feat, loss_G_l1]
    fake_nchw = jnp.transpose(fake, (0, 3, 1, 2))
    return losses, (fake_nchw if infer else None)


# ----------------------------------------------------------------------------
# Main
# ----------------------------------------------------------------------------
if __name__ == "__main__":
    opt = SimpleNamespace(
        isTrain=True, input_nc=3, output_nc=3, ngf=8, ndf=8,
        n_downsample_global=2, n_blocks_global=1, n_layers_D=2, num_D=1,
        norm="instance", gan_type="lsgan", cat_input=True,
        no_ganFeat_loss=False, no_vgg_loss=True, use_grad_loss=False,
        use_ssim_loss=False, use_tv_loss=False, use_l1_loss=True,
        lambda_feat=10.0,
    )

    root = jax.random.PRNGKey(0)
    k_param, k_label, k_image = jax.random.split(root, 3)

    params = init_params(k_param, opt)

    B, H, W = 2, 32, 32
    label = jax.random.normal(k_label, (B, opt.input_nc, H, W), jnp.float32)
    image = jax.random.normal(k_image, (B, opt.output_nc, H, W), jnp.float32)

    fwd = jax.jit(lambda p, l, im: model_forward(p, l, im, opt, infer=True))
    losses, fake = fwd(params, label, image)

    jax.block_until_ready(losses)
    jax.block_until_ready(fake)

    assert fake.shape == (B, opt.output_nc, H, W)
    assert all(jnp.isfinite(v) for v in losses)
    print("KERNEL_OK")
</pallas_src>

<mosaic_0001>
module attributes {stable_mosaic.version = 11 : i64} {
  func.func @_matmul_bias_act_kernel(%arg0: i32, %arg1: i32, %arg2: memref<128x256xbf16, #tpu.memory_space<vmem>>, %arg3: memref<256x128xbf16, #tpu.memory_space<vmem>>, %arg4: memref<1x128xf32, #tpu.memory_space<vmem>>, %arg5: memref<128x128xf32, #tpu.memory_space<vmem>>) attributes {dimension_semantics = [#tpu.dimension_semantics<parallel>, #tpu.dimension_semantics<parallel>], iteration_bounds = array<i64: 16, 1>, scalar_prefetch = 0 : i64, scratch_operands = 0 : i64, tpu.core_type = #tpu.core_type<tc>, window_params = [{transform_indices = @transform_0, window_bounds = array<i64: 128, 256>}, {transform_indices = @transform_1, window_bounds = array<i64: 256, 128>}, {transform_indices = @transform_2, window_bounds = array<i64: 1, 128>}, {transform_indices = @transform_3, window_bounds = array<i64: 128, 128>}]} {
    %c0 = arith.constant 0 : index
    %c0_0 = arith.constant 0 : index
    %0 = vector.load %arg2[%c0, %c0_0] : memref<128x256xbf16, #tpu.memory_space<vmem>>, vector<128x256xbf16>
    %c0_1 = arith.constant 0 : index
    %c0_2 = arith.constant 0 : index
    %1 = vector.load %arg3[%c0_1, %c0_2] : memref<256x128xbf16, #tpu.memory_space<vmem>>, vector<256x128xbf16>
    %cst = arith.constant dense<0.000000e+00> : vector<128x128xf32>
    %2 = tpu.matmul %0, %1, %cst {dimension_numbers = #tpu.dot_dimension_numbers<[1], [0], [0], [1], [0, 0, 1, 1], [], []>} : vector<128x256xbf16>, vector<256x128xbf16>, vector<128x128xf32> -> vector<128x128xf32>
    %c0_3 = arith.constant 0 : index
    %c0_4 = arith.constant 0 : index
    %3 = vector.load %arg4[%c0_3, %c0_4] : memref<1x128xf32, #tpu.memory_space<vmem>>, vector<1x128xf32>
    %4 = vector.broadcast %3 : vector<1x128xf32> to vector<128x128xf32>
    %5 = arith.addf %2, %4 : vector<128x128xf32>
    %c0_5 = arith.constant 0 : index
    %c0_6 = arith.constant 0 : index
    %6 = vector.load %arg5[%c0_5, %c0_6] : memref<128x128xf32, #tpu.memory_space<vmem>>, vector<128x128xf32>
    tpu.vector_store %arg5[%c0_5, %c0_6], %5 {strides = array<i32>} : memref<128x128xf32, #tpu.memory_space<vmem>>, vector<128x128xf32>,
    return
  }
  func.func @transform_0(%arg0: i32, %arg1: i32) -> (i32, i32) {
    %c0_i32 = arith.constant 0 : i32
    %c0_i32_0 = arith.constant 0 : i32
    return %arg0, %c0_i32 : i32, i32
  }
  func.func @transform_1(%arg0: i32, %arg1: i32) -> (i32, i32) {
    %c0_i32 = arith.constant 0 : i32
    %c0_i32_0 = arith.constant 0 : i32
    return %c0_i32, %arg1 : i32, i32
  }
  func.func @transform_2(%arg0: i32, %arg1: i32) -> (i32, i32) {
    %c0_i32 = arith.constant 0 : i32
    %c0_i32_0 = arith.constant 0 : i32
    return %c0_i32, %arg1 : i32, i32
  }
  func.func @transform_3(%arg0: i32, %arg1: i32) -> (i32, i32) {
    %c0_i32 = arith.constant 0 : i32
    return %arg0, %arg1 : i32, i32
  }
}

module attributes {stable_mosaic.version = 11 : i64} {
  func.func @_matmul_bias_act_kernel(%arg0: i32, %arg1: i32, %arg2: memref<128x128xbf16, #tpu.memory_space<vmem>>, %arg3: memref<128x128xbf16, #tpu.memory_space<vmem>>, %arg4: memref<1x128xf32, #tpu.memory_space<vmem>>, %arg5: memref<128x128xf32, #tpu.memory_space<vmem>>) attributes {dimension_semantics = [#tpu.dimension_semantics<parallel>, #tpu.dimension_semantics<parallel>], iteration_bounds = array<i64: 4, 1>, scalar_prefetch = 0 : i64, scratch_operands = 0 : i64, tpu.core_type = #tpu.core_type<tc>, window_params = [{transform_indices = @transform_0, window_bounds = array<i64: 128, 128>}, {transform_indices = @transform_1, window_bounds = array<i64: 128, 128>}, {transform_indices = @transform_2, window_bounds = array<i64: 1, 128>}, {transform_indices = @transform_3, window_bounds = array<i64: 128, 128>}]} {
    %c0 = arith.constant 0 : index
    %c0_0 = arith.constant 0 : index
    %0 = vector.load %arg2[%c0, %c0_0] : memref<128x128xbf16, #tpu.memory_space<vmem>>, vector<128x128xbf16>
    %c0_1 = arith.constant 0 : index
    %c0_2 = arith.constant 0 : index
    %1 = vector.load %arg3[%c0_1, %c0_2] : memref<128x128xbf16, #tpu.memory_space<vmem>>, vector<128x128xbf16>
    %cst = arith.constant dense<0.000000e+00> : vector<128x128xf32>
    %2 = tpu.matmul %0, %1, %cst {dimension_numbers = #tpu.dot_dimension_numbers<[1], [0], [0], [1], [0, 0, 1, 1], [], []>} : vector<128x128xbf16>, vector<128x128xbf16>, vector<128x128xf32> -> vector<128x128xf32>
    %c0_3 = arith.constant 0 : index
    %c0_4 = arith.constant 0 : index
    %3 = vector.load %arg4[%c0_3, %c0_4] : memref<1x128xf32, #tpu.memory_space<vmem>>, vector<1x128xf32>
    %4 = vector.broadcast %3 : vector<1x128xf32> to vector<128x128xf32>
    %5 = arith.addf %2, %4 : vector<128x128xf32>
    %c0_5 = arith.constant 0 : index
    %c0_6 = arith.constant 0 : index
    %6 = vector.load %arg5[%c0_5, %c0_6] : memref<128x128xf32, #tpu.memory_space<vmem>>, vector<128x128xf32>
    tpu.vector_store %arg5[%c0_5, %c0_6], %5 {strides = array<i32>} : memref<128x128xf32, #tpu.memory_space<vmem>>, vector<128x128xf32>,
    return
  }
  func.func @transform_0(%arg0: i32, %arg1: i32) -> (i32, i32) {
    %c0_i32 = arith.constant 0 : i32
    %c0_i32_0 = arith.constant 0 : i32
    return %arg0, %c0_i32 : i32, i32
  }
  func.func @transform_1(%arg0: i32, %arg1: i32) -> (i32, i32) {
    %c0_i32 = arith.constant 0 : i32
    %c0_i32_0 = arith.constant 0 : i32
    return %c0_i32, %arg1 : i32, i32
  }
  func.func @transform_2(%arg0: i32, %arg1: i32) -> (i32, i32) {
    %c0_i32 = arith.constant 0 : i32
    %c0_i32_0 = arith.constant 0 : i32
    return %c0_i32, %arg1 : i32, i32
  }
  func.func @transform_3(%arg0: i32, %arg1: i32) -> (i32, i32) {
    %c0_i32 = arith.constant 0 : i32
    return %arg0, %arg1 : i32, i32
  }
}

module attributes {stable_mosaic.version = 11 : i64} {
  func.func @_matmul_bias_act_kernel(%arg0: i32, %arg1: i32, %arg2: memref<128x256xbf16, #tpu.memory_space<vmem>>, %arg3: memref<256x128xbf16, #tpu.memory_space<vmem>>, %arg4: memref<1x128xf32, #tpu.memory_space<vmem>>, %arg5: memref<128x128xf32, #tpu.memory_space<vmem>>) attributes {dimension_semantics = [#tpu.dimension_semantics<parallel>, #tpu.dimension_semantics<parallel>], iteration_bounds = array<i64: 1, 1>, scalar_prefetch = 0 : i64, scratch_operands = 0 : i64, tpu.core_type = #tpu.core_type<tc>, window_params = [{transform_indices = @transform_0, window_bounds = array<i64: 128, 256>}, {transform_indices = @transform_1, window_bounds = array<i64: 256, 128>}, {transform_indices = @transform_2, window_bounds = array<i64: 1, 128>}, {transform_indices = @transform_3, window_bounds = array<i64: 128, 128>}]} {
    %c0 = arith.constant 0 : index
    %c0_0 = arith.constant 0 : index
    %0 = vector.load %arg2[%c0, %c0_0] : memref<128x256xbf16, #tpu.memory_space<vmem>>, vector<128x256xbf16>
    %c0_1 = arith.constant 0 : index
    %c0_2 = arith.constant 0 : index
    %1 = vector.load %arg3[%c0_1, %c0_2] : memref<256x128xbf16, #tpu.memory_space<vmem>>, vector<256x128xbf16>
    %cst = arith.constant dense<0.000000e+00> : vector<128x128xf32>
    %2 = tpu.matmul %0, %1, %cst {dimension_numbers = #tpu.dot_dimension_numbers<[1], [0], [0], [1], [0, 0, 1, 1], [], []>} : vector<128x256xbf16>, vector<256x128xbf16>, vector<128x128xf32> -> vector<128x128xf32>
    %c0_3 = arith.constant 0 : index
    %c0_4 = arith.constant 0 : index
    %3 = vector.load %arg4[%c0_3, %c0_4] : memref<1x128xf32, #tpu.memory_space<vmem>>, vector<1x128xf32>
    %4 = vector.broadcast %3 : vector<1x128xf32> to vector<128x128xf32>
    %5 = arith.addf %2, %4 : vector<128x128xf32>
    %c0_5 = arith.constant 0 : index
    %c0_6 = arith.constant 0 : index
    %6 = vector.load %arg5[%c0_5, %c0_6] : memref<128x128xf32, #tpu.memory_space<vmem>>, vector<128x128xf32>
    tpu.vector_store %arg5[%c0_5, %c0_6], %5 {strides = array<i32>} : memref<128x128xf32, #tpu.memory_space<vmem>>, vector<128x128xf32>,
    return
  }
  func.func @transform_0(%arg0: i32, %arg1: i32) -> (i32, i32) {
    %c0_i32 = arith.constant 0 : i32
    %c0_i32_0 = arith.constant 0 : i32
    return %arg0, %c0_i32 : i32, i32
  }
  func.func @transform_1(%arg0: i32, %arg1: i32) -> (i32, i32) {
    %c0_i32 = arith.constant 0 : i32
    %c0_i32_0 = arith.constant 0 : i32
    return %c0_i32, %arg1 : i32, i32
  }
  func.func @transform_2(%arg0: i32, %arg1: i32) -> (i32, i32) {
    %c0_i32 = arith.constant 0 : i32
    %c0_i32_0 = arith.constant 0 : i32
    return %c0_i32, %arg1 : i32, i32
  }
  func.func @transform_3(%arg0: i32, %arg1: i32) -> (i32, i32) {
    %c0_i32 = arith.constant 0 : i32
    return %arg0, %arg1 : i32, i32
  }
}

module attributes {stable_mosaic.version = 11 : i64} {
  func.func @_matmul_bias_act_kernel(%arg0: i32, %arg1: i32, %arg2: memref<128x384xbf16, #tpu.memory_space<vmem>>, %arg3: memref<384x128xbf16, #tpu.memory_space<vmem>>, %arg4: memref<1x128xf32, #tpu.memory_space<vmem>>, %arg5: memref<128x128xf32, #tpu.memory_space<vmem>>) attributes {dimension_semantics = [#tpu.dimension_semantics<parallel>, #tpu.dimension_semantics<parallel>], iteration_bounds = array<i64: 1, 1>, scalar_prefetch = 0 : i64, scratch_operands = 0 : i64, tpu.core_type = #tpu.core_type<tc>, window_params = [{transform_indices = @transform_0, window_bounds = array<i64: 128, 384>}, {transform_indices = @transform_1, window_bounds = array<i64: 384, 128>}, {transform_indices = @transform_2, window_bounds = array<i64: 1, 128>}, {transform_indices = @transform_3, window_bounds = array<i64: 128, 128>}]} {
    %c0 = arith.constant 0 : index
    %c0_0 = arith.constant 0 : index
    %0 = vector.load %arg2[%c0, %c0_0] : memref<128x384xbf16, #tpu.memory_space<vmem>>, vector<128x384xbf16>
    %c0_1 = arith.constant 0 : index
    %c0_2 = arith.constant 0 : index
    %1 = vector.load %arg3[%c0_1, %c0_2] : memref<384x128xbf16, #tpu.memory_space<vmem>>, vector<384x128xbf16>
    %cst = arith.constant dense<0.000000e+00> : vector<128x128xf32>
    %2 = tpu.matmul %0, %1, %cst {dimension_numbers = #tpu.dot_dimension_numbers<[1], [0], [0], [1], [0, 0, 1, 1], [], []>} : vector<128x384xbf16>, vector<384x128xbf16>, vector<128x128xf32> -> vector<128x128xf32>
    %c0_3 = arith.constant 0 : index
    %c0_4 = arith.constant 0 : index
    %3 = vector.load %arg4[%c0_3, %c0_4] : memref<1x128xf32, #tpu.memory_space<vmem>>, vector<1x128xf32>
    %4 = vector.broadcast %3 : vector<1x128xf32> to vector<128x128xf32>
    %5 = arith.addf %2, %4 : vector<128x128xf32>
    %c0_5 = arith.constant 0 : index
    %c0_6 = arith.constant 0 : index
    %6 = vector.load %arg5[%c0_5, %c0_6] : memref<128x128xf32, #tpu.memory_space<vmem>>, vector<128x128xf32>
    tpu.vector_store %arg5[%c0_5, %c0_6], %5 {strides = array<i32>} : memref<128x128xf32, #tpu.memory_space<vmem>>, vector<128x128xf32>,
    return
  }
  func.func @transform_0(%arg0: i32, %arg1: i32) -> (i32, i32) {
    %c0_i32 = arith.constant 0 : i32
    %c0_i32_0 = arith.constant 0 : i32
    return %arg0, %c0_i32 : i32, i32
  }
  func.func @transform_1(%arg0: i32, %arg1: i32) -> (i32, i32) {
    %c0_i32 = arith.constant 0 : i32
    %c0_i32_0 = arith.constant 0 : i32
    return %c0_i32, %arg1 : i32, i32
  }
  func.func @transform_2(%arg0: i32, %arg1: i32) -> (i32, i32) {
    %c0_i32 = arith.constant 0 : i32
    %c0_i32_0 = arith.constant 0 : i32
    return %c0_i32, %arg1 : i32, i32
  }
  func.func @transform_3(%arg0: i32, %arg1: i32) -> (i32, i32) {
    %c0_i32 = arith.constant 0 : i32
    return %arg0, %arg1 : i32, i32
  }
}

module attributes {stable_mosaic.version = 11 : i64} {
  func.func @_matmul_bias_act_kernel(%arg0: i32, %arg1: i32, %arg2: memref<128x128xbf16, #tpu.memory_space<vmem>>, %arg3: memref<128x128xbf16, #tpu.memory_space<vmem>>, %arg4: memref<1x128xf32, #tpu.memory_space<vmem>>, %arg5: memref<128x128xf32, #tpu.memory_space<vmem>>) attributes {dimension_semantics = [#tpu.dimension_semantics<parallel>, #tpu.dimension_semantics<parallel>], iteration_bounds = array<i64: 1, 1>, scalar_prefetch = 0 : i64, scratch_operands = 0 : i64, tpu.core_type = #tpu.core_type<tc>, window_params = [{transform_indices = @transform_0, window_bounds = array<i64: 128, 128>}, {transform_indices = @transform_1, window_bounds = array<i64: 128, 128>}, {transform_indices = @transform_2, window_bounds = array<i64: 1, 128>}, {transform_indices = @transform_3, window_bounds = array<i64: 128, 128>}]} {
    %c0 = arith.constant 0 : index
    %c0_0 = arith.constant 0 : index
    %0 = vector.load %arg2[%c0, %c0_0] : memref<128x128xbf16, #tpu.memory_space<vmem>>, vector<128x128xbf16>
    %c0_1 = arith.constant 0 : index
    %c0_2 = arith.constant 0 : index
    %1 = vector.load %arg3[%c0_1, %c0_2] : memref<128x128xbf16, #tpu.memory_space<vmem>>, vector<128x128xbf16>
    %cst = arith.constant dense<0.000000e+00> : vector<128x128xf32>
    %2 = tpu.matmul %0, %1, %cst {dimension_numbers = #tpu.dot_dimension_numbers<[1], [0], [0], [1], [0, 0, 1, 1], [], []>} : vector<128x128xbf16>, vector<128x128xbf16>, vector<128x128xf32> -> vector<128x128xf32>
    %c0_3 = arith.constant 0 : index
    %c0_4 = arith.constant 0 : index
    %3 = vector.load %arg4[%c0_3, %c0_4] : memref<1x128xf32, #tpu.memory_space<vmem>>, vector<1x128xf32>
    %4 = vector.broadcast %3 : vector<1x128xf32> to vector<128x128xf32>
    %5 = arith.addf %2, %4 : vector<128x128xf32>
    %c0_5 = arith.constant 0 : index
    %c0_6 = arith.constant 0 : index
    %6 = vector.load %arg5[%c0_5, %c0_6] : memref<128x128xf32, #tpu.memory_space<vmem>>, vector<128x128xf32>
    tpu.vector_store %arg5[%c0_5, %c0_6], %5 {strides = array<i32>} : memref<128x128xf32, #tpu.memory_space<vmem>>, vector<128x128xf32>,
    return
  }
  func.func @transform_0(%arg0: i32, %arg1: i32) -> (i32, i32) {
    %c0_i32 = arith.constant 0 : i32
    %c0_i32_0 = arith.constant 0 : i32
    return %arg0, %c0_i32 : i32, i32
  }
  func.func @transform_1(%arg0: i32, %arg1: i32) -> (i32, i32) {
    %c0_i32 = arith.constant 0 : i32
    %c0_i32_0 = arith.constant 0 : i32
    return %c0_i32, %arg1 : i32, i32
  }
  func.func @transform_2(%arg0: i32, %arg1: i32) -> (i32, i32) {
    %c0_i32 = arith.constant 0 : i32
    %c0_i32_0 = arith.constant 0 : i32
    return %c0_i32, %arg1 : i32, i32
  }
  func.func @transform_3(%arg0: i32, %arg1: i32) -> (i32, i32) {
    %c0_i32 = arith.constant 0 : i32
    return %arg0, %arg1 : i32, i32
  }
}

module attributes {stable_mosaic.version = 11 : i64} {
  func.func @_matmul_bias_act_kernel(%arg0: i32, %arg1: i32, %arg2: memref<128x512xbf16, #tpu.memory_space<vmem>>, %arg3: memref<512x128xbf16, #tpu.memory_space<vmem>>, %arg4: memref<1x128xf32, #tpu.memory_space<vmem>>, %arg5: memref<128x128xf32, #tpu.memory_space<vmem>>) attributes {dimension_semantics = [#tpu.dimension_semantics<parallel>, #tpu.dimension_semantics<parallel>], iteration_bounds = array<i64: 16, 1>, scalar_prefetch = 0 : i64, scratch_operands = 0 : i64, tpu.core_type = #tpu.core_type<tc>, window_params = [{transform_indices = @transform_0, window_bounds = array<i64: 128, 512>}, {transform_indices = @transform_1, window_bounds = array<i64: 512, 128>}, {transform_indices = @transform_2, window_bounds = array<i64: 1, 128>}, {transform_indices = @transform_3, window_bounds = array<i64: 128, 128>}]} {
    %c0 = arith.constant 0 : index
    %c0_0 = arith.constant 0 : index
    %0 = vector.load %arg2[%c0, %c0_0] : memref<128x512xbf16, #tpu.memory_space<vmem>>, vector<128x512xbf16>
    %c0_1 = arith.constant 0 : index
    %c0_2 = arith.constant 0 : index
    %1 = vector.load %arg3[%c0_1, %c0_2] : memref<512x128xbf16, #tpu.memory_space<vmem>>, vector<512x128xbf16>
    %cst = arith.constant dense<0.000000e+00> : vector<128x128xf32>
    %2 = tpu.matmul %0, %1, %cst {dimension_numbers = #tpu.dot_dimension_numbers<[1], [0], [0], [1], [0, 0, 1, 1], [], []>} : vector<128x512xbf16>, vector<512x128xbf16>, vector<128x128xf32> -> vector<128x128xf32>
    %c0_3 = arith.constant 0 : index
    %c0_4 = arith.constant 0 : index
    %3 = vector.load %arg4[%c0_3, %c0_4] : memref<1x128xf32, #tpu.memory_space<vmem>>, vector<1x128xf32>
    %4 = vector.broadcast %3 : vector<1x128xf32> to vector<128x128xf32>
    %5 = arith.addf %2, %4 : vector<128x128xf32>
    %6 = math.tanh %5 : vector<128x128xf32>
    %c0_5 = arith.constant 0 : index
    %c0_6 = arith.constant 0 : index
    %7 = vector.load %arg5[%c0_5, %c0_6] : memref<128x128xf32, #tpu.memory_space<vmem>>, vector<128x128xf32>
    tpu.vector_store %arg5[%c0_5, %c0_6], %6 {strides = array<i32>} : memref<128x128xf32, #tpu.memory_space<vmem>>, vector<128x128xf32>,
    return
  }
  func.func @transform_0(%arg0: i32, %arg1: i32) -> (i32, i32) {
    %c0_i32 = arith.constant 0 : i32
    %c0_i32_0 = arith.constant 0 : i32
    return %arg0, %c0_i32 : i32, i32
  }
  func.func @transform_1(%arg0: i32, %arg1: i32) -> (i32, i32) {
    %c0_i32 = arith.constant 0 : i32
    %c0_i32_0 = arith.constant 0 : i32
    return %c0_i32, %arg1 : i32, i32
  }
  func.func @transform_2(%arg0: i32, %arg1: i32) -> (i32, i32) {
    %c0_i32 = arith.constant 0 : i32
    %c0_i32_0 = arith.constant 0 : i32
    return %c0_i32, %arg1 : i32, i32
  }
  func.func @transform_3(%arg0: i32, %arg1: i32) -> (i32, i32) {
    %c0_i32 = arith.constant 0 : i32
    return %arg0, %arg1 : i32, i32
  }
}

module attributes {stable_mosaic.version = 11 : i64} {
  func.func @_matmul_bias_act_kernel(%arg0: i32, %arg1: i32, %arg2: memref<128x128xbf16, #tpu.memory_space<vmem>>, %arg3: memref<128x128xbf16, #tpu.memory_space<vmem>>, %arg4: memref<1x128xf32, #tpu.memory_space<vmem>>, %arg5: memref<128x128xf32, #tpu.memory_space<vmem>>) attributes {dimension_semantics = [#tpu.dimension_semantics<parallel>, #tpu.dimension_semantics<parallel>], iteration_bounds = array<i64: 5, 1>, scalar_prefetch = 0 : i64, scratch_operands = 0 : i64, tpu.core_type = #tpu.core_type<tc>, window_params = [{transform_indices = @transform_0, window_bounds = array<i64: 128, 128>}, {transform_indices = @transform_1, window_bounds = array<i64: 128, 128>}, {transform_indices = @transform_2, window_bounds = array<i64: 1, 128>}, {transform_indices = @transform_3, window_bounds = array<i64: 128, 128>}]} {
    %c0 = arith.constant 0 : index
    %c0_0 = arith.constant 0 : index
    %0 = vector.load %arg2[%c0, %c0_0] : memref<128x128xbf16, #tpu.memory_space<vmem>>, vector<128x128xbf16>
    %c0_1 = arith.constant 0 : index
    %c0_2 = arith.constant 0 : index
    %1 = vector.load %arg3[%c0_1, %c0_2] : memref<128x128xbf16, #tpu.memory_space<vmem>>, vector<128x128xbf16>
    %cst = arith.constant dense<0.000000e+00> : vector<128x128xf32>
    %2 = tpu.matmul %0, %1, %cst {dimension_numbers = #tpu.dot_dimension_numbers<[1], [0], [0], [1], [0, 0, 1, 1], [], []>} : vector<128x128xbf16>, vector<128x128xbf16>, vector<128x128xf32> -> vector<128x128xf32>
    %c0_3 = arith.constant 0 : index
    %c0_4 = arith.constant 0 : index
    %3 = vector.load %arg4[%c0_3, %c0_4] : memref<1x128xf32, #tpu.memory_space<vmem>>, vector<1x128xf32>
    %4 = vector.broadcast %3 : vector<1x128xf32> to vector<128x128xf32>
    %5 = arith.addf %2, %4 : vector<128x128xf32>
    %cst_5 = arith.constant 0.000000e+00 : f32
    %6 = vector.broadcast %cst_5 : f32 to vector<128x128xf32>
    %7 = arith.cmpf ogt, %5, %6 : vector<128x128xf32>
    %cst_6 = arith.constant 2.000000e-01 : f32
    %8 = vector.broadcast %cst_6 : f32 to vector<128x128xf32>
    %9 = arith.mulf %8, %5 : vector<128x128xf32>
    %10 = arith.select %7, %5, %9 : vector<128x128xi1>, vector<128x128xf32>
    %c0_7 = arith.constant 0 : index
    %c0_8 = arith.constant 0 : index
    %11 = vector.load %arg5[%c0_7, %c0_8] : memref<128x128xf32, #tpu.memory_space<vmem>>, vector<128x128xf32>
    tpu.vector_store %arg5[%c0_7, %c0_8], %10 {strides = array<i32>} : memref<128x128xf32, #tpu.memory_space<vmem>>, vector<128x128xf32>,
    return
  }
  func.func @transform_0(%arg0: i32, %arg1: i32) -> (i32, i32) {
    %c0_i32 = arith.constant 0 : i32
    %c0_i32_0 = arith.constant 0 : i32
    return %arg0, %c0_i32 : i32, i32
  }
  func.func @transform_1(%arg0: i32, %arg1: i32) -> (i32, i32) {
    %c0_i32 = arith.constant 0 : i32
    %c0_i32_0 = arith.constant 0 : i32
    return %c0_i32, %arg1 : i32, i32
  }
  func.func @transform_2(%arg0: i32, %arg1: i32) -> (i32, i32) {
    %c0_i32 = arith.constant 0 : i32
    %c0_i32_0 = arith.constant 0 : i32
    return %c0_i32, %arg1 : i32, i32
  }
  func.func @transform_3(%arg0: i32, %arg1: i32) -> (i32, i32) {
    %c0_i32 = arith.constant 0 : i32
    return %arg0, %arg1 : i32, i32
  }
}

module attributes {stable_mosaic.version = 11 : i64} {
  func.func @_matmul_bias_act_kernel(%arg0: i32, %arg1: i32, %arg2: memref<128x128xbf16, #tpu.memory_space<vmem>>, %arg3: memref<128x128xbf16, #tpu.memory_space<vmem>>, %arg4: memref<1x128xf32, #tpu.memory_space<vmem>>, %arg5: memref<128x128xf32, #tpu.memory_space<vmem>>) attributes {dimension_semantics = [#tpu.dimension_semantics<parallel>, #tpu.dimension_semantics<parallel>], iteration_bounds = array<i64: 2, 1>, scalar_prefetch = 0 : i64, scratch_operands = 0 : i64, tpu.core_type = #tpu.core_type<tc>, window_params = [{transform_indices = @transform_0, window_bounds = array<i64: 128, 128>}, {transform_indices = @transform_1, window_bounds = array<i64: 128, 128>}, {transform_indices = @transform_2, window_bounds = array<i64: 1, 128>}, {transform_indices = @transform_3, window_bounds = array<i64: 128, 128>}]} {
    %c0 = arith.constant 0 : index
    %c0_0 = arith.constant 0 : index
    %0 = vector.load %arg2[%c0, %c0_0] : memref<128x128xbf16, #tpu.memory_space<vmem>>, vector<128x128xbf16>
    %c0_1 = arith.constant 0 : index
    %c0_2 = arith.constant 0 : index
    %1 = vector.load %arg3[%c0_1, %c0_2] : memref<128x128xbf16, #tpu.memory_space<vmem>>, vector<128x128xbf16>
    %cst = arith.constant dense<0.000000e+00> : vector<128x128xf32>
    %2 = tpu.matmul %0, %1, %cst {dimension_numbers = #tpu.dot_dimension_numbers<[1], [0], [0], [1], [0, 0, 1, 1], [], []>} : vector<128x128xbf16>, vector<128x128xbf16>, vector<128x128xf32> -> vector<128x128xf32>
    %c0_3 = arith.constant 0 : index
    %c0_4 = arith.constant 0 : index
    %3 = vector.load %arg4[%c0_3, %c0_4] : memref<1x128xf32, #tpu.memory_space<vmem>>, vector<1x128xf32>
    %4 = vector.broadcast %3 : vector<1x128xf32> to vector<128x128xf32>
    %5 = arith.addf %2, %4 : vector<128x128xf32>
    %c0_5 = arith.constant 0 : index
    %c0_6 = arith.constant 0 : index
    %6 = vector.load %arg5[%c0_5, %c0_6] : memref<128x128xf32, #tpu.memory_space<vmem>>, vector<128x128xf32>
    tpu.vector_store %arg5[%c0_5, %c0_6], %5 {strides = array<i32>} : memref<128x128xf32, #tpu.memory_space<vmem>>, vector<128x128xf32>,
    return
  }
  func.func @transform_0(%arg0: i32, %arg1: i32) -> (i32, i32) {
    %c0_i32 = arith.constant 0 : i32
    %c0_i32_0 = arith.constant 0 : i32
    return %arg0, %c0_i32 : i32, i32
  }
  func.func @transform_1(%arg0: i32, %arg1: i32) -> (i32, i32) {
    %c0_i32 = arith.constant 0 : i32
    %c0_i32_0 = arith.constant 0 : i32
    return %c0_i32, %arg1 : i32, i32
  }
  func.func @transform_2(%arg0: i32, %arg1: i32) -> (i32, i32) {
    %c0_i32 = arith.constant 0 : i32
    %c0_i32_0 = arith.constant 0 : i32
    return %c0_i32, %arg1 : i32, i32
  }
  func.func @transform_3(%arg0: i32, %arg1: i32) -> (i32, i32) {
    %c0_i32 = arith.constant 0 : i32
    return %arg0, %arg1 : i32, i32
  }
}

module attributes {stable_mosaic.version = 11 : i64} {
  func.func @_matmul_bias_act_kernel(%arg0: i32, %arg1: i32, %arg2: memref<128x256xbf16, #tpu.memory_space<vmem>>, %arg3: memref<256x128xbf16, #tpu.memory_space<vmem>>, %arg4: memref<1x128xf32, #tpu.memory_space<vmem>>, %arg5: memref<128x128xf32, #tpu.memory_space<vmem>>) attributes {dimension_semantics = [#tpu.dimension_semantics<parallel>, #tpu.dimension_semantics<parallel>], iteration_bounds = array<i64: 2, 1>, scalar_prefetch = 0 : i64, scratch_operands = 0 : i64, tpu.core_type = #tpu.core_type<tc>, window_params = [{transform_indices = @transform_0, window_bounds = array<i64: 128, 256>}, {transform_indices = @transform_1, window_bounds = array<i64: 256, 128>}, {transform_indices = @transform_2, window_bounds = array<i64: 1, 128>}, {transform_indices = @transform_3, window_bounds = array<i64: 128, 128>}]} {
    %c0 = arith.constant 0 : index
    %c0_0 = arith.constant 0 : index
    %0 = vector.load %arg2[%c0, %c0_0] : memref<128x256xbf16, #tpu.memory_space<vmem>>, vector<128x256xbf16>
    %c0_1 = arith.constant 0 : index
    %c0_2 = arith.constant 0 : index
    %1 = vector.load %arg3[%c0_1, %c0_2] : memref<256x128xbf16, #tpu.memory_space<vmem>>, vector<256x128xbf16>
    %cst = arith.constant dense<0.000000e+00> : vector<128x128xf32>
    %2 = tpu.matmul %0, %1, %cst {dimension_numbers = #tpu.dot_dimension_numbers<[1], [0], [0], [1], [0, 0, 1, 1], [], []>} : vector<128x256xbf16>, vector<256x128xbf16>, vector<128x128xf32> -> vector<128x128xf32>
    %c0_3 = arith.constant 0 : index
    %c0_4 = arith.constant 0 : index
    %3 = vector.load %arg4[%c0_3, %c0_4] : memref<1x128xf32, #tpu.memory_space<vmem>>, vector<1x128xf32>
    %4 = vector.broadcast %3 : vector<1x128xf32> to vector<128x128xf32>
    %5 = arith.addf %2, %4 : vector<128x128xf32>
    %c0_5 = arith.constant 0 : index
    %c0_6 = arith.constant 0 : index
    %6 = vector.load %arg5[%c0_5, %c0_6] : memref<128x128xf32, #tpu.memory_space<vmem>>, vector<128x128xf32>
    tpu.vector_store %arg5[%c0_5, %c0_6], %5 {strides = array<i32>} : memref<128x128xf32, #tpu.memory_space<vmem>>, vector<128x128xf32>,
    return
  }
  func.func @transform_0(%arg0: i32, %arg1: i32) -> (i32, i32) {
    %c0_i32 = arith.constant 0 : i32
    %c0_i32_0 = arith.constant 0 : i32
    return %arg0, %c0_i32 : i32, i32
  }
  func.func @transform_1(%arg0: i32, %arg1: i32) -> (i32, i32) {
    %c0_i32 = arith.constant 0 : i32
    %c0_i32_0 = arith.constant 0 : i32
    return %c0_i32, %arg1 : i32, i32
  }
  func.func @transform_2(%arg0: i32, %arg1: i32) -> (i32, i32) {
    %c0_i32 = arith.constant 0 : i32
    %c0_i32_0 = arith.constant 0 : i32
    return %c0_i32, %arg1 : i32, i32
  }
  func.func @transform_3(%arg0: i32, %arg1: i32) -> (i32, i32) {
    %c0_i32 = arith.constant 0 : i32
    return %arg0, %arg1 : i32, i32
  }
}

module attributes {stable_mosaic.version = 11 : i64} {
  func.func @_sum_abs_diff_kernel(%arg0: i32, %arg1: memref<56x128xf32, #tpu.memory_space<vmem>>, %arg2: memref<56x128xf32, #tpu.memory_space<vmem>>, %arg3: memref<1x1xf32, #tpu.memory_space<vmem>>) attributes {dimension_semantics = [#tpu.dimension_semantics<arbitrary>], iteration_bounds = array<i64: 1>, scalar_prefetch = 0 : i64, scratch_operands = 0 : i64, tpu.core_type = #tpu.core_type<tc>, window_params = [{pipeline_mode = #tpu.pipeline_mode<synchronous>, transform_indices = @transform_0, window_bounds = array<i64: 56, 128>}, {pipeline_mode = #tpu.pipeline_mode<synchronous>, transform_indices = @transform_1, window_bounds = array<i64: 56, 128>}, {pipeline_mode = #tpu.pipeline_mode<synchronous>, transform_indices = @transform_2, window_bounds = array<i64: 1, 1>}]} {
    %c0 = arith.constant 0 : index
    %c0_0 = arith.constant 0 : index
    %0 = vector.load %arg1[%c0, %c0_0] : memref<56x128xf32, #tpu.memory_space<vmem>>, vector<56x128xf32>
    %c0_1 = arith.constant 0 : index
    %c0_2 = arith.constant 0 : index
    %1 = vector.load %arg2[%c0_1, %c0_2] : memref<56x128xf32, #tpu.memory_space<vmem>>, vector<56x128xf32>
    %2 = arith.subf %0, %1 : vector<56x128xf32>
    %3 = math.absf %2 : vector<56x128xf32>
    %4 = vector.shape_cast %3 : vector<56x128xf32> to vector<1x56x128xf32>
    %cst = arith.constant dense<0.000000e+00> : vector<1xf32>
    %5 = vector.multi_reduction <add>, %4, %cst [1, 2] : vector<1x56x128xf32> to vector<1xf32>
    %6 = vector.shape_cast %5 : vector<1xf32> to vector<1x1x1xf32>
    %7 = vector.extract %6[0, 0, 0] : f32 from vector<1x1x1xf32>
    %8 = vector.broadcast %7 : f32 to vector<1x1xf32>
    %c0_3 = arith.constant 0 : index
    %c0_4 = arith.constant 0 : index
    %9 = vector.load %arg3[%c0_3, %c0_4] : memref<1x1xf32, #tpu.memory_space<vmem>>, vector<1x1xf32>
    tpu.vector_store %arg3[%c0_3, %c0_4], %8 {strides = array<i32>} : memref<1x1xf32, #tpu.memory_space<vmem>>, vector<1x1xf32>,
    return
  }
  func.func @transform_0(%arg0: i32) -> (i32, i32) {
    %c0_i32 = arith.constant 0 : i32
    %c0_i32_0 = arith.constant 0 : i32
    %c0_i32_1 = arith.constant 0 : i32
    return %c0_i32, %c0_i32_0 : i32, i32
  }
  func.func @transform_1(%arg0: i32) -> (i32, i32) {
    %c0_i32 = arith.constant 0 : i32
    %c0_i32_0 = arith.constant 0 : i32
    %c0_i32_1 = arith.constant 0 : i32
    return %c0_i32, %c0_i32_0 : i32, i32
  }
  func.func @transform_2(%arg0: i32) -> (i32, i32) {
    %c0_i32 = arith.constant 0 : i32
    %c0_i32_0 = arith.constant 0 : i32
    %c0_i32_1 = arith.constant 0 : i32
    return %c0_i32, %c0_i32_0 : i32, i32
  }
}

module attributes {stable_mosaic.version = 11 : i64} {
  func.func @_sum_abs_diff_kernel(%arg0: i32, %arg1: memref<24x128xf32, #tpu.memory_space<vmem>>, %arg2: memref<24x128xf32, #tpu.memory_space<vmem>>, %arg3: memref<1x1xf32, #tpu.memory_space<vmem>>) attributes {dimension_semantics = [#tpu.dimension_semantics<arbitrary>], iteration_bounds = array<i64: 1>, scalar_prefetch = 0 : i64, scratch_operands = 0 : i64, tpu.core_type = #tpu.core_type<tc>, window_params = [{pipeline_mode = #tpu.pipeline_mode<synchronous>, transform_indices = @transform_0, window_bounds = array<i64: 24, 128>}, {pipeline_mode = #tpu.pipeline_mode<synchronous>, transform_indices = @transform_1, window_bounds = array<i64: 24, 128>}, {pipeline_mode = #tpu.pipeline_mode<synchronous>, transform_indices = @transform_2, window_bounds = array<i64: 1, 1>}]} {
    %c0 = arith.constant 0 : index
    %c0_0 = arith.constant 0 : index
    %0 = vector.load %arg1[%c0, %c0_0] : memref<24x128xf32, #tpu.memory_space<vmem>>, vector<24x128xf32>
    %c0_1 = arith.constant 0 : index
    %c0_2 = arith.constant 0 : index
    %1 = vector.load %arg2[%c0_1, %c0_2] : memref<24x128xf32, #tpu.memory_space<vmem>>, vector<24x128xf32>
    %2 = arith.subf %0, %1 : vector<24x128xf32>
    %3 = math.absf %2 : vector<24x128xf32>
    %4 = vector.shape_cast %3 : vector<24x128xf32> to vector<1x24x128xf32>
    %cst = arith.constant dense<0.000000e+00> : vector<1xf32>
    %5 = vector.multi_reduction <add>, %4, %cst [1, 2] : vector<1x24x128xf32> to vector<1xf32>
    %6 = vector.shape_cast %5 : vector<1xf32> to vector<1x1x1xf32>
    %7 = vector.extract %6[0, 0, 0] : f32 from vector<1x1x1xf32>
    %8 = vector.broadcast %7 : f32 to vector<1x1xf32>
    %c0_3 = arith.constant 0 : index
    %c0_4 = arith.constant 0 : index
    %9 = vector.load %arg3[%c0_3, %c0_4] : memref<1x1xf32, #tpu.memory_space<vmem>>, vector<1x1xf32>
    tpu.vector_store %arg3[%c0_3, %c0_4], %8 {strides = array<i32>} : memref<1x1xf32, #tpu.memory_space<vmem>>, vector<1x1xf32>,
    return
  }
  func.func @transform_0(%arg0: i32) -> (i32, i32) {
    %c0_i32 = arith.constant 0 : i32
    %c0_i32_0 = arith.constant 0 : i32
    %c0_i32_1 = arith.constant 0 : i32
    return %c0_i32, %c0_i32_0 : i32, i32
  }
  func.func @transform_1(%arg0: i32) -> (i32, i32) {
    %c0_i32 = arith.constant 0 : i32
    %c0_i32_0 = arith.constant 0 : i32
    %c0_i32_1 = arith.constant 0 : i32
    return %c0_i32, %c0_i32_0 : i32, i32
  }
  func.func @transform_2(%arg0: i32) -> (i32, i32) {
    %c0_i32 = arith.constant 0 : i32
    %c0_i32_0 = arith.constant 0 : i32
    %c0_i32_1 = arith.constant 0 : i32
    return %c0_i32, %c0_i32_0 : i32, i32
  }
}

module attributes {stable_mosaic.version = 11 : i64} {
  func.func @_sum_abs_diff_kernel(%arg0: i32, %arg1: memref<40x128xf32, #tpu.memory_space<vmem>>, %arg2: memref<40x128xf32, #tpu.memory_space<vmem>>, %arg3: memref<1x1xf32, #tpu.memory_space<vmem>>) attributes {dimension_semantics = [#tpu.dimension_semantics<arbitrary>], iteration_bounds = array<i64: 1>, scalar_prefetch = 0 : i64, scratch_operands = 0 : i64, tpu.core_type = #tpu.core_type<tc>, window_params = [{pipeline_mode = #tpu.pipeline_mode<synchronous>, transform_indices = @transform_0, window_bounds = array<i64: 40, 128>}, {pipeline_mode = #tpu.pipeline_mode<synchronous>, transform_indices = @transform_1, window_bounds = array<i64: 40, 128>}, {pipeline_mode = #tpu.pipeline_mode<synchronous>, transform_indices = @transform_2, window_bounds = array<i64: 1, 1>}]} {
    %c0 = arith.constant 0 : index
    %c0_0 = arith.constant 0 : index
    %0 = vector.load %arg1[%c0, %c0_0] : memref<40x128xf32, #tpu.memory_space<vmem>>, vector<40x128xf32>
    %c0_1 = arith.constant 0 : index
    %c0_2 = arith.constant 0 : index
    %1 = vector.load %arg2[%c0_1, %c0_2] : memref<40x128xf32, #tpu.memory_space<vmem>>, vector<40x128xf32>
    %2 = arith.subf %0, %1 : vector<40x128xf32>
    %3 = math.absf %2 : vector<40x128xf32>
    %4 = vector.shape_cast %3 : vector<40x128xf32> to vector<1x40x128xf32>
    %cst = arith.constant dense<0.000000e+00> : vector<1xf32>
    %5 = vector.multi_reduction <add>, %4, %cst [1, 2] : vector<1x40x128xf32> to vector<1xf32>
    %6 = vector.shape_cast %5 : vector<1xf32> to vector<1x1x1xf32>
    %7 = vector.extract %6[0, 0, 0] : f32 from vector<1x1x1xf32>
    %8 = vector.broadcast %7 : f32 to vector<1x1xf32>
    %c0_3 = arith.constant 0 : index
    %c0_4 = arith.constant 0 : index
    %9 = vector.load %arg3[%c0_3, %c0_4] : memref<1x1xf32, #tpu.memory_space<vmem>>, vector<1x1xf32>
    tpu.vector_store %arg3[%c0_3, %c0_4], %8 {strides = array<i32>} : memref<1x1xf32, #tpu.memory_space<vmem>>, vector<1x1xf32>,
    return
  }
  func.func @transform_0(%arg0: i32) -> (i32, i32) {
    %c0_i32 = arith.constant 0 : i32
    %c0_i32_0 = arith.constant 0 : i32
    %c0_i32_1 = arith.constant 0 : i32
    return %c0_i32, %c0_i32_0 : i32, i32
  }
  func.func @transform_1(%arg0: i32) -> (i32, i32) {
    %c0_i32 = arith.constant 0 : i32
    %c0_i32_0 = arith.constant 0 : i32
    %c0_i32_1 = arith.constant 0 : i32
    return %c0_i32, %c0_i32_0 : i32, i32
  }
  func.func @transform_2(%arg0: i32) -> (i32, i32) {
    %c0_i32 = arith.constant 0 : i32
    %c0_i32_0 = arith.constant 0 : i32
    %c0_i32_1 = arith.constant 0 : i32
    return %c0_i32, %c0_i32_0 : i32, i32
  }
}

module attributes {stable_mosaic.version = 11 : i64} {
  func.func @_matmul_bias_act_kernel(%arg0: i32, %arg1: i32, %arg2: memref<128x512xbf16, #tpu.memory_space<vmem>>, %arg3: memref<512x128xbf16, #tpu.memory_space<vmem>>, %arg4: memref<1x128xf32, #tpu.memory_space<vmem>>, %arg5: memref<128x128xf32, #tpu.memory_space<vmem>>) attributes {dimension_semantics = [#tpu.dimension_semantics<parallel>, #tpu.dimension_semantics<parallel>], iteration_bounds = array<i64: 2, 1>, scalar_prefetch = 0 : i64, scratch_operands = 0 : i64, tpu.core_type = #tpu.core_type<tc>, window_params = [{transform_indices = @transform_0, window_bounds = array<i64: 128, 512>}, {transform_indices = @transform_1, window_bounds = array<i64: 512, 128>}, {transform_indices = @transform_2, window_bounds = array<i64: 1, 128>}, {transform_indices = @transform_3, window_bounds = array<i64: 128, 128>}]} {
    %c0 = arith.constant 0 : index
    %c0_0 = arith.constant 0 : index
    %0 = vector.load %arg2[%c0, %c0_0] : memref<128x512xbf16, #tpu.memory_space<vmem>>, vector<128x512xbf16>
    %c0_1 = arith.constant 0 : index
    %c0_2 = arith.constant 0 : index
    %1 = vector.load %arg3[%c0_1, %c0_2] : memref<512x128xbf16, #tpu.memory_space<vmem>>, vector<512x128xbf16>
    %cst = arith.constant dense<0.000000e+00> : vector<128x128xf32>
    %2 = tpu.matmul %0, %1, %cst {dimension_numbers = #tpu.dot_dimension_numbers<[1], [0], [0], [1], [0, 0, 1, 1], [], []>} : vector<128x512xbf16>, vector<512x128xbf16>, vector<128x128xf32> -> vector<128x128xf32>
    %c0_3 = arith.constant 0 : index
    %c0_4 = arith.constant 0 : index
    %3 = vector.load %arg4[%c0_3, %c0_4] : memref<1x128xf32, #tpu.memory_space<vmem>>, vector<1x128xf32>
    %4 = vector.broadcast %3 : vector<1x128xf32> to vector<128x128xf32>
    %5 = arith.addf %2, %4 : vector<128x128xf32>
    %c0_5 = arith.constant 0 : index
    %c0_6 = arith.constant 0 : index
    %6 = vector.load %arg5[%c0_5, %c0_6] : memref<128x128xf32, #tpu.memory_space<vmem>>, vector<128x128xf32>
    tpu.vector_store %arg5[%c0_5, %c0_6], %5 {strides = array<i32>} : memref<128x128xf32, #tpu.memory_space<vmem>>, vector<128x128xf32>,
    return
  }
  func.func @transform_0(%arg0: i32, %arg1: i32) -> (i32, i32) {
    %c0_i32 = arith.constant 0 : i32
    %c0_i32_0 = arith.constant 0 : i32
    return %arg0, %c0_i32 : i32, i32
  }
  func.func @transform_1(%arg0: i32, %arg1: i32) -> (i32, i32) {
    %c0_i32 = arith.constant 0 : i32
    %c0_i32_0 = arith.constant 0 : i32
    return %c0_i32, %arg1 : i32, i32
  }
  func.func @transform_2(%arg0: i32, %arg1: i32) -> (i32, i32) {
    %c0_i32 = arith.constant 0 : i32
    %c0_i32_0 = arith.constant 0 : i32
    return %c0_i32, %arg1 : i32, i32
  }
  func.func @transform_3(%arg0: i32, %arg1: i32) -> (i32, i32) {
    %c0_i32 = arith.constant 0 : i32
    return %arg0, %arg1 : i32, i32
  }
}

module attributes {stable_mosaic.version = 11 : i64} {
  func.func @_sum_sq_const_kernel(%arg0: i32, %arg1: memref<8x128xf32, #tpu.memory_space<vmem>>, %arg2: memref<1x1xf32, #tpu.memory_space<vmem>>) attributes {dimension_semantics = [#tpu.dimension_semantics<arbitrary>], iteration_bounds = array<i64: 1>, scalar_prefetch = 0 : i64, scratch_operands = 0 : i64, tpu.core_type = #tpu.core_type<tc>, window_params = [{pipeline_mode = #tpu.pipeline_mode<synchronous>, transform_indices = @transform_0, window_bounds = array<i64: 8, 128>}, {pipeline_mode = #tpu.pipeline_mode<synchronous>, transform_indices = @transform_1, window_bounds = array<i64: 1, 1>}]} {
    %c0 = arith.constant 0 : index
    %c0_0 = arith.constant 0 : index
    %0 = vector.load %arg1[%c0, %c0_0] : memref<8x128xf32, #tpu.memory_space<vmem>>, vector<8x128xf32>
    %cst = arith.constant 1.000000e+00 : f32
    %1 = vector.broadcast %cst : f32 to vector<8x128xf32>
    %2 = arith.subf %0, %1 : vector<8x128xf32>
    %3 = arith.mulf %2, %2 : vector<8x128xf32>
    %4 = vector.shape_cast %3 : vector<8x128xf32> to vector<1x8x128xf32>
    %cst_1 = arith.constant dense<0.000000e+00> : vector<1xf32>
    %5 = vector.multi_reduction <add>, %4, %cst_1 [1, 2] : vector<1x8x128xf32> to vector<1xf32>
    %6 = vector.shape_cast %5 : vector<1xf32> to vector<1x1x1xf32>
    %7 = vector.extract %6[0, 0, 0] : f32 from vector<1x1x1xf32>
    %8 = vector.broadcast %7 : f32 to vector<1x1xf32>
    %c0_2 = arith.constant 0 : index
    %c0_3 = arith.constant 0 : index
    %9 = vector.load %arg2[%c0_2, %c0_3] : memref<1x1xf32, #tpu.memory_space<vmem>>, vector<1x1xf32>
    tpu.vector_store %arg2[%c0_2, %c0_3], %8 {strides = array<i32>} : memref<1x1xf32, #tpu.memory_space<vmem>>, vector<1x1xf32>,
    return
  }
  func.func @transform_0(%arg0: i32) -> (i32, i32) {
    %c0_i32 = arith.constant 0 : i32
    %c0_i32_0 = arith.constant 0 : i32
    %c0_i32_1 = arith.constant 0 : i32
    return %c0_i32, %c0_i32_0 : i32, i32
  }
  func.func @transform_1(%arg0: i32) -> (i32, i32) {
    %c0_i32 = arith.constant 0 : i32
    %c0_i32_0 = arith.constant 0 : i32
    %c0_i32_1 = arith.constant 0 : i32
    return %c0_i32, %c0_i32_0 : i32, i32
  }
}

module attributes {stable_mosaic.version = 11 : i64} {
  func.func @_sum_sq_const_kernel(%arg0: i32, %arg1: memref<8x128xf32, #tpu.memory_space<vmem>>, %arg2: memref<1x1xf32, #tpu.memory_space<vmem>>) attributes {dimension_semantics = [#tpu.dimension_semantics<arbitrary>], iteration_bounds = array<i64: 1>, scalar_prefetch = 0 : i64, scratch_operands = 0 : i64, tpu.core_type = #tpu.core_type<tc>, window_params = [{pipeline_mode = #tpu.pipeline_mode<synchronous>, transform_indices = @transform_0, window_bounds = array<i64: 8, 128>}, {pipeline_mode = #tpu.pipeline_mode<synchronous>, transform_indices = @transform_1, window_bounds = array<i64: 1, 1>}]} {
    %c0 = arith.constant 0 : index
    %c0_0 = arith.constant 0 : index
    %0 = vector.load %arg1[%c0, %c0_0] : memref<8x128xf32, #tpu.memory_space<vmem>>, vector<8x128xf32>
    %cst = arith.constant 0.000000e+00 : f32
    %1 = vector.broadcast %cst : f32 to vector<8x128xf32>
    %2 = arith.subf %0, %1 : vector<8x128xf32>
    %3 = arith.mulf %2, %2 : vector<8x128xf32>
    %4 = vector.shape_cast %3 : vector<8x128xf32> to vector<1x8x128xf32>
    %cst_1 = arith.constant dense<0.000000e+00> : vector<1xf32>
    %5 = vector.multi_reduction <add>, %4, %cst_1 [1, 2] : vector<1x8x128xf32> to vector<1xf32>
    %6 = vector.shape_cast %5 : vector<1xf32> to vector<1x1x1xf32>
    %7 = vector.extract %6[0, 0, 0] : f32 from vector<1x1x1xf32>
    %8 = vector.broadcast %7 : f32 to vector<1x1xf32>
    %c0_2 = arith.constant 0 : index
    %c0_3 = arith.constant 0 : index
    %9 = vector.load %arg2[%c0_2, %c0_3] : memref<1x1xf32, #tpu.memory_space<vmem>>, vector<1x1xf32>
    tpu.vector_store %arg2[%c0_2, %c0_3], %8 {strides = array<i32>} : memref<1x1xf32, #tpu.memory_space<vmem>>, vector<1x1xf32>,
    return
  }
  func.func @transform_0(%arg0: i32) -> (i32, i32) {
    %c0_i32 = arith.constant 0 : i32
    %c0_i32_0 = arith.constant 0 : i32
    %c0_i32_1 = arith.constant 0 : i32
    return %c0_i32, %c0_i32_0 : i32, i32
  }
  func.func @transform_1(%arg0: i32) -> (i32, i32) {
    %c0_i32 = arith.constant 0 : i32
    %c0_i32_0 = arith.constant 0 : i32
    %c0_i32_1 = arith.constant 0 : i32
    return %c0_i32, %c0_i32_0 : i32, i32
  }
}

module attributes {stable_mosaic.version = 11 : i64} {
  func.func @_sum_abs_diff_kernel(%arg0: i32, %arg1: memref<48x128xf32, #tpu.memory_space<vmem>>, %arg2: memref<48x128xf32, #tpu.memory_space<vmem>>, %arg3: memref<1x1xf32, #tpu.memory_space<vmem>>) attributes {dimension_semantics = [#tpu.dimension_semantics<arbitrary>], iteration_bounds = array<i64: 1>, scalar_prefetch = 0 : i64, scratch_operands = 0 : i64, tpu.core_type = #tpu.core_type<tc>, window_params = [{pipeline_mode = #tpu.pipeline_mode<synchronous>, transform_indices = @transform_0, window_bounds = array<i64: 48, 128>}, {pipeline_mode = #tpu.pipeline_mode<synchronous>, transform_indices = @transform_1, window_bounds = array<i64: 48, 128>}, {pipeline_mode = #tpu.pipeline_mode<synchronous>, transform_indices = @transform_2, window_bounds = array<i64: 1, 1>}]} {
    %c0 = arith.constant 0 : index
    %c0_0 = arith.constant 0 : index
    %0 = vector.load %arg1[%c0, %c0_0] : memref<48x128xf32, #tpu.memory_space<vmem>>, vector<48x128xf32>
    %c0_1 = arith.constant 0 : index
    %c0_2 = arith.constant 0 : index
    %1 = vector.load %arg2[%c0_1, %c0_2] : memref<48x128xf32, #tpu.memory_space<vmem>>, vector<48x128xf32>
    %2 = arith.subf %0, %1 : vector<48x128xf32>
    %3 = math.absf %2 : vector<48x128xf32>
    %4 = vector.shape_cast %3 : vector<48x128xf32> to vector<1x48x128xf32>
    %cst = arith.constant dense<0.000000e+00> : vector<1xf32>
    %5 = vector.multi_reduction <add>, %4, %cst [1, 2] : vector<1x48x128xf32> to vector<1xf32>
    %6 = vector.shape_cast %5 : vector<1xf32> to vector<1x1x1xf32>
    %7 = vector.extract %6[0, 0, 0] : f32 from vector<1x1x1xf32>
    %8 = vector.broadcast %7 : f32 to vector<1x1xf32>
    %c0_3 = arith.constant 0 : index
    %c0_4 = arith.constant 0 : index
    %9 = vector.load %arg3[%c0_3, %c0_4] : memref<1x1xf32, #tpu.memory_space<vmem>>, vector<1x1xf32>
    tpu.vector_store %arg3[%c0_3, %c0_4], %8 {strides = array<i32>} : memref<1x1xf32, #tpu.memory_space<vmem>>, vector<1x1xf32>,
    return
  }
  func.func @transform_0(%arg0: i32) -> (i32, i32) {
    %c0_i32 = arith.constant 0 : i32
    %c0_i32_0 = arith.constant 0 : i32
    %c0_i32_1 = arith.constant 0 : i32
    return %c0_i32, %c0_i32_0 : i32, i32
  }
  func.func @transform_1(%arg0: i32) -> (i32, i32) {
    %c0_i32 = arith.constant 0 : i32
    %c0_i32_0 = arith.constant 0 : i32
    %c0_i32_1 = arith.constant 0 : i32
    return %c0_i32, %c0_i32_0 : i32, i32
  }
  func.func @transform_2(%arg0: i32) -> (i32, i32) {
    %c0_i32 = arith.constant 0 : i32
    %c0_i32_0 = arith.constant 0 : i32
    %c0_i32_1 = arith.constant 0 : i32
    return %c0_i32, %c0_i32_0 : i32, i32
  }
}

</mosaic_0001>

<llo_original>
// kernel: _lambda_.23
$region0: #{_lambda_.23}
  #allocation0 [shape = 'u32[]', space=smem, size = 0x4, offset = 0x4, fixed_abs, tag = 'smem constant byte address 0x4 - core index']
  #allocation1 [shape = 'u32[144,128]{1,0:T(1,128)}', space=vmem, size = 0x12000, scoped, tag = 'internal scratch']
  %s0 = inlined_call_operand.vmem [shape: bf16[2048,256], index: 0, kind: input, shape index: {}]
  %s1 = inlined_call_operand.vmem [shape: bf16[256,128], index: 1, kind: input, shape index: {}]
  %s2 = inlined_call_operand.vmem [shape: f32[1,128], index: 2, kind: input, shape index: {}]
  %s3 = inlined_call_operand.vmem [shape: f32[2048,128], index: 3, kind: output, shape index: {}]
  %s4 = sld [smem:[#allocation0]]
  $region45: #{_lambda_.23} parent=0
    _
  %s6 = ssub.s32 1, %s4
  %s7 = scalar_select 0, %s6, %s4
  loop: start=0, step=1, limit=18
  $region2: #{_lambda_.23} parent=0 // loop_pre_header
    _
  $region3: #{_lambda_.23} parent=0 // loop_header
    %s9 = sphi 0, %s13
    %p10 = scmp.ge.s32.totalorder %s9, 18
    %s16 = sphi 0, %s28
    %s17 = sphi 0, %s24
    %s18 = sphi 0, %s16
    %s19 = sphi 0, %s17
    %s20 = sphi 0, %s18
    %s21 = sphi 0, %s19
    %s31 = sphi 0, %s33
    %s34 = sphi 0, %s31
    %s35 = sphi 0, %s34
    %s51 = sphi 0, %s35
    %s57 = sphi 0, %s59
    %s60 = sphi 0, %s57
    %s61 = sphi 0, %s60
    %s77 = sphi 0, %s61
    %s83 = sphi 0, %s85
    %s86 = sphi 0, %s83
    %s87 = sphi 0, %s86
    %s103 = sphi 0, %s87
    %s111 = sphi 0, %s113
    %s114 = sphi 0, %s111
    %s115 = sphi 0, %s114
    %s131 = sphi 0, %s115
  $region4: #{_lambda_.23} parent=0 // loop_header_branch
    %12 = sbr.rel (%p10) target = $region8
  $region5: #{_lambda_.23} parent=0 // loop_body
    %s14 = ssub.s32 %s9, 1
    %s15 = ssub.s32 %s9, 2
    %s22 = sadd.s32 1, %s17
    %p23 = scmp.ge.s32.totalorder %s22, 1
    %s24 = scalar_select %p23, 0, %s22
    %s25 = sadd.s32 1, %s16
    %s26 = scalar_select %p23, %s25, %s16
    %p27 = scmp.ge.s32.totalorder %s26, 16
    %s28 = scalar_select %p27, 0, %s26
    %s29 = ssub.s32 %s16, %s28
    %p30 = scmp.eq.s32.totalorder %s29, 0
    %s32 = sadd.s32 %s31, 1
    %s33 = scalar_select %p30, %s31, %s32
    %p36 = pneg %p30
    %p37 = scmp.eq.s32.totalorder %s9, 15
    %p38 = por %p36, %p37
    %p39 = scmp.ne.s32.totalorder %s31, %s34
    %p40 = scmp.eq.s32.totalorder %s9, 0
    %p41 = por %p39, %p40
    %p42 = scmp.ne.s32.totalorder %s31, %s34
    %p43 = scmp.eq.s32.totalorder %s14, 15
    %p44 = por %p42, %p43
    %p45 = scmp.ne.s32.totalorder %s34, %s35
    %p46 = scmp.eq.s32.totalorder %s14, 0
    %p47 = por %p45, %p46
    %p48 = scmp.ne.s32.totalorder %s34, %s35
    %p49 = scmp.eq.s32.totalorder %s15, 15
    %p50 = por %p48, %p49
    %p52 = scmp.ne.s32.totalorder %s35, %s51
    %p53 = scmp.eq.s32.totalorder %s15, 0
    %p54 = por %p52, %p53
    %s55 = ssub.s32 %s17, %s24
    %p56 = scmp.eq.s32.totalorder %s55, 0
    %s58 = sadd.s32 %s57, 1
    %s59 = scalar_select %p56, %s57, %s58
    %p62 = pneg %p56
    %p63 = scmp.eq.s32.totalorder %s9, 15
    %p64 = por %p62, %p63
    %p65 = scmp.ne.s32.totalorder %s57, %s60
    %p66 = scmp.eq.s32.totalorder %s9, 0
    %p67 = por %p65, %p66
    %p68 = scmp.ne.s32.totalorder %s57, %s60
    %p69 = scmp.eq.s32.totalorder %s14, 15
    %p70 = por %p68, %p69
    %p71 = scmp.ne.s32.totalorder %s60, %s61
    %p72 = scmp.eq.s32.totalorder %s14, 0
    %p73 = por %p71, %p72
    %p74 = scmp.ne.s32.totalorder %s60, %s61
    %p75 = scmp.eq.s32.totalorder %s15, 15
    %p76 = por %p74, %p75
    %p78 = scmp.ne.s32.totalorder %s61, %s77
    %p79 = scmp.eq.s32.totalorder %s15, 0
    %p80 = por %p78, %p79
    %s81 = ssub.s32 %s17, %s24
    %p82 = scmp.eq.s32.totalorder %s81, 0
    %s84 = sadd.s32 %s83, 1
    %s85 = scalar_select %p82, %s83, %s84
    %p88 = pneg %p82
    %p89 = scmp.eq.s32.totalorder %s9, 15
    %p90 = por %p88, %p89
    %p91 = scmp.ne.s32.totalorder %s83, %s86
    %p92 = scmp.eq.s32.totalorder %s9, 0
    %p93 = por %p91, %p92
    %p94 = scmp.ne.s32.totalorder %s83, %s86
    %p95 = scmp.eq.s32.totalorder %s14, 15
    %p96 = por %p94, %p95
    %p97 = scmp.ne.s32.totalorder %s86, %s87
    %p98 = scmp.eq.s32.totalorder %s14, 0
    %p99 = por %p97, %p98
    %p100 = scmp.ne.s32.totalorder %s86, %s87
    %p101 = scmp.eq.s32.totalorder %s15, 15
    %p102 = por %p100, %p101
    %p104 = scmp.ne.s32.totalorder %s87, %s103
    %p105 = scmp.eq.s32.totalorder %s15, 0
    %p106 = por %p104, %p105
    %s107 = ssub.s32 %s16, %s28
    %s108 = ssub.s32 %s17, %s24
    %s109 = sor.u32 %s107, %s108
    %p110 = scmp.eq.s32.totalorder %s109, 0
    %s112 = sadd.s32 %s111, 1
    %s113 = scalar_select %p110, %s111, %s112
    %p116 = pneg %p110
    %p117 = scmp.eq.s32.totalorder %s9, 15
    %p118 = por %p116, %p117
    %p119 = scmp.ne.s32.totalorder %s111, %s114
    %p120 = scmp.eq.s32.totalorder %s9, 0
    %p121 = por %p119, %p120
    %p122 = scmp.ne.s32.totalorder %s111, %s114
    %p123 = scmp.eq.s32.totalorder %s14, 15
    %p124 = por %p122, %p123
    %p125 = scmp.ne.s32.totalorder %s114, %s115
    %p126 = scmp.eq.s32.totalorder %s14, 0
    %p127 = por %p125, %p126
    %p128 = scmp.ne.s32.totalorder %s114, %s115
    %p129 = scmp.eq.s32.totalorder %s15, 15
    %p130 = por %p128, %p129
    %p132 = scmp.ne.s32.totalorder %s115, %s131
    %p133 = scmp.eq.s32.totalorder %s15, 0
    %p134 = por %p132, %p133
    %p135 = scmp.le.s32.totalorder 1, %s9
    %p136 = scmp.lt.s32.totalorder %s9, 17
    %p137 = pnand %p135, %p136
    %p138 = pneg %p137
    // Predicated region
    $region9: #{_lambda_.23} parent=5 // pred_check
      _
    $region10: #{_lambda_.23} parent=5 // pred_check_branch
      %140 = sbr.rel (%p137) target = $region12
    $region11: #{_lambda_.23} parent=5 // pred_region
      %s141 = ssub.s32 %s9, 1
      // Predicated region
      $region13: #{_lambda_.23} parent=11 // pred_check
        %p142 = pneg %p73
      $region14: #{_lambda_.23} parent=11 // pred_check_branch
        %144 = sbr.rel (%p142) target = $region16
      $region15: #{_lambda_.23} parent=11 // pred_region
        %p145 = scmp.lt.s32.totalorder %s19, 0
        %s146 = scalar_select %p145, %s19, 0
        %s147 = smul.addr %s146, 4
        %s148 = scalar_lea.vmem %s1, %s147
      $region16: #{_lambda_.23} parent=11 // pred_fallthru
        _
      // Predicated region
      $region17: #{_lambda_.23} parent=11 // pred_check
        %p149 = pneg %p99
      $region18: #{_lambda_.23} parent=11 // pred_check_branch
        %151 = sbr.rel (%p149) target = $region20
      $region19: #{_lambda_.23} parent=11 // pred_region
        %p152 = scmp.lt.s32.totalorder %s19, 0
        %s153 = scalar_select %p152, %s19, 0
        %s154 = scalar_lea.vmem %s2, %s153
      $region20: #{_lambda_.23} parent=11 // pred_fallthru
        _
    $region12: #{_lambda_.23} parent=5 // pred_fallthru
      _
    %p155 = scmp.lt.s32.totalorder %s9, 16
    // Predicated region
    $region21: #{_lambda_.23} parent=5 // pred_check
      %p156 = pneg %p155
    $region22: #{_lambda_.23} parent=5 // pred_check_branch
      %158 = sbr.rel (%p156) target = $region24
    $region23: #{_lambda_.23} parent=5 // pred_region
      // Predicated region
      $region25: #{_lambda_.23} parent=23 // pred_check
        %p159 = pneg %p41
      $region26: #{_lambda_.23} parent=23 // pred_check_branch
        %161 = sbr.rel (%p159) target = $region28
      $region27: #{_lambda_.23} parent=23 // pred_region
        %s162 = smul.u32 16, %s16
        %p163 = scmp.lt.s32.totalorder %s162, 255
        %s164 = scalar_select %p163, %s162, 255
        %s165 = smul.addr %s164, 2
        %s166 = smul.addr %s165, 4
        %s167 = scalar_lea.vmem %s0, %s166
        %s168 = smul.u32 16, %s16
      $region28: #{_lambda_.23} parent=23 // pred_fallthru
        _
    $region24: #{_lambda_.23} parent=5 // pred_fallthru
      _
    %p169 = scmp.le.s32.totalorder 1, %s9
    %p170 = scmp.lt.s32.totalorder %s9, 17
    %p171 = pnand %p169, %p170
    %p172 = pneg %p171
    // Predicated region
    $region29: #{_lambda_.23} parent=5 // pred_check
      _
    $region30: #{_lambda_.23} parent=5 // pred_check_branch
      %174 = sbr.rel (%p171) target = $region32
    $region31: #{_lambda_.23} parent=5 // pred_region
      %s175 = ssub.s32 %s9, 1
      %s176 = smul.u32 16, %s18
      %p177 = scmp.lt.s32.totalorder %s176, 255
      %s178 = scalar_select %p177, %s176, 255
      %s179 = smul.addr %s178, 2
      %s180 = smul.addr %s179, 4
      %s181 = scalar_lea.vmem %s0, %s180
      %p182 = pneg %p47
      %p183 = pneg %p44
      %p184 = scmp.lt.s32.totalorder %s19, 0
      %s185 = scalar_select %p184, %s19, 0
      %s186 = smul.addr %s185, 4
      %s187 = scalar_lea.vmem %s1, %s186
      %p188 = pneg %p73
      %p189 = pneg %p70
      %p190 = scmp.lt.s32.totalorder %s19, 0
      %s191 = scalar_select %p190, %s19, 0
      %s192 = scalar_lea.vmem %s2, %s191
      %p193 = pneg %p99
      %p194 = pneg %p96
      %p195 = pneg %p127
      %p196 = pneg %p124
      %s197 = smul.u32 16, %s18
      %p198 = scmp.lt.s32.totalorder %s197, 255
      %s199 = scalar_select %p198, %s197, 255
      %p200 = scmp.lt.s32.totalorder %s19, 0
      %s201 = scalar_select %p200, %s19, 0
      %s202 = sadd.s32 %s201, %s199
      %s203 = smul.addr %s202, 8
      %s204 = scalar_lea.vmem %s3, %s203
      %s205 = smul.u32 16, %s18
      %p206 = scmp.lt.s32.totalorder %s205, 255
      %s207 = scalar_select %p206, %s205, 255
      %s208 = smul.addr %s207, 2
      %s209 = smul.addr %s208, 4
      %s210 = scalar_lea.vmem %s0, %s209
      %s211 = smul.u32 16, %s18
      %p212 = scmp.lt.s32.totalorder %s19, 0
      %s213 = scalar_select %p212, %s19, 0
      %s214 = smul.addr %s213, 4
      %s215 = scalar_lea.vmem %s1, %s214
      %p216 = scmp.lt.s32.totalorder %s19, 0
      %s217 = scalar_select %p216, %s19, 0
      %s218 = scalar_lea.vmem %s2, %s217
      %s219 = smul.u32 16, %s18
      %p220 = scmp.lt.s32.totalorder %s219, 255
      %s221 = scalar_select %p220, %s219, 255
      %p222 = scmp.lt.s32.totalorder %s19, 0
      %s223 = scalar_select %p222, %s19, 0
      %s224 = sadd.s32 %s223, %s221
      %s225 = smul.addr %s224, 8
      %s226 = scalar_lea.vmem %s3, %s225
      %s227 = smul.u32 16, %s18
      %v229 = vld [vmem:[%s210] sm:$0xff]
      %v230 = vld [vmem:[%s210 + $0x8] sm:$0xff]
      %v231 = vld [vmem:[%s210 + $0x10] sm:$0xff]
      %v232 = vld [vmem:[%s210 + $0x18] sm:$0xff]
      %v233 = vld [vmem:[%s210 + $0x20] sm:$0xff]
      %v234 = vld [vmem:[%s210 + $0x28] sm:$0xff]
      %v235 = vld [vmem:[%s210 + $0x30] sm:$0xff]
      %v236 = vld [vmem:[%s210 + $0x38] sm:$0xff]
      %v237 = vld [vmem:[%s210 + $0x40] sm:$0xff]
      %v238 = vld [vmem:[%s210 + $0x48] sm:$0xff]
      %v239 = vld [vmem:[%s210 + $0x50] sm:$0xff]
      %v240 = vld [vmem:[%s210 + $0x58] sm:$0xff]
      %v241 = vld [vmem:[%s210 + $0x60] sm:$0xff]
      %v242 = vld [vmem:[%s210 + $0x68] sm:$0xff]
      %v243 = vld [vmem:[%s210 + $0x70] sm:$0xff]
      %v244 = vld [vmem:[%s210 + $0x78] sm:$0xff]
      %v245 = vld [vmem:[%s215] sm:$0xf]
      %v246 = vld [vmem:[%s215 + $0x4] sm:$0xf]
      %v247 = vld [vmem:[%s215 + $0x8] sm:$0xf]
      %v248 = vld [vmem:[%s215 + $0xc] sm:$0xf]
      %v249 = vld [vmem:[%s215 + $0x10] sm:$0xf]
      %v250 = vld [vmem:[%s215 + $0x14] sm:$0xf]
      %v251 = vld [vmem:[%s215 + $0x18] sm:$0xf]
      %v252 = vld [vmem:[%s215 + $0x1c] sm:$0xf]
      %v253 = vld [vmem:[%s215 + $0x20] sm:$0xf]
      %v254 = vld [vmem:[%s215 + $0x24] sm:$0xf]
      %v255 = vld [vmem:[%s215 + $0x28] sm:$0xf]
      %v256 = vld [vmem:[%s215 + $0x2c] sm:$0xf]
      %v257 = vld [vmem:[%s215 + $0x30] sm:$0xf]
      %v258 = vld [vmem:[%s215 + $0x34] sm:$0xf]
      %v259 = vld [vmem:[%s215 + $0x38] sm:$0xf]
      %v260 = vld [vmem:[%s215 + $0x3c] sm:$0xf]
      %v261 = vld [vmem:[%s215 + $0x40] sm:$0xf]
      %v262 = vld [vmem:[%s215 + $0x44] sm:$0xf]
      %v263 = vld [vmem:[%s215 + $0x48] sm:$0xf]
      %v264 = vld [vmem:[%s215 + $0x4c] sm:$0xf]
      %v265 = vld [vmem:[%s215 + $0x50] sm:$0xf]
      %v266 = vld [vmem:[%s215 + $0x54] sm:$0xf]
      %v267 = vld [vmem:[%s215 + $0x58] sm:$0xf]
      %v268 = vld [vmem:[%s215 + $0x5c] sm:$0xf]
      %v269 = vld [vmem:[%s215 + $0x60] sm:$0xf]
      %v270 = vld [vmem:[%s215 + $0x64] sm:$0xf]
      %v271 = vld [vmem:[%s215 + $0x68] sm:$0xf]
      %v272 = vld [vmem:[%s215 + $0x6c] sm:$0xf]
      %v273 = vld [vmem:[%s215 + $0x70] sm:$0xf]
      %v274 = vld [vmem:[%s215 + $0x74] sm:$0xf]
      %v275 = vld [vmem:[%s215 + $0x78] sm:$0xf]
      %v276 = vld [vmem:[%s215 + $0x7c] sm:$0xf]
      %v277 = vld [vmem:[%s218] sm:$0x1]
      %v279 = vlaneseq
      %v280 = vshrl.u32 %v279, 7
      %v281 = vsub.s32 0, %v280
      %v282 = vrot.slane %v277, %v281
      %v300 = vunpack.c.l.b16 %v229
      %v301 = vunpack.c.h.b16 %v229
      %v302 = vunpack.c.l.b16 %v230
      %v303 = vunpack.c.h.b16 %v230
      %v304 = vunpack.c.l.b16 %v231
      %v305 = vunpack.c.h.b16 %v231
      %v306 = vunpack.c.l.b16 %v232
      %v307 = vunpack.c.h.b16 %v232
      %v308 = vunpack.c.l.b16 %v233
      %v309 = vunpack.c.h.b16 %v233
      %v310 = vunpack.c.l.b16 %v234
      %v311 = vunpack.c.h.b16 %v234
      %v312 = vunpack.c.l.b16 %v235
      %v313 = vunpack.c.h.b16 %v235
      %v314 = vunpack.c.l.b16 %v236
      %v315 = vunpack.c.h.b16 %v236
      %v316 = vunpack.c.l.b16 %v237
      %v317 = vunpack.c.h.b16 %v237
      %v318 = vunpack.c.l.b16 %v238
      %v319 = vunpack.c.h.b16 %v238
      %v320 = vunpack.c.l.b16 %v239
      %v321 = vunpack.c.h.b16 %v239
      %v322 = vunpack.c.l.b16 %v240
      %v323 = vunpack.c.h.b16 %v240
      %v324 = vunpack.c.l.b16 %v241
      %v325 = vunpack.c.h.b16 %v241
      %v326 = vunpack.c.l.b16 %v242
      %v327 = vunpack.c.h.b16 %v242
      %v328 = vunpack.c.l.b16 %v243
      %v329 = vunpack.c.h.b16 %v243
      %v330 = vunpack.c.l.b16 %v244
      %v331 = vunpack.c.h.b16 %v244
      %v332 = vpack.c.b16 %v302, %v300
      %v333 = vpack.c.b16 %v303, %v301
      %v334 = vpack.c.b16 %v306, %v304
      %v335 = vpack.c.b16 %v307, %v305
      %v336 = vpack.c.b16 %v310, %v308
      %v337 = vpack.c.b16 %v311, %v309
      %v338 = vpack.c.b16 %v314, %v312
      %v339 = vpack.c.b16 %v315, %v313
      %v340 = vpack.c.b16 %v318, %v316
      %v341 = vpack.c.b16 %v319, %v317
      %v342 = vpack.c.b16 %v322, %v320
      %v343 = vpack.c.b16 %v323, %v321
      %v344 = vpack.c.b16 %v326, %v324
      %v345 = vpack.c.b16 %v327, %v325
      %v346 = vpack.c.b16 %v330, %v328
      %v347 = vpack.c.b16 %v331, %v329
      %v396 = vunpack.c.l.b16 %v245
      %v397 = vunpack.c.l.b16 %v246
      %v398 = vunpack.c.l.b16 %v247
      %v399 = vunpack.c.l.b16 %v248
      %v400 = vunpack.c.l.b16 %v249
      %v401 = vunpack.c.l.b16 %v250
      %v402 = vunpack.c.l.b16 %v251
      %v403 = vunpack.c.l.b16 %v252
      %v404 = vunpack.c.l.b16 %v253
      %v405 = vunpack.c.l.b16 %v254
      %v406 = vunpack.c.l.b16 %v255
      %v407 = vunpack.c.l.b16 %v256
      %v408 = vunpack.c.l.b16 %v257
      %v409 = vunpack.c.l.b16 %v258
      %v410 = vunpack.c.l.b16 %v259
      %v411 = vunpack.c.l.b16 %v260
      %v412 = vunpack.c.l.b16 %v261
      %v413 = vunpack.c.l.b16 %v262
      %v414 = vunpack.c.l.b16 %v263
      %v415 = vunpack.c.l.b16 %v264
      %v416 = vunpack.c.l.b16 %v265
      %v417 = vunpack.c.l.b16 %v266
      %v418 = vunpack.c.l.b16 %v267
      %v419 = vunpack.c.l.b16 %v268
      %v420 = vunpack.c.l.b16 %v269
      %v421 = vunpack.c.l.b16 %v270
      %v422 = vunpack.c.l.b16 %v271
      %v423 = vunpack.c.l.b16 %v272
      %v424 = vunpack.c.l.b16 %v273
      %v425 = vunpack.c.l.b16 %v274
      %v426 = vunpack.c.l.b16 %v275
      %v427 = vunpack.c.l.b16 %v276
      %v428 = vpack.c.b16 %v397, %v396
      %v429 = vpack.c.b16 %v399, %v398
      %v430 = vpack.c.b16 %v401, %v400
      %v431 = vpack.c.b16 %v403, %v402
      %v432 = vpack.c.b16 %v405, %v404
      %v433 = vpack.c.b16 %v407, %v406
      %v434 = vpack.c.b16 %v409, %v408
      %v435 = vpack.c.b16 %v411, %v410
      %v436 = vpack.c.b16 %v413, %v412
      %v437 = vpack.c.b16 %v415, %v414
      %v438 = vpack.c.b16 %v417, %v416
      %v439 = vpack.c.b16 %v419, %v418
      %v440 = vpack.c.b16 %v421, %v420
      %v441 = vpack.c.b16 %v423, %v422
      %v442 = vpack.c.b16 %v425, %v424
      %v443 = vpack.c.b16 %v427, %v426
      %460 = vmatprep.subr.bf16.mxu0 0
      %461 = vmatpush1.bf16.msra.mxu0 %v428
      %462 = vmatprep.subr.bf16.mxu0 0
      %463 = vmatpush1.bf16.msra.mxu0 %v429
      %464 = vmatprep.subr.bf16.mxu0 0
      %465 = vmatpush1.bf16.msra.mxu0 %v430
      %466 = vmatprep.subr.bf16.mxu0 0
      %467 = vmatpush1.bf16.msra.mxu0 %v431
      %468 = vmatprep.subr.bf16.mxu0 0
      %469 = vmatpush1.bf16.msra.mxu0 %v432
      %470 = vmatprep.subr.bf16.mxu0 0
      %471 = vmatpush1.bf16.msra.mxu0 %v433
      %472 = vmatprep.subr.bf16.mxu0 0
      %473 = vmatpush1.bf16.msra.mxu0 %v434
      %474 = vmatprep.subr.bf16.mxu0 0
      %475 = vmatpush1.bf16.msra.mxu0 %v435
      %476 = vmatprep.subr.bf16.mxu0 0
      %477 = vmatpush1.bf16.msra.mxu0 %v436
      %478 = vmatprep.subr.bf16.mxu0 0
      %479 = vmatpush1.bf16.msra.mxu0 %v437
      %480 = vmatprep.subr.bf16.mxu0 0
      %481 = vmatpush1.bf16.msra.mxu0 %v438
      %482 = vmatprep.subr.bf16.mxu0 0
      %483 = vmatpush1.bf16.msra.mxu0 %v439
      %484 = vmatprep.subr.bf16.mxu0 0
      %485 = vmatpush1.bf16.msra.mxu0 %v440
      %486 = vmatprep.subr.bf16.mxu0 0
      %487 = vmatpush1.bf16.msra.mxu0 %v441
      %488 = vmatprep.subr.bf16.mxu0 0
      %489 = vmatpush1.bf16.msra.mxu0 %v442
      %490 = vmatprep.subr.bf16.mxu0 0
      %491 = vmatpush1.bf16.msra.mxu0 %v443
      %492 = vmatprep.mubr.bf16.mxu0 %v333
      %493 = vmatmul.mubr.bf16.gmra.mrb[0].mxu0 %v332
      %v494 = vpop.f32.mrb[0].mxu0
      %v495 = vadd.f32 %v282, %v494
      %v496 = vpop.f32.mrb[0].mxu0
      %v497 = vpop.f32.mrb[0].mxu0
      %v498 = vadd.f32 %v282, %v497
      %v499 = vpop.f32.mrb[0].mxu0
      %500 = vmatprep.mubr.bf16.mxu0 %v335
      %501 = vmatmul.mubr.bf16.gmra.mrb[0].mxu0 %v334
      %v502 = vpop.f32.mrb[0].mxu0
      %v503 = vadd.f32 %v282, %v502
      %v504 = vpop.f32.mrb[0].mxu0
      %v505 = vpop.f32.mrb[0].mxu0
      %v506 = vadd.f32 %v282, %v505
      %v507 = vpop.f32.mrb[0].mxu0
      %508 = vmatprep.mubr.bf16.mxu0 %v337
      %509 = vmatmul.mubr.bf16.gmra.mrb[0].mxu0 %v336
      %v510 = vpop.f32.mrb[0].mxu0
      %v511 = vadd.f32 %v282, %v510
      %v512 = vpop.f32.mrb[0].mxu0
      %v513 = vpop.f32.mrb[0].mxu0
      %v514 = vadd.f32 %v282, %v513
      %v515 = vpop.f32.mrb[0].mxu0
      %516 = vmatprep.mubr.bf16.mxu0 %v339
      %517 = vmatmul.mubr.bf16.gmra.mrb[0].mxu0 %v338
      %v518 = vpop.f32.mrb[0].mxu0
      %v519 = vadd.f32 %v282, %v518
      %v520 = vpop.f32.mrb[0].mxu0
      %v521 = vpop.f32.mrb[0].mxu0
      %v522 = vadd.f32 %v282, %v521
      %v523 = vpop.f32.mrb[0].mxu0
      %524 = vmatprep.mubr.bf16.mxu0 %v341
      %525 = vmatmul.mubr.bf16.gmra.mrb[0].mxu0 %v340
      %v526 = vpop.f32.mrb[0].mxu0
      %v527 = vadd.f32 %v282, %v526
      %v528 = vpop.f32.mrb[0].mxu0
      %v529 = vpop.f32.mrb[0].mxu0
      %v530 = vadd.f32 %v282, %v529
      %v531 = vpop.f32.mrb[0].mxu0
      %532 = vmatprep.mubr.bf16.mxu0 %v343
      %533 = vmatmul.mubr.bf16.gmra.mrb[0].mxu0 %v342
      %v534 = vpop.f32.mrb[0].mxu0
      %v535 = vadd.f32 %v282, %v534
      %v536 = vpop.f32.mrb[0].mxu0
      %v537 = vpop.f32.mrb[0].mxu0
      %v538 = vadd.f32 %v282, %v537
      %v539 = vpop.f32.mrb[0].mxu0
      %540 = vmatprep.mubr.bf16.mxu0 %v345
      %541 = vmatmul.mubr.bf16.gmra.mrb[0].mxu0 %v344
      %v542 = vpop.f32.mrb[0].mxu0
      %v543 = vadd.f32 %v282, %v542
      %v544 = vpop.f32.mrb[0].mxu0
      %v545 = vpop.f32.mrb[0].mxu0
      %v546 = vadd.f32 %v282, %v545
      %v547 = vpop.f32.mrb[0].mxu0
      %548 = vmatprep.mubr.bf16.mxu0 %v347
      %549 = vmatmul.mubr.bf16.gmra.mrb[0].mxu0 %v346
      %v550 = vpop.f32.mrb[0].mxu0
      %v551 = vadd.f32 %v282, %v550
      %v552 = vpop.f32.mrb[0].mxu0
      %v553 = vpop.f32.mrb[0].mxu0
      %v554 = vadd.f32 %v282, %v553
      %v555 = vpop.f32.mrb[0].mxu0
      %556 = vdwg.mxu0
      %557 = vst [vmem:[%s226] sm:$0xff] %v495
      %558 = vst [vmem:[%s226 + $0x8] sm:$0xff] %v498
      %559 = vst [vmem:[%s226 + $0x10] sm:$0xff] %v503
      %560 = vst [vmem:[%s226 + $0x18] sm:$0xff] %v506
      %561 = vst [vmem:[%s226 + $0x20] sm:$0xff] %v511
      %562 = vst [vmem:[%s226 + $0x28] sm:$0xff] %v514
      %563 = vst [vmem:[%s226 + $0x30] sm:$0xff] %v519
      %564 = vst [vmem:[%s226 + $0x38] sm:$0xff] %v522
      %565 = vst [vmem:[%s226 + $0x40] sm:$0xff] %v527
      %566 = vst [vmem:[%s226 + $0x48] sm:$0xff] %v530
      %567 = vst [vmem:[%s226 + $0x50] sm:$0xff] %v535
      %568 = vst [vmem:[%s226 + $0x58] sm:$0xff] %v538
      %569 = vst [vmem:[%s226 + $0x60] sm:$0xff] %v543
      %570 = vst [vmem:[%s226 + $0x68] sm:$0xff] %v546
      %571 = vst [vmem:[%s226 + $0x70] sm:$0xff] %v551
      %572 = vst [vmem:[%s226 + $0x78] sm:$0xff] %v554
      %s573 = smul.u32 16, %s18
      %p574 = scmp.lt.s32.totalorder %s573, 255
      %s575 = scalar_select %p574, %s573, 255
      %p576 = scmp.lt.s32.totalorder %s19, 0
      %s577 = scalar_select %p576, %s19, 0
      %s578 = sadd.s32 %s577, %s575
      %s579 = smul.addr %s578, 8
      %s580 = scalar_lea.vmem %s3, %s579
      // Predicated region
      $region33: #{_lambda_.23} parent=31 // pred_check
        %p581 = pneg %p124
      $region34: #{_lambda_.23} parent=31 // pred_check_branch
        %583 = sbr.rel (%p581) target = $region36
      $region35: #{_lambda_.23} parent=31 // pred_region
        %s584 = smul.u32 16, %s18
      $region36: #{_lambda_.23} parent=31 // pred_fallthru
        _
    $region32: #{_lambda_.23} parent=5 // pred_fallthru
      _
    %p585 = scmp.le.s32.totalorder 2, %s9
    // Predicated region
    $region37: #{_lambda_.23} parent=5 // pred_check
      %p586 = pneg %p585
    $region38: #{_lambda_.23} parent=5 // pred_check_branch
      %588 = sbr.rel (%p586) target = $region40
    $region39: #{_lambda_.23} parent=5 // pred_region
      %s589 = ssub.s32 %s9, 2
      // Predicated region
      $region41: #{_lambda_.23} parent=39 // pred_check
        %p590 = pneg %p130
      $region42: #{_lambda_.23} parent=39 // pred_check_branch
        %592 = sbr.rel (%p590) target = $region44
      $region43: #{_lambda_.23} parent=39 // pred_region
        %s593 = smul.u32 16, %s20
        %p594 = scmp.lt.s32.totalorder %s593, 255
        %s595 = scalar_select %p594, %s593, 255
        %p596 = scmp.lt.s32.totalorder %s21, 0
        %s597 = scalar_select %p596, %s21, 0
        %s598 = sadd.s32 %s597, %s595
        %s599 = smul.addr %s598, 8
        %s600 = scalar_lea.vmem %s3, %s599
      $region44: #{_lambda_.23} parent=39 // pred_fallthru
        _
    $region40: #{_lambda_.23} parent=5 // pred_fallthru
      _
  $region6: #{_lambda_.23} parent=0 // loop_footer
    %s13 = sadd.s32 1, %s9
  $region7: #{_lambda_.23} parent=0 // loop_footer_branch
    %8 = sbr.rel target = $region3
  $region8: #{_lambda_.23} parent=0 // loop_exit
    _

// kernel: _lambda_.24
$region0: #{_lambda_.24}
  #allocation0 [shape = 'u32[]', space=smem, size = 0x4, offset = 0x4, fixed_abs, tag = 'smem constant byte address 0x4 - core index']
  #allocation1 [shape = 'u32[144,128]{1,0:T(1,128)}', space=vmem, size = 0x12000, scoped, tag = 'internal scratch']
  %s0 = inlined_call_operand.vmem [shape: bf16[512,128], index: 0, kind: input, shape index: {}]
  %s1 = inlined_call_operand.vmem [shape: bf16[128,128], index: 1, kind: input, shape index: {}]
  %s2 = inlined_call_operand.vmem [shape: f32[1,128], index: 2, kind: input, shape index: {}]
  %s3 = inlined_call_operand.vmem [shape: f32[512,128], index: 3, kind: output, shape index: {}]
  %s4 = sld [smem:[#allocation0]]
  $region45: #{_lambda_.24} parent=0
    _
  %s6 = ssub.s32 1, %s4
  %s7 = scalar_select 0, %s6, %s4
  loop: start=0, step=1, limit=6
  $region2: #{_lambda_.24} parent=0 // loop_pre_header
    _
  $region3: #{_lambda_.24} parent=0 // loop_header
    %s9 = sphi 0, %s13
    %p10 = scmp.ge.s32.totalorder %s9, 6
    %s16 = sphi 0, %s28
    %s17 = sphi 0, %s24
    %s18 = sphi 0, %s16
    %s19 = sphi 0, %s17
    %s20 = sphi 0, %s18
    %s21 = sphi 0, %s19
    %s31 = sphi 0, %s33
    %s34 = sphi 0, %s31
    %s35 = sphi 0, %s34
    %s51 = sphi 0, %s35
    %s57 = sphi 0, %s59
    %s60 = sphi 0, %s57
    %s61 = sphi 0, %s60
    %s77 = sphi 0, %s61
    %s83 = sphi 0, %s85
    %s86 = sphi 0, %s83
    %s87 = sphi 0, %s86
    %s103 = sphi 0, %s87
    %s111 = sphi 0, %s113
    %s114 = sphi 0, %s111
    %s115 = sphi 0, %s114
    %s131 = sphi 0, %s115
  $region4: #{_lambda_.24} parent=0 // loop_header_branch
    %12 = sbr.rel (%p10) target = $region8
  $region5: #{_lambda_.24} parent=0 // loop_body
    %s14 = ssub.s32 %s9, 1
    %s15 = ssub.s32 %s9, 2
    %s22 = sadd.s32 1, %s17
    %p23 = scmp.ge.s32.totalorder %s22, 1
    %s24 = scalar_select %p23, 0, %s22
    %s25 = sadd.s32 1, %s16
    %s26 = scalar_select %p23, %s25, %s16
    %p27 = scmp.ge.s32.totalorder %s26, 4
    %s28 = scalar_select %p27, 0, %s26
    %s29 = ssub.s32 %s16, %s28
    %p30 = scmp.eq.s32.totalorder %s29, 0
    %s32 = sadd.s32 %s31, 1
    %s33 = scalar_select %p30, %s31, %s32
    %p36 = pneg %p30
    %p37 = scmp.eq.s32.totalorder %s9, 3
    %p38 = por %p36, %p37
    %p39 = scmp.ne.s32.totalorder %s31, %s34
    %p40 = scmp.eq.s32.totalorder %s9, 0
    %p41 = por %p39, %p40
    %p42 = scmp.ne.s32.totalorder %s31, %s34
    %p43 = scmp.eq.s32.totalorder %s14, 3
    %p44 = por %p42, %p43
    %p45 = scmp.ne.s32.totalorder %s34, %s35
    %p46 = scmp.eq.s32.totalorder %s14, 0
    %p47 = por %p45, %p46
    %p48 = scmp.ne.s32.totalorder %s34, %s35
    %p49 = scmp.eq.s32.totalorder %s15, 3
    %p50 = por %p48, %p49
    %p52 = scmp.ne.s32.totalorder %s35, %s51
    %p53 = scmp.eq.s32.totalorder %s15, 0
    %p54 = por %p52, %p53
    %s55 = ssub.s32 %s17, %s24
    %p56 = scmp.eq.s32.totalorder %s55, 0
    %s58 = sadd.s32 %s57, 1
    %s59 = scalar_select %p56, %s57, %s58
    %p62 = pneg %p56
    %p63 = scmp.eq.s32.totalorder %s9, 3
    %p64 = por %p62, %p63
    %p65 = scmp.ne.s32.totalorder %s57, %s60
    %p66 = scmp.eq.s32.totalorder %s9, 0
    %p67 = por %p65, %p66
    %p68 = scmp.ne.s32.totalorder %s57, %s60
    %p69 = scmp.eq.s32.totalorder %s14, 3
    %p70 = por %p68, %p69
    %p71 = scmp.ne.s32.totalorder %s60, %s61
    %p72 = scmp.eq.s32.totalorder %s14, 0
    %p73 = por %p71, %p72
    %p74 = scmp.ne.s32.totalorder %s60, %s61
    %p75 = scmp.eq.s32.totalorder %s15, 3
    %p76 = por %p74, %p75
    %p78 = scmp.ne.s32.totalorder %s61, %s77
    %p79 = scmp.eq.s32.totalorder %s15, 0
    %p80 = por %p78, %p79
    %s81 = ssub.s32 %s17, %s24
    %p82 = scmp.eq.s32.totalorder %s81, 0
    %s84 = sadd.s32 %s83, 1
    %s85 = scalar_select %p82, %s83, %s84
    %p88 = pneg %p82
    %p89 = scmp.eq.s32.totalorder %s9, 3
    %p90 = por %p88, %p89
    %p91 = scmp.ne.s32.totalorder %s83, %s86
    %p92 = scmp.eq.s32.totalorder %s9, 0
    %p93 = por %p91, %p92
    %p94 = scmp.ne.s32.totalorder %s83, %s86
    %p95 = scmp.eq.s32.totalorder %s14, 3
    %p96 = por %p94, %p95
    %p97 = scmp.ne.s32.totalorder %s86, %s87
    %p98 = scmp.eq.s32.totalorder %s14, 0
    %p99 = por %p97, %p98
    %p100 = scmp.ne.s32.totalorder %s86, %s87
    %p101 = scmp.eq.s32.totalorder %s15, 3
    %p102 = por %p100, %p101
    %p104 = scmp.ne.s32.totalorder %s87, %s103
    %p105 = scmp.eq.s32.totalorder %s15, 0
    %p106 = por %p104, %p105
    %s107 = ssub.s32 %s16, %s28
    %s108 = ssub.s32 %s17, %s24
    %s109 = sor.u32 %s107, %s108
    %p110 = scmp.eq.s32.totalorder %s109, 0
    %s112 = sadd.s32 %s111, 1
    %s113 = scalar_select %p110, %s111, %s112
    %p116 = pneg %p110
    %p117 = scmp.eq.s32.totalorder %s9, 3
    %p118 = por %p116, %p117
    %p119 = scmp.ne.s32.totalorder %s111, %s114
    %p120 = scmp.eq.s32.totalorder %s9, 0
    %p121 = por %p119, %p120
    %p122 = scmp.ne.s32.totalorder %s111, %s114
    %p123 = scmp.eq.s32.totalorder %s14, 3
    %p124 = por %p122, %p123
    %p125 = scmp.ne.s32.totalorder %s114, %s115
    %p126 = scmp.eq.s32.totalorder %s14, 0
    %p127 = por %p125, %p126
    %p128 = scmp.ne.s32.totalorder %s114, %s115
    %p129 = scmp.eq.s32.totalorder %s15, 3
    %p130 = por %p128, %p129
    %p132 = scmp.ne.s32.totalorder %s115, %s131
    %p133 = scmp.eq.s32.totalorder %s15, 0
    %p134 = por %p132, %p133
    %p135 = scmp.le.s32.totalorder 1, %s9
    %p136 = scmp.lt.s32.totalorder %s9, 5
    %p137 = pnand %p135, %p136
    %p138 = pneg %p137
    // Predicated region
    $region9: #{_lambda_.24} parent=5 // pred_check
      _
    $region10: #{_lambda_.24} parent=5 // pred_check_branch
      %140 = sbr.rel (%p137) target = $region12
    $region11: #{_lambda_.24} parent=5 // pred_region
      %s141 = ssub.s32 %s9, 1
      // Predicated region
      $region13: #{_lambda_.24} parent=11 // pred_check
        %p142 = pneg %p73
      $region14: #{_lambda_.24} parent=11 // pred_check_branch
        %144 = sbr.rel (%p142) target = $region16
      $region15: #{_lambda_.24} parent=11 // pred_region
        %p145 = scmp.lt.s32.totalorder %s19, 0
        %s146 = scalar_select %p145, %s19, 0
        %s147 = smul.addr %s146, 4
        %s148 = scalar_lea.vmem %s1, %s147
      $region16: #{_lambda_.24} parent=11 // pred_fallthru
        _
      // Predicated region
      $region17: #{_lambda_.24} parent=11 // pred_check
        %p149 = pneg %p99
      $region18: #{_lambda_.24} parent=11 // pred_check_branch
        %151 = sbr.rel (%p149) target = $region20
      $region19: #{_lambda_.24} parent=11 // pred_region
        %p152 = scmp.lt.s32.totalorder %s19, 0
        %s153 = scalar_select %p152, %s19, 0
        %s154 = scalar_lea.vmem %s2, %s153
      $region20: #{_lambda_.24} parent=11 // pred_fallthru
        _
    $region12: #{_lambda_.24} parent=5 // pred_fallthru
      _
    %p155 = scmp.lt.s32.totalorder %s9, 4
    // Predicated region
    $region21: #{_lambda_.24} parent=5 // pred_check
      %p156 = pneg %p155
    $region22: #{_lambda_.24} parent=5 // pred_check_branch
      %158 = sbr.rel (%p156) target = $region24
    $region23: #{_lambda_.24} parent=5 // pred_region
      // Predicated region
      $region25: #{_lambda_.24} parent=23 // pred_check
        %p159 = pneg %p41
      $region26: #{_lambda_.24} parent=23 // pred_check_branch
        %161 = sbr.rel (%p159) target = $region28
      $region27: #{_lambda_.24} parent=23 // pred_region
        %s162 = smul.u32 16, %s16
        %p163 = scmp.lt.s32.totalorder %s162, 63
        %s164 = scalar_select %p163, %s162, 63
        %s165 = smul.addr %s164, 4
        %s166 = scalar_lea.vmem %s0, %s165
        %s167 = smul.u32 16, %s16
      $region28: #{_lambda_.24} parent=23 // pred_fallthru
        _
    $region24: #{_lambda_.24} parent=5 // pred_fallthru
      _
    %p168 = scmp.le.s32.totalorder 1, %s9
    %p169 = scmp.lt.s32.totalorder %s9, 5
    %p170 = pnand %p168, %p169
    %p171 = pneg %p170
    // Predicated region
    $region29: #{_lambda_.24} parent=5 // pred_check
      _
    $region30: #{_lambda_.24} parent=5 // pred_check_branch
      %173 = sbr.rel (%p170) target = $region32
    $region31: #{_lambda_.24} parent=5 // pred_region
      %s174 = ssub.s32 %s9, 1
      %s175 = smul.u32 16, %s18
      %p176 = scmp.lt.s32.totalorder %s175, 63
      %s177 = scalar_select %p176, %s175, 63
      %s178 = smul.addr %s177, 4
      %s179 = scalar_lea.vmem %s0, %s178
      %p180 = pneg %p47
      %p181 = pneg %p44
      %p182 = scmp.lt.s32.totalorder %s19, 0
      %s183 = scalar_select %p182, %s19, 0
      %s184 = smul.addr %s183, 4
      %s185 = scalar_lea.vmem %s1, %s184
      %p186 = pneg %p73
      %p187 = pneg %p70
      %p188 = scmp.lt.s32.totalorder %s19, 0
      %s189 = scalar_select %p188, %s19, 0
      %s190 = scalar_lea.vmem %s2, %s189
      %p191 = pneg %p99
      %p192 = pneg %p96
      %p193 = pneg %p127
      %p194 = pneg %p124
      %s195 = smul.u32 16, %s18
      %p196 = scmp.lt.s32.totalorder %s195, 63
      %s197 = scalar_select %p196, %s195, 63
      %p198 = scmp.lt.s32.totalorder %s19, 0
      %s199 = scalar_select %p198, %s19, 0
      %s200 = sadd.s32 %s199, %s197
      %s201 = smul.addr %s200, 8
      %s202 = scalar_lea.vmem %s3, %s201
      %s203 = smul.u32 16, %s18
      %p204 = scmp.lt.s32.totalorder %s203, 63
      %s205 = scalar_select %p204, %s203, 63
      %s206 = smul.addr %s205, 4
      %s207 = scalar_lea.vmem %s0, %s206
      %s208 = smul.u32 16, %s18
      %p209 = scmp.lt.s32.totalorder %s19, 0
      %s210 = scalar_select %p209, %s19, 0
      %s211 = smul.addr %s210, 4
      %s212 = scalar_lea.vmem %s1, %s211
      %p213 = scmp.lt.s32.totalorder %s19, 0
      %s214 = scalar_select %p213, %s19, 0
      %s215 = scalar_lea.vmem %s2, %s214
      %s216 = smul.u32 16, %s18
      %p217 = scmp.lt.s32.totalorder %s216, 63
      %s218 = scalar_select %p217, %s216, 63
      %p219 = scmp.lt.s32.totalorder %s19, 0
      %s220 = scalar_select %p219, %s19, 0
      %s221 = sadd.s32 %s220, %s218
      %s222 = smul.addr %s221, 8
      %s223 = scalar_lea.vmem %s3, %s222
      %s224 = smul.u32 16, %s18
      %v226 = vld [vmem:[%s207] sm:$0xf]
      %v227 = vld [vmem:[%s207 + $0x4] sm:$0xf]
      %v228 = vld [vmem:[%s207 + $0x8] sm:$0xf]
      %v229 = vld [vmem:[%s207 + $0xc] sm:$0xf]
      %v230 = vld [vmem:[%s207 + $0x10] sm:$0xf]
      %v231 = vld [vmem:[%s207 + $0x14] sm:$0xf]
      %v232 = vld [vmem:[%s207 + $0x18] sm:$0xf]
      %v233 = vld [vmem:[%s207 + $0x1c] sm:$0xf]
      %v234 = vld [vmem:[%s207 + $0x20] sm:$0xf]
      %v235 = vld [vmem:[%s207 + $0x24] sm:$0xf]
      %v236 = vld [vmem:[%s207 + $0x28] sm:$0xf]
      %v237 = vld [vmem:[%s207 + $0x2c] sm:$0xf]
      %v238 = vld [vmem:[%s207 + $0x30] sm:$0xf]
      %v239 = vld [vmem:[%s207 + $0x34] sm:$0xf]
      %v240 = vld [vmem:[%s207 + $0x38] sm:$0xf]
      %v241 = vld [vmem:[%s207 + $0x3c] sm:$0xf]
      %v242 = vld [vmem:[%s212] sm:$0xf]
      %v243 = vld [vmem:[%s212 + $0x4] sm:$0xf]
      %v244 = vld [vmem:[%s212 + $0x8] sm:$0xf]
      %v245 = vld [vmem:[%s212 + $0xc] sm:$0xf]
      %v246 = vld [vmem:[%s212 + $0x10] sm:$0xf]
      %v247 = vld [vmem:[%s212 + $0x14] sm:$0xf]
      %v248 = vld [vmem:[%s212 + $0x18] sm:$0xf]
      %v249 = vld [vmem:[%s212 + $0x1c] sm:$0xf]
      %v250 = vld [vmem:[%s212 + $0x20] sm:$0xf]
      %v251 = vld [vmem:[%s212 + $0x24] sm:$0xf]
      %v252 = vld [vmem:[%s212 + $0x28] sm:$0xf]
      %v253 = vld [vmem:[%s212 + $0x2c] sm:$0xf]
      %v254 = vld [vmem:[%s212 + $0x30] sm:$0xf]
      %v255 = vld [vmem:[%s212 + $0x34] sm:$0xf]
      %v256 = vld [vmem:[%s212 + $0x38] sm:$0xf]
      %v257 = vld [vmem:[%s212 + $0x3c] sm:$0xf]
      %v258 = vld [vmem:[%s215] sm:$0x1]
      %v260 = vlaneseq
      %v261 = vshrl.u32 %v260, 7
      %v262 = vsub.s32 0, %v261
      %v263 = vrot.slane %v258, %v262
      %v281 = vunpack.c.l.b16 %v226
      %v282 = vunpack.c.l.b16 %v227
      %v283 = vunpack.c.l.b16 %v228
      %v284 = vunpack.c.l.b16 %v229
      %v285 = vunpack.c.l.b16 %v230
      %v286 = vunpack.c.l.b16 %v231
      %v287 = vunpack.c.l.b16 %v232
      %v288 = vunpack.c.l.b16 %v233
      %v289 = vunpack.c.l.b16 %v234
      %v290 = vunpack.c.l.b16 %v235
      %v291 = vunpack.c.l.b16 %v236
      %v292 = vunpack.c.l.b16 %v237
      %v293 = vunpack.c.l.b16 %v238
      %v294 = vunpack.c.l.b16 %v239
      %v295 = vunpack.c.l.b16 %v240
      %v296 = vunpack.c.l.b16 %v241
      %v297 = vpack.c.b16 %v282, %v281
      %v298 = vpack.c.b16 %v284, %v283
      %v299 = vpack.c.b16 %v286, %v285
      %v300 = vpack.c.b16 %v288, %v287
      %v301 = vpack.c.b16 %v290, %v289
      %v302 = vpack.c.b16 %v292, %v291
      %v303 = vpack.c.b16 %v294, %v293
      %v304 = vpack.c.b16 %v296, %v295
      %v329 = vunpack.c.l.b16 %v242
      %v330 = vunpack.c.l.b16 %v243
      %v331 = vunpack.c.l.b16 %v244
      %v332 = vunpack.c.l.b16 %v245
      %v333 = vunpack.c.l.b16 %v246
      %v334 = vunpack.c.l.b16 %v247
      %v335 = vunpack.c.l.b16 %v248
      %v336 = vunpack.c.l.b16 %v249
      %v337 = vunpack.c.l.b16 %v250
      %v338 = vunpack.c.l.b16 %v251
      %v339 = vunpack.c.l.b16 %v252
      %v340 = vunpack.c.l.b16 %v253
      %v341 = vunpack.c.l.b16 %v254
      %v342 = vunpack.c.l.b16 %v255
      %v343 = vunpack.c.l.b16 %v256
      %v344 = vunpack.c.l.b16 %v257
      %v345 = vpack.c.b16 %v330, %v329
      %v346 = vpack.c.b16 %v332, %v331
      %v347 = vpack.c.b16 %v334, %v333
      %v348 = vpack.c.b16 %v336, %v335
      %v349 = vpack.c.b16 %v338, %v337
      %v350 = vpack.c.b16 %v340, %v339
      %v351 = vpack.c.b16 %v342, %v341
      %v352 = vpack.c.b16 %v344, %v343
      %361 = vmatprep.subr.bf16.mxu0 0
      %362 = vmatpush1.bf16.msra.mxu0 %v345
      %363 = vmatprep.subr.bf16.mxu0 0
      %364 = vmatpush1.bf16.msra.mxu0 %v346
      %365 = vmatprep.subr.bf16.mxu0 0
      %366 = vmatpush1.bf16.msra.mxu0 %v347
      %367 = vmatprep.subr.bf16.mxu0 0
      %368 = vmatpush1.bf16.msra.mxu0 %v348
      %369 = vmatprep.subr.bf16.mxu0 0
      %370 = vmatpush1.bf16.msra.mxu0 %v349
      %371 = vmatprep.subr.bf16.mxu0 0
      %372 = vmatpush1.bf16.msra.mxu0 %v350
      %373 = vmatprep.subr.bf16.mxu0 0
      %374 = vmatpush1.bf16.msra.mxu0 %v351
      %375 = vmatprep.subr.bf16.mxu0 0
      %376 = vmatpush1.bf16.msra.mxu0 %v352
      %377 = vmatprep.subr.bf16.mxu0 0
      %378 = vmatpush1.bf16.msra.mxu0 0
      %379 = vmatprep.subr.bf16.mxu0 0
      %380 = vmatpush1.bf16.msra.mxu0 0
      %381 = vmatprep.subr.bf16.mxu0 0
      %382 = vmatpush1.bf16.msra.mxu0 0
      %383 = vmatprep.subr.bf16.mxu0 0
      %384 = vmatpush1.bf16.msra.mxu0 0
      %385 = vmatprep.subr.bf16.mxu0 0
      %386 = vmatpush1.bf16.msra.mxu0 0
      %387 = vmatprep.subr.bf16.mxu0 0
      %388 = vmatpush1.bf16.msra.mxu0 0
      %389 = vmatprep.subr.bf16.mxu0 0
      %390 = vmatpush1.bf16.msra.mxu0 0
      %391 = vmatprep.subr.bf16.mxu0 0
      %392 = vmatpush1.bf16.msra.mxu0 0
      %393 = vmatprep.mubr.bf16.mxu0 0
      %394 = vmatmul.mubr.bf16.gmra.mrb[0].mxu0 %v297
      %v395 = vpop.f32.mrb[0].mxu0
      %v396 = vadd.f32 %v263, %v395
      %v397 = vpop.f32.mrb[0].mxu0
      %v398 = vpop.f32.mrb[0].mxu0
      %v399 = vadd.f32 %v263, %v398
      %v400 = vpop.f32.mrb[0].mxu0
      %401 = vmatprep.mubr.bf16.mxu0 0
      %402 = vmatmul.mubr.bf16.gmra.mrb[0].mxu0 %v298
      %v403 = vpop.f32.mrb[0].mxu0
      %v404 = vadd.f32 %v263, %v403
      %v405 = vpop.f32.mrb[0].mxu0
      %v406 = vpop.f32.mrb[0].mxu0
      %v407 = vadd.f32 %v263, %v406
      %v408 = vpop.f32.mrb[0].mxu0
      %409 = vmatprep.mubr.bf16.mxu0 0
      %410 = vmatmul.mubr.bf16.gmra.mrb[0].mxu0 %v299
      %v411 = vpop.f32.mrb[0].mxu0
      %v412 = vadd.f32 %v263, %v411
      %v413 = vpop.f32.mrb[0].mxu0
      %v414 = vpop.f32.mrb[0].mxu0
      %v415 = vadd.f32 %v263, %v414
      %v416 = vpop.f32.mrb[0].mxu0
      %417 = vmatprep.mubr.bf16.mxu0 0
      %418 = vmatmul.mubr.bf16.gmra.mrb[0].mxu0 %v300
      %v419 = vpop.f32.mrb[0].mxu0
      %v420 = vadd.f32 %v263, %v419
      %v421 = vpop.f32.mrb[0].mxu0
      %v422 = vpop.f32.mrb[0].mxu0
      %v423 = vadd.f32 %v263, %v422
      %v424 = vpop.f32.mrb[0].mxu0
      %425 = vmatprep.mubr.bf16.mxu0 0
      %426 = vmatmul.mubr.bf16.gmra.mrb[0].mxu0 %v301
      %v427 = vpop.f32.mrb[0].mxu0
      %v428 = vadd.f32 %v263, %v427
      %v429 = vpop.f32.mrb[0].mxu0
      %v430 = vpop.f32.mrb[0].mxu0
      %v431 = vadd.f32 %v263, %v430
      %v432 = vpop.f32.mrb[0].mxu0
      %433 = vmatprep.mubr.bf16.mxu0 0
      %434 = vmatmul.mubr.bf16.gmra.mrb[0].mxu0 %v302
      %v435 = vpop.f32.mrb[0].mxu0
      %v436 = vadd.f32 %v263, %v435
      %v437 = vpop.f32.mrb[0].mxu0
      %v438 = vpop.f32.mrb[0].mxu0
      %v439 = vadd.f32 %v263, %v438
      %v440 = vpop.f32.mrb[0].mxu0
      %441 = vmatprep.mubr.bf16.mxu0 0
      %442 = vmatmul.mubr.bf16.gmra.mrb[0].mxu0 %v303
      %v443 = vpop.f32.mrb[0].mxu0
      %v444 = vadd.f32 %v263, %v443
      %v445 = vpop.f32.mrb[0].mxu0
      %v446 = vpop.f32.mrb[0].mxu0
      %v447 = vadd.f32 %v263, %v446
      %v448 = vpop.f32.mrb[0].mxu0
      %449 = vmatprep.mubr.bf16.mxu0 0
      %450 = vmatmul.mubr.bf16.gmra.mrb[0].mxu0 %v304
      %v451 = vpop.f32.mrb[0].mxu0
      %v452 = vadd.f32 %v263, %v451
      %v453 = vpop.f32.mrb[0].mxu0
      %v454 = vpop.f32.mrb[0].mxu0
      %v455 = vadd.f32 %v263, %v454
      %v456 = vpop.f32.mrb[0].mxu0
      %457 = vdwg.mxu0
      %458 = vst [vmem:[%s223] sm:$0xff] %v396
      %459 = vst [vmem:[%s223 + $0x8] sm:$0xff] %v399
      %460 = vst [vmem:[%s223 + $0x10] sm:$0xff] %v404
      %461 = vst [vmem:[%s223 + $0x18] sm:$0xff] %v407
      %462 = vst [vmem:[%s223 + $0x20] sm:$0xff] %v412
      %463 = vst [vmem:[%s223 + $0x28] sm:$0xff] %v415
      %464 = vst [vmem:[%s223 + $0x30] sm:$0xff] %v420
      %465 = vst [vmem:[%s223 + $0x38] sm:$0xff] %v423
      %466 = vst [vmem:[%s223 + $0x40] sm:$0xff] %v428
      %467 = vst [vmem:[%s223 + $0x48] sm:$0xff] %v431
      %468 = vst [vmem:[%s223 + $0x50] sm:$0xff] %v436
      %469 = vst [vmem:[%s223 + $0x58] sm:$0xff] %v439
      %470 = vst [vmem:[%s223 + $0x60] sm:$0xff] %v444
      %471 = vst [vmem:[%s223 + $0x68] sm:$0xff] %v447
      %472 = vst [vmem:[%s223 + $0x70] sm:$0xff] %v452
      %473 = vst [vmem:[%s223 + $0x78] sm:$0xff] %v455
      %s474 = smul.u32 16, %s18
      %p475 = scmp.lt.s32.totalorder %s474, 63
      %s476 = scalar_select %p475, %s474, 63
      %p477 = scmp.lt.s32.totalorder %s19, 0
      %s478 = scalar_select %p477, %s19, 0
      %s479 = sadd.s32 %s478, %s476
      %s480 = smul.addr %s479, 8
      %s481 = scalar_lea.vmem %s3, %s480
      // Predicated region
      $region33: #{_lambda_.24} parent=31 // pred_check
        %p482 = pneg %p124
      $region34: #{_lambda_.24} parent=31 // pred_check_branch
        %484 = sbr.rel (%p482) target = $region36
      $region35: #{_lambda_.24} parent=31 // pred_region
        %s485 = smul.u32 16, %s18
      $region36: #{_lambda_.24} parent=31 // pred_fallthru
        _
    $region32: #{_lambda_.24} parent=5 // pred_fallthru
      _
    %p486 = scmp.le.s32.totalorder 2, %s9
    // Predicated region
    $region37: #{_lambda_.24} parent=5 // pred_check
      %p487 = pneg %p486
    $region38: #{_lambda_.24} parent=5 // pred_check_branch
      %489 = sbr.rel (%p487) target = $region40
    $region39: #{_lambda_.24} parent=5 // pred_region
      %s490 = ssub.s32 %s9, 2
      // Predicated region
      $region41: #{_lambda_.24} parent=39 // pred_check
        %p491 = pneg %p130
      $region42: #{_lambda_.24} parent=39 // pred_check_branch
        %493 = sbr.rel (%p491) target = $region44
      $region43: #{_lambda_.24} parent=39 // pred_region
        %s494 = smul.u32 16, %s20
        %p495 = scmp.lt.s32.totalorder %s494, 63
        %s496 = scalar_select %p495, %s494, 63
        %p497 = scmp.lt.s32.totalorder %s21, 0
        %s498 = scalar_select %p497, %s21, 0
        %s499 = sadd.s32 %s498, %s496
        %s500 = smul.addr %s499, 8
        %s501 = scalar_lea.vmem %s3, %s500
      $region44: #{_lambda_.24} parent=39 // pred_fallthru
        _
    $region40: #{_lambda_.24} parent=5 // pred_fallthru
      _
  $region6: #{_lambda_.24} parent=0 // loop_footer
    %s13 = sadd.s32 1, %s9
  $region7: #{_lambda_.24} parent=0 // loop_footer_branch
    %8 = sbr.rel target = $region3
  $region8: #{_lambda_.24} parent=0 // loop_exit
    _

// kernel: _lambda_.25
$region0: #{_lambda_.25}
  #allocation0 [shape = 'u32[]', space=smem, size = 0x4, offset = 0x4, fixed_abs, tag = 'smem constant byte address 0x4 - core index']
  #allocation1 [shape = 'u32[144,128]{1,0:T(1,128)}', space=vmem, size = 0x12000, scoped, tag = 'internal scratch']
  %s0 = inlined_call_operand.vmem [shape: bf16[128,256], index: 0, kind: input, shape index: {}]
  %s1 = inlined_call_operand.vmem [shape: bf16[256,128], index: 1, kind: input, shape index: {}]
  %s2 = inlined_call_operand.vmem [shape: f32[1,128], index: 2, kind: input, shape index: {}]
  %s3 = inlined_call_operand.vmem [shape: f32[128,128], index: 3, kind: output, shape index: {}]
  %s4 = sld [smem:[#allocation0]]
  $region22: #{_lambda_.25} parent=0
    _
  %s6 = ssub.s32 1, %s4
  %s7 = scalar_select 0, %s6, %s4
  // Predicated region
  $region2: #{_lambda_.25} parent=0 // pred_check
    _
  $region3: #{_lambda_.25} parent=0 // pred_check_branch
    %9 = sbr.rel (0) target = $region5
  $region4: #{_lambda_.25} parent=0 // pred_region
    _
  $region5: #{_lambda_.25} parent=0 // pred_fallthru
    _
  // Predicated region
  $region6: #{_lambda_.25} parent=0 // pred_check
    _
  $region7: #{_lambda_.25} parent=0 // pred_check_branch
    %11 = sbr.rel (0) target = $region9
  $region8: #{_lambda_.25} parent=0 // pred_region
    _
  $region9: #{_lambda_.25} parent=0 // pred_fallthru
    _
  // Predicated region
  $region10: #{_lambda_.25} parent=0 // pred_check
    _
  $region11: #{_lambda_.25} parent=0 // pred_check_branch
    %13 = sbr.rel (0) target = $region13
  $region12: #{_lambda_.25} parent=0 // pred_region
    _
  $region13: #{_lambda_.25} parent=0 // pred_fallthru
    _
  %v15 = vld [vmem:[%s0] sm:$0xff]
  %v16 = vld [vmem:[%s0 + $0x8] sm:$0xff]
  %v17 = vld [vmem:[%s0 + $0x10] sm:$0xff]
  %v18 = vld [vmem:[%s0 + $0x18] sm:$0xff]
  %v19 = vld [vmem:[%s0 + $0x20] sm:$0xff]
  %v20 = vld [vmem:[%s0 + $0x28] sm:$0xff]
  %v21 = vld [vmem:[%s0 + $0x30] sm:$0xff]
  %v22 = vld [vmem:[%s0 + $0x38] sm:$0xff]
  %v23 = vld [vmem:[%s0 + $0x40] sm:$0xff]
  %v24 = vld [vmem:[%s0 + $0x48] sm:$0xff]
  %v25 = vld [vmem:[%s0 + $0x50] sm:$0xff]
  %v26 = vld [vmem:[%s0 + $0x58] sm:$0xff]
  %v27 = vld [vmem:[%s0 + $0x60] sm:$0xff]
  %v28 = vld [vmem:[%s0 + $0x68] sm:$0xff]
  %v29 = vld [vmem:[%s0 + $0x70] sm:$0xff]
  %v30 = vld [vmem:[%s0 + $0x78] sm:$0xff]
  %v31 = vld [vmem:[%s1] sm:$0xf]
  %v32 = vld [vmem:[%s1 + $0x4] sm:$0xf]
  %v33 = vld [vmem:[%s1 + $0x8] sm:$0xf]
  %v34 = vld [vmem:[%s1 + $0xc] sm:$0xf]
  %v35 = vld [vmem:[%s1 + $0x10] sm:$0xf]
  %v36 = vld [vmem:[%s1 + $0x14] sm:$0xf]
  %v37 = vld [vmem:[%s1 + $0x18] sm:$0xf]
  %v38 = vld [vmem:[%s1 + $0x1c] sm:$0xf]
  %v39 = vld [vmem:[%s1 + $0x20] sm:$0xf]
  %v40 = vld [vmem:[%s1 + $0x24] sm:$0xf]
  %v41 = vld [vmem:[%s1 + $0x28] sm:$0xf]
  %v42 = vld [vmem:[%s1 + $0x2c] sm:$0xf]
  %v43 = vld [vmem:[%s1 + $0x30] sm:$0xf]
  %v44 = vld [vmem:[%s1 + $0x34] sm:$0xf]
  %v45 = vld [vmem:[%s1 + $0x38] sm:$0xf]
  %v46 = vld [vmem:[%s1 + $0x3c] sm:$0xf]
  %v47 = vld [vmem:[%s1 + $0x40] sm:$0xf]
  %v48 = vld [vmem:[%s1 + $0x44] sm:$0xf]
  %v49 = vld [vmem:[%s1 + $0x48] sm:$0xf]
  %v50 = vld [vmem:[%s1 + $0x4c] sm:$0xf]
  %v51 = vld [vmem:[%s1 + $0x50] sm:$0xf]
  %v52 = vld [vmem:[%s1 + $0x54] sm:$0xf]
  %v53 = vld [vmem:[%s1 + $0x58] sm:$0xf]
  %v54 = vld [vmem:[%s1 + $0x5c] sm:$0xf]
  %v55 = vld [vmem:[%s1 + $0x60] sm:$0xf]
  %v56 = vld [vmem:[%s1 + $0x64] sm:$0xf]
  %v57 = vld [vmem:[%s1 + $0x68] sm:$0xf]
  %v58 = vld [vmem:[%s1 + $0x6c] sm:$0xf]
  %v59 = vld [vmem:[%s1 + $0x70] sm:$0xf]
  %v60 = vld [vmem:[%s1 + $0x74] sm:$0xf]
  %v61 = vld [vmem:[%s1 + $0x78] sm:$0xf]
  %v62 = vld [vmem:[%s1 + $0x7c] sm:$0xf]
  %v63 = vld [vmem:[%s2] sm:$0x1]
  %v65 = vlaneseq
  %v66 = vshrl.u32 %v65, 7
  %v67 = vsub.s32 0, %v66
  %v68 = vrot.slane %v63, %v67
  %v86 = vunpack.c.l.b16 %v15
  %v87 = vunpack.c.h.b16 %v15
  %v88 = vunpack.c.l.b16 %v16
  %v89 = vunpack.c.h.b16 %v16
  %v90 = vunpack.c.l.b16 %v17
  %v91 = vunpack.c.h.b16 %v17
  %v92 = vunpack.c.l.b16 %v18
  %v93 = vunpack.c.h.b16 %v18
  %v94 = vunpack.c.l.b16 %v19
  %v95 = vunpack.c.h.b16 %v19
  %v96 = vunpack.c.l.b16 %v20
  %v97 = vunpack.c.h.b16 %v20
  %v98 = vunpack.c.l.b16 %v21
  %v99 = vunpack.c.h.b16 %v21
  %v100 = vunpack.c.l.b16 %v22
  %v101 = vunpack.c.h.b16 %v22
  %v102 = vunpack.c.l.b16 %v23
  %v103 = vunpack.c.h.b16 %v23
  %v104 = vunpack.c.l.b16 %v24
  %v105 = vunpack.c.h.b16 %v24
  %v106 = vunpack.c.l.b16 %v25
  %v107 = vunpack.c.h.b16 %v25
  %v108 = vunpack.c.l.b16 %v26
  %v109 = vunpack.c.h.b16 %v26
  %v110 = vunpack.c.l.b16 %v27
  %v111 = vunpack.c.h.b16 %v27
  %v112 = vunpack.c.l.b16 %v28
  %v113 = vunpack.c.h.b16 %v28
  %v114 = vunpack.c.l.b16 %v29
  %v115 = vunpack.c.h.b16 %v29
  %v116 = vunpack.c.l.b16 %v30
  %v117 = vunpack.c.h.b16 %v30
  %v118 = vpack.c.b16 %v88, %v86
  %v119 = vpack.c.b16 %v89, %v87
  %v120 = vpack.c.b16 %v92, %v90
  %v121 = vpack.c.b16 %v93, %v91
  %v122 = vpack.c.b16 %v96, %v94
  %v123 = vpack.c.b16 %v97, %v95
  %v124 = vpack.c.b16 %v100, %v98
  %v125 = vpack.c.b16 %v101, %v99
  %v126 = vpack.c.b16 %v104, %v102
  %v127 = vpack.c.b16 %v105, %v103
  %v128 = vpack.c.b16 %v108, %v106
  %v129 = vpack.c.b16 %v109, %v107
  %v130 = vpack.c.b16 %v112, %v110
  %v131 = vpack.c.b16 %v113, %v111
  %v132 = vpack.c.b16 %v116, %v114
  %v133 = vpack.c.b16 %v117, %v115
  %v182 = vunpack.c.l.b16 %v31
  %v183 = vunpack.c.l.b16 %v32
  %v184 = vunpack.c.l.b16 %v33
  %v185 = vunpack.c.l.b16 %v34
  %v186 = vunpack.c.l.b16 %v35
  %v187 = vunpack.c.l.b16 %v36
  %v188 = vunpack.c.l.b16 %v37
  %v189 = vunpack.c.l.b16 %v38
  %v190 = vunpack.c.l.b16 %v39
  %v191 = vunpack.c.l.b16 %v40
  %v192 = vunpack.c.l.b16 %v41
  %v193 = vunpack.c.l.b16 %v42
  %v194 = vunpack.c.l.b16 %v43
  %v195 = vunpack.c.l.b16 %v44
  %v196 = vunpack.c.l.b16 %v45
  %v197 = vunpack.c.l.b16 %v46
  %v198 = vunpack.c.l.b16 %v47
  %v199 = vunpack.c.l.b16 %v48
  %v200 = vunpack.c.l.b16 %v49
  %v201 = vunpack.c.l.b16 %v50
  %v202 = vunpack.c.l.b16 %v51
  %v203 = vunpack.c.l.b16 %v52
  %v204 = vunpack.c.l.b16 %v53
  %v205 = vunpack.c.l.b16 %v54
  %v206 = vunpack.c.l.b16 %v55
  %v207 = vunpack.c.l.b16 %v56
  %v208 = vunpack.c.l.b16 %v57
  %v209 = vunpack.c.l.b16 %v58
  %v210 = vunpack.c.l.b16 %v59
  %v211 = vunpack.c.l.b16 %v60
  %v212 = vunpack.c.l.b16 %v61
  %v213 = vunpack.c.l.b16 %v62
  %v214 = vpack.c.b16 %v183, %v182
  %v215 = vpack.c.b16 %v185, %v184
  %v216 = vpack.c.b16 %v187, %v186
  %v217 = vpack.c.b16 %v189, %v188
  %v218 = vpack.c.b16 %v191, %v190
  %v219 = vpack.c.b16 %v193, %v192
  %v220 = vpack.c.b16 %v195, %v194
  %v221 = vpack.c.b16 %v197, %v196
  %v222 = vpack.c.b16 %v199, %v198
  %v223 = vpack.c.b16 %v201, %v200
  %v224 = vpack.c.b16 %v203, %v202
  %v225 = vpack.c.b16 %v205, %v204
  %v226 = vpack.c.b16 %v207, %v206
  %v227 = vpack.c.b16 %v209, %v208
  %v228 = vpack.c.b16 %v211, %v210
  %v229 = vpack.c.b16 %v213, %v212
  %246 = vmatprep.subr.bf16.mxu0 0
  %247 = vmatpush1.bf16.msra.mxu0 %v214
  %248 = vmatprep.subr.bf16.mxu0 0
  %249 = vmatpush1.bf16.msra.mxu0 %v215
  %250 = vmatprep.subr.bf16.mxu0 0
  %251 = vmatpush1.bf16.msra.mxu0 %v216
  %252 = vmatprep.subr.bf16.mxu0 0
  %253 = vmatpush1.bf16.msra.mxu0 %v217
  %254 = vmatprep.subr.bf16.mxu0 0
  %255 = vmatpush1.bf16.msra.mxu0 %v218
  %256 = vmatprep.subr.bf16.mxu0 0
  %257 = vmatpush1.bf16.msra.mxu0 %v219
  %258 = vmatprep.subr.bf16.mxu0 0
  %259 = vmatpush1.bf16.msra.mxu0 %v220
  %260 = vmatprep.subr.bf16.mxu0 0
  %261 = vmatpush1.bf16.msra.mxu0 %v221
  %262 = vmatprep.subr.bf16.mxu0 0
  %263 = vmatpush1.bf16.msra.mxu0 %v222
  %264 = vmatprep.subr.bf16.mxu0 0
  %265 = vmatpush1.bf16.msra.mxu0 %v223
  %266 = vmatprep.subr.bf16.mxu0 0
  %267 = vmatpush1.bf16.msra.mxu0 %v224
  %268 = vmatprep.subr.bf16.mxu0 0
  %269 = vmatpush1.bf16.msra.mxu0 %v225
  %270 = vmatprep.subr.bf16.mxu0 0
  %271 = vmatpush1.bf16.msra.mxu0 %v226
  %272 = vmatprep.subr.bf16.mxu0 0
  %273 = vmatpush1.bf16.msra.mxu0 %v227
  %274 = vmatprep.subr.bf16.mxu0 0
  %275 = vmatpush1.bf16.msra.mxu0 %v228
  %276 = vmatprep.subr.bf16.mxu0 0
  %277 = vmatpush1.bf16.msra.mxu0 %v229
  %278 = vmatprep.mubr.bf16.mxu0 %v119
  %279 = vmatmul.mubr.bf16.gmra.mrb[0].mxu0 %v118
  %v280 = vpop.f32.mrb[0].mxu0
  %v281 = vadd.f32 %v68, %v280
  %v282 = vpop.f32.mrb[0].mxu0
  %v283 = vpop.f32.mrb[0].mxu0
  %v284 = vadd.f32 %v68, %v283
  %v285 = vpop.f32.mrb[0].mxu0
  %286 = vmatprep.mubr.bf16.mxu0 %v121
  %287 = vmatmul.mubr.bf16.gmra.mrb[0].mxu0 %v120
  %v288 = vpop.f32.mrb[0].mxu0
  %v289 = vadd.f32 %v68, %v288
  %v290 = vpop.f32.mrb[0].mxu0
  %v291 = vpop.f32.mrb[0].mxu0
  %v292 = vadd.f32 %v68, %v291
  %v293 = vpop.f32.mrb[0].mxu0
  %294 = vmatprep.mubr.bf16.mxu0 %v123
  %295 = vmatmul.mubr.bf16.gmra.mrb[0].mxu0 %v122
  %v296 = vpop.f32.mrb[0].mxu0
  %v297 = vadd.f32 %v68, %v296
  %v298 = vpop.f32.mrb[0].mxu0
  %v299 = vpop.f32.mrb[0].mxu0
  %v300 = vadd.f32 %v68, %v299
  %v301 = vpop.f32.mrb[0].mxu0
  %302 = vmatprep.mubr.bf16.mxu0 %v125
  %303 = vmatmul.mubr.bf16.gmra.mrb[0].mxu0 %v124
  %v304 = vpop.f32.mrb[0].mxu0
  %v305 = vadd.f32 %v68, %v304
  %v306 = vpop.f32.mrb[0].mxu0
  %v307 = vpop.f32.mrb[0].mxu0
  %v308 = vadd.f32 %v68, %v307
  %v309 = vpop.f32.mrb[0].mxu0
  %310 = vmatprep.mubr.bf16.mxu0 %v127
  %311 = vmatmul.mubr.bf16.gmra.mrb[0].mxu0 %v126
  %v312 = vpop.f32.mrb[0].mxu0
  %v313 = vadd.f32 %v68, %v312
  %v314 = vpop.f32.mrb[0].mxu0
  %v315 = vpop.f32.mrb[0].mxu0
  %v316 = vadd.f32 %v68, %v315
  %v317 = vpop.f32.mrb[0].mxu0
  %318 = vmatprep.mubr.bf16.mxu0 %v129
  %319 = vmatmul.mubr.bf16.gmra.mrb[0].mxu0 %v128
  %v320 = vpop.f32.mrb[0].mxu0
  %v321 = vadd.f32 %v68, %v320
  %v322 = vpop.f32.mrb[0].mxu0
  %v323 = vpop.f32.mrb[0].mxu0
  %v324 = vadd.f32 %v68, %v323
  %v325 = vpop.f32.mrb[0].mxu0
  %326 = vmatprep.mubr.bf16.mxu0 %v131
  %327 = vmatmul.mubr.bf16.gmra.mrb[0].mxu0 %v130
  %v328 = vpop.f32.mrb[0].mxu0
  %v329 = vadd.f32 %v68, %v328
  %v330 = vpop.f32.mrb[0].mxu0
  %v331 = vpop.f32.mrb[0].mxu0
  %v332 = vadd.f32 %v68, %v331
  %v333 = vpop.f32.mrb[0].mxu0
  %334 = vmatprep.mubr.bf16.mxu0 %v133
  %335 = vmatmul.mubr.bf16.gmra.mrb[0].mxu0 %v132
  %v336 = vpop.f32.mrb[0].mxu0
  %v337 = vadd.f32 %v68, %v336
  %v338 = vpop.f32.mrb[0].mxu0
  %v339 = vpop.f32.mrb[0].mxu0
  %v340 = vadd.f32 %v68, %v339
  %v341 = vpop.f32.mrb[0].mxu0
  %342 = vdwg.mxu0
  %343 = vst [vmem:[%s3] sm:$0xff] %v281
  %344 = vst [vmem:[%s3 + $0x8] sm:$0xff] %v284
  %345 = vst [vmem:[%s3 + $0x10] sm:$0xff] %v289
  %346 = vst [vmem:[%s3 + $0x18] sm:$0xff] %v292
  %347 = vst [vmem:[%s3 + $0x20] sm:$0xff] %v297
  %348 = vst [vmem:[%s3 + $0x28] sm:$0xff] %v300
  %349 = vst [vmem:[%s3 + $0x30] sm:$0xff] %v305
  %350 = vst [vmem:[%s3 + $0x38] sm:$0xff] %v308
  %351 = vst [vmem:[%s3 + $0x40] sm:$0xff] %v313
  %352 = vst [vmem:[%s3 + $0x48] sm:$0xff] %v316
  %353 = vst [vmem:[%s3 + $0x50] sm:$0xff] %v321
  %354 = vst [vmem:[%s3 + $0x58] sm:$0xff] %v324
  %355 = vst [vmem:[%s3 + $0x60] sm:$0xff] %v329
  %356 = vst [vmem:[%s3 + $0x68] sm:$0xff] %v332
  %357 = vst [vmem:[%s3 + $0x70] sm:$0xff] %v337
  %358 = vst [vmem:[%s3 + $0x78] sm:$0xff] %v340
  // Predicated region
  $region14: #{_lambda_.25} parent=0 // pred_check
    _
  $region15: #{_lambda_.25} parent=0 // pred_check_branch
    %360 = sbr.rel (0) target = $region17
  $region16: #{_lambda_.25} parent=0 // pred_region
    _
  $region17: #{_lambda_.25} parent=0 // pred_fallthru
    _
  // Predicated region
  $region18: #{_lambda_.25} parent=0 // pred_check
    _
  $region19: #{_lambda_.25} parent=0 // pred_check_branch
    %362 = sbr.rel (0) target = $region21
  $region20: #{_lambda_.25} parent=0 // pred_region
    _
  $region21: #{_lambda_.25} parent=0 // pred_fallthru
    _

// kernel: _lambda_.26
$region0: #{_lambda_.26}
  #allocation0 [shape = 'u32[]', space=smem, size = 0x4, offset = 0x4, fixed_abs, tag = 'smem constant byte address 0x4 - core index']
  #allocation1 [shape = 'u32[144,128]{1,0:T(1,128)}', space=vmem, size = 0x12000, scoped, tag = 'internal scratch']
  %s0 = inlined_call_operand.vmem [shape: bf16[128,384], index: 0, kind: input, shape index: {}]
  %s1 = inlined_call_operand.vmem [shape: bf16[384,128], index: 1, kind: input, shape index: {}]
  %s2 = inlined_call_operand.vmem [shape: f32[1,128], index: 2, kind: input, shape index: {}]
  %s3 = inlined_call_operand.vmem [shape: f32[128,128], index: 3, kind: output, shape index: {}]
  %s4 = sld [smem:[#allocation0]]
  $region22: #{_lambda_.26} parent=0
    _
  %s6 = ssub.s32 1, %s4
  %s7 = scalar_select 0, %s6, %s4
  // Predicated region
  $region2: #{_lambda_.26} parent=0 // pred_check
    _
  $region3: #{_lambda_.26} parent=0 // pred_check_branch
    %9 = sbr.rel (0) target = $region5
  $region4: #{_lambda_.26} parent=0 // pred_region
    _
  $region5: #{_lambda_.26} parent=0 // pred_fallthru
    _
  // Predicated region
  $region6: #{_lambda_.26} parent=0 // pred_check
    _
  $region7: #{_lambda_.26} parent=0 // pred_check_branch
    %11 = sbr.rel (0) target = $region9
  $region8: #{_lambda_.26} parent=0 // pred_region
    _
  $region9: #{_lambda_.26} parent=0 // pred_fallthru
    _
  // Predicated region
  $region10: #{_lambda_.26} parent=0 // pred_check
    _
  $region11: #{_lambda_.26} parent=0 // pred_check_branch
    %13 = sbr.rel (0) target = $region13
  $region12: #{_lambda_.26} parent=0 // pred_region
    _
  $region13: #{_lambda_.26} parent=0 // pred_fallthru
    _
  %v15 = vld [vmem:[%s0] sm:$0xff]
  %v16 = vld [vmem:[%s0 + $0x8] sm:$0xf]
  %v17 = vld [vmem:[%s0 + $0xc] sm:$0xff]
  %v18 = vld [vmem:[%s0 + $0x14] sm:$0xf]
  %v19 = vld [vmem:[%s0 + $0x18] sm:$0xff]
  %v20 = vld [vmem:[%s0 + $0x20] sm:$0xf]
  %v21 = vld [vmem:[%s0 + $0x24] sm:$0xff]
  %v22 = vld [vmem:[%s0 + $0x2c] sm:$0xf]
  %v23 = vld [vmem:[%s0 + $0x30] sm:$0xff]
  %v24 = vld [vmem:[%s0 + $0x38] sm:$0xf]
  %v25 = vld [vmem:[%s0 + $0x3c] sm:$0xff]
  %v26 = vld [vmem:[%s0 + $0x44] sm:$0xf]
  %v27 = vld [vmem:[%s0 + $0x48] sm:$0xff]
  %v28 = vld [vmem:[%s0 + $0x50] sm:$0xf]
  %v29 = vld [vmem:[%s0 + $0x54] sm:$0xff]
  %v30 = vld [vmem:[%s0 + $0x5c] sm:$0xf]
  %v31 = vld [vmem:[%s0 + $0x60] sm:$0xff]
  %v32 = vld [vmem:[%s0 + $0x68] sm:$0xf]
  %v33 = vld [vmem:[%s0 + $0x6c] sm:$0xff]
  %v34 = vld [vmem:[%s0 + $0x74] sm:$0xf]
  %v35 = vld [vmem:[%s0 + $0x78] sm:$0xff]
  %v36 = vld [vmem:[%s0 + $0x80] sm:$0xf]
  %v37 = vld [vmem:[%s0 + $0x84] sm:$0xff]
  %v38 = vld [vmem:[%s0 + $0x8c] sm:$0xf]
  %v39 = vld [vmem:[%s0 + $0x90] sm:$0xff]
  %v40 = vld [vmem:[%s0 + $0x98] sm:$0xf]
  %v41 = vld [vmem:[%s0 + $0x9c] sm:$0xff]
  %v42 = vld [vmem:[%s0 + $0xa4] sm:$0xf]
  %v43 = vld [vmem:[%s0 + $0xa8] sm:$0xff]
  %v44 = vld [vmem:[%s0 + $0xb0] sm:$0xf]
  %v45 = vld [vmem:[%s0 + $0xb4] sm:$0xff]
  %v46 = vld [vmem:[%s0 + $0xbc] sm:$0xf]
  %v47 = vld [vmem:[%s1] sm:$0xf]
  %v48 = vld [vmem:[%s1 + $0x4] sm:$0xf]
  %v49 = vld [vmem:[%s1 + $0x8] sm:$0xf]
  %v50 = vld [vmem:[%s1 + $0xc] sm:$0xf]
  %v51 = vld [vmem:[%s1 + $0x10] sm:$0xf]
  %v52 = vld [vmem:[%s1 + $0x14] sm:$0xf]
  %v53 = vld [vmem:[%s1 + $0x18] sm:$0xf]
  %v54 = vld [vmem:[%s1 + $0x1c] sm:$0xf]
  %v55 = vld [vmem:[%s1 + $0x20] sm:$0xf]
  %v56 = vld [vmem:[%s1 + $0x24] sm:$0xf]
  %v57 = vld [vmem:[%s1 + $0x28] sm:$0xf]
  %v58 = vld [vmem:[%s1 + $0x2c] sm:$0xf]
  %v59 = vld [vmem:[%s1 + $0x30] sm:$0xf]
  %v60 = vld [vmem:[%s1 + $0x34] sm:$0xf]
  %v61 = vld [vmem:[%s1 + $0x38] sm:$0xf]
  %v62 = vld [vmem:[%s1 + $0x3c] sm:$0xf]
  %v63 = vld [vmem:[%s1 + $0x40] sm:$0xf]
  %v64 = vld [vmem:[%s1 + $0x44] sm:$0xf]
  %v65 = vld [vmem:[%s1 + $0x48] sm:$0xf]
  %v66 = vld [vmem:[%s1 + $0x4c] sm:$0xf]
  %v67 = vld [vmem:[%s1 + $0x50] sm:$0xf]
  %v68 = vld [vmem:[%s1 + $0x54] sm:$0xf]
  %v69 = vld [vmem:[%s1 + $0x58] sm:$0xf]
  %v70 = vld [vmem:[%s1 + $0x5c] sm:$0xf]
  %v71 = vld [vmem:[%s1 + $0x60] sm:$0xf]
  %v72 = vld [vmem:[%s1 + $0x64] sm:$0xf]
  %v73 = vld [vmem:[%s1 + $0x68] sm:$0xf]
  %v74 = vld [vmem:[%s1 + $0x6c] sm:$0xf]
  %v75 = vld [vmem:[%s1 + $0x70] sm:$0xf]
  %v76 = vld [vmem:[%s1 + $0x74] sm:$0xf]
  %v77 = vld [vmem:[%s1 + $0x78] sm:$0xf]
  %v78 = vld [vmem:[%s1 + $0x7c] sm:$0xf]
  %v79 = vld [vmem:[%s1 + $0x80] sm:$0xf]
  %v80 = vld [vmem:[%s1 + $0x84] sm:$0xf]
  %v81 = vld [vmem:[%s1 + $0x88] sm:$0xf]
  %v82 = vld [vmem:[%s1 + $0x8c] sm:$0xf]
  %v83 = vld [vmem:[%s1 + $0x90] sm:$0xf]
  %v84 = vld [vmem:[%s1 + $0x94] sm:$0xf]
  %v85 = vld [vmem:[%s1 + $0x98] sm:$0xf]
  %v86 = vld [vmem:[%s1 + $0x9c] sm:$0xf]
  %v87 = vld [vmem:[%s1 + $0xa0] sm:$0xf]
  %v88 = vld [vmem:[%s1 + $0xa4] sm:$0xf]
  %v89 = vld [vmem:[%s1 + $0xa8] sm:$0xf]
  %v90 = vld [vmem:[%s1 + $0xac] sm:$0xf]
  %v91 = vld [vmem:[%s1 + $0xb0] sm:$0xf]
  %v92 = vld [vmem:[%s1 + $0xb4] sm:$0xf]
  %v93 = vld [vmem:[%s1 + $0xb8] sm:$0xf]
  %v94 = vld [vmem:[%s1 + $0xbc] sm:$0xf]
  %v95 = vld [vmem:[%s2] sm:$0x1]
  %v97 = vlaneseq
  %v98 = vshrl.u32 %v97, 7
  %v99 = vsub.s32 0, %v98
  %v100 = vrot.slane %v95, %v99
  %v134 = vunpack.c.l.b16 %v15
  %v135 = vunpack.c.h.b16 %v15
  %v136 = vunpack.c.l.b16 %v16
  %v137 = vunpack.c.l.b16 %v17
  %v138 = vunpack.c.h.b16 %v17
  %v139 = vunpack.c.l.b16 %v18
  %v140 = vunpack.c.l.b16 %v19
  %v141 = vunpack.c.h.b16 %v19
  %v142 = vunpack.c.l.b16 %v20
  %v143 = vunpack.c.l.b16 %v21
  %v144 = vunpack.c.h.b16 %v21
  %v145 = vunpack.c.l.b16 %v22
  %v146 = vunpack.c.l.b16 %v23
  %v147 = vunpack.c.h.b16 %v23
  %v148 = vunpack.c.l.b16 %v24
  %v149 = vunpack.c.l.b16 %v25
  %v150 = vunpack.c.h.b16 %v25
  %v151 = vunpack.c.l.b16 %v26
  %v152 = vunpack.c.l.b16 %v27
  %v153 = vunpack.c.h.b16 %v27
  %v154 = vunpack.c.l.b16 %v28
  %v155 = vunpack.c.l.b16 %v29
  %v156 = vunpack.c.h.b16 %v29
  %v157 = vunpack.c.l.b16 %v30
  %v158 = vunpack.c.l.b16 %v31
  %v159 = vunpack.c.h.b16 %v31
  %v160 = vunpack.c.l.b16 %v32
  %v161 = vunpack.c.l.b16 %v33
  %v162 = vunpack.c.h.b16 %v33
  %v163 = vunpack.c.l.b16 %v34
  %v164 = vunpack.c.l.b16 %v35
  %v165 = vunpack.c.h.b16 %v35
  %v166 = vunpack.c.l.b16 %v36
  %v167 = vunpack.c.l.b16 %v37
  %v168 = vunpack.c.h.b16 %v37
  %v169 = vunpack.c.l.b16 %v38
  %v170 = vunpack.c.l.b16 %v39
  %v171 = vunpack.c.h.b16 %v39
  %v172 = vunpack.c.l.b16 %v40
  %v173 = vunpack.c.l.b16 %v41
  %v174 = vunpack.c.h.b16 %v41
  %v175 = vunpack.c.l.b16 %v42
  %v176 = vunpack.c.l.b16 %v43
  %v177 = vunpack.c.h.b16 %v43
  %v178 = vunpack.c.l.b16 %v44
  %v179 = vunpack.c.l.b16 %v45
  %v180 = vunpack.c.h.b16 %v45
  %v181 = vunpack.c.l.b16 %v46
  %v182 = vpack.c.b16 %v137, %v134
  %v183 = vpack.c.b16 %v138, %v135
  %v184 = vpack.c.b16 %v139, %v136
  %v185 = vpack.c.b16 %v143, %v140
  %v186 = vpack.c.b16 %v144, %v141
  %v187 = vpack.c.b16 %v145, %v142
  %v188 = vpack.c.b16 %v149, %v146
  %v189 = vpack.c.b16 %v150, %v147
  %v190 = vpack.c.b16 %v151, %v148
  %v191 = vpack.c.b16 %v155, %v152
  %v192 = vpack.c.b16 %v156, %v153
  %v193 = vpack.c.b16 %v157, %v154
  %v194 = vpack.c.b16 %v161, %v158
  %v195 = vpack.c.b16 %v162, %v159
  %v196 = vpack.c.b16 %v163, %v160
  %v197 = vpack.c.b16 %v167, %v164
  %v198 = vpack.c.b16 %v168, %v165
  %v199 = vpack.c.b16 %v169, %v166
  %v200 = vpack.c.b16 %v173, %v170
  %v201 = vpack.c.b16 %v174, %v171
  %v202 = vpack.c.b16 %v175, %v172
  %v203 = vpack.c.b16 %v179, %v176
  %v204 = vpack.c.b16 %v180, %v177
  %v205 = vpack.c.b16 %v181, %v178
  %v278 = vunpack.c.l.b16 %v47
  %v279 = vunpack.c.l.b16 %v48
  %v280 = vunpack.c.l.b16 %v49
  %v281 = vunpack.c.l.b16 %v50
  %v282 = vunpack.c.l.b16 %v51
  %v283 = vunpack.c.l.b16 %v52
  %v284 = vunpack.c.l.b16 %v53
  %v285 = vunpack.c.l.b16 %v54
  %v286 = vunpack.c.l.b16 %v55
  %v287 = vunpack.c.l.b16 %v56
  %v288 = vunpack.c.l.b16 %v57
  %v289 = vunpack.c.l.b16 %v58
  %v290 = vunpack.c.l.b16 %v59
  %v291 = vunpack.c.l.b16 %v60
  %v292 = vunpack.c.l.b16 %v61
  %v293 = vunpack.c.l.b16 %v62
  %v294 = vunpack.c.l.b16 %v63
  %v295 = vunpack.c.l.b16 %v64
  %v296 = vunpack.c.l.b16 %v65
  %v297 = vunpack.c.l.b16 %v66
  %v298 = vunpack.c.l.b16 %v67
  %v299 = vunpack.c.l.b16 %v68
  %v300 = vunpack.c.l.b16 %v69
  %v301 = vunpack.c.l.b16 %v70
  %v302 = vunpack.c.l.b16 %v71
  %v303 = vunpack.c.l.b16 %v72
  %v304 = vunpack.c.l.b16 %v73
  %v305 = vunpack.c.l.b16 %v74
  %v306 = vunpack.c.l.b16 %v75
  %v307 = vunpack.c.l.b16 %v76
  %v308 = vunpack.c.l.b16 %v77
  %v309 = vunpack.c.l.b16 %v78
  %v310 = vunpack.c.l.b16 %v79
  %v311 = vunpack.c.l.b16 %v80
  %v312 = vunpack.c.l.b16 %v81
  %v313 = vunpack.c.l.b16 %v82
  %v314 = vunpack.c.l.b16 %v83
  %v315 = vunpack.c.l.b16 %v84
  %v316 = vunpack.c.l.b16 %v85
  %v317 = vunpack.c.l.b16 %v86
  %v318 = vunpack.c.l.b16 %v87
  %v319 = vunpack.c.l.b16 %v88
  %v320 = vunpack.c.l.b16 %v89
  %v321 = vunpack.c.l.b16 %v90
  %v322 = vunpack.c.l.b16 %v91
  %v323 = vunpack.c.l.b16 %v92
  %v324 = vunpack.c.l.b16 %v93
  %v325 = vunpack.c.l.b16 %v94
  %v326 = vpack.c.b16 %v279, %v278
  %v327 = vpack.c.b16 %v281, %v280
  %v328 = vpack.c.b16 %v283, %v282
  %v329 = vpack.c.b16 %v285, %v284
  %v330 = vpack.c.b16 %v287, %v286
  %v331 = vpack.c.b16 %v289, %v288
  %v332 = vpack.c.b16 %v291, %v290
  %v333 = vpack.c.b16 %v293, %v292
  %v334 = vpack.c.b16 %v295, %v294
  %v335 = vpack.c.b16 %v297, %v296
  %v336 = vpack.c.b16 %v299, %v298
  %v337 = vpack.c.b16 %v301, %v300
  %v338 = vpack.c.b16 %v303, %v302
  %v339 = vpack.c.b16 %v305, %v304
  %v340 = vpack.c.b16 %v307, %v306
  %v341 = vpack.c.b16 %v309, %v308
  %v342 = vpack.c.b16 %v311, %v310
  %v343 = vpack.c.b16 %v313, %v312
  %v344 = vpack.c.b16 %v315, %v314
  %v345 = vpack.c.b16 %v317, %v316
  %v346 = vpack.c.b16 %v319, %v318
  %v347 = vpack.c.b16 %v321, %v320
  %v348 = vpack.c.b16 %v323, %v322
  %v349 = vpack.c.b16 %v325, %v324
  %374 = vmatprep.subr.bf16.mxu0 0
  %375 = vmatpush1.bf16.msra.mxu0 %v326
  %376 = vmatprep.subr.bf16.mxu0 0
  %377 = vmatpush1.bf16.msra.mxu0 %v327
  %378 = vmatprep.subr.bf16.mxu0 0
  %379 = vmatpush1.bf16.msra.mxu0 %v328
  %380 = vmatprep.subr.bf16.mxu0 0
  %381 = vmatpush1.bf16.msra.mxu0 %v329
  %382 = vmatprep.subr.bf16.mxu0 0
  %383 = vmatpush1.bf16.msra.mxu0 %v330
  %384 = vmatprep.subr.bf16.mxu0 0
  %385 = vmatpush1.bf16.msra.mxu0 %v331
  %386 = vmatprep.subr.bf16.mxu0 0
  %387 = vmatpush1.bf16.msra.mxu0 %v332
  %388 = vmatprep.subr.bf16.mxu0 0
  %389 = vmatpush1.bf16.msra.mxu0 %v333
  %390 = vmatprep.subr.bf16.mxu0 0
  %391 = vmatpush1.bf16.msra.mxu0 %v334
  %392 = vmatprep.subr.bf16.mxu0 0
  %393 = vmatpush1.bf16.msra.mxu0 %v335
  %394 = vmatprep.subr.bf16.mxu0 0
  %395 = vmatpush1.bf16.msra.mxu0 %v336
  %396 = vmatprep.subr.bf16.mxu0 0
  %397 = vmatpush1.bf16.msra.mxu0 %v337
  %398 = vmatprep.subr.bf16.mxu0 0
  %399 = vmatpush1.bf16.msra.mxu0 %v338
  %400 = vmatprep.subr.bf16.mxu0 0
  %401 = vmatpush1.bf16.msra.mxu0 %v339
  %402 = vmatprep.subr.bf16.mxu0 0
  %403 = vmatpush1.bf16.msra.mxu0 %v340
  %404 = vmatprep.subr.bf16.mxu0 0
  %405 = vmatpush1.bf16.msra.mxu0 %v341
  %406 = vmatprep.mubr.bf16.mxu0 %v183
  %407 = vmatmul.mubr.bf16.gmra.mrb[0].mxu0 %v182
  %v408 = vpop.f32.mrb[0].mxu0
  %v409 = vadd.f32 %v100, %v408
  %v410 = vpop.f32.mrb[0].mxu0
  %v411 = vpop.f32.mrb[0].mxu0
  %v412 = vadd.f32 %v100, %v411
  %v413 = vpop.f32.mrb[0].mxu0
  %414 = vmatprep.mubr.bf16.mxu0 %v186
  %415 = vmatmul.mubr.bf16.gmra.mrb[0].mxu0 %v185
  %v416 = vpop.f32.mrb[0].mxu0
  %v417 = vadd.f32 %v100, %v416
  %v418 = vpop.f32.mrb[0].mxu0
  %v419 = vpop.f32.mrb[0].mxu0
  %v420 = vadd.f32 %v100, %v419
  %v421 = vpop.f32.mrb[0].mxu0
  %422 = vmatprep.mubr.bf16.mxu0 %v189
  %423 = vmatmul.mubr.bf16.gmra.mrb[0].mxu0 %v188
  %v424 = vpop.f32.mrb[0].mxu0
  %v425 = vadd.f32 %v100, %v424
  %v426 = vpop.f32.mrb[0].mxu0
  %v427 = vpop.f32.mrb[0].mxu0
  %v428 = vadd.f32 %v100, %v427
  %v429 = vpop.f32.mrb[0].mxu0
  %430 = vmatprep.mubr.bf16.mxu0 %v192
  %431 = vmatmul.mubr.bf16.gmra.mrb[0].mxu0 %v191
  %v432 = vpop.f32.mrb[0].mxu0
  %v433 = vadd.f32 %v100, %v432
  %v434 = vpop.f32.mrb[0].mxu0
  %v435 = vpop.f32.mrb[0].mxu0
  %v436 = vadd.f32 %v100, %v435
  %v437 = vpop.f32.mrb[0].mxu0
  %438 = vmatprep.mubr.bf16.mxu0 %v195
  %439 = vmatmul.mubr.bf16.gmra.mrb[0].mxu0 %v194
  %v440 = vpop.f32.mrb[0].mxu0
  %v441 = vadd.f32 %v100, %v440
  %v442 = vpop.f32.mrb[0].mxu0
  %v443 = vpop.f32.mrb[0].mxu0
  %v444 = vadd.f32 %v100, %v443
  %v445 = vpop.f32.mrb[0].mxu0
  %446 = vmatprep.mubr.bf16.mxu0 %v198
  %447 = vmatmul.mubr.bf16.gmra.mrb[0].mxu0 %v197
  %v448 = vpop.f32.mrb[0].mxu0
  %v449 = vadd.f32 %v100, %v448
  %v450 = vpop.f32.mrb[0].mxu0
  %v451 = vpop.f32.mrb[0].mxu0
  %v452 = vadd.f32 %v100, %v451
  %v453 = vpop.f32.mrb[0].mxu0
  %454 = vmatprep.mubr.bf16.mxu0 %v201
  %455 = vmatmul.mubr.bf16.gmra.mrb[0].mxu0 %v200
  %v456 = vpop.f32.mrb[0].mxu0
  %v457 = vadd.f32 %v100, %v456
  %v458 = vpop.f32.mrb[0].mxu0
  %v459 = vpop.f32.mrb[0].mxu0
  %v460 = vadd.f32 %v100, %v459
  %v461 = vpop.f32.mrb[0].mxu0
  %462 = vmatprep.mubr.bf16.mxu0 %v204
  %463 = vmatmul.mubr.bf16.gmra.mrb[0].mxu0 %v203
  %v464 = vpop.f32.mrb[0].mxu0
  %v465 = vadd.f32 %v100, %v464
  %v466 = vpop.f32.mrb[0].mxu0
  %v467 = vpop.f32.mrb[0].mxu0
  %v468 = vadd.f32 %v100, %v467
  %v469 = vpop.f32.mrb[0].mxu0
  %470 = vdwg.mxu0
  %471 = vmatprep.subr.bf16.mxu0 0
  %472 = vmatpush1.bf16.msra.mxu0 %v342
  %473 = vmatprep.subr.bf16.mxu0 0
  %474 = vmatpush1.bf16.msra.mxu0 %v343
  %475 = vmatprep.subr.bf16.mxu0 0
  %476 = vmatpush1.bf16.msra.mxu0 %v344
  %477 = vmatprep.subr.bf16.mxu0 0
  %478 = vmatpush1.bf16.msra.mxu0 %v345
  %479 = vmatprep.subr.bf16.mxu0 0
  %480 = vmatpush1.bf16.msra.mxu0 %v346
  %481 = vmatprep.subr.bf16.mxu0 0
  %482 = vmatpush1.bf16.msra.mxu0 %v347
  %483 = vmatprep.subr.bf16.mxu0 0
  %484 = vmatpush1.bf16.msra.mxu0 %v348
  %485 = vmatprep.subr.bf16.mxu0 0
  %486 = vmatpush1.bf16.msra.mxu0 %v349
  %487 = vmatprep.subr.bf16.mxu0 0
  %488 = vmatpush1.bf16.msra.mxu0 0
  %489 = vmatprep.subr.bf16.mxu0 0
  %490 = vmatpush1.bf16.msra.mxu0 0
  %491 = vmatprep.subr.bf16.mxu0 0
  %492 = vmatpush1.bf16.msra.mxu0 0
  %493 = vmatprep.subr.bf16.mxu0 0
  %494 = vmatpush1.bf16.msra.mxu0 0
  %495 = vmatprep.subr.bf16.mxu0 0
  %496 = vmatpush1.bf16.msra.mxu0 0
  %497 = vmatprep.subr.bf16.mxu0 0
  %498 = vmatpush1.bf16.msra.mxu0 0
  %499 = vmatprep.subr.bf16.mxu0 0
  %500 = vmatpush1.bf16.msra.mxu0 0
  %501 = vmatprep.subr.bf16.mxu0 0
  %502 = vmatpush1.bf16.msra.mxu0 0
  %503 = vmatprep.mubr.bf16.mxu0 0
  %504 = vmatmul.mubr.bf16.gmra.mrb[0].mxu0 %v184
  %v505 = vpop.f32.mrb[0].mxu0
  %v506 = vadd.f32 %v409, %v505
  %v507 = vpop.f32.mrb[0].mxu0
  %v508 = vpop.f32.mrb[0].mxu0
  %v509 = vadd.f32 %v412, %v508
  %v510 = vpop.f32.mrb[0].mxu0
  %511 = vmatprep.mubr.bf16.mxu0 0
  %512 = vmatmul.mubr.bf16.gmra.mrb[0].mxu0 %v187
  %v513 = vpop.f32.mrb[0].mxu0
  %v514 = vadd.f32 %v417, %v513
  %v515 = vpop.f32.mrb[0].mxu0
  %v516 = vpop.f32.mrb[0].mxu0
  %v517 = vadd.f32 %v420, %v516
  %v518 = vpop.f32.mrb[0].mxu0
  %519 = vmatprep.mubr.bf16.mxu0 0
  %520 = vmatmul.mubr.bf16.gmra.mrb[0].mxu0 %v190
  %v521 = vpop.f32.mrb[0].mxu0
  %v522 = vadd.f32 %v425, %v521
  %v523 = vpop.f32.mrb[0].mxu0
  %v524 = vpop.f32.mrb[0].mxu0
  %v525 = vadd.f32 %v428, %v524
  %v526 = vpop.f32.mrb[0].mxu0
  %527 = vmatprep.mubr.bf16.mxu0 0
  %528 = vmatmul.mubr.bf16.gmra.mrb[0].mxu0 %v193
  %v529 = vpop.f32.mrb[0].mxu0
  %v530 = vadd.f32 %v433, %v529
  %v531 = vpop.f32.mrb[0].mxu0
  %v532 = vpop.f32.mrb[0].mxu0
  %v533 = vadd.f32 %v436, %v532
  %v534 = vpop.f32.mrb[0].mxu0
  %535 = vmatprep.mubr.bf16.mxu0 0
  %536 = vmatmul.mubr.bf16.gmra.mrb[0].mxu0 %v196
  %v537 = vpop.f32.mrb[0].mxu0
  %v538 = vadd.f32 %v441, %v537
  %v539 = vpop.f32.mrb[0].mxu0
  %v540 = vpop.f32.mrb[0].mxu0
  %v541 = vadd.f32 %v444, %v540
  %v542 = vpop.f32.mrb[0].mxu0
  %543 = vmatprep.mubr.bf16.mxu0 0
  %544 = vmatmul.mubr.bf16.gmra.mrb[0].mxu0 %v199
  %v545 = vpop.f32.mrb[0].mxu0
  %v546 = vadd.f32 %v449, %v545
  %v547 = vpop.f32.mrb[0].mxu0
  %v548 = vpop.f32.mrb[0].mxu0
  %v549 = vadd.f32 %v452, %v548
  %v550 = vpop.f32.mrb[0].mxu0
  %551 = vmatprep.mubr.bf16.mxu0 0
  %552 = vmatmul.mubr.bf16.gmra.mrb[0].mxu0 %v202
  %v553 = vpop.f32.mrb[0].mxu0
  %v554 = vadd.f32 %v457, %v553
  %v555 = vpop.f32.mrb[0].mxu0
  %v556 = vpop.f32.mrb[0].mxu0
  %v557 = vadd.f32 %v460, %v556
  %v558 = vpop.f32.mrb[0].mxu0
  %559 = vmatprep.mubr.bf16.mxu0 0
  %560 = vmatmul.mubr.bf16.gmra.mrb[0].mxu0 %v205
  %v561 = vpop.f32.mrb[0].mxu0
  %v562 = vadd.f32 %v465, %v561
  %v563 = vpop.f32.mrb[0].mxu0
  %v564 = vpop.f32.mrb[0].mxu0
  %v565 = vadd.f32 %v468, %v564
  %v566 = vpop.f32.mrb[0].mxu0
  %567 = vdwg.mxu0
  %568 = vst [vmem:[%s3] sm:$0xff] %v506
  %569 = vst [vmem:[%s3 + $0x8] sm:$0xff] %v509
  %570 = vst [vmem:[%s3 + $0x10] sm:$0xff] %v514
  %571 = vst [vmem:[%s3 + $0x18] sm:$0xff] %v517
  %572 = vst [vmem:[%s3 + $0x20] sm:$0xff] %v522
  %573 = vst [vmem:[%s3 + $0x28] sm:$0xff] %v525
  %574 = vst [vmem:[%s3 + $0x30] sm:$0xff] %v530
  %575 = vst [vmem:[%s3 + $0x38] sm:$0xff] %v533
  %576 = vst [vmem:[%s3 + $0x40] sm:$0xff] %v538
  %577 = vst [vmem:[%s3 + $0x48] sm:$0xff] %v541
  %578 = vst [vmem:[%s3 + $0x50] sm:$0xff] %v546
  %579 = vst [vmem:[%s3 + $0x58] sm:$0xff] %v549
  %580 = vst [vmem:[%s3 + $0x60] sm:$0xff] %v554
  %581 = vst [vmem:[%s3 + $0x68] sm:$0xff] %v557
  %582 = vst [vmem:[%s3 + $0x70] sm:$0xff] %v562
  %583 = vst [vmem:[%s3 + $0x78] sm:$0xff] %v565
  // Predicated region
  $region14: #{_lambda_.26} parent=0 // pred_check
    _
  $region15: #{_lambda_.26} parent=0 // pred_check_branch
    %585 = sbr.rel (0) target = $region17
  $region16: #{_lambda_.26} parent=0 // pred_region
    _
  $region17: #{_lambda_.26} parent=0 // pred_fallthru
    _
  // Predicated region
  $region18: #{_lambda_.26} parent=0 // pred_check
    _
  $region19: #{_lambda_.26} parent=0 // pred_check_branch
    %587 = sbr.rel (0) target = $region21
  $region20: #{_lambda_.26} parent=0 // pred_region
    _
  $region21: #{_lambda_.26} parent=0 // pred_fallthru
    _

// kernel: _lambda_.28
$region0: #{_lambda_.28}
  #allocation0 [shape = 'u32[]', space=smem, size = 0x4, offset = 0x4, fixed_abs, tag = 'smem constant byte address 0x4 - core index']
  #allocation1 [shape = 'u32[144,128]{1,0:T(1,128)}', space=vmem, size = 0x12000, scoped, tag = 'internal scratch']
  %s0 = inlined_call_operand.vmem [shape: bf16[128,128], index: 0, kind: input, shape index: {}]
  %s1 = inlined_call_operand.vmem [shape: bf16[128,128], index: 1, kind: input, shape index: {}]
  %s2 = inlined_call_operand.vmem [shape: f32[1,128], index: 2, kind: input, shape index: {}]
  %s3 = inlined_call_operand.vmem [shape: f32[128,128], index: 3, kind: output, shape index: {}]
  %s4 = sld [smem:[#allocation0]]
  $region22: #{_lambda_.28} parent=0
    _
  %s6 = ssub.s32 1, %s4
  %s7 = scalar_select 0, %s6, %s4
  // Predicated region
  $region2: #{_lambda_.28} parent=0 // pred_check
    _
  $region3: #{_lambda_.28} parent=0 // pred_check_branch
    %9 = sbr.rel (0) target = $region5
  $region4: #{_lambda_.28} parent=0 // pred_region
    _
  $region5: #{_lambda_.28} parent=0 // pred_fallthru
    _
  // Predicated region
  $region6: #{_lambda_.28} parent=0 // pred_check
    _
  $region7: #{_lambda_.28} parent=0 // pred_check_branch
    %11 = sbr.rel (0) target = $region9
  $region8: #{_lambda_.28} parent=0 // pred_region
    _
  $region9: #{_lambda_.28} parent=0 // pred_fallthru
    _
  // Predicated region
  $region10: #{_lambda_.28} parent=0 // pred_check
    _
  $region11: #{_lambda_.28} parent=0 // pred_check_branch
    %13 = sbr.rel (0) target = $region13
  $region12: #{_lambda_.28} parent=0 // pred_region
    _
  $region13: #{_lambda_.28} parent=0 // pred_fallthru
    _
  %v15 = vld [vmem:[%s0] sm:$0xf]
  %v16 = vld [vmem:[%s0 + $0x4] sm:$0xf]
  %v17 = vld [vmem:[%s0 + $0x8] sm:$0xf]
  %v18 = vld [vmem:[%s0 + $0xc] sm:$0xf]
  %v19 = vld [vmem:[%s0 + $0x10] sm:$0xf]
  %v20 = vld [vmem:[%s0 + $0x14] sm:$0xf]
  %v21 = vld [vmem:[%s0 + $0x18] sm:$0xf]
  %v22 = vld [vmem:[%s0 + $0x1c] sm:$0xf]
  %v23 = vld [vmem:[%s0 + $0x20] sm:$0xf]
  %v24 = vld [vmem:[%s0 + $0x24] sm:$0xf]
  %v25 = vld [vmem:[%s0 + $0x28] sm:$0xf]
  %v26 = vld [vmem:[%s0 + $0x2c] sm:$0xf]
  %v27 = vld [vmem:[%s0 + $0x30] sm:$0xf]
  %v28 = vld [vmem:[%s0 + $0x34] sm:$0xf]
  %v29 = vld [vmem:[%s0 + $0x38] sm:$0xf]
  %v30 = vld [vmem:[%s0 + $0x3c] sm:$0xf]
  %v31 = vld [vmem:[%s1] sm:$0xf]
  %v32 = vld [vmem:[%s1 + $0x4] sm:$0xf]
  %v33 = vld [vmem:[%s1 + $0x8] sm:$0xf]
  %v34 = vld [vmem:[%s1 + $0xc] sm:$0xf]
  %v35 = vld [vmem:[%s1 + $0x10] sm:$0xf]
  %v36 = vld [vmem:[%s1 + $0x14] sm:$0xf]
  %v37 = vld [vmem:[%s1 + $0x18] sm:$0xf]
  %v38 = vld [vmem:[%s1 + $0x1c] sm:$0xf]
  %v39 = vld [vmem:[%s1 + $0x20] sm:$0xf]
  %v40 = vld [vmem:[%s1 + $0x24] sm:$0xf]
  %v41 = vld [vmem:[%s1 + $0x28] sm:$0xf]
  %v42 = vld [vmem:[%s1 + $0x2c] sm:$0xf]
  %v43 = vld [vmem:[%s1 + $0x30] sm:$0xf]
  %v44 = vld [vmem:[%s1 + $0x34] sm:$0xf]
  %v45 = vld [vmem:[%s1 + $0x38] sm:$0xf]
  %v46 = vld [vmem:[%s1 + $0x3c] sm:$0xf]
  %v47 = vld [vmem:[%s2] sm:$0x1]
  %v49 = vlaneseq
  %v50 = vshrl.u32 %v49, 7
  %v51 = vsub.s32 0, %v50
  %v52 = vrot.slane %v47, %v51
  %v70 = vunpack.c.l.b16 %v15
  %v71 = vunpack.c.l.b16 %v16
  %v72 = vunpack.c.l.b16 %v17
  %v73 = vunpack.c.l.b16 %v18
  %v74 = vunpack.c.l.b16 %v19
  %v75 = vunpack.c.l.b16 %v20
  %v76 = vunpack.c.l.b16 %v21
  %v77 = vunpack.c.l.b16 %v22
  %v78 = vunpack.c.l.b16 %v23
  %v79 = vunpack.c.l.b16 %v24
  %v80 = vunpack.c.l.b16 %v25
  %v81 = vunpack.c.l.b16 %v26
  %v82 = vunpack.c.l.b16 %v27
  %v83 = vunpack.c.l.b16 %v28
  %v84 = vunpack.c.l.b16 %v29
  %v85 = vunpack.c.l.b16 %v30
  %v86 = vpack.c.b16 %v71, %v70
  %v87 = vpack.c.b16 %v73, %v72
  %v88 = vpack.c.b16 %v75, %v74
  %v89 = vpack.c.b16 %v77, %v76
  %v90 = vpack.c.b16 %v79, %v78
  %v91 = vpack.c.b16 %v81, %v80
  %v92 = vpack.c.b16 %v83, %v82
  %v93 = vpack.c.b16 %v85, %v84
  %v118 = vunpack.c.l.b16 %v31
  %v119 = vunpack.c.l.b16 %v32
  %v120 = vunpack.c.l.b16 %v33
  %v121 = vunpack.c.l.b16 %v34
  %v122 = vunpack.c.l.b16 %v35
  %v123 = vunpack.c.l.b16 %v36
  %v124 = vunpack.c.l.b16 %v37
  %v125 = vunpack.c.l.b16 %v38
  %v126 = vunpack.c.l.b16 %v39
  %v127 = vunpack.c.l.b16 %v40
  %v128 = vunpack.c.l.b16 %v41
  %v129 = vunpack.c.l.b16 %v42
  %v130 = vunpack.c.l.b16 %v43
  %v131 = vunpack.c.l.b16 %v44
  %v132 = vunpack.c.l.b16 %v45
  %v133 = vunpack.c.l.b16 %v46
  %v134 = vpack.c.b16 %v119, %v118
  %v135 = vpack.c.b16 %v121, %v120
  %v136 = vpack.c.b16 %v123, %v122
  %v137 = vpack.c.b16 %v125, %v124
  %v138 = vpack.c.b16 %v127, %v126
  %v139 = vpack.c.b16 %v129, %v128
  %v140 = vpack.c.b16 %v131, %v130
  %v141 = vpack.c.b16 %v133, %v132
  %150 = vmatprep.subr.bf16.mxu0 0
  %151 = vmatpush1.bf16.msra.mxu0 %v134
  %152 = vmatprep.subr.bf16.mxu0 0
  %153 = vmatpush1.bf16.msra.mxu0 %v135
  %154 = vmatprep.subr.bf16.mxu0 0
  %155 = vmatpush1.bf16.msra.mxu0 %v136
  %156 = vmatprep.subr.bf16.mxu0 0
  %157 = vmatpush1.bf16.msra.mxu0 %v137
  %158 = vmatprep.subr.bf16.mxu0 0
  %159 = vmatpush1.bf16.msra.mxu0 %v138
  %160 = vmatprep.subr.bf16.mxu0 0
  %161 = vmatpush1.bf16.msra.mxu0 %v139
  %162 = vmatprep.subr.bf16.mxu0 0
  %163 = vmatpush1.bf16.msra.mxu0 %v140
  %164 = vmatprep.subr.bf16.mxu0 0
  %165 = vmatpush1.bf16.msra.mxu0 %v141
  %166 = vmatprep.subr.bf16.mxu0 0
  %167 = vmatpush1.bf16.msra.mxu0 0
  %168 = vmatprep.subr.bf16.mxu0 0
  %169 = vmatpush1.bf16.msra.mxu0 0
  %170 = vmatprep.subr.bf16.mxu0 0
  %171 = vmatpush1.bf16.msra.mxu0 0
  %172 = vmatprep.subr.bf16.mxu0 0
  %173 = vmatpush1.bf16.msra.mxu0 0
  %174 = vmatprep.subr.bf16.mxu0 0
  %175 = vmatpush1.bf16.msra.mxu0 0
  %176 = vmatprep.subr.bf16.mxu0 0
  %177 = vmatpush1.bf16.msra.mxu0 0
  %178 = vmatprep.subr.bf16.mxu0 0
  %179 = vmatpush1.bf16.msra.mxu0 0
  %180 = vmatprep.subr.bf16.mxu0 0
  %181 = vmatpush1.bf16.msra.mxu0 0
  %182 = vmatprep.mubr.bf16.mxu0 0
  %183 = vmatmul.mubr.bf16.gmra.mrb[0].mxu0 %v86
  %v184 = vpop.f32.mrb[0].mxu0
  %v185 = vadd.f32 %v52, %v184
  %v186 = vpop.f32.mrb[0].mxu0
  %v187 = vpop.f32.mrb[0].mxu0
  %v188 = vadd.f32 %v52, %v187
  %v189 = vpop.f32.mrb[0].mxu0
  %190 = vmatprep.mubr.bf16.mxu0 0
  %191 = vmatmul.mubr.bf16.gmra.mrb[0].mxu0 %v87
  %v192 = vpop.f32.mrb[0].mxu0
  %v193 = vadd.f32 %v52, %v192
  %v194 = vpop.f32.mrb[0].mxu0
  %v195 = vpop.f32.mrb[0].mxu0
  %v196 = vadd.f32 %v52, %v195
  %v197 = vpop.f32.mrb[0].mxu0
  %198 = vmatprep.mubr.bf16.mxu0 0
  %199 = vmatmul.mubr.bf16.gmra.mrb[0].mxu0 %v88
  %v200 = vpop.f32.mrb[0].mxu0
  %v201 = vadd.f32 %v52, %v200
  %v202 = vpop.f32.mrb[0].mxu0
  %v203 = vpop.f32.mrb[0].mxu0
  %v204 = vadd.f32 %v52, %v203
  %v205 = vpop.f32.mrb[0].mxu0
  %206 = vmatprep.mubr.bf16.mxu0 0
  %207 = vmatmul.mubr.bf16.gmra.mrb[0].mxu0 %v89
  %v208 = vpop.f32.mrb[0].mxu0
  %v209 = vadd.f32 %v52, %v208
  %v210 = vpop.f32.mrb[0].mxu0
  %v211 = vpop.f32.mrb[0].mxu0
  %v212 = vadd.f32 %v52, %v211
  %v213 = vpop.f32.mrb[0].mxu0
  %214 = vmatprep.mubr.bf16.mxu0 0
  %215 = vmatmul.mubr.bf16.gmra.mrb[0].mxu0 %v90
  %v216 = vpop.f32.mrb[0].mxu0
  %v217 = vadd.f32 %v52, %v216
  %v218 = vpop.f32.mrb[0].mxu0
  %v219 = vpop.f32.mrb[0].mxu0
  %v220 = vadd.f32 %v52, %v219
  %v221 = vpop.f32.mrb[0].mxu0
  %222 = vmatprep.mubr.bf16.mxu0 0
  %223 = vmatmul.mubr.bf16.gmra.mrb[0].mxu0 %v91
  %v224 = vpop.f32.mrb[0].mxu0
  %v225 = vadd.f32 %v52, %v224
  %v226 = vpop.f32.mrb[0].mxu0
  %v227 = vpop.f32.mrb[0].mxu0
  %v228 = vadd.f32 %v52, %v227
  %v229 = vpop.f32.mrb[0].mxu0
  %230 = vmatprep.mubr.bf16.mxu0 0
  %231 = vmatmul.mubr.bf16.gmra.mrb[0].mxu0 %v92
  %v232 = vpop.f32.mrb[0].mxu0
  %v233 = vadd.f32 %v52, %v232
  %v234 = vpop.f32.mrb[0].mxu0
  %v235 = vpop.f32.mrb[0].mxu0
  %v236 = vadd.f32 %v52, %v235
  %v237 = vpop.f32.mrb[0].mxu0
  %238 = vmatprep.mubr.bf16.mxu0 0
  %239 = vmatmul.mubr.bf16.gmra.mrb[0].mxu0 %v93
  %v240 = vpop.f32.mrb[0].mxu0
  %v241 = vadd.f32 %v52, %v240
  %v242 = vpop.f32.mrb[0].mxu0
  %v243 = vpop.f32.mrb[0].mxu0
  %v244 = vadd.f32 %v52, %v243
  %v245 = vpop.f32.mrb[0].mxu0
  %246 = vdwg.mxu0
  %247 = vst [vmem:[%s3] sm:$0xff] %v185
  %248 = vst [vmem:[%s3 + $0x8] sm:$0xff] %v188
  %249 = vst [vmem:[%s3 + $0x10] sm:$0xff] %v193
  %250 = vst [vmem:[%s3 + $0x18] sm:$0xff] %v196
  %251 = vst [vmem:[%s3 + $0x20] sm:$0xff] %v201
  %252 = vst [vmem:[%s3 + $0x28] sm:$0xff] %v204
  %253 = vst [vmem:[%s3 + $0x30] sm:$0xff] %v209
  %254 = vst [vmem:[%s3 + $0x38] sm:$0xff] %v212
  %255 = vst [vmem:[%s3 + $0x40] sm:$0xff] %v217
  %256 = vst [vmem:[%s3 + $0x48] sm:$0xff] %v220
  %257 = vst [vmem:[%s3 + $0x50] sm:$0xff] %v225
  %258 = vst [vmem:[%s3 + $0x58] sm:$0xff] %v228
  %259 = vst [vmem:[%s3 + $0x60] sm:$0xff] %v233
  %260 = vst [vmem:[%s3 + $0x68] sm:$0xff] %v236
  %261 = vst [vmem:[%s3 + $0x70] sm:$0xff] %v241
  %262 = vst [vmem:[%s3 + $0x78] sm:$0xff] %v244
  // Predicated region
  $region14: #{_lambda_.28} parent=0 // pred_check
    _
  $region15: #{_lambda_.28} parent=0 // pred_check_branch
    %264 = sbr.rel (0) target = $region17
  $region16: #{_lambda_.28} parent=0 // pred_region
    _
  $region17: #{_lambda_.28} parent=0 // pred_fallthru
    _
  // Predicated region
  $region18: #{_lambda_.28} parent=0 // pred_check
    _
  $region19: #{_lambda_.28} parent=0 // pred_check_branch
    %266 = sbr.rel (0) target = $region21
  $region20: #{_lambda_.28} parent=0 // pred_region
    _
  $region21: #{_lambda_.28} parent=0 // pred_fallthru
    _

// kernel: _lambda_.30
$region0: #{_lambda_.30}
  #allocation0 [shape = 'u32[]', space=smem, size = 0x4, offset = 0x4, fixed_abs, tag = 'smem constant byte address 0x4 - core index']
  #allocation1 [shape = 'u32[144,128]{1,0:T(1,128)}', space=vmem, size = 0x12000, scoped, tag = 'internal scratch']
  %s0 = inlined_call_operand.vmem [shape: bf16[2048,512], index: 0, kind: input, shape index: {}]
  %s1 = inlined_call_operand.vmem [shape: bf16[512,128], index: 1, kind: input, shape index: {}]
  %s2 = inlined_call_operand.vmem [shape: f32[1,128], index: 2, kind: input, shape index: {}]
  %s3 = inlined_call_operand.vmem [shape: f32[2048,128], index: 3, kind: output, shape index: {}]
  %s4 = sld [smem:[#allocation0]]
  $region45: #{_lambda_.30} parent=0
    _
  %s6 = ssub.s32 1, %s4
  %s7 = scalar_select 0, %s6, %s4
  loop: start=0, step=1, limit=18
  $region2: #{_lambda_.30} parent=0 // loop_pre_header
    _
  $region3: #{_lambda_.30} parent=0 // loop_header
    %s9 = sphi 0, %s13
    %p10 = scmp.ge.s32.totalorder %s9, 18
    %s16 = sphi 0, %s28
    %s17 = sphi 0, %s24
    %s18 = sphi 0, %s16
    %s19 = sphi 0, %s17
    %s20 = sphi 0, %s18
    %s21 = sphi 0, %s19
    %s31 = sphi 0, %s33
    %s34 = sphi 0, %s31
    %s35 = sphi 0, %s34
    %s51 = sphi 0, %s35
    %s57 = sphi 0, %s59
    %s60 = sphi 0, %s57
    %s61 = sphi 0, %s60
    %s77 = sphi 0, %s61
    %s83 = sphi 0, %s85
    %s86 = sphi 0, %s83
    %s87 = sphi 0, %s86
    %s103 = sphi 0, %s87
    %s111 = sphi 0, %s113
    %s114 = sphi 0, %s111
    %s115 = sphi 0, %s114
    %s131 = sphi 0, %s115
  $region4: #{_lambda_.30} parent=0 // loop_header_branch
    %12 = sbr.rel (%p10) target = $region8
  $region5: #{_lambda_.30} parent=0 // loop_body
    %s14 = ssub.s32 %s9, 1
    %s15 = ssub.s32 %s9, 2
    %s22 = sadd.s32 1, %s17
    %p23 = scmp.ge.s32.totalorder %s22, 1
    %s24 = scalar_select %p23, 0, %s22
    %s25 = sadd.s32 1, %s16
    %s26 = scalar_select %p23, %s25, %s16
    %p27 = scmp.ge.s32.totalorder %s26, 16
    %s28 = scalar_select %p27, 0, %s26
    %s29 = ssub.s32 %s16, %s28
    %p30 = scmp.eq.s32.totalorder %s29, 0
    %s32 = sadd.s32 %s31, 1
    %s33 = scalar_select %p30, %s31, %s32
    %p36 = pneg %p30
    %p37 = scmp.eq.s32.totalorder %s9, 15
    %p38 = por %p36, %p37
    %p39 = scmp.ne.s32.totalorder %s31, %s34
    %p40 = scmp.eq.s32.totalorder %s9, 0
    %p41 = por %p39, %p40
    %p42 = scmp.ne.s32.totalorder %s31, %s34
    %p43 = scmp.eq.s32.totalorder %s14, 15
    %p44 = por %p42, %p43
    %p45 = scmp.ne.s32.totalorder %s34, %s35
    %p46 = scmp.eq.s32.totalorder %s14, 0
    %p47 = por %p45, %p46
    %p48 = scmp.ne.s32.totalorder %s34, %s35
    %p49 = scmp.eq.s32.totalorder %s15, 15
    %p50 = por %p48, %p49
    %p52 = scmp.ne.s32.totalorder %s35, %s51
    %p53 = scmp.eq.s32.totalorder %s15, 0
    %p54 = por %p52, %p53
    %s55 = ssub.s32 %s17, %s24
    %p56 = scmp.eq.s32.totalorder %s55, 0
    %s58 = sadd.s32 %s57, 1
    %s59 = scalar_select %p56, %s57, %s58
    %p62 = pneg %p56
    %p63 = scmp.eq.s32.totalorder %s9, 15
    %p64 = por %p62, %p63
    %p65 = scmp.ne.s32.totalorder %s57, %s60
    %p66 = scmp.eq.s32.totalorder %s9, 0
    %p67 = por %p65, %p66
    %p68 = scmp.ne.s32.totalorder %s57, %s60
    %p69 = scmp.eq.s32.totalorder %s14, 15
    %p70 = por %p68, %p69
    %p71 = scmp.ne.s32.totalorder %s60, %s61
    %p72 = scmp.eq.s32.totalorder %s14, 0
    %p73 = por %p71, %p72
    %p74 = scmp.ne.s32.totalorder %s60, %s61
    %p75 = scmp.eq.s32.totalorder %s15, 15
    %p76 = por %p74, %p75
    %p78 = scmp.ne.s32.totalorder %s61, %s77
    %p79 = scmp.eq.s32.totalorder %s15, 0
    %p80 = por %p78, %p79
    %s81 = ssub.s32 %s17, %s24
    %p82 = scmp.eq.s32.totalorder %s81, 0
    %s84 = sadd.s32 %s83, 1
    %s85 = scalar_select %p82, %s83, %s84
    %p88 = pneg %p82
    %p89 = scmp.eq.s32.totalorder %s9, 15
    %p90 = por %p88, %p89
    %p91 = scmp.ne.s32.totalorder %s83, %s86
    %p92 = scmp.eq.s32.totalorder %s9, 0
    %p93 = por %p91, %p92
    %p94 = scmp.ne.s32.totalorder %s83, %s86
    %p95 = scmp.eq.s32.totalorder %s14, 15
    %p96 = por %p94, %p95
    %p97 = scmp.ne.s32.totalorder %s86, %s87
    %p98 = scmp.eq.s32.totalorder %s14, 0
    %p99 = por %p97, %p98
    %p100 = scmp.ne.s32.totalorder %s86, %s87
    %p101 = scmp.eq.s32.totalorder %s15, 15
    %p102 = por %p100, %p101
    %p104 = scmp.ne.s32.totalorder %s87, %s103
    %p105 = scmp.eq.s32.totalorder %s15, 0
    %p106 = por %p104, %p105
    %s107 = ssub.s32 %s16, %s28
    %s108 = ssub.s32 %s17, %s24
    %s109 = sor.u32 %s107, %s108
    %p110 = scmp.eq.s32.totalorder %s109, 0
    %s112 = sadd.s32 %s111, 1
    %s113 = scalar_select %p110, %s111, %s112
    %p116 = pneg %p110
    %p117 = scmp.eq.s32.totalorder %s9, 15
    %p118 = por %p116, %p117
    %p119 = scmp.ne.s32.totalorder %s111, %s114
    %p120 = scmp.eq.s32.totalorder %s9, 0
    %p121 = por %p119, %p120
    %p122 = scmp.ne.s32.totalorder %s111, %s114
    %p123 = scmp.eq.s32.totalorder %s14, 15
    %p124 = por %p122, %p123
    %p125 = scmp.ne.s32.totalorder %s114, %s115
    %p126 = scmp.eq.s32.totalorder %s14, 0
    %p127 = por %p125, %p126
    %p128 = scmp.ne.s32.totalorder %s114, %s115
    %p129 = scmp.eq.s32.totalorder %s15, 15
    %p130 = por %p128, %p129
    %p132 = scmp.ne.s32.totalorder %s115, %s131
    %p133 = scmp.eq.s32.totalorder %s15, 0
    %p134 = por %p132, %p133
    %p135 = scmp.le.s32.totalorder 1, %s9
    %p136 = scmp.lt.s32.totalorder %s9, 17
    %p137 = pnand %p135, %p136
    %p138 = pneg %p137
    // Predicated region
    $region9: #{_lambda_.30} parent=5 // pred_check
      _
    $region10: #{_lambda_.30} parent=5 // pred_check_branch
      %140 = sbr.rel (%p137) target = $region12
    $region11: #{_lambda_.30} parent=5 // pred_region
      %s141 = ssub.s32 %s9, 1
      // Predicated region
      $region13: #{_lambda_.30} parent=11 // pred_check
        %p142 = pneg %p73
      $region14: #{_lambda_.30} parent=11 // pred_check_branch
        %144 = sbr.rel (%p142) target = $region16
      $region15: #{_lambda_.30} parent=11 // pred_region
        %p145 = scmp.lt.s32.totalorder %s19, 0
        %s146 = scalar_select %p145, %s19, 0
        %s147 = smul.addr %s146, 4
        %s148 = scalar_lea.vmem %s1, %s147
      $region16: #{_lambda_.30} parent=11 // pred_fallthru
        _
      // Predicated region
      $region17: #{_lambda_.30} parent=11 // pred_check
        %p149 = pneg %p99
      $region18: #{_lambda_.30} parent=11 // pred_check_branch
        %151 = sbr.rel (%p149) target = $region20
      $region19: #{_lambda_.30} parent=11 // pred_region
        %p152 = scmp.lt.s32.totalorder %s19, 0
        %s153 = scalar_select %p152, %s19, 0
        %s154 = scalar_lea.vmem %s2, %s153
      $region20: #{_lambda_.30} parent=11 // pred_fallthru
        _
    $region12: #{_lambda_.30} parent=5 // pred_fallthru
      _
    %p155 = scmp.lt.s32.totalorder %s9, 16
    // Predicated region
    $region21: #{_lambda_.30} parent=5 // pred_check
      %p156 = pneg %p155
    $region22: #{_lambda_.30} parent=5 // pred_check_branch
      %158 = sbr.rel (%p156) target = $region24
    $region23: #{_lambda_.30} parent=5 // pred_region
      // Predicated region
      $region25: #{_lambda_.30} parent=23 // pred_check
        %p159 = pneg %p41
      $region26: #{_lambda_.30} parent=23 // pred_check_branch
        %161 = sbr.rel (%p159) target = $region28
      $region27: #{_lambda_.30} parent=23 // pred_region
        %s162 = smul.u32 16, %s16
        %p163 = scmp.lt.s32.totalorder %s162, 255
        %s164 = scalar_select %p163, %s162, 255
        %s165 = smul.addr %s164, 4
        %s166 = smul.addr %s165, 4
        %s167 = scalar_lea.vmem %s0, %s166
        %s168 = smul.u32 16, %s16
      $region28: #{_lambda_.30} parent=23 // pred_fallthru
        _
    $region24: #{_lambda_.30} parent=5 // pred_fallthru
      _
    %p169 = scmp.le.s32.totalorder 1, %s9
    %p170 = scmp.lt.s32.totalorder %s9, 17
    %p171 = pnand %p169, %p170
    %p172 = pneg %p171
    // Predicated region
    $region29: #{_lambda_.30} parent=5 // pred_check
      _
    $region30: #{_lambda_.30} parent=5 // pred_check_branch
      %174 = sbr.rel (%p171) target = $region32
    $region31: #{_lambda_.30} parent=5 // pred_region
      %s175 = ssub.s32 %s9, 1
      %s176 = smul.u32 16, %s18
      %p177 = scmp.lt.s32.totalorder %s176, 255
      %s178 = scalar_select %p177, %s176, 255
      %s179 = smul.addr %s178, 4
      %s180 = smul.addr %s179, 4
      %s181 = scalar_lea.vmem %s0, %s180
      %p182 = pneg %p47
      %p183 = pneg %p44
      %p184 = scmp.lt.s32.totalorder %s19, 0
      %s185 = scalar_select %p184, %s19, 0
      %s186 = smul.addr %s185, 4
      %s187 = scalar_lea.vmem %s1, %s186
      %p188 = pneg %p73
      %p189 = pneg %p70
      %p190 = scmp.lt.s32.totalorder %s19, 0
      %s191 = scalar_select %p190, %s19, 0
      %s192 = scalar_lea.vmem %s2, %s191
      %p193 = pneg %p99
      %p194 = pneg %p96
      %p195 = pneg %p127
      %p196 = pneg %p124
      %s197 = smul.u32 16, %s18
      %p198 = scmp.lt.s32.totalorder %s197, 255
      %s199 = scalar_select %p198, %s197, 255
      %p200 = scmp.lt.s32.totalorder %s19, 0
      %s201 = scalar_select %p200, %s19, 0
      %s202 = sadd.s32 %s201, %s199
      %s203 = smul.addr %s202, 8
      %s204 = scalar_lea.vmem %s3, %s203
      %s205 = smul.u32 16, %s18
      %p206 = scmp.lt.s32.totalorder %s205, 255
      %s207 = scalar_select %p206, %s205, 255
      %s208 = smul.addr %s207, 4
      %s209 = smul.addr %s208, 4
      %s210 = scalar_lea.vmem %s0, %s209
      %s211 = smul.u32 16, %s18
      %p212 = scmp.lt.s32.totalorder %s19, 0
      %s213 = scalar_select %p212, %s19, 0
      %s214 = smul.addr %s213, 4
      %s215 = scalar_lea.vmem %s1, %s214
      %p216 = scmp.lt.s32.totalorder %s19, 0
      %s217 = scalar_select %p216, %s19, 0
      %s218 = scalar_lea.vmem %s2, %s217
      %s219 = smul.u32 16, %s18
      %p220 = scmp.lt.s32.totalorder %s219, 255
      %s221 = scalar_select %p220, %s219, 255
      %p222 = scmp.lt.s32.totalorder %s19, 0
      %s223 = scalar_select %p222, %s19, 0
      %s224 = sadd.s32 %s223, %s221
      %s225 = smul.addr %s224, 8
      %s226 = scalar_lea.vmem %s3, %s225
      %s227 = smul.u32 16, %s18
      %v229 = vld [vmem:[%s210] sm:$0xff]
      %v230 = vld [vmem:[%s210 + $0x8] sm:$0xff]
      %v231 = vld [vmem:[%s210 + $0x10] sm:$0xff]
      %v232 = vld [vmem:[%s210 + $0x18] sm:$0xff]
      %v233 = vld [vmem:[%s210 + $0x20] sm:$0xff]
      %v234 = vld [vmem:[%s210 + $0x28] sm:$0xff]
      %v235 = vld [vmem:[%s210 + $0x30] sm:$0xff]
      %v236 = vld [vmem:[%s210 + $0x38] sm:$0xff]
      %v237 = vld [vmem:[%s210 + $0x40] sm:$0xff]
      %v238 = vld [vmem:[%s210 + $0x48] sm:$0xff]
      %v239 = vld [vmem:[%s210 + $0x50] sm:$0xff]
      %v240 = vld [vmem:[%s210 + $0x58] sm:$0xff]
      %v241 = vld [vmem:[%s210 + $0x60] sm:$0xff]
      %v242 = vld [vmem:[%s210 + $0x68] sm:$0xff]
      %v243 = vld [vmem:[%s210 + $0x70] sm:$0xff]
      %v244 = vld [vmem:[%s210 + $0x78] sm:$0xff]
      %v245 = vld [vmem:[%s210 + $0x80] sm:$0xff]
      %v246 = vld [vmem:[%s210 + $0x88] sm:$0xff]
      %v247 = vld [vmem:[%s210 + $0x90] sm:$0xff]
      %v248 = vld [vmem:[%s210 + $0x98] sm:$0xff]
      %v249 = vld [vmem:[%s210 + $0xa0] sm:$0xff]
      %v250 = vld [vmem:[%s210 + $0xa8] sm:$0xff]
      %v251 = vld [vmem:[%s210 + $0xb0] sm:$0xff]
      %v252 = vld [vmem:[%s210 + $0xb8] sm:$0xff]
      %v253 = vld [vmem:[%s210 + $0xc0] sm:$0xff]
      %v254 = vld [vmem:[%s210 + $0xc8] sm:$0xff]
      %v255 = vld [vmem:[%s210 + $0xd0] sm:$0xff]
      %v256 = vld [vmem:[%s210 + $0xd8] sm:$0xff]
      %v257 = vld [vmem:[%s210 + $0xe0] sm:$0xff]
      %v258 = vld [vmem:[%s210 + $0xe8] sm:$0xff]
      %v259 = vld [vmem:[%s210 + $0xf0] sm:$0xff]
      %v260 = vld [vmem:[%s210 + $0xf8] sm:$0xff]
      %v261 = vld [vmem:[%s215] sm:$0xf]
      %v262 = vld [vmem:[%s215 + $0x4] sm:$0xf]
      %v263 = vld [vmem:[%s215 + $0x8] sm:$0xf]
      %v264 = vld [vmem:[%s215 + $0xc] sm:$0xf]
      %v265 = vld [vmem:[%s215 + $0x10] sm:$0xf]
      %v266 = vld [vmem:[%s215 + $0x14] sm:$0xf]
      %v267 = vld [vmem:[%s215 + $0x18] sm:$0xf]
      %v268 = vld [vmem:[%s215 + $0x1c] sm:$0xf]
      %v269 = vld [vmem:[%s215 + $0x20] sm:$0xf]
      %v270 = vld [vmem:[%s215 + $0x24] sm:$0xf]
      %v271 = vld [vmem:[%s215 + $0x28] sm:$0xf]
      %v272 = vld [vmem:[%s215 + $0x2c] sm:$0xf]
      %v273 = vld [vmem:[%s215 + $0x30] sm:$0xf]
      %v274 = vld [vmem:[%s215 + $0x34] sm:$0xf]
      %v275 = vld [vmem:[%s215 + $0x38] sm:$0xf]
      %v276 = vld [vmem:[%s215 + $0x3c] sm:$0xf]
      %v277 = vld [vmem:[%s215 + $0x40] sm:$0xf]
      %v278 = vld [vmem:[%s215 + $0x44] sm:$0xf]
      %v279 = vld [vmem:[%s215 + $0x48] sm:$0xf]
      %v280 = vld [vmem:[%s215 + $0x4c] sm:$0xf]
      %v281 = vld [vmem:[%s215 + $0x50] sm:$0xf]
      %v282 = vld [vmem:[%s215 + $0x54] sm:$0xf]
      %v283 = vld [vmem:[%s215 + $0x58] sm:$0xf]
      %v284 = vld [vmem:[%s215 + $0x5c] sm:$0xf]
      %v285 = vld [vmem:[%s215 + $0x60] sm:$0xf]
      %v286 = vld [vmem:[%s215 + $0x64] sm:$0xf]
      %v287 = vld [vmem:[%s215 + $0x68] sm:$0xf]
      %v288 = vld [vmem:[%s215 + $0x6c] sm:$0xf]
      %v289 = vld [vmem:[%s215 + $0x70] sm:$0xf]
      %v290 = vld [vmem:[%s215 + $0x74] sm:$0xf]
      %v291 = vld [vmem:[%s215 + $0x78] sm:$0xf]
      %v292 = vld [vmem:[%s215 + $0x7c] sm:$0xf]
      %v293 = vld [vmem:[%s215 + $0x80] sm:$0xf]
      %v294 = vld [vmem:[%s215 + $0x84] sm:$0xf]
      %v295 = vld [vmem:[%s215 + $0x88] sm:$0xf]
      %v296 = vld [vmem:[%s215 + $0x8c] sm:$0xf]
      %v297 = vld [vmem:[%s215 + $0x90] sm:$0xf]
      %v298 = vld [vmem:[%s215 + $0x94] sm:$0xf]
      %v299 = vld [vmem:[%s215 + $0x98] sm:$0xf]
      %v300 = vld [vmem:[%s215 + $0x9c] sm:$0xf]
      %v301 = vld [vmem:[%s215 + $0xa0] sm:$0xf]
      %v302 = vld [vmem:[%s215 + $0xa4] sm:$0xf]
      %v303 = vld [vmem:[%s215 + $0xa8] sm:$0xf]
      %v304 = vld [vmem:[%s215 + $0xac] sm:$0xf]
      %v305 = vld [vmem:[%s215 + $0xb0] sm:$0xf]
      %v306 = vld [vmem:[%s215 + $0xb4] sm:$0xf]
      %v307 = vld [vmem:[%s215 + $0xb8] sm:$0xf]
      %v308 = vld [vmem:[%s215 + $0xbc] sm:$0xf]
      %v309 = vld [vmem:[%s215 + $0xc0] sm:$0xf]
      %v310 = vld [vmem:[%s215 + $0xc4] sm:$0xf]
      %v311 = vld [vmem:[%s215 + $0xc8] sm:$0xf]
      %v312 = vld [vmem:[%s215 + $0xcc] sm:$0xf]
      %v313 = vld [vmem:[%s215 + $0xd0] sm:$0xf]
      %v314 = vld [vmem:[%s215 + $0xd4] sm:$0xf]
      %v315 = vld [vmem:[%s215 + $0xd8] sm:$0xf]
      %v316 = vld [vmem:[%s215 + $0xdc] sm:$0xf]
      %v317 = vld [vmem:[%s215 + $0xe0] sm:$0xf]
      %v318 = vld [vmem:[%s215 + $0xe4] sm:$0xf]
      %v319 = vld [vmem:[%s215 + $0xe8] sm:$0xf]
      %v320 = vld [vmem:[%s215 + $0xec] sm:$0xf]
      %v321 = vld [vmem:[%s215 + $0xf0] sm:$0xf]
      %v322 = vld [vmem:[%s215 + $0xf4] sm:$0xf]
      %v323 = vld [vmem:[%s215 + $0xf8] sm:$0xf]
      %v324 = vld [vmem:[%s215 + $0xfc] sm:$0xf]
      %v325 = vld [vmem:[%s218] sm:$0x1]
      %v327 = vlaneseq
      %v328 = vshrl.u32 %v327, 7
      %v329 = vsub.s32 0, %v328
      %v330 = vrot.slane %v325, %v329
      %v364 = vunpack.c.l.b16 %v229
      %v365 = vunpack.c.h.b16 %v229
      %v366 = vunpack.c.l.b16 %v230
      %v367 = vunpack.c.h.b16 %v230
      %v368 = vunpack.c.l.b16 %v231
      %v369 = vunpack.c.h.b16 %v231
      %v370 = vunpack.c.l.b16 %v232
      %v371 = vunpack.c.h.b16 %v232
      %v372 = vunpack.c.l.b16 %v233
      %v373 = vunpack.c.h.b16 %v233
      %v374 = vunpack.c.l.b16 %v234
      %v375 = vunpack.c.h.b16 %v234
      %v376 = vunpack.c.l.b16 %v235
      %v377 = vunpack.c.h.b16 %v235
      %v378 = vunpack.c.l.b16 %v236
      %v379 = vunpack.c.h.b16 %v236
      %v380 = vunpack.c.l.b16 %v237
      %v381 = vunpack.c.h.b16 %v237
      %v382 = vunpack.c.l.b16 %v238
      %v383 = vunpack.c.h.b16 %v238
      %v384 = vunpack.c.l.b16 %v239
      %v385 = vunpack.c.h.b16 %v239
      %v386 = vunpack.c.l.b16 %v240
      %v387 = vunpack.c.h.b16 %v240
      %v388 = vunpack.c.l.b16 %v241
      %v389 = vunpack.c.h.b16 %v241
      %v390 = vunpack.c.l.b16 %v242
      %v391 = vunpack.c.h.b16 %v242
      %v392 = vunpack.c.l.b16 %v243
      %v393 = vunpack.c.h.b16 %v243
      %v394 = vunpack.c.l.b16 %v244
      %v395 = vunpack.c.h.b16 %v244
      %v396 = vunpack.c.l.b16 %v245
      %v397 = vunpack.c.h.b16 %v245
      %v398 = vunpack.c.l.b16 %v246
      %v399 = vunpack.c.h.b16 %v246
      %v400 = vunpack.c.l.b16 %v247
      %v401 = vunpack.c.h.b16 %v247
      %v402 = vunpack.c.l.b16 %v248
      %v403 = vunpack.c.h.b16 %v248
      %v404 = vunpack.c.l.b16 %v249
      %v405 = vunpack.c.h.b16 %v249
      %v406 = vunpack.c.l.b16 %v250
      %v407 = vunpack.c.h.b16 %v250
      %v408 = vunpack.c.l.b16 %v251
      %v409 = vunpack.c.h.b16 %v251
      %v410 = vunpack.c.l.b16 %v252
      %v411 = vunpack.c.h.b16 %v252
      %v412 = vunpack.c.l.b16 %v253
      %v413 = vunpack.c.h.b16 %v253
      %v414 = vunpack.c.l.b16 %v254
      %v415 = vunpack.c.h.b16 %v254
      %v416 = vunpack.c.l.b16 %v255
      %v417 = vunpack.c.h.b16 %v255
      %v418 = vunpack.c.l.b16 %v256
      %v419 = vunpack.c.h.b16 %v256
      %v420 = vunpack.c.l.b16 %v257
      %v421 = vunpack.c.h.b16 %v257
      %v422 = vunpack.c.l.b16 %v258
      %v423 = vunpack.c.h.b16 %v258
      %v424 = vunpack.c.l.b16 %v259
      %v425 = vunpack.c.h.b16 %v259
      %v426 = vunpack.c.l.b16 %v260
      %v427 = vunpack.c.h.b16 %v260
      %v428 = vpack.c.b16 %v368, %v364
      %v429 = vpack.c.b16 %v369, %v365
      %v430 = vpack.c.b16 %v370, %v366
      %v431 = vpack.c.b16 %v371, %v367
      %v432 = vpack.c.b16 %v376, %v372
      %v433 = vpack.c.b16 %v377, %v373
      %v434 = vpack.c.b16 %v378, %v374
      %v435 = vpack.c.b16 %v379, %v375
      %v436 = vpack.c.b16 %v384, %v380
      %v437 = vpack.c.b16 %v385, %v381
      %v438 = vpack.c.b16 %v386, %v382
      %v439 = vpack.c.b16 %v387, %v383
      %v440 = vpack.c.b16 %v392, %v388
      %v441 = vpack.c.b16 %v393, %v389
      %v442 = vpack.c.b16 %v394, %v390
      %v443 = vpack.c.b16 %v395, %v391
      %v444 = vpack.c.b16 %v400, %v396
      %v445 = vpack.c.b16 %v401, %v397
      %v446 = vpack.c.b16 %v402, %v398
      %v447 = vpack.c.b16 %v403, %v399
      %v448 = vpack.c.b16 %v408, %v404
      %v449 = vpack.c.b16 %v409, %v405
      %v450 = vpack.c.b16 %v410, %v406
      %v451 = vpack.c.b16 %v411, %v407
      %v452 = vpack.c.b16 %v416, %v412
      %v453 = vpack.c.b16 %v417, %v413
      %v454 = vpack.c.b16 %v418, %v414
      %v455 = vpack.c.b16 %v419, %v415
      %v456 = vpack.c.b16 %v424, %v420
      %v457 = vpack.c.b16 %v425, %v421
      %v458 = vpack.c.b16 %v426, %v422
      %v459 = vpack.c.b16 %v427, %v423
      %v556 = vunpack.c.l.b16 %v261
      %v557 = vunpack.c.l.b16 %v262
      %v558 = vunpack.c.l.b16 %v263
      %v559 = vunpack.c.l.b16 %v264
      %v560 = vunpack.c.l.b16 %v265
      %v561 = vunpack.c.l.b16 %v266
      %v562 = vunpack.c.l.b16 %v267
      %v563 = vunpack.c.l.b16 %v268
      %v564 = vunpack.c.l.b16 %v269
      %v565 = vunpack.c.l.b16 %v270
      %v566 = vunpack.c.l.b16 %v271
      %v567 = vunpack.c.l.b16 %v272
      %v568 = vunpack.c.l.b16 %v273
      %v569 = vunpack.c.l.b16 %v274
      %v570 = vunpack.c.l.b16 %v275
      %v571 = vunpack.c.l.b16 %v276
      %v572 = vunpack.c.l.b16 %v277
      %v573 = vunpack.c.l.b16 %v278
      %v574 = vunpack.c.l.b16 %v279
      %v575 = vunpack.c.l.b16 %v280
      %v576 = vunpack.c.l.b16 %v281
      %v577 = vunpack.c.l.b16 %v282
      %v578 = vunpack.c.l.b16 %v283
      %v579 = vunpack.c.l.b16 %v284
      %v580 = vunpack.c.l.b16 %v285
      %v581 = vunpack.c.l.b16 %v286
      %v582 = vunpack.c.l.b16 %v287
      %v583 = vunpack.c.l.b16 %v288
      %v584 = vunpack.c.l.b16 %v289
      %v585 = vunpack.c.l.b16 %v290
      %v586 = vunpack.c.l.b16 %v291
      %v587 = vunpack.c.l.b16 %v292
      %v588 = vunpack.c.l.b16 %v293
      %v589 = vunpack.c.l.b16 %v294
      %v590 = vunpack.c.l.b16 %v295
      %v591 = vunpack.c.l.b16 %v296
      %v592 = vunpack.c.l.b16 %v297
      %v593 = vunpack.c.l.b16 %v298
      %v594 = vunpack.c.l.b16 %v299
      %v595 = vunpack.c.l.b16 %v300
      %v596 = vunpack.c.l.b16 %v301
      %v597 = vunpack.c.l.b16 %v302
      %v598 = vunpack.c.l.b16 %v303
      %v599 = vunpack.c.l.b16 %v304
      %v600 = vunpack.c.l.b16 %v305
      %v601 = vunpack.c.l.b16 %v306
      %v602 = vunpack.c.l.b16 %v307
      %v603 = vunpack.c.l.b16 %v308
      %v604 = vunpack.c.l.b16 %v309
      %v605 = vunpack.c.l.b16 %v310
      %v606 = vunpack.c.l.b16 %v311
      %v607 = vunpack.c.l.b16 %v312
      %v608 = vunpack.c.l.b16 %v313
      %v609 = vunpack.c.l.b16 %v314
      %v610 = vunpack.c.l.b16 %v315
      %v611 = vunpack.c.l.b16 %v316
      %v612 = vunpack.c.l.b16 %v317
      %v613 = vunpack.c.l.b16 %v318
      %v614 = vunpack.c.l.b16 %v319
      %v615 = vunpack.c.l.b16 %v320
      %v616 = vunpack.c.l.b16 %v321
      %v617 = vunpack.c.l.b16 %v322
      %v618 = vunpack.c.l.b16 %v323
      %v619 = vunpack.c.l.b16 %v324
      %v620 = vpack.c.b16 %v557, %v556
      %v621 = vpack.c.b16 %v559, %v558
      %v622 = vpack.c.b16 %v561, %v560
      %v623 = vpack.c.b16 %v563, %v562
      %v624 = vpack.c.b16 %v565, %v564
      %v625 = vpack.c.b16 %v567, %v566
      %v626 = vpack.c.b16 %v569, %v568
      %v627 = vpack.c.b16 %v571, %v570
      %v628 = vpack.c.b16 %v573, %v572
      %v629 = vpack.c.b16 %v575, %v574
      %v630 = vpack.c.b16 %v577, %v576
      %v631 = vpack.c.b16 %v579, %v578
      %v632 = vpack.c.b16 %v581, %v580
      %v633 = vpack.c.b16 %v583, %v582
      %v634 = vpack.c.b16 %v585, %v584
      %v635 = vpack.c.b16 %v587, %v586
      %v636 = vpack.c.b16 %v589, %v588
      %v637 = vpack.c.b16 %v591, %v590
      %v638 = vpack.c.b16 %v593, %v592
      %v639 = vpack.c.b16 %v595, %v594
      %v640 = vpack.c.b16 %v597, %v596
      %v641 = vpack.c.b16 %v599, %v598
      %v642 = vpack.c.b16 %v601, %v600
      %v643 = vpack.c.b16 %v603, %v602
      %v644 = vpack.c.b16 %v605, %v604
      %v645 = vpack.c.b16 %v607, %v606
      %v646 = vpack.c.b16 %v609, %v608
      %v647 = vpack.c.b16 %v611, %v610
      %v648 = vpack.c.b16 %v613, %v612
      %v649 = vpack.c.b16 %v615, %v614
      %v650 = vpack.c.b16 %v617, %v616
      %v651 = vpack.c.b16 %v619, %v618
      %684 = vmatprep.subr.bf16.mxu0 0
      %685 = vmatpush1.bf16.msra.mxu0 %v620
      %686 = vmatprep.subr.bf16.mxu0 0
      %687 = vmatpush1.bf16.msra.mxu0 %v621
      %688 = vmatprep.subr.bf16.mxu0 0
      %689 = vmatpush1.bf16.msra.mxu0 %v622
      %690 = vmatprep.subr.bf16.mxu0 0
      %691 = vmatpush1.bf16.msra.mxu0 %v623
      %692 = vmatprep.subr.bf16.mxu0 0
      %693 = vmatpush1.bf16.msra.mxu0 %v624
      %694 = vmatprep.subr.bf16.mxu0 0
      %695 = vmatpush1.bf16.msra.mxu0 %v625
      %696 = vmatprep.subr.bf16.mxu0 0
      %697 = vmatpush1.bf16.msra.mxu0 %v626
      %698 = vmatprep.subr.bf16.mxu0 0
      %699 = vmatpush1.bf16.msra.mxu0 %v627
      %700 = vmatprep.subr.bf16.mxu0 0
      %701 = vmatpush1.bf16.msra.mxu0 %v628
      %702 = vmatprep.subr.bf16.mxu0 0
      %703 = vmatpush1.bf16.msra.mxu0 %v629
      %704 = vmatprep.subr.bf16.mxu0 0
      %705 = vmatpush1.bf16.msra.mxu0 %v630
      %706 = vmatprep.subr.bf16.mxu0 0
      %707 = vmatpush1.bf16.msra.mxu0 %v631
      %708 = vmatprep.subr.bf16.mxu0 0
      %709 = vmatpush1.bf16.msra.mxu0 %v632
      %710 = vmatprep.subr.bf16.mxu0 0
      %711 = vmatpush1.bf16.msra.mxu0 %v633
      %712 = vmatprep.subr.bf16.mxu0 0
      %713 = vmatpush1.bf16.msra.mxu0 %v634
      %714 = vmatprep.subr.bf16.mxu0 0
      %715 = vmatpush1.bf16.msra.mxu0 %v635
      %716 = vmatprep.mubr.bf16.mxu0 %v429
      %717 = vmatmul.mubr.bf16.gmra.mrb[0].mxu0 %v428
      %v718 = vpop.f32.mrb[0].mxu0
      %v719 = vadd.f32 %v330, %v718
      %v720 = vpop.f32.mrb[0].mxu0
      %v721 = vpop.f32.mrb[0].mxu0
      %v722 = vadd.f32 %v330, %v721
      %v723 = vpop.f32.mrb[0].mxu0
      %724 = vmatprep.mubr.bf16.mxu0 %v433
      %725 = vmatmul.mubr.bf16.gmra.mrb[0].mxu0 %v432
      %v726 = vpop.f32.mrb[0].mxu0
      %v727 = vadd.f32 %v330, %v726
      %v728 = vpop.f32.mrb[0].mxu0
      %v729 = vpop.f32.mrb[0].mxu0
      %v730 = vadd.f32 %v330, %v729
      %v731 = vpop.f32.mrb[0].mxu0
      %732 = vmatprep.mubr.bf16.mxu0 %v437
      %733 = vmatmul.mubr.bf16.gmra.mrb[0].mxu0 %v436
      %v734 = vpop.f32.mrb[0].mxu0
      %v735 = vadd.f32 %v330, %v734
      %v736 = vpop.f32.mrb[0].mxu0
      %v737 = vpop.f32.mrb[0].mxu0
      %v738 = vadd.f32 %v330, %v737
      %v739 = vpop.f32.mrb[0].mxu0
      %740 = vmatprep.mubr.bf16.mxu0 %v441
      %741 = vmatmul.mubr.bf16.gmra.mrb[0].mxu0 %v440
      %v742 = vpop.f32.mrb[0].mxu0
      %v743 = vadd.f32 %v330, %v742
      %v744 = vpop.f32.mrb[0].mxu0
      %v745 = vpop.f32.mrb[0].mxu0
      %v746 = vadd.f32 %v330, %v745
      %v747 = vpop.f32.mrb[0].mxu0
      %748 = vmatprep.mubr.bf16.mxu0 %v445
      %749 = vmatmul.mubr.bf16.gmra.mrb[0].mxu0 %v444
      %v750 = vpop.f32.mrb[0].mxu0
      %v751 = vadd.f32 %v330, %v750
      %v752 = vpop.f32.mrb[0].mxu0
      %v753 = vpop.f32.mrb[0].mxu0
      %v754 = vadd.f32 %v330, %v753
      %v755 = vpop.f32.mrb[0].mxu0
      %756 = vmatprep.mubr.bf16.mxu0 %v449
      %757 = vmatmul.mubr.bf16.gmra.mrb[0].mxu0 %v448
      %v758 = vpop.f32.mrb[0].mxu0
      %v759 = vadd.f32 %v330, %v758
      %v760 = vpop.f32.mrb[0].mxu0
      %v761 = vpop.f32.mrb[0].mxu0
      %v762 = vadd.f32 %v330, %v761
      %v763 = vpop.f32.mrb[0].mxu0
      %764 = vmatprep.mubr.bf16.mxu0 %v453
      %765 = vmatmul.mubr.bf16.gmra.mrb[0].mxu0 %v452
      %v766 = vpop.f32.mrb[0].mxu0
      %v767 = vadd.f32 %v330, %v766
      %v768 = vpop.f32.mrb[0].mxu0
      %v769 = vpop.f32.mrb[0].mxu0
      %v770 = vadd.f32 %v330, %v769
      %v771 = vpop.f32.mrb[0].mxu0
      %772 = vmatprep.mubr.bf16.mxu0 %v457
      %773 = vmatmul.mubr.bf16.gmra.mrb[0].mxu0 %v456
      %v774 = vpop.f32.mrb[0].mxu0
      %v775 = vadd.f32 %v330, %v774
      %v776 = vpop.f32.mrb[0].mxu0
      %v777 = vpop.f32.mrb[0].mxu0
      %v778 = vadd.f32 %v330, %v777
      %v779 = vpop.f32.mrb[0].mxu0
      %780 = vdwg.mxu0
      %781 = vmatprep.subr.bf16.mxu0 0
      %782 = vmatpush1.bf16.msra.mxu0 %v636
      %783 = vmatprep.subr.bf16.mxu0 0
      %784 = vmatpush1.bf16.msra.mxu0 %v637
      %785 = vmatprep.subr.bf16.mxu0 0
      %786 = vmatpush1.bf16.msra.mxu0 %v638
      %787 = vmatprep.subr.bf16.mxu0 0
      %788 = vmatpush1.bf16.msra.mxu0 %v639
      %789 = vmatprep.subr.bf16.mxu0 0
      %790 = vmatpush1.bf16.msra.mxu0 %v640
      %791 = vmatprep.subr.bf16.mxu0 0
      %792 = vmatpush1.bf16.msra.mxu0 %v641
      %793 = vmatprep.subr.bf16.mxu0 0
      %794 = vmatpush1.bf16.msra.mxu0 %v642
      %795 = vmatprep.subr.bf16.mxu0 0
      %796 = vmatpush1.bf16.msra.mxu0 %v643
      %797 = vmatprep.subr.bf16.mxu0 0
      %798 = vmatpush1.bf16.msra.mxu0 %v644
      %799 = vmatprep.subr.bf16.mxu0 0
      %800 = vmatpush1.bf16.msra.mxu0 %v645
      %801 = vmatprep.subr.bf16.mxu0 0
      %802 = vmatpush1.bf16.msra.mxu0 %v646
      %803 = vmatprep.subr.bf16.mxu0 0
      %804 = vmatpush1.bf16.msra.mxu0 %v647
      %805 = vmatprep.subr.bf16.mxu0 0
      %806 = vmatpush1.bf16.msra.mxu0 %v648
      %807 = vmatprep.subr.bf16.mxu0 0
      %808 = vmatpush1.bf16.msra.mxu0 %v649
      %809 = vmatprep.subr.bf16.mxu0 0
      %810 = vmatpush1.bf16.msra.mxu0 %v650
      %811 = vmatprep.subr.bf16.mxu0 0
      %812 = vmatpush1.bf16.msra.mxu0 %v651
      %813 = vmatprep.mubr.bf16.mxu0 %v431
      %814 = vmatmul.mubr.bf16.gmra.mrb[0].mxu0 %v430
      %v815 = vpop.f32.mrb[0].mxu0
      %v816 = vadd.f32 %v719, %v815
      %v817 = vpop.f32.mrb[0].mxu0
      %v818 = vpop.f32.mrb[0].mxu0
      %v819 = vadd.f32 %v722, %v818
      %v820 = vpop.f32.mrb[0].mxu0
      %821 = vmatprep.mubr.bf16.mxu0 %v435
      %822 = vmatmul.mubr.bf16.gmra.mrb[0].mxu0 %v434
      %v823 = vpop.f32.mrb[0].mxu0
      %v824 = vadd.f32 %v727, %v823
      %v825 = vpop.f32.mrb[0].mxu0
      %v826 = vpop.f32.mrb[0].mxu0
      %v827 = vadd.f32 %v730, %v826
      %v828 = vpop.f32.mrb[0].mxu0
      %829 = vmatprep.mubr.bf16.mxu0 %v439
      %830 = vmatmul.mubr.bf16.gmra.mrb[0].mxu0 %v438
      %v831 = vpop.f32.mrb[0].mxu0
      %v832 = vadd.f32 %v735, %v831
      %v833 = vpop.f32.mrb[0].mxu0
      %v834 = vpop.f32.mrb[0].mxu0
      %v835 = vadd.f32 %v738, %v834
      %v836 = vpop.f32.mrb[0].mxu0
      %837 = vmatprep.mubr.bf16.mxu0 %v443
      %838 = vmatmul.mubr.bf16.gmra.mrb[0].mxu0 %v442
      %v839 = vpop.f32.mrb[0].mxu0
      %v840 = vadd.f32 %v743, %v839
      %v841 = vpop.f32.mrb[0].mxu0
      %v842 = vpop.f32.mrb[0].mxu0
      %v843 = vadd.f32 %v746, %v842
      %v844 = vpop.f32.mrb[0].mxu0
      %845 = vmatprep.mubr.bf16.mxu0 %v447
      %846 = vmatmul.mubr.bf16.gmra.mrb[0].mxu0 %v446
      %v847 = vpop.f32.mrb[0].mxu0
      %v848 = vadd.f32 %v751, %v847
      %v849 = vpop.f32.mrb[0].mxu0
      %v850 = vpop.f32.mrb[0].mxu0
      %v851 = vadd.f32 %v754, %v850
      %v852 = vpop.f32.mrb[0].mxu0
      %853 = vmatprep.mubr.bf16.mxu0 %v451
      %854 = vmatmul.mubr.bf16.gmra.mrb[0].mxu0 %v450
      %v855 = vpop.f32.mrb[0].mxu0
      %v856 = vadd.f32 %v759, %v855
      %v857 = vpop.f32.mrb[0].mxu0
      %v858 = vpop.f32.mrb[0].mxu0
      %v859 = vadd.f32 %v762, %v858
      %v860 = vpop.f32.mrb[0].mxu0
      %861 = vmatprep.mubr.bf16.mxu0 %v455
      %862 = vmatmul.mubr.bf16.gmra.mrb[0].mxu0 %v454
      %v863 = vpop.f32.mrb[0].mxu0
      %v864 = vadd.f32 %v767, %v863
      %v865 = vpop.f32.mrb[0].mxu0
      %v866 = vpop.f32.mrb[0].mxu0
      %v867 = vadd.f32 %v770, %v866
      %v868 = vpop.f32.mrb[0].mxu0
      %869 = vmatprep.mubr.bf16.mxu0 %v459
      %870 = vmatmul.mubr.bf16.gmra.mrb[0].mxu0 %v458
      %v871 = vpop.f32.mrb[0].mxu0
      %v872 = vadd.f32 %v775, %v871
      %v873 = vpop.f32.mrb[0].mxu0
      %v874 = vpop.f32.mrb[0].mxu0
      %v875 = vadd.f32 %v778, %v874
      %v876 = vpop.f32.mrb[0].mxu0
      %877 = vdwg.mxu0
      %v878 = vtanh.pop %v816
      %v879 = vtanh.pop %v819
      %v880 = vtanh.pop %v824
      %v881 = vtanh.pop %v827
      %v882 = vtanh.pop %v832
      %v883 = vtanh.pop %v835
      %v884 = vtanh.pop %v840
      %v885 = vtanh.pop %v843
      %v886 = vtanh.pop %v848
      %v887 = vtanh.pop %v851
      %v888 = vtanh.pop %v856
      %v889 = vtanh.pop %v859
      %v890 = vtanh.pop %v864
      %v891 = vtanh.pop %v867
      %v892 = vtanh.pop %v872
      %v893 = vtanh.pop %v875
      %894 = vst [vmem:[%s226] sm:$0xff] %v878
      %895 = vst [vmem:[%s226 + $0x8] sm:$0xff] %v879
      %896 = vst [vmem:[%s226 + $0x10] sm:$0xff] %v880
      %897 = vst [vmem:[%s226 + $0x18] sm:$0xff] %v881
      %898 = vst [vmem:[%s226 + $0x20] sm:$0xff] %v882
      %899 = vst [vmem:[%s226 + $0x28] sm:$0xff] %v883
      %900 = vst [vmem:[%s226 + $0x30] sm:$0xff] %v884
      %901 = vst [vmem:[%s226 + $0x38] sm:$0xff] %v885
      %902 = vst [vmem:[%s226 + $0x40] sm:$0xff] %v886
      %903 = vst [vmem:[%s226 + $0x48] sm:$0xff] %v887
      %904 = vst [vmem:[%s226 + $0x50] sm:$0xff] %v888
      %905 = vst [vmem:[%s226 + $0x58] sm:$0xff] %v889
      %906 = vst [vmem:[%s226 + $0x60] sm:$0xff] %v890
      %907 = vst [vmem:[%s226 + $0x68] sm:$0xff] %v891
      %908 = vst [vmem:[%s226 + $0x70] sm:$0xff] %v892
      %909 = vst [vmem:[%s226 + $0x78] sm:$0xff] %v893
      %s910 = smul.u32 16, %s18
      %p911 = scmp.lt.s32.totalorder %s910, 255
      %s912 = scalar_select %p911, %s910, 255
      %p913 = scmp.lt.s32.totalorder %s19, 0
      %s914 = scalar_select %p913, %s19, 0
      %s915 = sadd.s32 %s914, %s912
      %s916 = smul.addr %s915, 8
      %s917 = scalar_lea.vmem %s3, %s916
      // Predicated region
      $region33: #{_lambda_.30} parent=31 // pred_check
        %p918 = pneg %p124
      $region34: #{_lambda_.30} parent=31 // pred_check_branch
        %920 = sbr.rel (%p918) target = $region36
      $region35: #{_lambda_.30} parent=31 // pred_region
        %s921 = smul.u32 16, %s18
      $region36: #{_lambda_.30} parent=31 // pred_fallthru
        _
    $region32: #{_lambda_.30} parent=5 // pred_fallthru
      _
    %p922 = scmp.le.s32.totalorder 2, %s9
    // Predicated region
    $region37: #{_lambda_.30} parent=5 // pred_check
      %p923 = pneg %p922
    $region38: #{_lambda_.30} parent=5 // pred_check_branch
      %925 = sbr.rel (%p923) target = $region40
    $region39: #{_lambda_.30} parent=5 // pred_region
      %s926 = ssub.s32 %s9, 2
      // Predicated region
      $region41: #{_lambda_.30} parent=39 // pred_check
        %p927 = pneg %p130
      $region42: #{_lambda_.30} parent=39 // pred_check_branch
        %929 = sbr.rel (%p927) target = $region44
      $region43: #{_lambda_.30} parent=39 // pred_region
        %s930 = smul.u32 16, %s20
        %p931 = scmp.lt.s32.totalorder %s930, 255
        %s932 = scalar_select %p931, %s930, 255
        %p933 = scmp.lt.s32.totalorder %s21, 0
        %s934 = scalar_select %p933, %s21, 0
        %s935 = sadd.s32 %s934, %s932
        %s936 = smul.addr %s935, 8
        %s937 = scalar_lea.vmem %s3, %s936
      $region44: #{_lambda_.30} parent=39 // pred_fallthru
        _
    $region40: #{_lambda_.30} parent=5 // pred_fallthru
      _
  $region6: #{_lambda_.30} parent=0 // loop_footer
    %s13 = sadd.s32 1, %s9
  $region7: #{_lambda_.30} parent=0 // loop_footer_branch
    %8 = sbr.rel target = $region3
  $region8: #{_lambda_.30} parent=0 // loop_exit
    _

// kernel: _lambda_.37
$region0: #{_lambda_.37}
  #allocation0 [shape = 'u32[]', space=smem, size = 0x4, offset = 0x4, fixed_abs, tag = 'smem constant byte address 0x4 - core index']
  #allocation1 [shape = 'u32[144,128]{1,0:T(1,128)}', space=vmem, size = 0x12000, scoped, tag = 'internal scratch']
  %s0 = inlined_call_operand.vmem [shape: bf16[640,128], index: 0, kind: input, shape index: {}]
  %s1 = inlined_call_operand.vmem [shape: bf16[128,128], index: 1, kind: input, shape index: {}]
  %s2 = inlined_call_operand.vmem [shape: f32[1,128], index: 2, kind: input, shape index: {}]
  %s3 = inlined_call_operand.vmem [shape: f32[640,128], index: 3, kind: output, shape index: {}]
  %s4 = sld [smem:[#allocation0]]
  $region45: #{_lambda_.37} parent=0
    _
  %s6 = ssub.s32 1, %s4
  %s7 = scalar_select 0, %s6, %s4
  loop: start=0, step=1, limit=7
  $region2: #{_lambda_.37} parent=0 // loop_pre_header
    _
  $region3: #{_lambda_.37} parent=0 // loop_header
    %s9 = sphi 0, %s13
    %p10 = scmp.ge.s32.totalorder %s9, 7
    %s16 = sphi 0, %s28
    %s17 = sphi 0, %s24
    %s18 = sphi 0, %s16
    %s19 = sphi 0, %s17
    %s20 = sphi 0, %s18
    %s21 = sphi 0, %s19
    %s31 = sphi 0, %s33
    %s34 = sphi 0, %s31
    %s35 = sphi 0, %s34
    %s51 = sphi 0, %s35
    %s57 = sphi 0, %s59
    %s60 = sphi 0, %s57
    %s61 = sphi 0, %s60
    %s77 = sphi 0, %s61
    %s83 = sphi 0, %s85
    %s86 = sphi 0, %s83
    %s87 = sphi 0, %s86
    %s103 = sphi 0, %s87
    %s111 = sphi 0, %s113
    %s114 = sphi 0, %s111
    %s115 = sphi 0, %s114
    %s131 = sphi 0, %s115
  $region4: #{_lambda_.37} parent=0 // loop_header_branch
    %12 = sbr.rel (%p10) target = $region8
  $region5: #{_lambda_.37} parent=0 // loop_body
    %s14 = ssub.s32 %s9, 1
    %s15 = ssub.s32 %s9, 2
    %s22 = sadd.s32 1, %s17
    %p23 = scmp.ge.s32.totalorder %s22, 1
    %s24 = scalar_select %p23, 0, %s22
    %s25 = sadd.s32 1, %s16
    %s26 = scalar_select %p23, %s25, %s16
    %p27 = scmp.ge.s32.totalorder %s26, 5
    %s28 = scalar_select %p27, 0, %s26
    %s29 = ssub.s32 %s16, %s28
    %p30 = scmp.eq.s32.totalorder %s29, 0
    %s32 = sadd.s32 %s31, 1
    %s33 = scalar_select %p30, %s31, %s32
    %p36 = pneg %p30
    %p37 = scmp.eq.s32.totalorder %s9, 4
    %p38 = por %p36, %p37
    %p39 = scmp.ne.s32.totalorder %s31, %s34
    %p40 = scmp.eq.s32.totalorder %s9, 0
    %p41 = por %p39, %p40
    %p42 = scmp.ne.s32.totalorder %s31, %s34
    %p43 = scmp.eq.s32.totalorder %s14, 4
    %p44 = por %p42, %p43
    %p45 = scmp.ne.s32.totalorder %s34, %s35
    %p46 = scmp.eq.s32.totalorder %s14, 0
    %p47 = por %p45, %p46
    %p48 = scmp.ne.s32.totalorder %s34, %s35
    %p49 = scmp.eq.s32.totalorder %s15, 4
    %p50 = por %p48, %p49
    %p52 = scmp.ne.s32.totalorder %s35, %s51
    %p53 = scmp.eq.s32.totalorder %s15, 0
    %p54 = por %p52, %p53
    %s55 = ssub.s32 %s17, %s24
    %p56 = scmp.eq.s32.totalorder %s55, 0
    %s58 = sadd.s32 %s57, 1
    %s59 = scalar_select %p56, %s57, %s58
    %p62 = pneg %p56
    %p63 = scmp.eq.s32.totalorder %s9, 4
    %p64 = por %p62, %p63
    %p65 = scmp.ne.s32.totalorder %s57, %s60
    %p66 = scmp.eq.s32.totalorder %s9, 0
    %p67 = por %p65, %p66
    %p68 = scmp.ne.s32.totalorder %s57, %s60
    %p69 = scmp.eq.s32.totalorder %s14, 4
    %p70 = por %p68, %p69
    %p71 = scmp.ne.s32.totalorder %s60, %s61
    %p72 = scmp.eq.s32.totalorder %s14, 0
    %p73 = por %p71, %p72
    %p74 = scmp.ne.s32.totalorder %s60, %s61
    %p75 = scmp.eq.s32.totalorder %s15, 4
    %p76 = por %p74, %p75
    %p78 = scmp.ne.s32.totalorder %s61, %s77
    %p79 = scmp.eq.s32.totalorder %s15, 0
    %p80 = por %p78, %p79
    %s81 = ssub.s32 %s17, %s24
    %p82 = scmp.eq.s32.totalorder %s81, 0
    %s84 = sadd.s32 %s83, 1
    %s85 = scalar_select %p82, %s83, %s84
    %p88 = pneg %p82
    %p89 = scmp.eq.s32.totalorder %s9, 4
    %p90 = por %p88, %p89
    %p91 = scmp.ne.s32.totalorder %s83, %s86
    %p92 = scmp.eq.s32.totalorder %s9, 0
    %p93 = por %p91, %p92
    %p94 = scmp.ne.s32.totalorder %s83, %s86
    %p95 = scmp.eq.s32.totalorder %s14, 4
    %p96 = por %p94, %p95
    %p97 = scmp.ne.s32.totalorder %s86, %s87
    %p98 = scmp.eq.s32.totalorder %s14, 0
    %p99 = por %p97, %p98
    %p100 = scmp.ne.s32.totalorder %s86, %s87
    %p101 = scmp.eq.s32.totalorder %s15, 4
    %p102 = por %p100, %p101
    %p104 = scmp.ne.s32.totalorder %s87, %s103
    %p105 = scmp.eq.s32.totalorder %s15, 0
    %p106 = por %p104, %p105
    %s107 = ssub.s32 %s16, %s28
    %s108 = ssub.s32 %s17, %s24
    %s109 = sor.u32 %s107, %s108
    %p110 = scmp.eq.s32.totalorder %s109, 0
    %s112 = sadd.s32 %s111, 1
    %s113 = scalar_select %p110, %s111, %s112
    %p116 = pneg %p110
    %p117 = scmp.eq.s32.totalorder %s9, 4
    %p118 = por %p116, %p117
    %p119 = scmp.ne.s32.totalorder %s111, %s114
    %p120 = scmp.eq.s32.totalorder %s9, 0
    %p121 = por %p119, %p120
    %p122 = scmp.ne.s32.totalorder %s111, %s114
    %p123 = scmp.eq.s32.totalorder %s14, 4
    %p124 = por %p122, %p123
    %p125 = scmp.ne.s32.totalorder %s114, %s115
    %p126 = scmp.eq.s32.totalorder %s14, 0
    %p127 = por %p125, %p126
    %p128 = scmp.ne.s32.totalorder %s114, %s115
    %p129 = scmp.eq.s32.totalorder %s15, 4
    %p130 = por %p128, %p129
    %p132 = scmp.ne.s32.totalorder %s115, %s131
    %p133 = scmp.eq.s32.totalorder %s15, 0
    %p134 = por %p132, %p133
    %p135 = scmp.le.s32.totalorder 1, %s9
    %p136 = scmp.lt.s32.totalorder %s9, 6
    %p137 = pnand %p135, %p136
    %p138 = pneg %p137
    // Predicated region
    $region9: #{_lambda_.37} parent=5 // pred_check
      _
    $region10: #{_lambda_.37} parent=5 // pred_check_branch
      %140 = sbr.rel (%p137) target = $region12
    $region11: #{_lambda_.37} parent=5 // pred_region
      %s141 = ssub.s32 %s9, 1
      // Predicated region
      $region13: #{_lambda_.37} parent=11 // pred_check
        %p142 = pneg %p73
      $region14: #{_lambda_.37} parent=11 // pred_check_branch
        %144 = sbr.rel (%p142) target = $region16
      $region15: #{_lambda_.37} parent=11 // pred_region
        %p145 = scmp.lt.s32.totalorder %s19, 0
        %s146 = scalar_select %p145, %s19, 0
        %s147 = smul.addr %s146, 4
        %s148 = scalar_lea.vmem %s1, %s147
      $region16: #{_lambda_.37} parent=11 // pred_fallthru
        _
      // Predicated region
      $region17: #{_lambda_.37} parent=11 // pred_check
        %p149 = pneg %p99
      $region18: #{_lambda_.37} parent=11 // pred_check_branch
        %151 = sbr.rel (%p149) target = $region20
      $region19: #{_lambda_.37} parent=11 // pred_region
        %p152 = scmp.lt.s32.totalorder %s19, 0
        %s153 = scalar_select %p152, %s19, 0
        %s154 = scalar_lea.vmem %s2, %s153
      $region20: #{_lambda_.37} parent=11 // pred_fallthru
        _
    $region12: #{_lambda_.37} parent=5 // pred_fallthru
      _
    %p155 = scmp.lt.s32.totalorder %s9, 5
    // Predicated region
    $region21: #{_lambda_.37} parent=5 // pred_check
      %p156 = pneg %p155
    $region22: #{_lambda_.37} parent=5 // pred_check_branch
      %158 = sbr.rel (%p156) target = $region24
    $region23: #{_lambda_.37} parent=5 // pred_region
      // Predicated region
      $region25: #{_lambda_.37} parent=23 // pred_check
        %p159 = pneg %p41
      $region26: #{_lambda_.37} parent=23 // pred_check_branch
        %161 = sbr.rel (%p159) target = $region28
      $region27: #{_lambda_.37} parent=23 // pred_region
        %s162 = smul.u32 16, %s16
        %p163 = scmp.lt.s32.totalorder %s162, 79
        %s164 = scalar_select %p163, %s162, 79
        %s165 = smul.addr %s164, 4
        %s166 = scalar_lea.vmem %s0, %s165
        %s167 = smul.u32 16, %s16
      $region28: #{_lambda_.37} parent=23 // pred_fallthru
        _
    $region24: #{_lambda_.37} parent=5 // pred_fallthru
      _
    %p168 = scmp.le.s32.totalorder 1, %s9
    %p169 = scmp.lt.s32.totalorder %s9, 6
    %p170 = pnand %p168, %p169
    %p171 = pneg %p170
    // Predicated region
    $region29: #{_lambda_.37} parent=5 // pred_check
      _
    $region30: #{_lambda_.37} parent=5 // pred_check_branch
      %173 = sbr.rel (%p170) target = $region32
    $region31: #{_lambda_.37} parent=5 // pred_region
      %s174 = ssub.s32 %s9, 1
      %s175 = smul.u32 16, %s18
      %p176 = scmp.lt.s32.totalorder %s175, 79
      %s177 = scalar_select %p176, %s175, 79
      %s178 = smul.addr %s177, 4
      %s179 = scalar_lea.vmem %s0, %s178
      %p180 = pneg %p47
      %p181 = pneg %p44
      %p182 = scmp.lt.s32.totalorder %s19, 0
      %s183 = scalar_select %p182, %s19, 0
      %s184 = smul.addr %s183, 4
      %s185 = scalar_lea.vmem %s1, %s184
      %p186 = pneg %p73
      %p187 = pneg %p70
      %p188 = scmp.lt.s32.totalorder %s19, 0
      %s189 = scalar_select %p188, %s19, 0
      %s190 = scalar_lea.vmem %s2, %s189
      %p191 = pneg %p99
      %p192 = pneg %p96
      %p193 = pneg %p127
      %p194 = pneg %p124
      %s195 = smul.u32 16, %s18
      %p196 = scmp.lt.s32.totalorder %s195, 79
      %s197 = scalar_select %p196, %s195, 79
      %p198 = scmp.lt.s32.totalorder %s19, 0
      %s199 = scalar_select %p198, %s19, 0
      %s200 = sadd.s32 %s199, %s197
      %s201 = smul.addr %s200, 8
      %s202 = scalar_lea.vmem %s3, %s201
      %s203 = smul.u32 16, %s18
      %p204 = scmp.lt.s32.totalorder %s203, 79
      %s205 = scalar_select %p204, %s203, 79
      %s206 = smul.addr %s205, 4
      %s207 = scalar_lea.vmem %s0, %s206
      %s208 = smul.u32 16, %s18
      %p209 = scmp.lt.s32.totalorder %s19, 0
      %s210 = scalar_select %p209, %s19, 0
      %s211 = smul.addr %s210, 4
      %s212 = scalar_lea.vmem %s1, %s211
      %p213 = scmp.lt.s32.totalorder %s19, 0
      %s214 = scalar_select %p213, %s19, 0
      %s215 = scalar_lea.vmem %s2, %s214
      %s216 = smul.u32 16, %s18
      %p217 = scmp.lt.s32.totalorder %s216, 79
      %s218 = scalar_select %p217, %s216, 79
      %p219 = scmp.lt.s32.totalorder %s19, 0
      %s220 = scalar_select %p219, %s19, 0
      %s221 = sadd.s32 %s220, %s218
      %s222 = smul.addr %s221, 8
      %s223 = scalar_lea.vmem %s3, %s222
      %s224 = smul.u32 16, %s18
      %v226 = vld [vmem:[%s207] sm:$0xf]
      %v227 = vld [vmem:[%s207 + $0x4] sm:$0xf]
      %v228 = vld [vmem:[%s207 + $0x8] sm:$0xf]
      %v229 = vld [vmem:[%s207 + $0xc] sm:$0xf]
      %v230 = vld [vmem:[%s207 + $0x10] sm:$0xf]
      %v231 = vld [vmem:[%s207 + $0x14] sm:$0xf]
      %v232 = vld [vmem:[%s207 + $0x18] sm:$0xf]
      %v233 = vld [vmem:[%s207 + $0x1c] sm:$0xf]
      %v234 = vld [vmem:[%s207 + $0x20] sm:$0xf]
      %v235 = vld [vmem:[%s207 + $0x24] sm:$0xf]
      %v236 = vld [vmem:[%s207 + $0x28] sm:$0xf]
      %v237 = vld [vmem:[%s207 + $0x2c] sm:$0xf]
      %v238 = vld [vmem:[%s207 + $0x30] sm:$0xf]
      %v239 = vld [vmem:[%s207 + $0x34] sm:$0xf]
      %v240 = vld [vmem:[%s207 + $0x38] sm:$0xf]
      %v241 = vld [vmem:[%s207 + $0x3c] sm:$0xf]
      %v242 = vld [vmem:[%s212] sm:$0xf]
      %v243 = vld [vmem:[%s212 + $0x4] sm:$0xf]
      %v244 = vld [vmem:[%s212 + $0x8] sm:$0xf]
      %v245 = vld [vmem:[%s212 + $0xc] sm:$0xf]
      %v246 = vld [vmem:[%s212 + $0x10] sm:$0xf]
      %v247 = vld [vmem:[%s212 + $0x14] sm:$0xf]
      %v248 = vld [vmem:[%s212 + $0x18] sm:$0xf]
      %v249 = vld [vmem:[%s212 + $0x1c] sm:$0xf]
      %v250 = vld [vmem:[%s212 + $0x20] sm:$0xf]
      %v251 = vld [vmem:[%s212 + $0x24] sm:$0xf]
      %v252 = vld [vmem:[%s212 + $0x28] sm:$0xf]
      %v253 = vld [vmem:[%s212 + $0x2c] sm:$0xf]
      %v254 = vld [vmem:[%s212 + $0x30] sm:$0xf]
      %v255 = vld [vmem:[%s212 + $0x34] sm:$0xf]
      %v256 = vld [vmem:[%s212 + $0x38] sm:$0xf]
      %v257 = vld [vmem:[%s212 + $0x3c] sm:$0xf]
      %v258 = vld [vmem:[%s215] sm:$0x1]
      %v260 = vlaneseq
      %v261 = vshrl.u32 %v260, 7
      %v262 = vsub.s32 0, %v261
      %v263 = vrot.slane %v258, %v262
      %v281 = vunpack.c.l.b16 %v226
      %v282 = vunpack.c.l.b16 %v227
      %v283 = vunpack.c.l.b16 %v228
      %v284 = vunpack.c.l.b16 %v229
      %v285 = vunpack.c.l.b16 %v230
      %v286 = vunpack.c.l.b16 %v231
      %v287 = vunpack.c.l.b16 %v232
      %v288 = vunpack.c.l.b16 %v233
      %v289 = vunpack.c.l.b16 %v234
      %v290 = vunpack.c.l.b16 %v235
      %v291 = vunpack.c.l.b16 %v236
      %v292 = vunpack.c.l.b16 %v237
      %v293 = vunpack.c.l.b16 %v238
      %v294 = vunpack.c.l.b16 %v239
      %v295 = vunpack.c.l.b16 %v240
      %v296 = vunpack.c.l.b16 %v241
      %v297 = vpack.c.b16 %v282, %v281
      %v298 = vpack.c.b16 %v284, %v283
      %v299 = vpack.c.b16 %v286, %v285
      %v300 = vpack.c.b16 %v288, %v287
      %v301 = vpack.c.b16 %v290, %v289
      %v302 = vpack.c.b16 %v292, %v291
      %v303 = vpack.c.b16 %v294, %v293
      %v304 = vpack.c.b16 %v296, %v295
      %v329 = vunpack.c.l.b16 %v242
      %v330 = vunpack.c.l.b16 %v243
      %v331 = vunpack.c.l.b16 %v244
      %v332 = vunpack.c.l.b16 %v245
      %v333 = vunpack.c.l.b16 %v246
      %v334 = vunpack.c.l.b16 %v247
      %v335 = vunpack.c.l.b16 %v248
      %v336 = vunpack.c.l.b16 %v249
      %v337 = vunpack.c.l.b16 %v250
      %v338 = vunpack.c.l.b16 %v251
      %v339 = vunpack.c.l.b16 %v252
      %v340 = vunpack.c.l.b16 %v253
      %v341 = vunpack.c.l.b16 %v254
      %v342 = vunpack.c.l.b16 %v255
      %v343 = vunpack.c.l.b16 %v256
      %v344 = vunpack.c.l.b16 %v257
      %v345 = vpack.c.b16 %v330, %v329
      %v346 = vpack.c.b16 %v332, %v331
      %v347 = vpack.c.b16 %v334, %v333
      %v348 = vpack.c.b16 %v336, %v335
      %v349 = vpack.c.b16 %v338, %v337
      %v350 = vpack.c.b16 %v340, %v339
      %v351 = vpack.c.b16 %v342, %v341
      %v352 = vpack.c.b16 %v344, %v343
      %361 = vmatprep.subr.bf16.mxu0 0
      %362 = vmatpush1.bf16.msra.mxu0 %v345
      %363 = vmatprep.subr.bf16.mxu0 0
      %364 = vmatpush1.bf16.msra.mxu0 %v346
      %365 = vmatprep.subr.bf16.mxu0 0
      %366 = vmatpush1.bf16.msra.mxu0 %v347
      %367 = vmatprep.subr.bf16.mxu0 0
      %368 = vmatpush1.bf16.msra.mxu0 %v348
      %369 = vmatprep.subr.bf16.mxu0 0
      %370 = vmatpush1.bf16.msra.mxu0 %v349
      %371 = vmatprep.subr.bf16.mxu0 0
      %372 = vmatpush1.bf16.msra.mxu0 %v350
      %373 = vmatprep.subr.bf16.mxu0 0
      %374 = vmatpush1.bf16.msra.mxu0 %v351
      %375 = vmatprep.subr.bf16.mxu0 0
      %376 = vmatpush1.bf16.msra.mxu0 %v352
      %377 = vmatprep.subr.bf16.mxu0 0
      %378 = vmatpush1.bf16.msra.mxu0 0
      %379 = vmatprep.subr.bf16.mxu0 0
      %380 = vmatpush1.bf16.msra.mxu0 0
      %381 = vmatprep.subr.bf16.mxu0 0
      %382 = vmatpush1.bf16.msra.mxu0 0
      %383 = vmatprep.subr.bf16.mxu0 0
      %384 = vmatpush1.bf16.msra.mxu0 0
      %385 = vmatprep.subr.bf16.mxu0 0
      %386 = vmatpush1.bf16.msra.mxu0 0
      %387 = vmatprep.subr.bf16.mxu0 0
      %388 = vmatpush1.bf16.msra.mxu0 0
      %389 = vmatprep.subr.bf16.mxu0 0
      %390 = vmatpush1.bf16.msra.mxu0 0
      %391 = vmatprep.subr.bf16.mxu0 0
      %392 = vmatpush1.bf16.msra.mxu0 0
      %393 = vmatprep.mubr.bf16.mxu0 0
      %394 = vmatmul.mubr.bf16.gmra.mrb[0].mxu0 %v297
      %v395 = vpop.f32.mrb[0].mxu0
      %v396 = vadd.f32 %v263, %v395
      %v397 = vpop.f32.mrb[0].mxu0
      %v398 = vpop.f32.mrb[0].mxu0
      %v399 = vadd.f32 %v263, %v398
      %v400 = vpop.f32.mrb[0].mxu0
      %401 = vmatprep.mubr.bf16.mxu0 0
      %402 = vmatmul.mubr.bf16.gmra.mrb[0].mxu0 %v298
      %v403 = vpop.f32.mrb[0].mxu0
      %v404 = vadd.f32 %v263, %v403
      %v405 = vpop.f32.mrb[0].mxu0
      %v406 = vpop.f32.mrb[0].mxu0
      %v407 = vadd.f32 %v263, %v406
      %v408 = vpop.f32.mrb[0].mxu0
      %409 = vmatprep.mubr.bf16.mxu0 0
      %410 = vmatmul.mubr.bf16.gmra.mrb[0].mxu0 %v299
      %v411 = vpop.f32.mrb[0].mxu0
      %v412 = vadd.f32 %v263, %v411
      %v413 = vpop.f32.mrb[0].mxu0
      %v414 = vpop.f32.mrb[0].mxu0
      %v415 = vadd.f32 %v263, %v414
      %v416 = vpop.f32.mrb[0].mxu0
      %417 = vmatprep.mubr.bf16.mxu0 0
      %418 = vmatmul.mubr.bf16.gmra.mrb[0].mxu0 %v300
      %v419 = vpop.f32.mrb[0].mxu0
      %v420 = vadd.f32 %v263, %v419
      %v421 = vpop.f32.mrb[0].mxu0
      %v422 = vpop.f32.mrb[0].mxu0
      %v423 = vadd.f32 %v263, %v422
      %v424 = vpop.f32.mrb[0].mxu0
      %425 = vmatprep.mubr.bf16.mxu0 0
      %426 = vmatmul.mubr.bf16.gmra.mrb[0].mxu0 %v301
      %v427 = vpop.f32.mrb[0].mxu0
      %v428 = vadd.f32 %v263, %v427
      %v429 = vpop.f32.mrb[0].mxu0
      %v430 = vpop.f32.mrb[0].mxu0
      %v431 = vadd.f32 %v263, %v430
      %v432 = vpop.f32.mrb[0].mxu0
      %433 = vmatprep.mubr.bf16.mxu0 0
      %434 = vmatmul.mubr.bf16.gmra.mrb[0].mxu0 %v302
      %v435 = vpop.f32.mrb[0].mxu0
      %v436 = vadd.f32 %v263, %v435
      %v437 = vpop.f32.mrb[0].mxu0
      %v438 = vpop.f32.mrb[0].mxu0
      %v439 = vadd.f32 %v263, %v438
      %v440 = vpop.f32.mrb[0].mxu0
      %441 = vmatprep.mubr.bf16.mxu0 0
      %442 = vmatmul.mubr.bf16.gmra.mrb[0].mxu0 %v303
      %v443 = vpop.f32.mrb[0].mxu0
      %v444 = vadd.f32 %v263, %v443
      %v445 = vpop.f32.mrb[0].mxu0
      %v446 = vpop.f32.mrb[0].mxu0
      %v447 = vadd.f32 %v263, %v446
      %v448 = vpop.f32.mrb[0].mxu0
      %449 = vmatprep.mubr.bf16.mxu0 0
      %450 = vmatmul.mubr.bf16.gmra.mrb[0].mxu0 %v304
      %v451 = vpop.f32.mrb[0].mxu0
      %v452 = vadd.f32 %v263, %v451
      %v453 = vpop.f32.mrb[0].mxu0
      %v454 = vpop.f32.mrb[0].mxu0
      %v455 = vadd.f32 %v263, %v454
      %v456 = vpop.f32.mrb[0].mxu0
      %457 = vdwg.mxu0
      %vm458 = vcmp.gt.f32.partialorder %v396, 0.0
      %vm459 = vcmp.gt.f32.partialorder %v399, 0.0
      %vm460 = vcmp.gt.f32.partialorder %v404, 0.0
      %vm461 = vcmp.gt.f32.partialorder %v407, 0.0
      %vm462 = vcmp.gt.f32.partialorder %v412, 0.0
      %vm463 = vcmp.gt.f32.partialorder %v415, 0.0
      %vm464 = vcmp.gt.f32.partialorder %v420, 0.0
      %vm465 = vcmp.gt.f32.partialorder %v423, 0.0
      %vm466 = vcmp.gt.f32.partialorder %v428, 0.0
      %vm467 = vcmp.gt.f32.partialorder %v431, 0.0
      %vm468 = vcmp.gt.f32.partialorder %v436, 0.0
      %vm469 = vcmp.gt.f32.partialorder %v439, 0.0
      %vm470 = vcmp.gt.f32.partialorder %v444, 0.0
      %vm471 = vcmp.gt.f32.partialorder %v447, 0.0
      %vm472 = vcmp.gt.f32.partialorder %v452, 0.0
      %vm473 = vcmp.gt.f32.partialorder %v455, 0.0
      %v474 = vmul.f32 %v396, 0.2
      %v475 = vmul.f32 %v399, 0.2
      %v476 = vmul.f32 %v404, 0.2
      %v477 = vmul.f32 %v407, 0.2
      %v478 = vmul.f32 %v412, 0.2
      %v479 = vmul.f32 %v415, 0.2
      %v480 = vmul.f32 %v420, 0.2
      %v481 = vmul.f32 %v423, 0.2
      %v482 = vmul.f32 %v428, 0.2
      %v483 = vmul.f32 %v431, 0.2
      %v484 = vmul.f32 %v436, 0.2
      %v485 = vmul.f32 %v439, 0.2
      %v486 = vmul.f32 %v444, 0.2
      %v487 = vmul.f32 %v447, 0.2
      %v488 = vmul.f32 %v452, 0.2
      %v489 = vmul.f32 %v455, 0.2
      %v490 = vsel %vm458, %v396, %v474
      %v491 = vsel %vm459, %v399, %v475
      %v492 = vsel %vm460, %v404, %v476
      %v493 = vsel %vm461, %v407, %v477
      %v494 = vsel %vm462, %v412, %v478
      %v495 = vsel %vm463, %v415, %v479
      %v496 = vsel %vm464, %v420, %v480
      %v497 = vsel %vm465, %v423, %v481
      %v498 = vsel %vm466, %v428, %v482
      %v499 = vsel %vm467, %v431, %v483
      %v500 = vsel %vm468, %v436, %v484
      %v501 = vsel %vm469, %v439, %v485
      %v502 = vsel %vm470, %v444, %v486
      %v503 = vsel %vm471, %v447, %v487
      %v504 = vsel %vm472, %v452, %v488
      %v505 = vsel %vm473, %v455, %v489
      %506 = vst [vmem:[%s223] sm:$0xff] %v490
      %507 = vst [vmem:[%s223 + $0x8] sm:$0xff] %v491
      %508 = vst [vmem:[%s223 + $0x10] sm:$0xff] %v492
      %509 = vst [vmem:[%s223 + $0x18] sm:$0xff] %v493
      %510 = vst [vmem:[%s223 + $0x20] sm:$0xff] %v494
      %511 = vst [vmem:[%s223 + $0x28] sm:$0xff] %v495
      %512 = vst [vmem:[%s223 + $0x30] sm:$0xff] %v496
      %513 = vst [vmem:[%s223 + $0x38] sm:$0xff] %v497
      %514 = vst [vmem:[%s223 + $0x40] sm:$0xff] %v498
      %515 = vst [vmem:[%s223 + $0x48] sm:$0xff] %v499
      %516 = vst [vmem:[%s223 + $0x50] sm:$0xff] %v500
      %517 = vst [vmem:[%s223 + $0x58] sm:$0xff] %v501
      %518 = vst [vmem:[%s223 + $0x60] sm:$0xff] %v502
      %519 = vst [vmem:[%s223 + $0x68] sm:$0xff] %v503
      %520 = vst [vmem:[%s223 + $0x70] sm:$0xff] %v504
      %521 = vst [vmem:[%s223 + $0x78] sm:$0xff] %v505
      %s522 = smul.u32 16, %s18
      %p523 = scmp.lt.s32.totalorder %s522, 79
      %s524 = scalar_select %p523, %s522, 79
      %p525 = scmp.lt.s32.totalorder %s19, 0
      %s526 = scalar_select %p525, %s19, 0
      %s527 = sadd.s32 %s526, %s524
      %s528 = smul.addr %s527, 8
      %s529 = scalar_lea.vmem %s3, %s528
      // Predicated region
      $region33: #{_lambda_.37} parent=31 // pred_check
        %p530 = pneg %p124
      $region34: #{_lambda_.37} parent=31 // pred_check_branch
        %532 = sbr.rel (%p530) target = $region36
      $region35: #{_lambda_.37} parent=31 // pred_region
        %s533 = smul.u32 16, %s18
      $region36: #{_lambda_.37} parent=31 // pred_fallthru
        _
    $region32: #{_lambda_.37} parent=5 // pred_fallthru
      _
    %p534 = scmp.le.s32.totalorder 2, %s9
    // Predicated region
    $region37: #{_lambda_.37} parent=5 // pred_check
      %p535 = pneg %p534
    $region38: #{_lambda_.37} parent=5 // pred_check_branch
      %537 = sbr.rel (%p535) target = $region40
    $region39: #{_lambda_.37} parent=5 // pred_region
      %s538 = ssub.s32 %s9, 2
      // Predicated region
      $region41: #{_lambda_.37} parent=39 // pred_check
        %p539 = pneg %p130
      $region42: #{_lambda_.37} parent=39 // pred_check_branch
        %541 = sbr.rel (%p539) target = $region44
      $region43: #{_lambda_.37} parent=39 // pred_region
        %s542 = smul.u32 16, %s20
        %p543 = scmp.lt.s32.totalorder %s542, 79
        %s544 = scalar_select %p543, %s542, 79
        %p545 = scmp.lt.s32.totalorder %s21, 0
        %s546 = scalar_select %p545, %s21, 0
        %s547 = sadd.s32 %s546, %s544
        %s548 = smul.addr %s547, 8
        %s549 = scalar_lea.vmem %s3, %s548
      $region44: #{_lambda_.37} parent=39 // pred_fallthru
        _
    $region40: #{_lambda_.37} parent=5 // pred_fallthru
      _
  $region6: #{_lambda_.37} parent=0 // loop_footer
    %s13 = sadd.s32 1, %s9
  $region7: #{_lambda_.37} parent=0 // loop_footer_branch
    %8 = sbr.rel target = $region3
  $region8: #{_lambda_.37} parent=0 // loop_exit
    _

// kernel: _lambda_.38
$region0: #{_lambda_.38}
  #allocation0 [shape = 'u32[]', space=smem, size = 0x4, offset = 0x4, fixed_abs, tag = 'smem constant byte address 0x4 - core index']
  #allocation1 [shape = 'u32[144,128]{1,0:T(1,128)}', space=vmem, size = 0x12000, scoped, tag = 'internal scratch']
  %s0 = inlined_call_operand.vmem [shape: bf16[256,128], index: 0, kind: input, shape index: {}]
  %s1 = inlined_call_operand.vmem [shape: bf16[128,128], index: 1, kind: input, shape index: {}]
  %s2 = inlined_call_operand.vmem [shape: f32[1,128], index: 2, kind: input, shape index: {}]
  %s3 = inlined_call_operand.vmem [shape: f32[256,128], index: 3, kind: output, shape index: {}]
  %s4 = sld [smem:[#allocation0]]
  $region45: #{_lambda_.38} parent=0
    _
  %s6 = ssub.s32 1, %s4
  %s7 = scalar_select 0, %s6, %s4
  loop: start=0, step=1, limit=4
  $region2: #{_lambda_.38} parent=0 // loop_pre_header
    _
  $region3: #{_lambda_.38} parent=0 // loop_header
    %s9 = sphi 0, %s13
    %p10 = scmp.ge.s32.totalorder %s9, 4
    %s16 = sphi 0, %s28
    %s17 = sphi 0, %s24
    %s18 = sphi 0, %s16
    %s19 = sphi 0, %s17
    %s20 = sphi 0, %s18
    %s21 = sphi 0, %s19
    %s31 = sphi 0, %s33
    %s34 = sphi 0, %s31
    %s35 = sphi 0, %s34
    %s51 = sphi 0, %s35
    %s57 = sphi 0, %s59
    %s60 = sphi 0, %s57
    %s61 = sphi 0, %s60
    %s77 = sphi 0, %s61
    %s83 = sphi 0, %s85
    %s86 = sphi 0, %s83
    %s87 = sphi 0, %s86
    %s103 = sphi 0, %s87
    %s111 = sphi 0, %s113
    %s114 = sphi 0, %s111
    %s115 = sphi 0, %s114
    %s131 = sphi 0, %s115
  $region4: #{_lambda_.38} parent=0 // loop_header_branch
    %12 = sbr.rel (%p10) target = $region8
  $region5: #{_lambda_.38} parent=0 // loop_body
    %s14 = ssub.s32 %s9, 1
    %s15 = ssub.s32 %s9, 2
    %s22 = sadd.s32 1, %s17
    %p23 = scmp.ge.s32.totalorder %s22, 1
    %s24 = scalar_select %p23, 0, %s22
    %s25 = sadd.s32 1, %s16
    %s26 = scalar_select %p23, %s25, %s16
    %p27 = scmp.ge.s32.totalorder %s26, 2
    %s28 = scalar_select %p27, 0, %s26
    %s29 = ssub.s32 %s16, %s28
    %p30 = scmp.eq.s32.totalorder %s29, 0
    %s32 = sadd.s32 %s31, 1
    %s33 = scalar_select %p30, %s31, %s32
    %p36 = pneg %p30
    %p37 = scmp.eq.s32.totalorder %s9, 1
    %p38 = por %p36, %p37
    %p39 = scmp.ne.s32.totalorder %s31, %s34
    %p40 = scmp.eq.s32.totalorder %s9, 0
    %p41 = por %p39, %p40
    %p42 = scmp.ne.s32.totalorder %s31, %s34
    %p43 = scmp.eq.s32.totalorder %s14, 1
    %p44 = por %p42, %p43
    %p45 = scmp.ne.s32.totalorder %s34, %s35
    %p46 = scmp.eq.s32.totalorder %s14, 0
    %p47 = por %p45, %p46
    %p48 = scmp.ne.s32.totalorder %s34, %s35
    %p49 = scmp.eq.s32.totalorder %s15, 1
    %p50 = por %p48, %p49
    %p52 = scmp.ne.s32.totalorder %s35, %s51
    %p53 = scmp.eq.s32.totalorder %s15, 0
    %p54 = por %p52, %p53
    %s55 = ssub.s32 %s17, %s24
    %p56 = scmp.eq.s32.totalorder %s55, 0
    %s58 = sadd.s32 %s57, 1
    %s59 = scalar_select %p56, %s57, %s58
    %p62 = pneg %p56
    %p63 = scmp.eq.s32.totalorder %s9, 1
    %p64 = por %p62, %p63
    %p65 = scmp.ne.s32.totalorder %s57, %s60
    %p66 = scmp.eq.s32.totalorder %s9, 0
    %p67 = por %p65, %p66
    %p68 = scmp.ne.s32.totalorder %s57, %s60
    %p69 = scmp.eq.s32.totalorder %s14, 1
    %p70 = por %p68, %p69
    %p71 = scmp.ne.s32.totalorder %s60, %s61
    %p72 = scmp.eq.s32.totalorder %s14, 0
    %p73 = por %p71, %p72
    %p74 = scmp.ne.s32.totalorder %s60, %s61
    %p75 = scmp.eq.s32.totalorder %s15, 1
    %p76 = por %p74, %p75
    %p78 = scmp.ne.s32.totalorder %s61, %s77
    %p79 = scmp.eq.s32.totalorder %s15, 0
    %p80 = por %p78, %p79
    %s81 = ssub.s32 %s17, %s24
    %p82 = scmp.eq.s32.totalorder %s81, 0
    %s84 = sadd.s32 %s83, 1
    %s85 = scalar_select %p82, %s83, %s84
    %p88 = pneg %p82
    %p89 = scmp.eq.s32.totalorder %s9, 1
    %p90 = por %p88, %p89
    %p91 = scmp.ne.s32.totalorder %s83, %s86
    %p92 = scmp.eq.s32.totalorder %s9, 0
    %p93 = por %p91, %p92
    %p94 = scmp.ne.s32.totalorder %s83, %s86
    %p95 = scmp.eq.s32.totalorder %s14, 1
    %p96 = por %p94, %p95
    %p97 = scmp.ne.s32.totalorder %s86, %s87
    %p98 = scmp.eq.s32.totalorder %s14, 0
    %p99 = por %p97, %p98
    %p100 = scmp.ne.s32.totalorder %s86, %s87
    %p101 = scmp.eq.s32.totalorder %s15, 1
    %p102 = por %p100, %p101
    %p104 = scmp.ne.s32.totalorder %s87, %s103
    %p105 = scmp.eq.s32.totalorder %s15, 0
    %p106 = por %p104, %p105
    %s107 = ssub.s32 %s16, %s28
    %s108 = ssub.s32 %s17, %s24
    %s109 = sor.u32 %s107, %s108
    %p110 = scmp.eq.s32.totalorder %s109, 0
    %s112 = sadd.s32 %s111, 1
    %s113 = scalar_select %p110, %s111, %s112
    %p116 = pneg %p110
    %p117 = scmp.eq.s32.totalorder %s9, 1
    %p118 = por %p116, %p117
    %p119 = scmp.ne.s32.totalorder %s111, %s114
    %p120 = scmp.eq.s32.totalorder %s9, 0
    %p121 = por %p119, %p120
    %p122 = scmp.ne.s32.totalorder %s111, %s114
    %p123 = scmp.eq.s32.totalorder %s14, 1
    %p124 = por %p122, %p123
    %p125 = scmp.ne.s32.totalorder %s114, %s115
    %p126 = scmp.eq.s32.totalorder %s14, 0
    %p127 = por %p125, %p126
    %p128 = scmp.ne.s32.totalorder %s114, %s115
    %p129 = scmp.eq.s32.totalorder %s15, 1
    %p130 = por %p128, %p129
    %p132 = scmp.ne.s32.totalorder %s115, %s131
    %p133 = scmp.eq.s32.totalorder %s15, 0
    %p134 = por %p132, %p133
    %p135 = scmp.le.s32.totalorder 1, %s9
    %p136 = scmp.lt.s32.totalorder %s9, 3
    %p137 = pnand %p135, %p136
    %p138 = pneg %p137
    // Predicated region
    $region9: #{_lambda_.38} parent=5 // pred_check
      _
    $region10: #{_lambda_.38} parent=5 // pred_check_branch
      %140 = sbr.rel (%p137) target = $region12
    $region11: #{_lambda_.38} parent=5 // pred_region
      %s141 = ssub.s32 %s9, 1
      // Predicated region
      $region13: #{_lambda_.38} parent=11 // pred_check
        %p142 = pneg %p73
      $region14: #{_lambda_.38} parent=11 // pred_check_branch
        %144 = sbr.rel (%p142) target = $region16
      $region15: #{_lambda_.38} parent=11 // pred_region
        %p145 = scmp.lt.s32.totalorder %s19, 0
        %s146 = scalar_select %p145, %s19, 0
        %s147 = smul.addr %s146, 4
        %s148 = scalar_lea.vmem %s1, %s147
      $region16: #{_lambda_.38} parent=11 // pred_fallthru
        _
      // Predicated region
      $region17: #{_lambda_.38} parent=11 // pred_check
        %p149 = pneg %p99
      $region18: #{_lambda_.38} parent=11 // pred_check_branch
        %151 = sbr.rel (%p149) target = $region20
      $region19: #{_lambda_.38} parent=11 // pred_region
        %p152 = scmp.lt.s32.totalorder %s19, 0
        %s153 = scalar_select %p152, %s19, 0
        %s154 = scalar_lea.vmem %s2, %s153
      $region20: #{_lambda_.38} parent=11 // pred_fallthru
        _
    $region12: #{_lambda_.38} parent=5 // pred_fallthru
      _
    %p155 = scmp.lt.s32.totalorder %s9, 2
    // Predicated region
    $region21: #{_lambda_.38} parent=5 // pred_check
      %p156 = pneg %p155
    $region22: #{_lambda_.38} parent=5 // pred_check_branch
      %158 = sbr.rel (%p156) target = $region24
    $region23: #{_lambda_.38} parent=5 // pred_region
      // Predicated region
      $region25: #{_lambda_.38} parent=23 // pred_check
        %p159 = pneg %p41
      $region26: #{_lambda_.38} parent=23 // pred_check_branch
        %161 = sbr.rel (%p159) target = $region28
      $region27: #{_lambda_.38} parent=23 // pred_region
        %s162 = smul.u32 16, %s16
        %p163 = scmp.lt.s32.totalorder %s162, 31
        %s164 = scalar_select %p163, %s162, 31
        %s165 = smul.addr %s164, 4
        %s166 = scalar_lea.vmem %s0, %s165
        %s167 = smul.u32 16, %s16
      $region28: #{_lambda_.38} parent=23 // pred_fallthru
        _
    $region24: #{_lambda_.38} parent=5 // pred_fallthru
      _
    %p168 = scmp.le.s32.totalorder 1, %s9
    %p169 = scmp.lt.s32.totalorder %s9, 3
    %p170 = pnand %p168, %p169
    %p171 = pneg %p170
    // Predicated region
    $region29: #{_lambda_.38} parent=5 // pred_check
      _
    $region30: #{_lambda_.38} parent=5 // pred_check_branch
      %173 = sbr.rel (%p170) target = $region32
    $region31: #{_lambda_.38} parent=5 // pred_region
      %s174 = ssub.s32 %s9, 1
      %s175 = smul.u32 16, %s18
      %p176 = scmp.lt.s32.totalorder %s175, 31
      %s177 = scalar_select %p176, %s175, 31
      %s178 = smul.addr %s177, 4
      %s179 = scalar_lea.vmem %s0, %s178
      %p180 = pneg %p47
      %p181 = pneg %p44
      %p182 = scmp.lt.s32.totalorder %s19, 0
      %s183 = scalar_select %p182, %s19, 0
      %s184 = smul.addr %s183, 4
      %s185 = scalar_lea.vmem %s1, %s184
      %p186 = pneg %p73
      %p187 = pneg %p70
      %p188 = scmp.lt.s32.totalorder %s19, 0
      %s189 = scalar_select %p188, %s19, 0
      %s190 = scalar_lea.vmem %s2, %s189
      %p191 = pneg %p99
      %p192 = pneg %p96
      %p193 = pneg %p127
      %p194 = pneg %p124
      %s195 = smul.u32 16, %s18
      %p196 = scmp.lt.s32.totalorder %s195, 31
      %s197 = scalar_select %p196, %s195, 31
      %p198 = scmp.lt.s32.totalorder %s19, 0
      %s199 = scalar_select %p198, %s19, 0
      %s200 = sadd.s32 %s199, %s197
      %s201 = smul.addr %s200, 8
      %s202 = scalar_lea.vmem %s3, %s201
      %s203 = smul.u32 16, %s18
      %p204 = scmp.lt.s32.totalorder %s203, 31
      %s205 = scalar_select %p204, %s203, 31
      %s206 = smul.addr %s205, 4
      %s207 = scalar_lea.vmem %s0, %s206
      %s208 = smul.u32 16, %s18
      %p209 = scmp.lt.s32.totalorder %s19, 0
      %s210 = scalar_select %p209, %s19, 0
      %s211 = smul.addr %s210, 4
      %s212 = scalar_lea.vmem %s1, %s211
      %p213 = scmp.lt.s32.totalorder %s19, 0
      %s214 = scalar_select %p213, %s19, 0
      %s215 = scalar_lea.vmem %s2, %s214
      %s216 = smul.u32 16, %s18
      %p217 = scmp.lt.s32.totalorder %s216, 31
      %s218 = scalar_select %p217, %s216, 31
      %p219 = scmp.lt.s32.totalorder %s19, 0
      %s220 = scalar_select %p219, %s19, 0
      %s221 = sadd.s32 %s220, %s218
      %s222 = smul.addr %s221, 8
      %s223 = scalar_lea.vmem %s3, %s222
      %s224 = smul.u32 16, %s18
      %v226 = vld [vmem:[%s207] sm:$0xf]
      %v227 = vld [vmem:[%s207 + $0x4] sm:$0xf]
      %v228 = vld [vmem:[%s207 + $0x8] sm:$0xf]
      %v229 = vld [vmem:[%s207 + $0xc] sm:$0xf]
      %v230 = vld [vmem:[%s207 + $0x10] sm:$0xf]
      %v231 = vld [vmem:[%s207 + $0x14] sm:$0xf]
      %v232 = vld [vmem:[%s207 + $0x18] sm:$0xf]
      %v233 = vld [vmem:[%s207 + $0x1c] sm:$0xf]
      %v234 = vld [vmem:[%s207 + $0x20] sm:$0xf]
      %v235 = vld [vmem:[%s207 + $0x24] sm:$0xf]
      %v236 = vld [vmem:[%s207 + $0x28] sm:$0xf]
      %v237 = vld [vmem:[%s207 + $0x2c] sm:$0xf]
      %v238 = vld [vmem:[%s207 + $0x30] sm:$0xf]
      %v239 = vld [vmem:[%s207 + $0x34] sm:$0xf]
      %v240 = vld [vmem:[%s207 + $0x38] sm:$0xf]
      %v241 = vld [vmem:[%s207 + $0x3c] sm:$0xf]
      %v242 = vld [vmem:[%s212] sm:$0xf]
      %v243 = vld [vmem:[%s212 + $0x4] sm:$0xf]
      %v244 = vld [vmem:[%s212 + $0x8] sm:$0xf]
      %v245 = vld [vmem:[%s212 + $0xc] sm:$0xf]
      %v246 = vld [vmem:[%s212 + $0x10] sm:$0xf]
      %v247 = vld [vmem:[%s212 + $0x14] sm:$0xf]
      %v248 = vld [vmem:[%s212 + $0x18] sm:$0xf]
      %v249 = vld [vmem:[%s212 + $0x1c] sm:$0xf]
      %v250 = vld [vmem:[%s212 + $0x20] sm:$0xf]
      %v251 = vld [vmem:[%s212 + $0x24] sm:$0xf]
      %v252 = vld [vmem:[%s212 + $0x28] sm:$0xf]
      %v253 = vld [vmem:[%s212 + $0x2c] sm:$0xf]
      %v254 = vld [vmem:[%s212 + $0x30] sm:$0xf]
      %v255 = vld [vmem:[%s212 + $0x34] sm:$0xf]
      %v256 = vld [vmem:[%s212 + $0x38] sm:$0xf]
      %v257 = vld [vmem:[%s212 + $0x3c] sm:$0xf]
      %v258 = vld [vmem:[%s215] sm:$0x1]
      %v260 = vlaneseq
      %v261 = vshrl.u32 %v260, 7
      %v262 = vsub.s32 0, %v261
      %v263 = vrot.slane %v258, %v262
      %v281 = vunpack.c.l.b16 %v226
      %v282 = vunpack.c.l.b16 %v227
      %v283 = vunpack.c.l.b16 %v228
      %v284 = vunpack.c.l.b16 %v229
      %v285 = vunpack.c.l.b16 %v230
      %v286 = vunpack.c.l.b16 %v231
      %v287 = vunpack.c.l.b16 %v232
      %v288 = vunpack.c.l.b16 %v233
      %v289 = vunpack.c.l.b16 %v234
      %v290 = vunpack.c.l.b16 %v235
      %v291 = vunpack.c.l.b16 %v236
      %v292 = vunpack.c.l.b16 %v237
      %v293 = vunpack.c.l.b16 %v238
      %v294 = vunpack.c.l.b16 %v239
      %v295 = vunpack.c.l.b16 %v240
      %v296 = vunpack.c.l.b16 %v241
      %v297 = vpack.c.b16 %v282, %v281
      %v298 = vpack.c.b16 %v284, %v283
      %v299 = vpack.c.b16 %v286, %v285
      %v300 = vpack.c.b16 %v288, %v287
      %v301 = vpack.c.b16 %v290, %v289
      %v302 = vpack.c.b16 %v292, %v291
      %v303 = vpack.c.b16 %v294, %v293
      %v304 = vpack.c.b16 %v296, %v295
      %v329 = vunpack.c.l.b16 %v242
      %v330 = vunpack.c.l.b16 %v243
      %v331 = vunpack.c.l.b16 %v244
      %v332 = vunpack.c.l.b16 %v245
      %v333 = vunpack.c.l.b16 %v246
      %v334 = vunpack.c.l.b16 %v247
      %v335 = vunpack.c.l.b16 %v248
      %v336 = vunpack.c.l.b16 %v249
      %v337 = vunpack.c.l.b16 %v250
      %v338 = vunpack.c.l.b16 %v251
      %v339 = vunpack.c.l.b16 %v252
      %v340 = vunpack.c.l.b16 %v253
      %v341 = vunpack.c.l.b16 %v254
      %v342 = vunpack.c.l.b16 %v255
      %v343 = vunpack.c.l.b16 %v256
      %v344 = vunpack.c.l.b16 %v257
      %v345 = vpack.c.b16 %v330, %v329
      %v346 = vpack.c.b16 %v332, %v331
      %v347 = vpack.c.b16 %v334, %v333
      %v348 = vpack.c.b16 %v336, %v335
      %v349 = vpack.c.b16 %v338, %v337
      %v350 = vpack.c.b16 %v340, %v339
      %v351 = vpack.c.b16 %v342, %v341
      %v352 = vpack.c.b16 %v344, %v343
      %361 = vmatprep.subr.bf16.mxu0 0
      %362 = vmatpush1.bf16.msra.mxu0 %v345
      %363 = vmatprep.subr.bf16.mxu0 0
      %364 = vmatpush1.bf16.msra.mxu0 %v346
      %365 = vmatprep.subr.bf16.mxu0 0
      %366 = vmatpush1.bf16.msra.mxu0 %v347
      %367 = vmatprep.subr.bf16.mxu0 0
      %368 = vmatpush1.bf16.msra.mxu0 %v348
      %369 = vmatprep.subr.bf16.mxu0 0
      %370 = vmatpush1.bf16.msra.mxu0 %v349
      %371 = vmatprep.subr.bf16.mxu0 0
      %372 = vmatpush1.bf16.msra.mxu0 %v350
      %373 = vmatprep.subr.bf16.mxu0 0
      %374 = vmatpush1.bf16.msra.mxu0 %v351
      %375 = vmatprep.subr.bf16.mxu0 0
      %376 = vmatpush1.bf16.msra.mxu0 %v352
      %377 = vmatprep.subr.bf16.mxu0 0
      %378 = vmatpush1.bf16.msra.mxu0 0
      %379 = vmatprep.subr.bf16.mxu0 0
      %380 = vmatpush1.bf16.msra.mxu0 0
      %381 = vmatprep.subr.bf16.mxu0 0
      %382 = vmatpush1.bf16.msra.mxu0 0
      %383 = vmatprep.subr.bf16.mxu0 0
      %384 = vmatpush1.bf16.msra.mxu0 0
      %385 = vmatprep.subr.bf16.mxu0 0
      %386 = vmatpush1.bf16.msra.mxu0 0
      %387 = vmatprep.subr.bf16.mxu0 0
      %388 = vmatpush1.bf16.msra.mxu0 0
      %389 = vmatprep.subr.bf16.mxu0 0
      %390 = vmatpush1.bf16.msra.mxu0 0
      %391 = vmatprep.subr.bf16.mxu0 0
      %392 = vmatpush1.bf16.msra.mxu0 0
      %393 = vmatprep.mubr.bf16.mxu0 0
      %394 = vmatmul.mubr.bf16.gmra.mrb[0].mxu0 %v297
      %v395 = vpop.f32.mrb[0].mxu0
      %v396 = vadd.f32 %v263, %v395
      %v397 = vpop.f32.mrb[0].mxu0
      %v398 = vpop.f32.mrb[0].mxu0
      %v399 = vadd.f32 %v263, %v398
      %v400 = vpop.f32.mrb[0].mxu0
      %401 = vmatprep.mubr.bf16.mxu0 0
      %402 = vmatmul.mubr.bf16.gmra.mrb[0].mxu0 %v298
      %v403 = vpop.f32.mrb[0].mxu0
      %v404 = vadd.f32 %v263, %v403
      %v405 = vpop.f32.mrb[0].mxu0
      %v406 = vpop.f32.mrb[0].mxu0
      %v407 = vadd.f32 %v263, %v406
      %v408 = vpop.f32.mrb[0].mxu0
      %409 = vmatprep.mubr.bf16.mxu0 0
      %410 = vmatmul.mubr.bf16.gmra.mrb[0].mxu0 %v299
      %v411 = vpop.f32.mrb[0].mxu0
      %v412 = vadd.f32 %v263, %v411
      %v413 = vpop.f32.mrb[0].mxu0
      %v414 = vpop.f32.mrb[0].mxu0
      %v415 = vadd.f32 %v263, %v414
      %v416 = vpop.f32.mrb[0].mxu0
      %417 = vmatprep.mubr.bf16.mxu0 0
      %418 = vmatmul.mubr.bf16.gmra.mrb[0].mxu0 %v300
      %v419 = vpop.f32.mrb[0].mxu0
      %v420 = vadd.f32 %v263, %v419
      %v421 = vpop.f32.mrb[0].mxu0
      %v422 = vpop.f32.mrb[0].mxu0
      %v423 = vadd.f32 %v263, %v422
      %v424 = vpop.f32.mrb[0].mxu0
      %425 = vmatprep.mubr.bf16.mxu0 0
      %426 = vmatmul.mubr.bf16.gmra.mrb[0].mxu0 %v301
      %v427 = vpop.f32.mrb[0].mxu0
      %v428 = vadd.f32 %v263, %v427
      %v429 = vpop.f32.mrb[0].mxu0
      %v430 = vpop.f32.mrb[0].mxu0
      %v431 = vadd.f32 %v263, %v430
      %v432 = vpop.f32.mrb[0].mxu0
      %433 = vmatprep.mubr.bf16.mxu0 0
      %434 = vmatmul.mubr.bf16.gmra.mrb[0].mxu0 %v302
      %v435 = vpop.f32.mrb[0].mxu0
      %v436 = vadd.f32 %v263, %v435
      %v437 = vpop.f32.mrb[0].mxu0
      %v438 = vpop.f32.mrb[0].mxu0
      %v439 = vadd.f32 %v263, %v438
      %v440 = vpop.f32.mrb[0].mxu0
      %441 = vmatprep.mubr.bf16.mxu0 0
      %442 = vmatmul.mubr.bf16.gmra.mrb[0].mxu0 %v303
      %v443 = vpop.f32.mrb[0].mxu0
      %v444 = vadd.f32 %v263, %v443
      %v445 = vpop.f32.mrb[0].mxu0
      %v446 = vpop.f32.mrb[0].mxu0
      %v447 = vadd.f32 %v263, %v446
      %v448 = vpop.f32.mrb[0].mxu0
      %449 = vmatprep.mubr.bf16.mxu0 0
      %450 = vmatmul.mubr.bf16.gmra.mrb[0].mxu0 %v304
      %v451 = vpop.f32.mrb[0].mxu0
      %v452 = vadd.f32 %v263, %v451
      %v453 = vpop.f32.mrb[0].mxu0
      %v454 = vpop.f32.mrb[0].mxu0
      %v455 = vadd.f32 %v263, %v454
      %v456 = vpop.f32.mrb[0].mxu0
      %457 = vdwg.mxu0
      %458 = vst [vmem:[%s223] sm:$0xff] %v396
      %459 = vst [vmem:[%s223 + $0x8] sm:$0xff] %v399
      %460 = vst [vmem:[%s223 + $0x10] sm:$0xff] %v404
      %461 = vst [vmem:[%s223 + $0x18] sm:$0xff] %v407
      %462 = vst [vmem:[%s223 + $0x20] sm:$0xff] %v412
      %463 = vst [vmem:[%s223 + $0x28] sm:$0xff] %v415
      %464 = vst [vmem:[%s223 + $0x30] sm:$0xff] %v420
      %465 = vst [vmem:[%s223 + $0x38] sm:$0xff] %v423
      %466 = vst [vmem:[%s223 + $0x40] sm:$0xff] %v428
      %467 = vst [vmem:[%s223 + $0x48] sm:$0xff] %v431
      %468 = vst [vmem:[%s223 + $0x50] sm:$0xff] %v436
      %469 = vst [vmem:[%s223 + $0x58] sm:$0xff] %v439
      %470 = vst [vmem:[%s223 + $0x60] sm:$0xff] %v444
      %471 = vst [vmem:[%s223 + $0x68] sm:$0xff] %v447
      %472 = vst [vmem:[%s223 + $0x70] sm:$0xff] %v452
      %473 = vst [vmem:[%s223 + $0x78] sm:$0xff] %v455
      %s474 = smul.u32 16, %s18
      %p475 = scmp.lt.s32.totalorder %s474, 31
      %s476 = scalar_select %p475, %s474, 31
      %p477 = scmp.lt.s32.totalorder %s19, 0
      %s478 = scalar_select %p477, %s19, 0
      %s479 = sadd.s32 %s478, %s476
      %s480 = smul.addr %s479, 8
      %s481 = scalar_lea.vmem %s3, %s480
      // Predicated region
      $region33: #{_lambda_.38} parent=31 // pred_check
        %p482 = pneg %p124
      $region34: #{_lambda_.38} parent=31 // pred_check_branch
        %484 = sbr.rel (%p482) target = $region36
      $region35: #{_lambda_.38} parent=31 // pred_region
        %s485 = smul.u32 16, %s18
      $region36: #{_lambda_.38} parent=31 // pred_fallthru
        _
    $region32: #{_lambda_.38} parent=5 // pred_fallthru
      _
    %p486 = scmp.le.s32.totalorder 2, %s9
    // Predicated region
    $region37: #{_lambda_.38} parent=5 // pred_check
      %p487 = pneg %p486
    $region38: #{_lambda_.38} parent=5 // pred_check_branch
      %489 = sbr.rel (%p487) target = $region40
    $region39: #{_lambda_.38} parent=5 // pred_region
      %s490 = ssub.s32 %s9, 2
      // Predicated region
      $region41: #{_lambda_.38} parent=39 // pred_check
        %p491 = pneg %p130
      $region42: #{_lambda_.38} parent=39 // pred_check_branch
        %493 = sbr.rel (%p491) target = $region44
      $region43: #{_lambda_.38} parent=39 // pred_region
        %s494 = smul.u32 16, %s20
        %p495 = scmp.lt.s32.totalorder %s494, 31
        %s496 = scalar_select %p495, %s494, 31
        %p497 = scmp.lt.s32.totalorder %s21, 0
        %s498 = scalar_select %p497, %s21, 0
        %s499 = sadd.s32 %s498, %s496
        %s500 = smul.addr %s499, 8
        %s501 = scalar_lea.vmem %s3, %s500
      $region44: #{_lambda_.38} parent=39 // pred_fallthru
        _
    $region40: #{_lambda_.38} parent=5 // pred_fallthru
      _
  $region6: #{_lambda_.38} parent=0 // loop_footer
    %s13 = sadd.s32 1, %s9
  $region7: #{_lambda_.38} parent=0 // loop_footer_branch
    %8 = sbr.rel target = $region3
  $region8: #{_lambda_.38} parent=0 // loop_exit
    _

// kernel: _lambda_.39
$region0: #{_lambda_.39}
  #allocation0 [shape = 'u32[]', space=smem, size = 0x4, offset = 0x4, fixed_abs, tag = 'smem constant byte address 0x4 - core index']
  #allocation1 [shape = 'u32[144,128]{1,0:T(1,128)}', space=vmem, size = 0x12000, scoped, tag = 'internal scratch']
  %s0 = inlined_call_operand.vmem [shape: bf16[256,256], index: 0, kind: input, shape index: {}]
  %s1 = inlined_call_operand.vmem [shape: bf16[256,128], index: 1, kind: input, shape index: {}]
  %s2 = inlined_call_operand.vmem [shape: f32[1,128], index: 2, kind: input, shape index: {}]
  %s3 = inlined_call_operand.vmem [shape: f32[256,128], index: 3, kind: output, shape index: {}]
  %s4 = sld [smem:[#allocation0]]
  $region45: #{_lambda_.39} parent=0
    _
  %s6 = ssub.s32 1, %s4
  %s7 = scalar_select 0, %s6, %s4
  loop: start=0, step=1, limit=4
  $region2: #{_lambda_.39} parent=0 // loop_pre_header
    _
  $region3: #{_lambda_.39} parent=0 // loop_header
    %s9 = sphi 0, %s13
    %p10 = scmp.ge.s32.totalorder %s9, 4
    %s16 = sphi 0, %s28
    %s17 = sphi 0, %s24
    %s18 = sphi 0, %s16
    %s19 = sphi 0, %s17
    %s20 = sphi 0, %s18
    %s21 = sphi 0, %s19
    %s31 = sphi 0, %s33
    %s34 = sphi 0, %s31
    %s35 = sphi 0, %s34
    %s51 = sphi 0, %s35
    %s57 = sphi 0, %s59
    %s60 = sphi 0, %s57
    %s61 = sphi 0, %s60
    %s77 = sphi 0, %s61
    %s83 = sphi 0, %s85
    %s86 = sphi 0, %s83
    %s87 = sphi 0, %s86
    %s103 = sphi 0, %s87
    %s111 = sphi 0, %s113
    %s114 = sphi 0, %s111
    %s115 = sphi 0, %s114
    %s131 = sphi 0, %s115
  $region4: #{_lambda_.39} parent=0 // loop_header_branch
    %12 = sbr.rel (%p10) target = $region8
  $region5: #{_lambda_.39} parent=0 // loop_body
    %s14 = ssub.s32 %s9, 1
    %s15 = ssub.s32 %s9, 2
    %s22 = sadd.s32 1, %s17
    %p23 = scmp.ge.s32.totalorder %s22, 1
    %s24 = scalar_select %p23, 0, %s22
    %s25 = sadd.s32 1, %s16
    %s26 = scalar_select %p23, %s25, %s16
    %p27 = scmp.ge.s32.totalorder %s26, 2
    %s28 = scalar_select %p27, 0, %s26
    %s29 = ssub.s32 %s16, %s28
    %p30 = scmp.eq.s32.totalorder %s29, 0
    %s32 = sadd.s32 %s31, 1
    %s33 = scalar_select %p30, %s31, %s32
    %p36 = pneg %p30
    %p37 = scmp.eq.s32.totalorder %s9, 1
    %p38 = por %p36, %p37
    %p39 = scmp.ne.s32.totalorder %s31, %s34
    %p40 = scmp.eq.s32.totalorder %s9, 0
    %p41 = por %p39, %p40
    %p42 = scmp.ne.s32.totalorder %s31, %s34
    %p43 = scmp.eq.s32.totalorder %s14, 1
    %p44 = por %p42, %p43
    %p45 = scmp.ne.s32.totalorder %s34, %s35
    %p46 = scmp.eq.s32.totalorder %s14, 0
    %p47 = por %p45, %p46
    %p48 = scmp.ne.s32.totalorder %s34, %s35
    %p49 = scmp.eq.s32.totalorder %s15, 1
    %p50 = por %p48, %p49
    %p52 = scmp.ne.s32.totalorder %s35, %s51
    %p53 = scmp.eq.s32.totalorder %s15, 0
    %p54 = por %p52, %p53
    %s55 = ssub.s32 %s17, %s24
    %p56 = scmp.eq.s32.totalorder %s55, 0
    %s58 = sadd.s32 %s57, 1
    %s59 = scalar_select %p56, %s57, %s58
    %p62 = pneg %p56
    %p63 = scmp.eq.s32.totalorder %s9, 1
    %p64 = por %p62, %p63
    %p65 = scmp.ne.s32.totalorder %s57, %s60
    %p66 = scmp.eq.s32.totalorder %s9, 0
    %p67 = por %p65, %p66
    %p68 = scmp.ne.s32.totalorder %s57, %s60
    %p69 = scmp.eq.s32.totalorder %s14, 1
    %p70 = por %p68, %p69
    %p71 = scmp.ne.s32.totalorder %s60, %s61
    %p72 = scmp.eq.s32.totalorder %s14, 0
    %p73 = por %p71, %p72
    %p74 = scmp.ne.s32.totalorder %s60, %s61
    %p75 = scmp.eq.s32.totalorder %s15, 1
    %p76 = por %p74, %p75
    %p78 = scmp.ne.s32.totalorder %s61, %s77
    %p79 = scmp.eq.s32.totalorder %s15, 0
    %p80 = por %p78, %p79
    %s81 = ssub.s32 %s17, %s24
    %p82 = scmp.eq.s32.totalorder %s81, 0
    %s84 = sadd.s32 %s83, 1
    %s85 = scalar_select %p82, %s83, %s84
    %p88 = pneg %p82
    %p89 = scmp.eq.s32.totalorder %s9, 1
    %p90 = por %p88, %p89
    %p91 = scmp.ne.s32.totalorder %s83, %s86
    %p92 = scmp.eq.s32.totalorder %s9, 0
    %p93 = por %p91, %p92
    %p94 = scmp.ne.s32.totalorder %s83, %s86
    %p95 = scmp.eq.s32.totalorder %s14, 1
    %p96 = por %p94, %p95
    %p97 = scmp.ne.s32.totalorder %s86, %s87
    %p98 = scmp.eq.s32.totalorder %s14, 0
    %p99 = por %p97, %p98
    %p100 = scmp.ne.s32.totalorder %s86, %s87
    %p101 = scmp.eq.s32.totalorder %s15, 1
    %p102 = por %p100, %p101
    %p104 = scmp.ne.s32.totalorder %s87, %s103
    %p105 = scmp.eq.s32.totalorder %s15, 0
    %p106 = por %p104, %p105
    %s107 = ssub.s32 %s16, %s28
    %s108 = ssub.s32 %s17, %s24
    %s109 = sor.u32 %s107, %s108
    %p110 = scmp.eq.s32.totalorder %s109, 0
    %s112 = sadd.s32 %s111, 1
    %s113 = scalar_select %p110, %s111, %s112
    %p116 = pneg %p110
    %p117 = scmp.eq.s32.totalorder %s9, 1
    %p118 = por %p116, %p117
    %p119 = scmp.ne.s32.totalorder %s111, %s114
    %p120 = scmp.eq.s32.totalorder %s9, 0
    %p121 = por %p119, %p120
    %p122 = scmp.ne.s32.totalorder %s111, %s114
    %p123 = scmp.eq.s32.totalorder %s14, 1
    %p124 = por %p122, %p123
    %p125 = scmp.ne.s32.totalorder %s114, %s115
    %p126 = scmp.eq.s32.totalorder %s14, 0
    %p127 = por %p125, %p126
    %p128 = scmp.ne.s32.totalorder %s114, %s115
    %p129 = scmp.eq.s32.totalorder %s15, 1
    %p130 = por %p128, %p129
    %p132 = scmp.ne.s32.totalorder %s115, %s131
    %p133 = scmp.eq.s32.totalorder %s15, 0
    %p134 = por %p132, %p133
    %p135 = scmp.le.s32.totalorder 1, %s9
    %p136 = scmp.lt.s32.totalorder %s9, 3
    %p137 = pnand %p135, %p136
    %p138 = pneg %p137
    // Predicated region
    $region9: #{_lambda_.39} parent=5 // pred_check
      _
    $region10: #{_lambda_.39} parent=5 // pred_check_branch
      %140 = sbr.rel (%p137) target = $region12
    $region11: #{_lambda_.39} parent=5 // pred_region
      %s141 = ssub.s32 %s9, 1
      // Predicated region
      $region13: #{_lambda_.39} parent=11 // pred_check
        %p142 = pneg %p73
      $region14: #{_lambda_.39} parent=11 // pred_check_branch
        %144 = sbr.rel (%p142) target = $region16
      $region15: #{_lambda_.39} parent=11 // pred_region
        %p145 = scmp.lt.s32.totalorder %s19, 0
        %s146 = scalar_select %p145, %s19, 0
        %s147 = smul.addr %s146, 4
        %s148 = scalar_lea.vmem %s1, %s147
      $region16: #{_lambda_.39} parent=11 // pred_fallthru
        _
      // Predicated region
      $region17: #{_lambda_.39} parent=11 // pred_check
        %p149 = pneg %p99
      $region18: #{_lambda_.39} parent=11 // pred_check_branch
        %151 = sbr.rel (%p149) target = $region20
      $region19: #{_lambda_.39} parent=11 // pred_region
        %p152 = scmp.lt.s32.totalorder %s19, 0
        %s153 = scalar_select %p152, %s19, 0
        %s154 = scalar_lea.vmem %s2, %s153
      $region20: #{_lambda_.39} parent=11 // pred_fallthru
        _
    $region12: #{_lambda_.39} parent=5 // pred_fallthru
      _
    %p155 = scmp.lt.s32.totalorder %s9, 2
    // Predicated region
    $region21: #{_lambda_.39} parent=5 // pred_check
      %p156 = pneg %p155
    $region22: #{_lambda_.39} parent=5 // pred_check_branch
      %158 = sbr.rel (%p156) target = $region24
    $region23: #{_lambda_.39} parent=5 // pred_region
      // Predicated region
      $region25: #{_lambda_.39} parent=23 // pred_check
        %p159 = pneg %p41
      $region26: #{_lambda_.39} parent=23 // pred_check_branch
        %161 = sbr.rel (%p159) target = $region28
      $region27: #{_lambda_.39} parent=23 // pred_region
        %s162 = smul.u32 16, %s16
        %p163 = scmp.lt.s32.totalorder %s162, 31
        %s164 = scalar_select %p163, %s162, 31
        %s165 = smul.addr %s164, 2
        %s166 = smul.addr %s165, 4
        %s167 = scalar_lea.vmem %s0, %s166
        %s168 = smul.u32 16, %s16
      $region28: #{_lambda_.39} parent=23 // pred_fallthru
        _
    $region24: #{_lambda_.39} parent=5 // pred_fallthru
      _
    %p169 = scmp.le.s32.totalorder 1, %s9
    %p170 = scmp.lt.s32.totalorder %s9, 3
    %p171 = pnand %p169, %p170
    %p172 = pneg %p171
    // Predicated region
    $region29: #{_lambda_.39} parent=5 // pred_check
      _
    $region30: #{_lambda_.39} parent=5 // pred_check_branch
      %174 = sbr.rel (%p171) target = $region32
    $region31: #{_lambda_.39} parent=5 // pred_region
      %s175 = ssub.s32 %s9, 1
      %s176 = smul.u32 16, %s18
      %p177 = scmp.lt.s32.totalorder %s176, 31
      %s178 = scalar_select %p177, %s176, 31
      %s179 = smul.addr %s178, 2
      %s180 = smul.addr %s179, 4
      %s181 = scalar_lea.vmem %s0, %s180
      %p182 = pneg %p47
      %p183 = pneg %p44
      %p184 = scmp.lt.s32.totalorder %s19, 0
      %s185 = scalar_select %p184, %s19, 0
      %s186 = smul.addr %s185, 4
      %s187 = scalar_lea.vmem %s1, %s186
      %p188 = pneg %p73
      %p189 = pneg %p70
      %p190 = scmp.lt.s32.totalorder %s19, 0
      %s191 = scalar_select %p190, %s19, 0
      %s192 = scalar_lea.vmem %s2, %s191
      %p193 = pneg %p99
      %p194 = pneg %p96
      %p195 = pneg %p127
      %p196 = pneg %p124
      %s197 = smul.u32 16, %s18
      %p198 = scmp.lt.s32.totalorder %s197, 31
      %s199 = scalar_select %p198, %s197, 31
      %p200 = scmp.lt.s32.totalorder %s19, 0
      %s201 = scalar_select %p200, %s19, 0
      %s202 = sadd.s32 %s201, %s199
      %s203 = smul.addr %s202, 8
      %s204 = scalar_lea.vmem %s3, %s203
      %s205 = smul.u32 16, %s18
      %p206 = scmp.lt.s32.totalorder %s205, 31
      %s207 = scalar_select %p206, %s205, 31
      %s208 = smul.addr %s207, 2
      %s209 = smul.addr %s208, 4
      %s210 = scalar_lea.vmem %s0, %s209
      %s211 = smul.u32 16, %s18
      %p212 = scmp.lt.s32.totalorder %s19, 0
      %s213 = scalar_select %p212, %s19, 0
      %s214 = smul.addr %s213, 4
      %s215 = scalar_lea.vmem %s1, %s214
      %p216 = scmp.lt.s32.totalorder %s19, 0
      %s217 = scalar_select %p216, %s19, 0
      %s218 = scalar_lea.vmem %s2, %s217
      %s219 = smul.u32 16, %s18
      %p220 = scmp.lt.s32.totalorder %s219, 31
      %s221 = scalar_select %p220, %s219, 31
      %p222 = scmp.lt.s32.totalorder %s19, 0
      %s223 = scalar_select %p222, %s19, 0
      %s224 = sadd.s32 %s223, %s221
      %s225 = smul.addr %s224, 8
      %s226 = scalar_lea.vmem %s3, %s225
      %s227 = smul.u32 16, %s18
      %v229 = vld [vmem:[%s210] sm:$0xff]
      %v230 = vld [vmem:[%s210 + $0x8] sm:$0xff]
      %v231 = vld [vmem:[%s210 + $0x10] sm:$0xff]
      %v232 = vld [vmem:[%s210 + $0x18] sm:$0xff]
      %v233 = vld [vmem:[%s210 + $0x20] sm:$0xff]
      %v234 = vld [vmem:[%s210 + $0x28] sm:$0xff]
      %v235 = vld [vmem:[%s210 + $0x30] sm:$0xff]
      %v236 = vld [vmem:[%s210 + $0x38] sm:$0xff]
      %v237 = vld [vmem:[%s210 + $0x40] sm:$0xff]
      %v238 = vld [vmem:[%s210 + $0x48] sm:$0xff]
      %v239 = vld [vmem:[%s210 + $0x50] sm:$0xff]
      %v240 = vld [vmem:[%s210 + $0x58] sm:$0xff]
      %v241 = vld [vmem:[%s210 + $0x60] sm:$0xff]
      %v242 = vld [vmem:[%s210 + $0x68] sm:$0xff]
      %v243 = vld [vmem:[%s210 + $0x70] sm:$0xff]
      %v244 = vld [vmem:[%s210 + $0x78] sm:$0xff]
      %v245 = vld [vmem:[%s215] sm:$0xf]
      %v246 = vld [vmem:[%s215 + $0x4] sm:$0xf]
      %v247 = vld [vmem:[%s215 + $0x8] sm:$0xf]
      %v248 = vld [vmem:[%s215 + $0xc] sm:$0xf]
      %v249 = vld [vmem:[%s215 + $0x10] sm:$0xf]
      %v250 = vld [vmem:[%s215 + $0x14] sm:$0xf]
      %v251 = vld [vmem:[%s215 + $0x18] sm:$0xf]
      %v252 = vld [vmem:[%s215 + $0x1c] sm:$0xf]
      %v253 = vld [vmem:[%s215 + $0x20] sm:$0xf]
      %v254 = vld [vmem:[%s215 + $0x24] sm:$0xf]
      %v255 = vld [vmem:[%s215 + $0x28] sm:$0xf]
      %v256 = vld [vmem:[%s215 + $0x2c] sm:$0xf]
      %v257 = vld [vmem:[%s215 + $0x30] sm:$0xf]
      %v258 = vld [vmem:[%s215 + $0x34] sm:$0xf]
      %v259 = vld [vmem:[%s215 + $0x38] sm:$0xf]
      %v260 = vld [vmem:[%s215 + $0x3c] sm:$0xf]
      %v261 = vld [vmem:[%s215 + $0x40] sm:$0xf]
      %v262 = vld [vmem:[%s215 + $0x44] sm:$0xf]
      %v263 = vld [vmem:[%s215 + $0x48] sm:$0xf]
      %v264 = vld [vmem:[%s215 + $0x4c] sm:$0xf]
      %v265 = vld [vmem:[%s215 + $0x50] sm:$0xf]
      %v266 = vld [vmem:[%s215 + $0x54] sm:$0xf]
      %v267 = vld [vmem:[%s215 + $0x58] sm:$0xf]
      %v268 = vld [vmem:[%s215 + $0x5c] sm:$0xf]
      %v269 = vld [vmem:[%s215 + $0x60] sm:$0xf]
      %v270 = vld [vmem:[%s215 + $0x64] sm:$0xf]
      %v271 = vld [vmem:[%s215 + $0x68] sm:$0xf]
      %v272 = vld [vmem:[%s215 + $0x6c] sm:$0xf]
      %v273 = vld [vmem:[%s215 + $0x70] sm:$0xf]
      %v274 = vld [vmem:[%s215 + $0x74] sm:$0xf]
      %v275 = vld [vmem:[%s215 + $0x78] sm:$0xf]
      %v276 = vld [vmem:[%s215 + $0x7c] sm:$0xf]
      %v277 = vld [vmem:[%s218] sm:$0x1]
      %v279 = vlaneseq
      %v280 = vshrl.u32 %v279, 7
      %v281 = vsub.s32 0, %v280
      %v282 = vrot.slane %v277, %v281
      %v300 = vunpack.c.l.b16 %v229
      %v301 = vunpack.c.h.b16 %v229
      %v302 = vunpack.c.l.b16 %v230
      %v303 = vunpack.c.h.b16 %v230
      %v304 = vunpack.c.l.b16 %v231
      %v305 = vunpack.c.h.b16 %v231
      %v306 = vunpack.c.l.b16 %v232
      %v307 = vunpack.c.h.b16 %v232
      %v308 = vunpack.c.l.b16 %v233
      %v309 = vunpack.c.h.b16 %v233
      %v310 = vunpack.c.l.b16 %v234
      %v311 = vunpack.c.h.b16 %v234
      %v312 = vunpack.c.l.b16 %v235
      %v313 = vunpack.c.h.b16 %v235
      %v314 = vunpack.c.l.b16 %v236
      %v315 = vunpack.c.h.b16 %v236
      %v316 = vunpack.c.l.b16 %v237
      %v317 = vunpack.c.h.b16 %v237
      %v318 = vunpack.c.l.b16 %v238
      %v319 = vunpack.c.h.b16 %v238
      %v320 = vunpack.c.l.b16 %v239
      %v321 = vunpack.c.h.b16 %v239
      %v322 = vunpack.c.l.b16 %v240
      %v323 = vunpack.c.h.b16 %v240
      %v324 = vunpack.c.l.b16 %v241
      %v325 = vunpack.c.h.b16 %v241
      %v326 = vunpack.c.l.b16 %v242
      %v327 = vunpack.c.h.b16 %v242
      %v328 = vunpack.c.l.b16 %v243
      %v329 = vunpack.c.h.b16 %v243
      %v330 = vunpack.c.l.b16 %v244
      %v331 = vunpack.c.h.b16 %v244
      %v332 = vpack.c.b16 %v302, %v300
      %v333 = vpack.c.b16 %v303, %v301
      %v334 = vpack.c.b16 %v306, %v304
      %v335 = vpack.c.b16 %v307, %v305
      %v336 = vpack.c.b16 %v310, %v308
      %v337 = vpack.c.b16 %v311, %v309
      %v338 = vpack.c.b16 %v314, %v312
      %v339 = vpack.c.b16 %v315, %v313
      %v340 = vpack.c.b16 %v318, %v316
      %v341 = vpack.c.b16 %v319, %v317
      %v342 = vpack.c.b16 %v322, %v320
      %v343 = vpack.c.b16 %v323, %v321
      %v344 = vpack.c.b16 %v326, %v324
      %v345 = vpack.c.b16 %v327, %v325
      %v346 = vpack.c.b16 %v330, %v328
      %v347 = vpack.c.b16 %v331, %v329
      %v396 = vunpack.c.l.b16 %v245
      %v397 = vunpack.c.l.b16 %v246
      %v398 = vunpack.c.l.b16 %v247
      %v399 = vunpack.c.l.b16 %v248
      %v400 = vunpack.c.l.b16 %v249
      %v401 = vunpack.c.l.b16 %v250
      %v402 = vunpack.c.l.b16 %v251
      %v403 = vunpack.c.l.b16 %v252
      %v404 = vunpack.c.l.b16 %v253
      %v405 = vunpack.c.l.b16 %v254
      %v406 = vunpack.c.l.b16 %v255
      %v407 = vunpack.c.l.b16 %v256
      %v408 = vunpack.c.l.b16 %v257
      %v409 = vunpack.c.l.b16 %v258
      %v410 = vunpack.c.l.b16 %v259
      %v411 = vunpack.c.l.b16 %v260
      %v412 = vunpack.c.l.b16 %v261
      %v413 = vunpack.c.l.b16 %v262
      %v414 = vunpack.c.l.b16 %v263
      %v415 = vunpack.c.l.b16 %v264
      %v416 = vunpack.c.l.b16 %v265
      %v417 = vunpack.c.l.b16 %v266
      %v418 = vunpack.c.l.b16 %v267
      %v419 = vunpack.c.l.b16 %v268
      %v420 = vunpack.c.l.b16 %v269
      %v421 = vunpack.c.l.b16 %v270
      %v422 = vunpack.c.l.b16 %v271
      %v423 = vunpack.c.l.b16 %v272
      %v424 = vunpack.c.l.b16 %v273
      %v425 = vunpack.c.l.b16 %v274
      %v426 = vunpack.c.l.b16 %v275
      %v427 = vunpack.c.l.b16 %v276
      %v428 = vpack.c.b16 %v397, %v396
      %v429 = vpack.c.b16 %v399, %v398
      %v430 = vpack.c.b16 %v401, %v400
      %v431 = vpack.c.b16 %v403, %v402
      %v432 = vpack.c.b16 %v405, %v404
      %v433 = vpack.c.b16 %v407, %v406
      %v434 = vpack.c.b16 %v409, %v408
      %v435 = vpack.c.b16 %v411, %v410
      %v436 = vpack.c.b16 %v413, %v412
      %v437 = vpack.c.b16 %v415, %v414
      %v438 = vpack.c.b16 %v417, %v416
      %v439 = vpack.c.b16 %v419, %v418
      %v440 = vpack.c.b16 %v421, %v420
      %v441 = vpack.c.b16 %v423, %v422
      %v442 = vpack.c.b16 %v425, %v424
      %v443 = vpack.c.b16 %v427, %v426
      %460 = vmatprep.subr.bf16.mxu0 0
      %461 = vmatpush1.bf16.msra.mxu0 %v428
      %462 = vmatprep.subr.bf16.mxu0 0
      %463 = vmatpush1.bf16.msra.mxu0 %v429
      %464 = vmatprep.subr.bf16.mxu0 0
      %465 = vmatpush1.bf16.msra.mxu0 %v430
      %466 = vmatprep.subr.bf16.mxu0 0
      %467 = vmatpush1.bf16.msra.mxu0 %v431
      %468 = vmatprep.subr.bf16.mxu0 0
      %469 = vmatpush1.bf16.msra.mxu0 %v432
      %470 = vmatprep.subr.bf16.mxu0 0
      %471 = vmatpush1.bf16.msra.mxu0 %v433
      %472 = vmatprep.subr.bf16.mxu0 0
      %473 = vmatpush1.bf16.msra.mxu0 %v434
      %474 = vmatprep.subr.bf16.mxu0 0
      %475 = vmatpush1.bf16.msra.mxu0 %v435
      %476 = vmatprep.subr.bf16.mxu0 0
      %477 = vmatpush1.bf16.msra.mxu0 %v436
      %478 = vmatprep.subr.bf16.mxu0 0
      %479 = vmatpush1.bf16.msra.mxu0 %v437
      %480 = vmatprep.subr.bf16.mxu0 0
      %481 = vmatpush1.bf16.msra.mxu0 %v438
      %482 = vmatprep.subr.bf16.mxu0 0
      %483 = vmatpush1.bf16.msra.mxu0 %v439
      %484 = vmatprep.subr.bf16.mxu0 0
      %485 = vmatpush1.bf16.msra.mxu0 %v440
      %486 = vmatprep.subr.bf16.mxu0 0
      %487 = vmatpush1.bf16.msra.mxu0 %v441
      %488 = vmatprep.subr.bf16.mxu0 0
      %489 = vmatpush1.bf16.msra.mxu0 %v442
      %490 = vmatprep.subr.bf16.mxu0 0
      %491 = vmatpush1.bf16.msra.mxu0 %v443
      %492 = vmatprep.mubr.bf16.mxu0 %v333
      %493 = vmatmul.mubr.bf16.gmra.mrb[0].mxu0 %v332
      %v494 = vpop.f32.mrb[0].mxu0
      %v495 = vadd.f32 %v282, %v494
      %v496 = vpop.f32.mrb[0].mxu0
      %v497 = vpop.f32.mrb[0].mxu0
      %v498 = vadd.f32 %v282, %v497
      %v499 = vpop.f32.mrb[0].mxu0
      %500 = vmatprep.mubr.bf16.mxu0 %v335
      %501 = vmatmul.mubr.bf16.gmra.mrb[0].mxu0 %v334
      %v502 = vpop.f32.mrb[0].mxu0
      %v503 = vadd.f32 %v282, %v502
      %v504 = vpop.f32.mrb[0].mxu0
      %v505 = vpop.f32.mrb[0].mxu0
      %v506 = vadd.f32 %v282, %v505
      %v507 = vpop.f32.mrb[0].mxu0
      %508 = vmatprep.mubr.bf16.mxu0 %v337
      %509 = vmatmul.mubr.bf16.gmra.mrb[0].mxu0 %v336
      %v510 = vpop.f32.mrb[0].mxu0
      %v511 = vadd.f32 %v282, %v510
      %v512 = vpop.f32.mrb[0].mxu0
      %v513 = vpop.f32.mrb[0].mxu0
      %v514 = vadd.f32 %v282, %v513
      %v515 = vpop.f32.mrb[0].mxu0
      %516 = vmatprep.mubr.bf16.mxu0 %v339
      %517 = vmatmul.mubr.bf16.gmra.mrb[0].mxu0 %v338
      %v518 = vpop.f32.mrb[0].mxu0
      %v519 = vadd.f32 %v282, %v518
      %v520 = vpop.f32.mrb[0].mxu0
      %v521 = vpop.f32.mrb[0].mxu0
      %v522 = vadd.f32 %v282, %v521
      %v523 = vpop.f32.mrb[0].mxu0
      %524 = vmatprep.mubr.bf16.mxu0 %v341
      %525 = vmatmul.mubr.bf16.gmra.mrb[0].mxu0 %v340
      %v526 = vpop.f32.mrb[0].mxu0
      %v527 = vadd.f32 %v282, %v526
      %v528 = vpop.f32.mrb[0].mxu0
      %v529 = vpop.f32.mrb[0].mxu0
      %v530 = vadd.f32 %v282, %v529
      %v531 = vpop.f32.mrb[0].mxu0
      %532 = vmatprep.mubr.bf16.mxu0 %v343
      %533 = vmatmul.mubr.bf16.gmra.mrb[0].mxu0 %v342
      %v534 = vpop.f32.mrb[0].mxu0
      %v535 = vadd.f32 %v282, %v534
      %v536 = vpop.f32.mrb[0].mxu0
      %v537 = vpop.f32.mrb[0].mxu0
      %v538 = vadd.f32 %v282, %v537
      %v539 = vpop.f32.mrb[0].mxu0
      %540 = vmatprep.mubr.bf16.mxu0 %v345
      %541 = vmatmul.mubr.bf16.gmra.mrb[0].mxu0 %v344
      %v542 = vpop.f32.mrb[0].mxu0
      %v543 = vadd.f32 %v282, %v542
      %v544 = vpop.f32.mrb[0].mxu0
      %v545 = vpop.f32.mrb[0].mxu0
      %v546 = vadd.f32 %v282, %v545
      %v547 = vpop.f32.mrb[0].mxu0
      %548 = vmatprep.mubr.bf16.mxu0 %v347
      %549 = vmatmul.mubr.bf16.gmra.mrb[0].mxu0 %v346
      %v550 = vpop.f32.mrb[0].mxu0
      %v551 = vadd.f32 %v282, %v550
      %v552 = vpop.f32.mrb[0].mxu0
      %v553 = vpop.f32.mrb[0].mxu0
      %v554 = vadd.f32 %v282, %v553
      %v555 = vpop.f32.mrb[0].mxu0
      %556 = vdwg.mxu0
      %557 = vst [vmem:[%s226] sm:$0xff] %v495
      %558 = vst [vmem:[%s226 + $0x8] sm:$0xff] %v498
      %559 = vst [vmem:[%s226 + $0x10] sm:$0xff] %v503
      %560 = vst [vmem:[%s226 + $0x18] sm:$0xff] %v506
      %561 = vst [vmem:[%s226 + $0x20] sm:$0xff] %v511
      %562 = vst [vmem:[%s226 + $0x28] sm:$0xff] %v514
      %563 = vst [vmem:[%s226 + $0x30] sm:$0xff] %v519
      %564 = vst [vmem:[%s226 + $0x38] sm:$0xff] %v522
      %565 = vst [vmem:[%s226 + $0x40] sm:$0xff] %v527
      %566 = vst [vmem:[%s226 + $0x48] sm:$0xff] %v530
      %567 = vst [vmem:[%s226 + $0x50] sm:$0xff] %v535
      %568 = vst [vmem:[%s226 + $0x58] sm:$0xff] %v538
      %569 = vst [vmem:[%s226 + $0x60] sm:$0xff] %v543
      %570 = vst [vmem:[%s226 + $0x68] sm:$0xff] %v546
      %571 = vst [vmem:[%s226 + $0x70] sm:$0xff] %v551
      %572 = vst [vmem:[%s226 + $0x78] sm:$0xff] %v554
      %s573 = smul.u32 16, %s18
      %p574 = scmp.lt.s32.totalorder %s573, 31
      %s575 = scalar_select %p574, %s573, 31
      %p576 = scmp.lt.s32.totalorder %s19, 0
      %s577 = scalar_select %p576, %s19, 0
      %s578 = sadd.s32 %s577, %s575
      %s579 = smul.addr %s578, 8
      %s580 = scalar_lea.vmem %s3, %s579
      // Predicated region
      $region33: #{_lambda_.39} parent=31 // pred_check
        %p581 = pneg %p124
      $region34: #{_lambda_.39} parent=31 // pred_check_branch
        %583 = sbr.rel (%p581) target = $region36
      $region35: #{_lambda_.39} parent=31 // pred_region
        %s584 = smul.u32 16, %s18
      $region36: #{_lambda_.39} parent=31 // pred_fallthru
        _
    $region32: #{_lambda_.39} parent=5 // pred_fallthru
      _
    %p585 = scmp.le.s32.totalorder 2, %s9
    // Predicated region
    $region37: #{_lambda_.39} parent=5 // pred_check
      %p586 = pneg %p585
    $region38: #{_lambda_.39} parent=5 // pred_check_branch
      %588 = sbr.rel (%p586) target = $region40
    $region39: #{_lambda_.39} parent=5 // pred_region
      %s589 = ssub.s32 %s9, 2
      // Predicated region
      $region41: #{_lambda_.39} parent=39 // pred_check
        %p590 = pneg %p130
      $region42: #{_lambda_.39} parent=39 // pred_check_branch
        %592 = sbr.rel (%p590) target = $region44
      $region43: #{_lambda_.39} parent=39 // pred_region
        %s593 = smul.u32 16, %s20
        %p594 = scmp.lt.s32.totalorder %s593, 31
        %s595 = scalar_select %p594, %s593, 31
        %p596 = scmp.lt.s32.totalorder %s21, 0
        %s597 = scalar_select %p596, %s21, 0
        %s598 = sadd.s32 %s597, %s595
        %s599 = smul.addr %s598, 8
        %s600 = scalar_lea.vmem %s3, %s599
      $region44: #{_lambda_.39} parent=39 // pred_fallthru
        _
    $region40: #{_lambda_.39} parent=5 // pred_fallthru
      _
  $region6: #{_lambda_.39} parent=0 // loop_footer
    %s13 = sadd.s32 1, %s9
  $region7: #{_lambda_.39} parent=0 // loop_footer_branch
    %8 = sbr.rel target = $region3
  $region8: #{_lambda_.39} parent=0 // loop_exit
    _

// kernel: mul.96.clone
$region0: #{mul.96.clone}
  #allocation0 [shape = 's32[1]{0}', space=sflag, size = 0x4, scoped, tag = 'scoped memory for mul.96.clone']
  %s0 = inlined_call_operand.vmem [shape: f32[2,32], index: 0, kind: input, shape index: {}]
  %s1 = inlined_call_operand.vmem [shape: f32[2,10,10,32], index: 1, kind: output, shape index: {}]
  // Predicated region
  $region2: #{mul.96.clone} parent=0 // pred_check
    _
  $region3: #{mul.96.clone} parent=0 // pred_check_branch
    %3 = sbr.rel (0) target = $region5
  $region4: #{mul.96.clone} parent=0 // pred_region
    _
  $region5: #{mul.96.clone} parent=0 // pred_fallthru
    _
  %v4 = vld [vmem:[%s0] ss:$0 sm:$0xff]
  %5 = vst [vmem:[%s1] sm:$0xff] %v4
  %s6 = scalar_lea.vmem %s0, 1
  %v7 = vld [vmem:[%s6] ss:$0 sm:$0xff]
  %s8 = scalar_lea.vmem %s1, 160
  %9 = vst [vmem:[%s8] sm:$0xff] %v7
  %s10 = scalar_lea.vmem %s1, 16
  %11 = vst [vmem:[%s10] sm:$0xff] %v4
  %s12 = scalar_lea.vmem %s1, 176
  %13 = vst [vmem:[%s12] sm:$0xff] %v7
  %s14 = scalar_lea.vmem %s1, 32
  %15 = vst [vmem:[%s14] sm:$0xff] %v4
  %s16 = scalar_lea.vmem %s1, 192
  %17 = vst [vmem:[%s16] sm:$0xff] %v7
  %s18 = scalar_lea.vmem %s1, 48
  %19 = vst [vmem:[%s18] sm:$0xff] %v4
  %s20 = scalar_lea.vmem %s1, 208
  %21 = vst [vmem:[%s20] sm:$0xff] %v7
  %s22 = scalar_lea.vmem %s1, 64
  %23 = vst [vmem:[%s22] sm:$0xff] %v4
  %s24 = scalar_lea.vmem %s1, 224
  %25 = vst [vmem:[%s24] sm:$0xff] %v7
  %s26 = scalar_lea.vmem %s1, 80
  %27 = vst [vmem:[%s26] sm:$0xff] %v4
  %s28 = scalar_lea.vmem %s1, 240
  %29 = vst [vmem:[%s28] sm:$0xff] %v7
  %s30 = scalar_lea.vmem %s1, 96
  %31 = vst [vmem:[%s30] sm:$0xff] %v4
  %s32 = scalar_lea.vmem %s1, 256
  %33 = vst [vmem:[%s32] sm:$0xff] %v7
  %s34 = scalar_lea.vmem %s1, 112
  %35 = vst [vmem:[%s34] sm:$0xff] %v4
  %s36 = scalar_lea.vmem %s1, 272
  %37 = vst [vmem:[%s36] sm:$0xff] %v7
  %s38 = scalar_lea.vmem %s1, 128
  %39 = vst [vmem:[%s38] sm:$0xff] %v4
  %s40 = scalar_lea.vmem %s1, 288
  %41 = vst [vmem:[%s40] sm:$0xff] %v7
  %s42 = scalar_lea.vmem %s1, 144
  %43 = vst [vmem:[%s42] sm:$0xff] %v4
  %s44 = scalar_lea.vmem %s1, 304
  %45 = vst [vmem:[%s44] sm:$0xff] %v7
  %s46 = scalar_lea.vmem %s1, 8
  %47 = vst [vmem:[%s46] sm:$0xff] %v4
  %s48 = scalar_lea.vmem %s1, 168
  %49 = vst [vmem:[%s48] sm:$0xff] %v7
  %s50 = scalar_lea.vmem %s1, 24
  %51 = vst [vmem:[%s50] sm:$0xff] %v4
  %s52 = scalar_lea.vmem %s1, 184
  %53 = vst [vmem:[%s52] sm:$0xff] %v7
  %s54 = scalar_lea.vmem %s1, 40
  %55 = vst [vmem:[%s54] sm:$0xff] %v4
  %s56 = scalar_lea.vmem %s1, 200
  %57 = vst [vmem:[%s56] sm:$0xff] %v7
  %s58 = scalar_lea.vmem %s1, 56
  %59 = vst [vmem:[%s58] sm:$0xff] %v4
  %s60 = scalar_lea.vmem %s1, 216
  %61 = vst [vmem:[%s60] sm:$0xff] %v7
  %s62 = scalar_lea.vmem %s1, 72
  %63 = vst [vmem:[%s62] sm:$0xff] %v4
  %s64 = scalar_lea.vmem %s1, 232
  %65 = vst [vmem:[%s64] sm:$0xff] %v7
  %s66 = scalar_lea.vmem %s1, 88
  %67 = vst [vmem:[%s66] sm:$0xff] %v4
  %s68 = scalar_lea.vmem %s1, 248
  %69 = vst [vmem:[%s68] sm:$0xff] %v7
  %s70 = scalar_lea.vmem %s1, 104
  %71 = vst [vmem:[%s70] sm:$0xff] %v4
  %s72 = scalar_lea.vmem %s1, 264
  %73 = vst [vmem:[%s72] sm:$0xff] %v7
  %s74 = scalar_lea.vmem %s1, 120
  %75 = vst [vmem:[%s74] sm:$0xff] %v4
  %s76 = scalar_lea.vmem %s1, 280
  %77 = vst [vmem:[%s76] sm:$0xff] %v7
  %s78 = scalar_lea.vmem %s1, 136
  %79 = vst [vmem:[%s78] sm:$0xff] %v4
  %s80 = scalar_lea.vmem %s1, 296
  %81 = vst [vmem:[%s80] sm:$0xff] %v7
  %s82 = scalar_lea.vmem %s1, 152
  %83 = vst [vmem:[%s82] sm:$0xff] %v4
  %s84 = scalar_lea.vmem %s1, 312
  %85 = vst [vmem:[%s84] sm:$0xff] %v7

// kernel: mul.91.clone
$region0: #{mul.91.clone}
  #allocation0 [shape = 's32[1]{0}', space=sflag, size = 0x4, scoped, tag = 'scoped memory for mul.91.clone']
  %s0 = inlined_call_operand.vmem [shape: f32[2,16], index: 0, kind: input, shape index: {}]
  %s1 = inlined_call_operand.vmem [shape: f32[2,9,9,16], index: 1, kind: output, shape index: {}]
  // Predicated region
  $region2: #{mul.91.clone} parent=0 // pred_check
    _
  $region3: #{mul.91.clone} parent=0 // pred_check_branch
    %3 = sbr.rel (0) target = $region5
  $region4: #{mul.91.clone} parent=0 // pred_region
    _
  $region5: #{mul.91.clone} parent=0 // pred_fallthru
    _
  %v4 = vld [vmem:[%s0] ss:$0 sm:$0xff]
  %5 = vst [vmem:[%s1] sm:$0xff] %v4
  %s6 = scalar_lea.vmem %s0, 1
  %v7 = vld [vmem:[%s6] ss:$0 sm:$0xff]
  %s8 = scalar_lea.vmem %s1, 144
  %9 = vst [vmem:[%s8] sm:$0xff] %v7
  %s10 = scalar_lea.vmem %s1, 16
  %11 = vst [vmem:[%s10] sm:$0xff] %v4
  %s12 = scalar_lea.vmem %s1, 160
  %13 = vst [vmem:[%s12] sm:$0xff] %v7
  %s14 = scalar_lea.vmem %s1, 32
  %15 = vst [vmem:[%s14] sm:$0xff] %v4
  %s16 = scalar_lea.vmem %s1, 176
  %17 = vst [vmem:[%s16] sm:$0xff] %v7
  %s18 = scalar_lea.vmem %s1, 48
  %19 = vst [vmem:[%s18] sm:$0xff] %v4
  %s20 = scalar_lea.vmem %s1, 192
  %21 = vst [vmem:[%s20] sm:$0xff] %v7
  %s22 = scalar_lea.vmem %s1, 64
  %23 = vst [vmem:[%s22] sm:$0xff] %v4
  %s24 = scalar_lea.vmem %s1, 208
  %25 = vst [vmem:[%s24] sm:$0xff] %v7
  %s26 = scalar_lea.vmem %s1, 80
  %27 = vst [vmem:[%s26] sm:$0xff] %v4
  %s28 = scalar_lea.vmem %s1, 224
  %29 = vst [vmem:[%s28] sm:$0xff] %v7
  %s30 = scalar_lea.vmem %s1, 96
  %31 = vst [vmem:[%s30] sm:$0xff] %v4
  %s32 = scalar_lea.vmem %s1, 240
  %33 = vst [vmem:[%s32] sm:$0xff] %v7
  %s34 = scalar_lea.vmem %s1, 112
  %35 = vst [vmem:[%s34] sm:$0xff] %v4
  %s36 = scalar_lea.vmem %s1, 256
  %37 = vst [vmem:[%s36] sm:$0xff] %v7
  %s38 = scalar_lea.vmem %s1, 128
  %39 = vst [vmem:[%s38] sm:$0xff] %v4
  %s40 = scalar_lea.vmem %s1, 272
  %41 = vst [vmem:[%s40] sm:$0xff] %v7
  %s42 = scalar_lea.vmem %s1, 8
  %43 = vst [vmem:[%s42] sm:$0xff] %v4
  %s44 = scalar_lea.vmem %s1, 152
  %45 = vst [vmem:[%s44] sm:$0xff] %v7
  %s46 = scalar_lea.vmem %s1, 24
  %47 = vst [vmem:[%s46] sm:$0xff] %v4
  %s48 = scalar_lea.vmem %s1, 168
  %49 = vst [vmem:[%s48] sm:$0xff] %v7
  %s50 = scalar_lea.vmem %s1, 40
  %51 = vst [vmem:[%s50] sm:$0xff] %v4
  %s52 = scalar_lea.vmem %s1, 184
  %53 = vst [vmem:[%s52] sm:$0xff] %v7
  %s54 = scalar_lea.vmem %s1, 56
  %55 = vst [vmem:[%s54] sm:$0xff] %v4
  %s56 = scalar_lea.vmem %s1, 200
  %57 = vst [vmem:[%s56] sm:$0xff] %v7
  %s58 = scalar_lea.vmem %s1, 72
  %59 = vst [vmem:[%s58] sm:$0xff] %v4
  %s60 = scalar_lea.vmem %s1, 216
  %61 = vst [vmem:[%s60] sm:$0xff] %v7
  %s62 = scalar_lea.vmem %s1, 88
  %63 = vst [vmem:[%s62] sm:$0xff] %v4
  %s64 = scalar_lea.vmem %s1, 232
  %65 = vst [vmem:[%s64] sm:$0xff] %v7
  %s66 = scalar_lea.vmem %s1, 104
  %67 = vst [vmem:[%s66] sm:$0xff] %v4
  %s68 = scalar_lea.vmem %s1, 248
  %69 = vst [vmem:[%s68] sm:$0xff] %v7
  %s70 = scalar_lea.vmem %s1, 120
  %71 = vst [vmem:[%s70] sm:$0xff] %v4
  %s72 = scalar_lea.vmem %s1, 264
  %73 = vst [vmem:[%s72] sm:$0xff] %v7
  %s74 = scalar_lea.vmem %s1, 136
  %75 = vst [vmem:[%s74] sm:$0xff] %v4
  %s76 = scalar_lea.vmem %s1, 280
  %77 = vst [vmem:[%s76] sm:$0xff] %v7

// kernel: _lambda_.44
$region0: #{_lambda_.44}
  #allocation0 [shape = 'u32[]', space=smem, size = 0x4, offset = 0x4, fixed_abs, tag = 'smem constant byte address 0x4 - core index']
  #allocation1 [shape = 'u32[144,128]{1,0:T(1,128)}', space=vmem, size = 0x12000, scoped, tag = 'internal scratch']
  %s0 = inlined_call_operand.vmem [shape: f32[56,128], index: 0, kind: input, shape index: {}]
  %s1 = inlined_call_operand.vmem [shape: f32[56,128], index: 1, kind: input, shape index: {}]
  %s2 = inlined_call_operand.hbm [shape: f32[1,1], index: 2, kind: output, shape index: {}]
  %s3 = sld [smem:[#allocation0]]
  $region18: #{_lambda_.44} parent=0
    _
  %s5 = ssub.s32 1, %s3
  %s6 = scalar_select 0, %s5, %s3
  $region1: #{_lambda_.44} parent=0
    #allocation2 [shape = 'u8[512]{0}', space=vmem, size = 0x400, scoped, tag = 'output window, operand 0, single buffered']
    #allocation3 [shape = 's32[1]{0}', space=sflag, size = 0x4, scoped, tag = 'scoped memory for _lambda_.44']
    %7 = vsyncpa [#allocation3], 0
    // Predicated region
    $region2: #{_lambda_.44} parent=1 // pred_check
      _
    $region3: #{_lambda_.44} parent=1 // pred_check_branch
      %9 = sbr.rel (0) target = $region5
    $region4: #{_lambda_.44} parent=1 // pred_region
      _
    $region5: #{_lambda_.44} parent=1 // pred_fallthru
      _
    // Predicated region
    $region6: #{_lambda_.44} parent=1 // pred_check
      _
    $region7: #{_lambda_.44} parent=1 // pred_check_branch
      %11 = sbr.rel (0) target = $region9
    $region8: #{_lambda_.44} parent=1 // pred_region
      _
    $region9: #{_lambda_.44} parent=1 // pred_fallthru
      _
    %v12 = vld [vmem:[%s0] sm:$0xff]
    %v13 = vld [vmem:[%s0 + $0x8] sm:$0xff]
    %v14 = vld [vmem:[%s0 + $0x10] sm:$0xff]
    %v15 = vld [vmem:[%s0 + $0x18] sm:$0xff]
    %v16 = vld [vmem:[%s0 + $0x20] sm:$0xff]
    %v17 = vld [vmem:[%s0 + $0x28] sm:$0xff]
    %v18 = vld [vmem:[%s0 + $0x30] sm:$0xff]
    %v19 = vld [vmem:[%s1] sm:$0xff]
    %v20 = vld [vmem:[%s1 + $0x8] sm:$0xff]
    %v21 = vld [vmem:[%s1 + $0x10] sm:$0xff]
    %v22 = vld [vmem:[%s1 + $0x18] sm:$0xff]
    %v23 = vld [vmem:[%s1 + $0x20] sm:$0xff]
    %v24 = vld [vmem:[%s1 + $0x28] sm:$0xff]
    %v25 = vld [vmem:[%s1 + $0x30] sm:$0xff]
    %v26 = vsub.f32 %v12, %v19
    %v27 = vsub.f32 %v13, %v20
    %v28 = vsub.f32 %v14, %v21
    %v29 = vsub.f32 %v15, %v22
    %v30 = vsub.f32 %v16, %v23
    %v31 = vsub.f32 %v17, %v24
    %v32 = vsub.f32 %v18, %v25
    %v33 = vand.u32 2147483647, %v26
    %v34 = vand.u32 2147483647, %v27
    %v35 = vand.u32 2147483647, %v28
    %v36 = vand.u32 2147483647, %v29
    %v37 = vand.u32 2147483647, %v30
    %v38 = vand.u32 2147483647, %v31
    %v39 = vand.u32 2147483647, %v32
    %v40 = vadd.f32 %v33, %v34
    %v41 = vadd.f32 %v40, %v35
    %v42 = vadd.f32 %v41, %v36
    %v43 = vadd.f32 %v42, %v37
    %v44 = vadd.f32 %v43, %v38
    %v45 = vadd.f32 %v44, %v39
    %46 = vadd.xlane.f32.xlu0 %v45
    %v47 = vpop.xlane.xlu0 %46
    %v48 = vrot.slane %v47, 4
    %v49 = vadd.f32 %v47, %v48
    %v50 = vrot.slane %v49, 2
    %v51 = vadd.f32 %v49, %v50
    %v52 = vrot.slane %v51, 1
    %v53 = vadd.f32 %v51, %v52
    %s54 = vtos %v53
    %v55 = vstv %s54
    %vm56 = vcmask 0
    %57 = vst.msk [vmem:[#allocation2] sm:$0x1] %vm56, %v55
    // Predicated region
    $region10: #{_lambda_.44} parent=1 // pred_check
      _
    $region11: #{_lambda_.44} parent=1 // pred_check_branch
      %59 = sbr.rel (0) target = $region13
    $region12: #{_lambda_.44} parent=1 // pred_region
      %s61 = ssub.s32 16, 16
      %62 = vsyncadd [#allocation3], %s61
      %s64 = sshll.u32 [#allocation2], 4
      %s65 = int_to_ptr.vmem [resolvable:$true] %s64
      %67 = dma.vmem_to_hbm [thread:$0]  %s65, 16, %s2, [#allocation3]
    $region13: #{_lambda_.44} parent=1 // pred_fallthru
      _
    // Predicated region
    $region14: #{_lambda_.44} parent=1 // pred_check
      _
    $region15: #{_lambda_.44} parent=1 // pred_check_branch
      %69 = sbr.rel (0) target = $region17
    $region16: #{_lambda_.44} parent=1 // pred_region
      %70 = dma.done [#allocation3], 16
    $region17: #{_lambda_.44} parent=1 // pred_fallthru
      _
    %71 = vsyncpa [#allocation3], 1

// kernel: _lambda_.43
$region0: #{_lambda_.43}
  #allocation0 [shape = 'u32[]', space=smem, size = 0x4, offset = 0x4, fixed_abs, tag = 'smem constant byte address 0x4 - core index']
  #allocation1 [shape = 'u32[144,128]{1,0:T(1,128)}', space=vmem, size = 0x12000, scoped, tag = 'internal scratch']
  %s0 = inlined_call_operand.vmem [shape: f32[24,128], index: 0, kind: input, shape index: {}]
  %s1 = inlined_call_operand.vmem [shape: f32[24,128], index: 1, kind: input, shape index: {}]
  %s2 = inlined_call_operand.hbm [shape: f32[1,1], index: 2, kind: output, shape index: {}]
  %s3 = sld [smem:[#allocation0]]
  $region18: #{_lambda_.43} parent=0
    _
  %s5 = ssub.s32 1, %s3
  %s6 = scalar_select 0, %s5, %s3
  $region1: #{_lambda_.43} parent=0
    #allocation2 [shape = 'u8[512]{0}', space=vmem, size = 0x400, scoped, tag = 'output window, operand 0, single buffered']
    #allocation3 [shape = 's32[1]{0}', space=sflag, size = 0x4, scoped, tag = 'scoped memory for _lambda_.43']
    %7 = vsyncpa [#allocation3], 0
    // Predicated region
    $region2: #{_lambda_.43} parent=1 // pred_check
      _
    $region3: #{_lambda_.43} parent=1 // pred_check_branch
      %9 = sbr.rel (0) target = $region5
    $region4: #{_lambda_.43} parent=1 // pred_region
      _
    $region5: #{_lambda_.43} parent=1 // pred_fallthru
      _
    // Predicated region
    $region6: #{_lambda_.43} parent=1 // pred_check
      _
    $region7: #{_lambda_.43} parent=1 // pred_check_branch
      %11 = sbr.rel (0) target = $region9
    $region8: #{_lambda_.43} parent=1 // pred_region
      _
    $region9: #{_lambda_.43} parent=1 // pred_fallthru
      _
    %v12 = vld [vmem:[%s0] sm:$0xff]
    %v13 = vld [vmem:[%s0 + $0x8] sm:$0xff]
    %v14 = vld [vmem:[%s0 + $0x10] sm:$0xff]
    %v15 = vld [vmem:[%s1] sm:$0xff]
    %v16 = vld [vmem:[%s1 + $0x8] sm:$0xff]
    %v17 = vld [vmem:[%s1 + $0x10] sm:$0xff]
    %v18 = vsub.f32 %v12, %v15
    %v19 = vsub.f32 %v13, %v16
    %v20 = vsub.f32 %v14, %v17
    %v21 = vand.u32 2147483647, %v18
    %v22 = vand.u32 2147483647, %v19
    %v23 = vand.u32 2147483647, %v20
    %v24 = vadd.f32 %v21, %v22
    %v25 = vadd.f32 %v24, %v23
    %26 = vadd.xlane.f32.xlu0 %v25
    %v27 = vpop.xlane.xlu0 %26
    %v28 = vrot.slane %v27, 4
    %v29 = vadd.f32 %v27, %v28
    %v30 = vrot.slane %v29, 2
    %v31 = vadd.f32 %v29, %v30
    %v32 = vrot.slane %v31, 1
    %v33 = vadd.f32 %v31, %v32
    %s34 = vtos %v33
    %v35 = vstv %s34
    %vm36 = vcmask 0
    %37 = vst.msk [vmem:[#allocation2] sm:$0x1] %vm36, %v35
    // Predicated region
    $region10: #{_lambda_.43} parent=1 // pred_check
      _
    $region11: #{_lambda_.43} parent=1 // pred_check_branch
      %39 = sbr.rel (0) target = $region13
    $region12: #{_lambda_.43} parent=1 // pred_region
      %s41 = ssub.s32 16, 16
      %42 = vsyncadd [#allocation3], %s41
      %s44 = sshll.u32 [#allocation2], 4
      %s45 = int_to_ptr.vmem [resolvable:$true] %s44
      %47 = dma.vmem_to_hbm [thread:$0]  %s45, 16, %s2, [#allocation3]
    $region13: #{_lambda_.43} parent=1 // pred_fallthru
      _
    // Predicated region
    $region14: #{_lambda_.43} parent=1 // pred_check
      _
    $region15: #{_lambda_.43} parent=1 // pred_check_branch
      %49 = sbr.rel (0) target = $region17
    $region16: #{_lambda_.43} parent=1 // pred_region
      %50 = dma.done [#allocation3], 16
    $region17: #{_lambda_.43} parent=1 // pred_fallthru
      _
    %51 = vsyncpa [#allocation3], 1

// kernel: _lambda_.42
$region0: #{_lambda_.42}
  #allocation0 [shape = 'u32[]', space=smem, size = 0x4, offset = 0x4, fixed_abs, tag = 'smem constant byte address 0x4 - core index']
  #allocation1 [shape = 'u32[144,128]{1,0:T(1,128)}', space=vmem, size = 0x12000, scoped, tag = 'internal scratch']
  %s0 = inlined_call_operand.vmem [shape: f32[40,128], index: 0, kind: input, shape index: {}]
  %s1 = inlined_call_operand.vmem [shape: f32[40,128], index: 1, kind: input, shape index: {}]
  %s2 = inlined_call_operand.hbm [shape: f32[1,1], index: 2, kind: output, shape index: {}]
  %s3 = sld [smem:[#allocation0]]
  $region18: #{_lambda_.42} parent=0
    _
  %s5 = ssub.s32 1, %s3
  %s6 = scalar_select 0, %s5, %s3
  $region1: #{_lambda_.42} parent=0
    #allocation2 [shape = 'u8[512]{0}', space=vmem, size = 0x400, scoped, tag = 'output window, operand 0, single buffered']
    #allocation3 [shape = 's32[1]{0}', space=sflag, size = 0x4, scoped, tag = 'scoped memory for _lambda_.42']
    %7 = vsyncpa [#allocation3], 0
    // Predicated region
    $region2: #{_lambda_.42} parent=1 // pred_check
      _
    $region3: #{_lambda_.42} parent=1 // pred_check_branch
      %9 = sbr.rel (0) target = $region5
    $region4: #{_lambda_.42} parent=1 // pred_region
      _
    $region5: #{_lambda_.42} parent=1 // pred_fallthru
      _
    // Predicated region
    $region6: #{_lambda_.42} parent=1 // pred_check
      _
    $region7: #{_lambda_.42} parent=1 // pred_check_branch
      %11 = sbr.rel (0) target = $region9
    $region8: #{_lambda_.42} parent=1 // pred_region
      _
    $region9: #{_lambda_.42} parent=1 // pred_fallthru
      _
    %v12 = vld [vmem:[%s0] sm:$0xff]
    %v13 = vld [vmem:[%s0 + $0x8] sm:$0xff]
    %v14 = vld [vmem:[%s0 + $0x10] sm:$0xff]
    %v15 = vld [vmem:[%s0 + $0x18] sm:$0xff]
    %v16 = vld [vmem:[%s0 + $0x20] sm:$0xff]
    %v17 = vld [vmem:[%s1] sm:$0xff]
    %v18 = vld [vmem:[%s1 + $0x8] sm:$0xff]
    %v19 = vld [vmem:[%s1 + $0x10] sm:$0xff]
    %v20 = vld [vmem:[%s1 + $0x18] sm:$0xff]
    %v21 = vld [vmem:[%s1 + $0x20] sm:$0xff]
    %v22 = vsub.f32 %v12, %v17
    %v23 = vsub.f32 %v13, %v18
    %v24 = vsub.f32 %v14, %v19
    %v25 = vsub.f32 %v15, %v20
    %v26 = vsub.f32 %v16, %v21
    %v27 = vand.u32 2147483647, %v22
    %v28 = vand.u32 2147483647, %v23
    %v29 = vand.u32 2147483647, %v24
    %v30 = vand.u32 2147483647, %v25
    %v31 = vand.u32 2147483647, %v26
    %v32 = vadd.f32 %v27, %v28
    %v33 = vadd.f32 %v32, %v29
    %v34 = vadd.f32 %v33, %v30
    %v35 = vadd.f32 %v34, %v31
    %36 = vadd.xlane.f32.xlu0 %v35
    %v37 = vpop.xlane.xlu0 %36
    %v38 = vrot.slane %v37, 4
    %v39 = vadd.f32 %v37, %v38
    %v40 = vrot.slane %v39, 2
    %v41 = vadd.f32 %v39, %v40
    %v42 = vrot.slane %v41, 1
    %v43 = vadd.f32 %v41, %v42
    %s44 = vtos %v43
    %v45 = vstv %s44
    %vm46 = vcmask 0
    %47 = vst.msk [vmem:[#allocation2] sm:$0x1] %vm46, %v45
    // Predicated region
    $region10: #{_lambda_.42} parent=1 // pred_check
      _
    $region11: #{_lambda_.42} parent=1 // pred_check_branch
      %49 = sbr.rel (0) target = $region13
    $region12: #{_lambda_.42} parent=1 // pred_region
      %s51 = ssub.s32 16, 16
      %52 = vsyncadd [#allocation3], %s51
      %s54 = sshll.u32 [#allocation2], 4
      %s55 = int_to_ptr.vmem [resolvable:$true] %s54
      %57 = dma.vmem_to_hbm [thread:$0]  %s55, 16, %s2, [#allocation3]
    $region13: #{_lambda_.42} parent=1 // pred_fallthru
      _
    // Predicated region
    $region14: #{_lambda_.42} parent=1 // pred_check
      _
    $region15: #{_lambda_.42} parent=1 // pred_check_branch
      %59 = sbr.rel (0) target = $region17
    $region16: #{_lambda_.42} parent=1 // pred_region
      %60 = dma.done [#allocation3], 16
    $region17: #{_lambda_.42} parent=1 // pred_fallthru
      _
    %61 = vsyncpa [#allocation3], 1

// kernel: _lambda_.40
$region0: #{_lambda_.40}
  #allocation0 [shape = 'u32[]', space=smem, size = 0x4, offset = 0x4, fixed_abs, tag = 'smem constant byte address 0x4 - core index']
  #allocation1 [shape = 'u32[144,128]{1,0:T(1,128)}', space=vmem, size = 0x12000, scoped, tag = 'internal scratch']
  %s0 = inlined_call_operand.vmem [shape: bf16[256,512], index: 0, kind: input, shape index: {}]
  %s1 = inlined_call_operand.vmem [shape: bf16[512,128], index: 1, kind: input, shape index: {}]
  %s2 = inlined_call_operand.vmem [shape: f32[1,128], index: 2, kind: input, shape index: {}]
  %s3 = inlined_call_operand.vmem [shape: f32[256,128], index: 3, kind: output, shape index: {}]
  %s4 = sld [smem:[#allocation0]]
  $region45: #{_lambda_.40} parent=0
    _
  %s6 = ssub.s32 1, %s4
  %s7 = scalar_select 0, %s6, %s4
  loop: start=0, step=1, limit=4
  $region2: #{_lambda_.40} parent=0 // loop_pre_header
    _
  $region3: #{_lambda_.40} parent=0 // loop_header
    %s9 = sphi 0, %s13
    %p10 = scmp.ge.s32.totalorder %s9, 4
    %s16 = sphi 0, %s28
    %s17 = sphi 0, %s24
    %s18 = sphi 0, %s16
    %s19 = sphi 0, %s17
    %s20 = sphi 0, %s18
    %s21 = sphi 0, %s19
    %s31 = sphi 0, %s33
    %s34 = sphi 0, %s31
    %s35 = sphi 0, %s34
    %s51 = sphi 0, %s35
    %s57 = sphi 0, %s59
    %s60 = sphi 0, %s57
    %s61 = sphi 0, %s60
    %s77 = sphi 0, %s61
    %s83 = sphi 0, %s85
    %s86 = sphi 0, %s83
    %s87 = sphi 0, %s86
    %s103 = sphi 0, %s87
    %s111 = sphi 0, %s113
    %s114 = sphi 0, %s111
    %s115 = sphi 0, %s114
    %s131 = sphi 0, %s115
  $region4: #{_lambda_.40} parent=0 // loop_header_branch
    %12 = sbr.rel (%p10) target = $region8
  $region5: #{_lambda_.40} parent=0 // loop_body
    %s14 = ssub.s32 %s9, 1
    %s15 = ssub.s32 %s9, 2
    %s22 = sadd.s32 1, %s17
    %p23 = scmp.ge.s32.totalorder %s22, 1
    %s24 = scalar_select %p23, 0, %s22
    %s25 = sadd.s32 1, %s16
    %s26 = scalar_select %p23, %s25, %s16
    %p27 = scmp.ge.s32.totalorder %s26, 2
    %s28 = scalar_select %p27, 0, %s26
    %s29 = ssub.s32 %s16, %s28
    %p30 = scmp.eq.s32.totalorder %s29, 0
    %s32 = sadd.s32 %s31, 1
    %s33 = scalar_select %p30, %s31, %s32
    %p36 = pneg %p30
    %p37 = scmp.eq.s32.totalorder %s9, 1
    %p38 = por %p36, %p37
    %p39 = scmp.ne.s32.totalorder %s31, %s34
    %p40 = scmp.eq.s32.totalorder %s9, 0
    %p41 = por %p39, %p40
    %p42 = scmp.ne.s32.totalorder %s31, %s34
    %p43 = scmp.eq.s32.totalorder %s14, 1
    %p44 = por %p42, %p43
    %p45 = scmp.ne.s32.totalorder %s34, %s35
    %p46 = scmp.eq.s32.totalorder %s14, 0
    %p47 = por %p45, %p46
    %p48 = scmp.ne.s32.totalorder %s34, %s35
    %p49 = scmp.eq.s32.totalorder %s15, 1
    %p50 = por %p48, %p49
    %p52 = scmp.ne.s32.totalorder %s35, %s51
    %p53 = scmp.eq.s32.totalorder %s15, 0
    %p54 = por %p52, %p53
    %s55 = ssub.s32 %s17, %s24
    %p56 = scmp.eq.s32.totalorder %s55, 0
    %s58 = sadd.s32 %s57, 1
    %s59 = scalar_select %p56, %s57, %s58
    %p62 = pneg %p56
    %p63 = scmp.eq.s32.totalorder %s9, 1
    %p64 = por %p62, %p63
    %p65 = scmp.ne.s32.totalorder %s57, %s60
    %p66 = scmp.eq.s32.totalorder %s9, 0
    %p67 = por %p65, %p66
    %p68 = scmp.ne.s32.totalorder %s57, %s60
    %p69 = scmp.eq.s32.totalorder %s14, 1
    %p70 = por %p68, %p69
    %p71 = scmp.ne.s32.totalorder %s60, %s61
    %p72 = scmp.eq.s32.totalorder %s14, 0
    %p73 = por %p71, %p72
    %p74 = scmp.ne.s32.totalorder %s60, %s61
    %p75 = scmp.eq.s32.totalorder %s15, 1
    %p76 = por %p74, %p75
    %p78 = scmp.ne.s32.totalorder %s61, %s77
    %p79 = scmp.eq.s32.totalorder %s15, 0
    %p80 = por %p78, %p79
    %s81 = ssub.s32 %s17, %s24
    %p82 = scmp.eq.s32.totalorder %s81, 0
    %s84 = sadd.s32 %s83, 1
    %s85 = scalar_select %p82, %s83, %s84
    %p88 = pneg %p82
    %p89 = scmp.eq.s32.totalorder %s9, 1
    %p90 = por %p88, %p89
    %p91 = scmp.ne.s32.totalorder %s83, %s86
    %p92 = scmp.eq.s32.totalorder %s9, 0
    %p93 = por %p91, %p92
    %p94 = scmp.ne.s32.totalorder %s83, %s86
    %p95 = scmp.eq.s32.totalorder %s14, 1
    %p96 = por %p94, %p95
    %p97 = scmp.ne.s32.totalorder %s86, %s87
    %p98 = scmp.eq.s32.totalorder %s14, 0
    %p99 = por %p97, %p98
    %p100 = scmp.ne.s32.totalorder %s86, %s87
    %p101 = scmp.eq.s32.totalorder %s15, 1
    %p102 = por %p100, %p101
    %p104 = scmp.ne.s32.totalorder %s87, %s103
    %p105 = scmp.eq.s32.totalorder %s15, 0
    %p106 = por %p104, %p105
    %s107 = ssub.s32 %s16, %s28
    %s108 = ssub.s32 %s17, %s24
    %s109 = sor.u32 %s107, %s108
    %p110 = scmp.eq.s32.totalorder %s109, 0
    %s112 = sadd.s32 %s111, 1
    %s113 = scalar_select %p110, %s111, %s112
    %p116 = pneg %p110
    %p117 = scmp.eq.s32.totalorder %s9, 1
    %p118 = por %p116, %p117
    %p119 = scmp.ne.s32.totalorder %s111, %s114
    %p120 = scmp.eq.s32.totalorder %s9, 0
    %p121 = por %p119, %p120
    %p122 = scmp.ne.s32.totalorder %s111, %s114
    %p123 = scmp.eq.s32.totalorder %s14, 1
    %p124 = por %p122, %p123
    %p125 = scmp.ne.s32.totalorder %s114, %s115
    %p126 = scmp.eq.s32.totalorder %s14, 0
    %p127 = por %p125, %p126
    %p128 = scmp.ne.s32.totalorder %s114, %s115
    %p129 = scmp.eq.s32.totalorder %s15, 1
    %p130 = por %p128, %p129
    %p132 = scmp.ne.s32.totalorder %s115, %s131
    %p133 = scmp.eq.s32.totalorder %s15, 0
    %p134 = por %p132, %p133
    %p135 = scmp.le.s32.totalorder 1, %s9
    %p136 = scmp.lt.s32.totalorder %s9, 3
    %p137 = pnand %p135, %p136
    %p138 = pneg %p137
    // Predicated region
    $region9: #{_lambda_.40} parent=5 // pred_check
      _
    $region10: #{_lambda_.40} parent=5 // pred_check_branch
      %140 = sbr.rel (%p137) target = $region12
    $region11: #{_lambda_.40} parent=5 // pred_region
      %s141 = ssub.s32 %s9, 1
      // Predicated region
      $region13: #{_lambda_.40} parent=11 // pred_check
        %p142 = pneg %p73
      $region14: #{_lambda_.40} parent=11 // pred_check_branch
        %144 = sbr.rel (%p142) target = $region16
      $region15: #{_lambda_.40} parent=11 // pred_region
        %p145 = scmp.lt.s32.totalorder %s19, 0
        %s146 = scalar_select %p145, %s19, 0
        %s147 = smul.addr %s146, 4
        %s148 = scalar_lea.vmem %s1, %s147
      $region16: #{_lambda_.40} parent=11 // pred_fallthru
        _
      // Predicated region
      $region17: #{_lambda_.40} parent=11 // pred_check
        %p149 = pneg %p99
      $region18: #{_lambda_.40} parent=11 // pred_check_branch
        %151 = sbr.rel (%p149) target = $region20
      $region19: #{_lambda_.40} parent=11 // pred_region
        %p152 = scmp.lt.s32.totalorder %s19, 0
        %s153 = scalar_select %p152, %s19, 0
        %s154 = scalar_lea.vmem %s2, %s153
      $region20: #{_lambda_.40} parent=11 // pred_fallthru
        _
    $region12: #{_lambda_.40} parent=5 // pred_fallthru
      _
    %p155 = scmp.lt.s32.totalorder %s9, 2
    // Predicated region
    $region21: #{_lambda_.40} parent=5 // pred_check
      %p156 = pneg %p155
    $region22: #{_lambda_.40} parent=5 // pred_check_branch
      %158 = sbr.rel (%p156) target = $region24
    $region23: #{_lambda_.40} parent=5 // pred_region
      // Predicated region
      $region25: #{_lambda_.40} parent=23 // pred_check
        %p159 = pneg %p41
      $region26: #{_lambda_.40} parent=23 // pred_check_branch
        %161 = sbr.rel (%p159) target = $region28
      $region27: #{_lambda_.40} parent=23 // pred_region
        %s162 = smul.u32 16, %s16
        %p163 = scmp.lt.s32.totalorder %s162, 31
        %s164 = scalar_select %p163, %s162, 31
        %s165 = smul.addr %s164, 4
        %s166 = smul.addr %s165, 4
        %s167 = scalar_lea.vmem %s0, %s166
        %s168 = smul.u32 16, %s16
      $region28: #{_lambda_.40} parent=23 // pred_fallthru
        _
    $region24: #{_lambda_.40} parent=5 // pred_fallthru
      _
    %p169 = scmp.le.s32.totalorder 1, %s9
    %p170 = scmp.lt.s32.totalorder %s9, 3
    %p171 = pnand %p169, %p170
    %p172 = pneg %p171
    // Predicated region
    $region29: #{_lambda_.40} parent=5 // pred_check
      _
    $region30: #{_lambda_.40} parent=5 // pred_check_branch
      %174 = sbr.rel (%p171) target = $region32
    $region31: #{_lambda_.40} parent=5 // pred_region
      %s175 = ssub.s32 %s9, 1
      %s176 = smul.u32 16, %s18
      %p177 = scmp.lt.s32.totalorder %s176, 31
      %s178 = scalar_select %p177, %s176, 31
      %s179 = smul.addr %s178, 4
      %s180 = smul.addr %s179, 4
      %s181 = scalar_lea.vmem %s0, %s180
      %p182 = pneg %p47
      %p183 = pneg %p44
      %p184 = scmp.lt.s32.totalorder %s19, 0
      %s185 = scalar_select %p184, %s19, 0
      %s186 = smul.addr %s185, 4
      %s187 = scalar_lea.vmem %s1, %s186
      %p188 = pneg %p73
      %p189 = pneg %p70
      %p190 = scmp.lt.s32.totalorder %s19, 0
      %s191 = scalar_select %p190, %s19, 0
      %s192 = scalar_lea.vmem %s2, %s191
      %p193 = pneg %p99
      %p194 = pneg %p96
      %p195 = pneg %p127
      %p196 = pneg %p124
      %s197 = smul.u32 16, %s18
      %p198 = scmp.lt.s32.totalorder %s197, 31
      %s199 = scalar_select %p198, %s197, 31
      %p200 = scmp.lt.s32.totalorder %s19, 0
      %s201 = scalar_select %p200, %s19, 0
      %s202 = sadd.s32 %s201, %s199
      %s203 = smul.addr %s202, 8
      %s204 = scalar_lea.vmem %s3, %s203
      %s205 = smul.u32 16, %s18
      %p206 = scmp.lt.s32.totalorder %s205, 31
      %s207 = scalar_select %p206, %s205, 31
      %s208 = smul.addr %s207, 4
      %s209 = smul.addr %s208, 4
      %s210 = scalar_lea.vmem %s0, %s209
      %s211 = smul.u32 16, %s18
      %p212 = scmp.lt.s32.totalorder %s19, 0
      %s213 = scalar_select %p212, %s19, 0
      %s214 = smul.addr %s213, 4
      %s215 = scalar_lea.vmem %s1, %s214
      %p216 = scmp.lt.s32.totalorder %s19, 0
      %s217 = scalar_select %p216, %s19, 0
      %s218 = scalar_lea.vmem %s2, %s217
      %s219 = smul.u32 16, %s18
      %p220 = scmp.lt.s32.totalorder %s219, 31
      %s221 = scalar_select %p220, %s219, 31
      %p222 = scmp.lt.s32.totalorder %s19, 0
      %s223 = scalar_select %p222, %s19, 0
      %s224 = sadd.s32 %s223, %s221
      %s225 = smul.addr %s224, 8
      %s226 = scalar_lea.vmem %s3, %s225
      %s227 = smul.u32 16, %s18
      %v229 = vld [vmem:[%s210] sm:$0xff]
      %v230 = vld [vmem:[%s210 + $0x8] sm:$0xff]
      %v231 = vld [vmem:[%s210 + $0x10] sm:$0xff]
      %v232 = vld [vmem:[%s210 + $0x18] sm:$0xff]
      %v233 = vld [vmem:[%s210 + $0x20] sm:$0xff]
      %v234 = vld [vmem:[%s210 + $0x28] sm:$0xff]
      %v235 = vld [vmem:[%s210 + $0x30] sm:$0xff]
      %v236 = vld [vmem:[%s210 + $0x38] sm:$0xff]
      %v237 = vld [vmem:[%s210 + $0x40] sm:$0xff]
      %v238 = vld [vmem:[%s210 + $0x48] sm:$0xff]
      %v239 = vld [vmem:[%s210 + $0x50] sm:$0xff]
      %v240 = vld [vmem:[%s210 + $0x58] sm:$0xff]
      %v241 = vld [vmem:[%s210 + $0x60] sm:$0xff]
      %v242 = vld [vmem:[%s210 + $0x68] sm:$0xff]
      %v243 = vld [vmem:[%s210 + $0x70] sm:$0xff]
      %v244 = vld [vmem:[%s210 + $0x78] sm:$0xff]
      %v245 = vld [vmem:[%s210 + $0x80] sm:$0xff]
      %v246 = vld [vmem:[%s210 + $0x88] sm:$0xff]
      %v247 = vld [vmem:[%s210 + $0x90] sm:$0xff]
      %v248 = vld [vmem:[%s210 + $0x98] sm:$0xff]
      %v249 = vld [vmem:[%s210 + $0xa0] sm:$0xff]
      %v250 = vld [vmem:[%s210 + $0xa8] sm:$0xff]
      %v251 = vld [vmem:[%s210 + $0xb0] sm:$0xff]
      %v252 = vld [vmem:[%s210 + $0xb8] sm:$0xff]
      %v253 = vld [vmem:[%s210 + $0xc0] sm:$0xff]
      %v254 = vld [vmem:[%s210 + $0xc8] sm:$0xff]
      %v255 = vld [vmem:[%s210 + $0xd0] sm:$0xff]
      %v256 = vld [vmem:[%s210 + $0xd8] sm:$0xff]
      %v257 = vld [vmem:[%s210 + $0xe0] sm:$0xff]
      %v258 = vld [vmem:[%s210 + $0xe8] sm:$0xff]
      %v259 = vld [vmem:[%s210 + $0xf0] sm:$0xff]
      %v260 = vld [vmem:[%s210 + $0xf8] sm:$0xff]
      %v261 = vld [vmem:[%s215] sm:$0xf]
      %v262 = vld [vmem:[%s215 + $0x4] sm:$0xf]
      %v263 = vld [vmem:[%s215 + $0x8] sm:$0xf]
      %v264 = vld [vmem:[%s215 + $0xc] sm:$0xf]
      %v265 = vld [vmem:[%s215 + $0x10] sm:$0xf]
      %v266 = vld [vmem:[%s215 + $0x14] sm:$0xf]
      %v267 = vld [vmem:[%s215 + $0x18] sm:$0xf]
      %v268 = vld [vmem:[%s215 + $0x1c] sm:$0xf]
      %v269 = vld [vmem:[%s215 + $0x20] sm:$0xf]
      %v270 = vld [vmem:[%s215 + $0x24] sm:$0xf]
      %v271 = vld [vmem:[%s215 + $0x28] sm:$0xf]
      %v272 = vld [vmem:[%s215 + $0x2c] sm:$0xf]
      %v273 = vld [vmem:[%s215 + $0x30] sm:$0xf]
      %v274 = vld [vmem:[%s215 + $0x34] sm:$0xf]
      %v275 = vld [vmem:[%s215 + $0x38] sm:$0xf]
      %v276 = vld [vmem:[%s215 + $0x3c] sm:$0xf]
      %v277 = vld [vmem:[%s215 + $0x40] sm:$0xf]
      %v278 = vld [vmem:[%s215 + $0x44] sm:$0xf]
      %v279 = vld [vmem:[%s215 + $0x48] sm:$0xf]
      %v280 = vld [vmem:[%s215 + $0x4c] sm:$0xf]
      %v281 = vld [vmem:[%s215 + $0x50] sm:$0xf]
      %v282 = vld [vmem:[%s215 + $0x54] sm:$0xf]
      %v283 = vld [vmem:[%s215 + $0x58] sm:$0xf]
      %v284 = vld [vmem:[%s215 + $0x5c] sm:$0xf]
      %v285 = vld [vmem:[%s215 + $0x60] sm:$0xf]
      %v286 = vld [vmem:[%s215 + $0x64] sm:$0xf]
      %v287 = vld [vmem:[%s215 + $0x68] sm:$0xf]
      %v288 = vld [vmem:[%s215 + $0x6c] sm:$0xf]
      %v289 = vld [vmem:[%s215 + $0x70] sm:$0xf]
      %v290 = vld [vmem:[%s215 + $0x74] sm:$0xf]
      %v291 = vld [vmem:[%s215 + $0x78] sm:$0xf]
      %v292 = vld [vmem:[%s215 + $0x7c] sm:$0xf]
      %v293 = vld [vmem:[%s215 + $0x80] sm:$0xf]
      %v294 = vld [vmem:[%s215 + $0x84] sm:$0xf]
      %v295 = vld [vmem:[%s215 + $0x88] sm:$0xf]
      %v296 = vld [vmem:[%s215 + $0x8c] sm:$0xf]
      %v297 = vld [vmem:[%s215 + $0x90] sm:$0xf]
      %v298 = vld [vmem:[%s215 + $0x94] sm:$0xf]
      %v299 = vld [vmem:[%s215 + $0x98] sm:$0xf]
      %v300 = vld [vmem:[%s215 + $0x9c] sm:$0xf]
      %v301 = vld [vmem:[%s215 + $0xa0] sm:$0xf]
      %v302 = vld [vmem:[%s215 + $0xa4] sm:$0xf]
      %v303 = vld [vmem:[%s215 + $0xa8] sm:$0xf]
      %v304 = vld [vmem:[%s215 + $0xac] sm:$0xf]
      %v305 = vld [vmem:[%s215 + $0xb0] sm:$0xf]
      %v306 = vld [vmem:[%s215 + $0xb4] sm:$0xf]
      %v307 = vld [vmem:[%s215 + $0xb8] sm:$0xf]
      %v308 = vld [vmem:[%s215 + $0xbc] sm:$0xf]
      %v309 = vld [vmem:[%s215 + $0xc0] sm:$0xf]
      %v310 = vld [vmem:[%s215 + $0xc4] sm:$0xf]
      %v311 = vld [vmem:[%s215 + $0xc8] sm:$0xf]
      %v312 = vld [vmem:[%s215 + $0xcc] sm:$0xf]
      %v313 = vld [vmem:[%s215 + $0xd0] sm:$0xf]
      %v314 = vld [vmem:[%s215 + $0xd4] sm:$0xf]
      %v315 = vld [vmem:[%s215 + $0xd8] sm:$0xf]
      %v316 = vld [vmem:[%s215 + $0xdc] sm:$0xf]
      %v317 = vld [vmem:[%s215 + $0xe0] sm:$0xf]
      %v318 = vld [vmem:[%s215 + $0xe4] sm:$0xf]
      %v319 = vld [vmem:[%s215 + $0xe8] sm:$0xf]
      %v320 = vld [vmem:[%s215 + $0xec] sm:$0xf]
      %v321 = vld [vmem:[%s215 + $0xf0] sm:$0xf]
      %v322 = vld [vmem:[%s215 + $0xf4] sm:$0xf]
      %v323 = vld [vmem:[%s215 + $0xf8] sm:$0xf]
      %v324 = vld [vmem:[%s215 + $0xfc] sm:$0xf]
      %v325 = vld [vmem:[%s218] sm:$0x1]
      %v327 = vlaneseq
      %v328 = vshrl.u32 %v327, 7
      %v329 = vsub.s32 0, %v328
      %v330 = vrot.slane %v325, %v329
      %v364 = vunpack.c.l.b16 %v229
      %v365 = vunpack.c.h.b16 %v229
      %v366 = vunpack.c.l.b16 %v230
      %v367 = vunpack.c.h.b16 %v230
      %v368 = vunpack.c.l.b16 %v231
      %v369 = vunpack.c.h.b16 %v231
      %v370 = vunpack.c.l.b16 %v232
      %v371 = vunpack.c.h.b16 %v232
      %v372 = vunpack.c.l.b16 %v233
      %v373 = vunpack.c.h.b16 %v233
      %v374 = vunpack.c.l.b16 %v234
      %v375 = vunpack.c.h.b16 %v234
      %v376 = vunpack.c.l.b16 %v235
      %v377 = vunpack.c.h.b16 %v235
      %v378 = vunpack.c.l.b16 %v236
      %v379 = vunpack.c.h.b16 %v236
      %v380 = vunpack.c.l.b16 %v237
      %v381 = vunpack.c.h.b16 %v237
      %v382 = vunpack.c.l.b16 %v238
      %v383 = vunpack.c.h.b16 %v238
      %v384 = vunpack.c.l.b16 %v239
      %v385 = vunpack.c.h.b16 %v239
      %v386 = vunpack.c.l.b16 %v240
      %v387 = vunpack.c.h.b16 %v240
      %v388 = vunpack.c.l.b16 %v241
      %v389 = vunpack.c.h.b16 %v241
      %v390 = vunpack.c.l.b16 %v242
      %v391 = vunpack.c.h.b16 %v242
      %v392 = vunpack.c.l.b16 %v243
      %v393 = vunpack.c.h.b16 %v243
      %v394 = vunpack.c.l.b16 %v244
      %v395 = vunpack.c.h.b16 %v244
      %v396 = vunpack.c.l.b16 %v245
      %v397 = vunpack.c.h.b16 %v245
      %v398 = vunpack.c.l.b16 %v246
      %v399 = vunpack.c.h.b16 %v246
      %v400 = vunpack.c.l.b16 %v247
      %v401 = vunpack.c.h.b16 %v247
      %v402 = vunpack.c.l.b16 %v248
      %v403 = vunpack.c.h.b16 %v248
      %v404 = vunpack.c.l.b16 %v249
      %v405 = vunpack.c.h.b16 %v249
      %v406 = vunpack.c.l.b16 %v250
      %v407 = vunpack.c.h.b16 %v250
      %v408 = vunpack.c.l.b16 %v251
      %v409 = vunpack.c.h.b16 %v251
      %v410 = vunpack.c.l.b16 %v252
      %v411 = vunpack.c.h.b16 %v252
      %v412 = vunpack.c.l.b16 %v253
      %v413 = vunpack.c.h.b16 %v253
      %v414 = vunpack.c.l.b16 %v254
      %v415 = vunpack.c.h.b16 %v254
      %v416 = vunpack.c.l.b16 %v255
      %v417 = vunpack.c.h.b16 %v255
      %v418 = vunpack.c.l.b16 %v256
      %v419 = vunpack.c.h.b16 %v256
      %v420 = vunpack.c.l.b16 %v257
      %v421 = vunpack.c.h.b16 %v257
      %v422 = vunpack.c.l.b16 %v258
      %v423 = vunpack.c.h.b16 %v258
      %v424 = vunpack.c.l.b16 %v259
      %v425 = vunpack.c.h.b16 %v259
      %v426 = vunpack.c.l.b16 %v260
      %v427 = vunpack.c.h.b16 %v260
      %v428 = vpack.c.b16 %v368, %v364
      %v429 = vpack.c.b16 %v369, %v365
      %v430 = vpack.c.b16 %v370, %v366
      %v431 = vpack.c.b16 %v371, %v367
      %v432 = vpack.c.b16 %v376, %v372
      %v433 = vpack.c.b16 %v377, %v373
      %v434 = vpack.c.b16 %v378, %v374
      %v435 = vpack.c.b16 %v379, %v375
      %v436 = vpack.c.b16 %v384, %v380
      %v437 = vpack.c.b16 %v385, %v381
      %v438 = vpack.c.b16 %v386, %v382
      %v439 = vpack.c.b16 %v387, %v383
      %v440 = vpack.c.b16 %v392, %v388
      %v441 = vpack.c.b16 %v393, %v389
      %v442 = vpack.c.b16 %v394, %v390
      %v443 = vpack.c.b16 %v395, %v391
      %v444 = vpack.c.b16 %v400, %v396
      %v445 = vpack.c.b16 %v401, %v397
      %v446 = vpack.c.b16 %v402, %v398
      %v447 = vpack.c.b16 %v403, %v399
      %v448 = vpack.c.b16 %v408, %v404
      %v449 = vpack.c.b16 %v409, %v405
      %v450 = vpack.c.b16 %v410, %v406
      %v451 = vpack.c.b16 %v411, %v407
      %v452 = vpack.c.b16 %v416, %v412
      %v453 = vpack.c.b16 %v417, %v413
      %v454 = vpack.c.b16 %v418, %v414
      %v455 = vpack.c.b16 %v419, %v415
      %v456 = vpack.c.b16 %v424, %v420
      %v457 = vpack.c.b16 %v425, %v421
      %v458 = vpack.c.b16 %v426, %v422
      %v459 = vpack.c.b16 %v427, %v423
      %v556 = vunpack.c.l.b16 %v261
      %v557 = vunpack.c.l.b16 %v262
      %v558 = vunpack.c.l.b16 %v263
      %v559 = vunpack.c.l.b16 %v264
      %v560 = vunpack.c.l.b16 %v265
      %v561 = vunpack.c.l.b16 %v266
      %v562 = vunpack.c.l.b16 %v267
      %v563 = vunpack.c.l.b16 %v268
      %v564 = vunpack.c.l.b16 %v269
      %v565 = vunpack.c.l.b16 %v270
      %v566 = vunpack.c.l.b16 %v271
      %v567 = vunpack.c.l.b16 %v272
      %v568 = vunpack.c.l.b16 %v273
      %v569 = vunpack.c.l.b16 %v274
      %v570 = vunpack.c.l.b16 %v275
      %v571 = vunpack.c.l.b16 %v276
      %v572 = vunpack.c.l.b16 %v277
      %v573 = vunpack.c.l.b16 %v278
      %v574 = vunpack.c.l.b16 %v279
      %v575 = vunpack.c.l.b16 %v280
      %v576 = vunpack.c.l.b16 %v281
      %v577 = vunpack.c.l.b16 %v282
      %v578 = vunpack.c.l.b16 %v283
      %v579 = vunpack.c.l.b16 %v284
      %v580 = vunpack.c.l.b16 %v285
      %v581 = vunpack.c.l.b16 %v286
      %v582 = vunpack.c.l.b16 %v287
      %v583 = vunpack.c.l.b16 %v288
      %v584 = vunpack.c.l.b16 %v289
      %v585 = vunpack.c.l.b16 %v290
      %v586 = vunpack.c.l.b16 %v291
      %v587 = vunpack.c.l.b16 %v292
      %v588 = vunpack.c.l.b16 %v293
      %v589 = vunpack.c.l.b16 %v294
      %v590 = vunpack.c.l.b16 %v295
      %v591 = vunpack.c.l.b16 %v296
      %v592 = vunpack.c.l.b16 %v297
      %v593 = vunpack.c.l.b16 %v298
      %v594 = vunpack.c.l.b16 %v299
      %v595 = vunpack.c.l.b16 %v300
      %v596 = vunpack.c.l.b16 %v301
      %v597 = vunpack.c.l.b16 %v302
      %v598 = vunpack.c.l.b16 %v303
      %v599 = vunpack.c.l.b16 %v304
      %v600 = vunpack.c.l.b16 %v305
      %v601 = vunpack.c.l.b16 %v306
      %v602 = vunpack.c.l.b16 %v307
      %v603 = vunpack.c.l.b16 %v308
      %v604 = vunpack.c.l.b16 %v309
      %v605 = vunpack.c.l.b16 %v310
      %v606 = vunpack.c.l.b16 %v311
      %v607 = vunpack.c.l.b16 %v312
      %v608 = vunpack.c.l.b16 %v313
      %v609 = vunpack.c.l.b16 %v314
      %v610 = vunpack.c.l.b16 %v315
      %v611 = vunpack.c.l.b16 %v316
      %v612 = vunpack.c.l.b16 %v317
      %v613 = vunpack.c.l.b16 %v318
      %v614 = vunpack.c.l.b16 %v319
      %v615 = vunpack.c.l.b16 %v320
      %v616 = vunpack.c.l.b16 %v321
      %v617 = vunpack.c.l.b16 %v322
      %v618 = vunpack.c.l.b16 %v323
      %v619 = vunpack.c.l.b16 %v324
      %v620 = vpack.c.b16 %v557, %v556
      %v621 = vpack.c.b16 %v559, %v558
      %v622 = vpack.c.b16 %v561, %v560
      %v623 = vpack.c.b16 %v563, %v562
      %v624 = vpack.c.b16 %v565, %v564
      %v625 = vpack.c.b16 %v567, %v566
      %v626 = vpack.c.b16 %v569, %v568
      %v627 = vpack.c.b16 %v571, %v570
      %v628 = vpack.c.b16 %v573, %v572
      %v629 = vpack.c.b16 %v575, %v574
      %v630 = vpack.c.b16 %v577, %v576
      %v631 = vpack.c.b16 %v579, %v578
      %v632 = vpack.c.b16 %v581, %v580
      %v633 = vpack.c.b16 %v583, %v582
      %v634 = vpack.c.b16 %v585, %v584
      %v635 = vpack.c.b16 %v587, %v586
      %v636 = vpack.c.b16 %v589, %v588
      %v637 = vpack.c.b16 %v591, %v590
      %v638 = vpack.c.b16 %v593, %v592
      %v639 = vpack.c.b16 %v595, %v594
      %v640 = vpack.c.b16 %v597, %v596
      %v641 = vpack.c.b16 %v599, %v598
      %v642 = vpack.c.b16 %v601, %v600
      %v643 = vpack.c.b16 %v603, %v602
      %v644 = vpack.c.b16 %v605, %v604
      %v645 = vpack.c.b16 %v607, %v606
      %v646 = vpack.c.b16 %v609, %v608
      %v647 = vpack.c.b16 %v611, %v610
      %v648 = vpack.c.b16 %v613, %v612
      %v649 = vpack.c.b16 %v615, %v614
      %v650 = vpack.c.b16 %v617, %v616
      %v651 = vpack.c.b16 %v619, %v618
      %684 = vmatprep.subr.bf16.mxu0 0
      %685 = vmatpush1.bf16.msra.mxu0 %v620
      %686 = vmatprep.subr.bf16.mxu0 0
      %687 = vmatpush1.bf16.msra.mxu0 %v621
      %688 = vmatprep.subr.bf16.mxu0 0
      %689 = vmatpush1.bf16.msra.mxu0 %v622
      %690 = vmatprep.subr.bf16.mxu0 0
      %691 = vmatpush1.bf16.msra.mxu0 %v623
      %692 = vmatprep.subr.bf16.mxu0 0
      %693 = vmatpush1.bf16.msra.mxu0 %v624
      %694 = vmatprep.subr.bf16.mxu0 0
      %695 = vmatpush1.bf16.msra.mxu0 %v625
      %696 = vmatprep.subr.bf16.mxu0 0
      %697 = vmatpush1.bf16.msra.mxu0 %v626
      %698 = vmatprep.subr.bf16.mxu0 0
      %699 = vmatpush1.bf16.msra.mxu0 %v627
      %700 = vmatprep.subr.bf16.mxu0 0
      %701 = vmatpush1.bf16.msra.mxu0 %v628
      %702 = vmatprep.subr.bf16.mxu0 0
      %703 = vmatpush1.bf16.msra.mxu0 %v629
      %704 = vmatprep.subr.bf16.mxu0 0
      %705 = vmatpush1.bf16.msra.mxu0 %v630
      %706 = vmatprep.subr.bf16.mxu0 0
      %707 = vmatpush1.bf16.msra.mxu0 %v631
      %708 = vmatprep.subr.bf16.mxu0 0
      %709 = vmatpush1.bf16.msra.mxu0 %v632
      %710 = vmatprep.subr.bf16.mxu0 0
      %711 = vmatpush1.bf16.msra.mxu0 %v633
      %712 = vmatprep.subr.bf16.mxu0 0
      %713 = vmatpush1.bf16.msra.mxu0 %v634
      %714 = vmatprep.subr.bf16.mxu0 0
      %715 = vmatpush1.bf16.msra.mxu0 %v635
      %716 = vmatprep.mubr.bf16.mxu0 %v429
      %717 = vmatmul.mubr.bf16.gmra.mrb[0].mxu0 %v428
      %v718 = vpop.f32.mrb[0].mxu0
      %v719 = vadd.f32 %v330, %v718
      %v720 = vpop.f32.mrb[0].mxu0
      %v721 = vpop.f32.mrb[0].mxu0
      %v722 = vadd.f32 %v330, %v721
      %v723 = vpop.f32.mrb[0].mxu0
      %724 = vmatprep.mubr.bf16.mxu0 %v433
      %725 = vmatmul.mubr.bf16.gmra.mrb[0].mxu0 %v432
      %v726 = vpop.f32.mrb[0].mxu0
      %v727 = vadd.f32 %v330, %v726
      %v728 = vpop.f32.mrb[0].mxu0
      %v729 = vpop.f32.mrb[0].mxu0
      %v730 = vadd.f32 %v330, %v729
      %v731 = vpop.f32.mrb[0].mxu0
      %732 = vmatprep.mubr.bf16.mxu0 %v437
      %733 = vmatmul.mubr.bf16.gmra.mrb[0].mxu0 %v436
      %v734 = vpop.f32.mrb[0].mxu0
      %v735 = vadd.f32 %v330, %v734
      %v736 = vpop.f32.mrb[0].mxu0
      %v737 = vpop.f32.mrb[0].mxu0
      %v738 = vadd.f32 %v330, %v737
      %v739 = vpop.f32.mrb[0].mxu0
      %740 = vmatprep.mubr.bf16.mxu0 %v441
      %741 = vmatmul.mubr.bf16.gmra.mrb[0].mxu0 %v440
      %v742 = vpop.f32.mrb[0].mxu0
      %v743 = vadd.f32 %v330, %v742
      %v744 = vpop.f32.mrb[0].mxu0
      %v745 = vpop.f32.mrb[0].mxu0
      %v746 = vadd.f32 %v330, %v745
      %v747 = vpop.f32.mrb[0].mxu0
      %748 = vmatprep.mubr.bf16.mxu0 %v445
      %749 = vmatmul.mubr.bf16.gmra.mrb[0].mxu0 %v444
      %v750 = vpop.f32.mrb[0].mxu0
      %v751 = vadd.f32 %v330, %v750
      %v752 = vpop.f32.mrb[0].mxu0
      %v753 = vpop.f32.mrb[0].mxu0
      %v754 = vadd.f32 %v330, %v753
      %v755 = vpop.f32.mrb[0].mxu0
      %756 = vmatprep.mubr.bf16.mxu0 %v449
      %757 = vmatmul.mubr.bf16.gmra.mrb[0].mxu0 %v448
      %v758 = vpop.f32.mrb[0].mxu0
      %v759 = vadd.f32 %v330, %v758
      %v760 = vpop.f32.mrb[0].mxu0
      %v761 = vpop.f32.mrb[0].mxu0
      %v762 = vadd.f32 %v330, %v761
      %v763 = vpop.f32.mrb[0].mxu0
      %764 = vmatprep.mubr.bf16.mxu0 %v453
      %765 = vmatmul.mubr.bf16.gmra.mrb[0].mxu0 %v452
      %v766 = vpop.f32.mrb[0].mxu0
      %v767 = vadd.f32 %v330, %v766
      %v768 = vpop.f32.mrb[0].mxu0
      %v769 = vpop.f32.mrb[0].mxu0
      %v770 = vadd.f32 %v330, %v769
      %v771 = vpop.f32.mrb[0].mxu0
      %772 = vmatprep.mubr.bf16.mxu0 %v457
      %773 = vmatmul.mubr.bf16.gmra.mrb[0].mxu0 %v456
      %v774 = vpop.f32.mrb[0].mxu0
      %v775 = vadd.f32 %v330, %v774
      %v776 = vpop.f32.mrb[0].mxu0
      %v777 = vpop.f32.mrb[0].mxu0
      %v778 = vadd.f32 %v330, %v777
      %v779 = vpop.f32.mrb[0].mxu0
      %780 = vdwg.mxu0
      %781 = vmatprep.subr.bf16.mxu0 0
      %782 = vmatpush1.bf16.msra.mxu0 %v636
      %783 = vmatprep.subr.bf16.mxu0 0
      %784 = vmatpush1.bf16.msra.mxu0 %v637
      %785 = vmatprep.subr.bf16.mxu0 0
      %786 = vmatpush1.bf16.msra.mxu0 %v638
      %787 = vmatprep.subr.bf16.mxu0 0
      %788 = vmatpush1.bf16.msra.mxu0 %v639
      %789 = vmatprep.subr.bf16.mxu0 0
      %790 = vmatpush1.bf16.msra.mxu0 %v640
      %791 = vmatprep.subr.bf16.mxu0 0
      %792 = vmatpush1.bf16.msra.mxu0 %v641
      %793 = vmatprep.subr.bf16.mxu0 0
      %794 = vmatpush1.bf16.msra.mxu0 %v642
      %795 = vmatprep.subr.bf16.mxu0 0
      %796 = vmatpush1.bf16.msra.mxu0 %v643
      %797 = vmatprep.subr.bf16.mxu0 0
      %798 = vmatpush1.bf16.msra.mxu0 %v644
      %799 = vmatprep.subr.bf16.mxu0 0
      %800 = vmatpush1.bf16.msra.mxu0 %v645
      %801 = vmatprep.subr.bf16.mxu0 0
      %802 = vmatpush1.bf16.msra.mxu0 %v646
      %803 = vmatprep.subr.bf16.mxu0 0
      %804 = vmatpush1.bf16.msra.mxu0 %v647
      %805 = vmatprep.subr.bf16.mxu0 0
      %806 = vmatpush1.bf16.msra.mxu0 %v648
      %807 = vmatprep.subr.bf16.mxu0 0
      %808 = vmatpush1.bf16.msra.mxu0 %v649
      %809 = vmatprep.subr.bf16.mxu0 0
      %810 = vmatpush1.bf16.msra.mxu0 %v650
      %811 = vmatprep.subr.bf16.mxu0 0
      %812 = vmatpush1.bf16.msra.mxu0 %v651
      %813 = vmatprep.mubr.bf16.mxu0 %v431
      %814 = vmatmul.mubr.bf16.gmra.mrb[0].mxu0 %v430
      %v815 = vpop.f32.mrb[0].mxu0
      %v816 = vadd.f32 %v719, %v815
      %v817 = vpop.f32.mrb[0].mxu0
      %v818 = vpop.f32.mrb[0].mxu0
      %v819 = vadd.f32 %v722, %v818
      %v820 = vpop.f32.mrb[0].mxu0
      %821 = vmatprep.mubr.bf16.mxu0 %v435
      %822 = vmatmul.mubr.bf16.gmra.mrb[0].mxu0 %v434
      %v823 = vpop.f32.mrb[0].mxu0
      %v824 = vadd.f32 %v727, %v823
      %v825 = vpop.f32.mrb[0].mxu0
      %v826 = vpop.f32.mrb[0].mxu0
      %v827 = vadd.f32 %v730, %v826
      %v828 = vpop.f32.mrb[0].mxu0
      %829 = vmatprep.mubr.bf16.mxu0 %v439
      %830 = vmatmul.mubr.bf16.gmra.mrb[0].mxu0 %v438
      %v831 = vpop.f32.mrb[0].mxu0
      %v832 = vadd.f32 %v735, %v831
      %v833 = vpop.f32.mrb[0].mxu0
      %v834 = vpop.f32.mrb[0].mxu0
      %v835 = vadd.f32 %v738, %v834
      %v836 = vpop.f32.mrb[0].mxu0
      %837 = vmatprep.mubr.bf16.mxu0 %v443
      %838 = vmatmul.mubr.bf16.gmra.mrb[0].mxu0 %v442
      %v839 = vpop.f32.mrb[0].mxu0
      %v840 = vadd.f32 %v743, %v839
      %v841 = vpop.f32.mrb[0].mxu0
      %v842 = vpop.f32.mrb[0].mxu0
      %v843 = vadd.f32 %v746, %v842
      %v844 = vpop.f32.mrb[0].mxu0
      %845 = vmatprep.mubr.bf16.mxu0 %v447
      %846 = vmatmul.mubr.bf16.gmra.mrb[0].mxu0 %v446
      %v847 = vpop.f32.mrb[0].mxu0
      %v848 = vadd.f32 %v751, %v847
      %v849 = vpop.f32.mrb[0].mxu0
      %v850 = vpop.f32.mrb[0].mxu0
      %v851 = vadd.f32 %v754, %v850
      %v852 = vpop.f32.mrb[0].mxu0
      %853 = vmatprep.mubr.bf16.mxu0 %v451
      %854 = vmatmul.mubr.bf16.gmra.mrb[0].mxu0 %v450
      %v855 = vpop.f32.mrb[0].mxu0
      %v856 = vadd.f32 %v759, %v855
      %v857 = vpop.f32.mrb[0].mxu0
      %v858 = vpop.f32.mrb[0].mxu0
      %v859 = vadd.f32 %v762, %v858
      %v860 = vpop.f32.mrb[0].mxu0
      %861 = vmatprep.mubr.bf16.mxu0 %v455
      %862 = vmatmul.mubr.bf16.gmra.mrb[0].mxu0 %v454
      %v863 = vpop.f32.mrb[0].mxu0
      %v864 = vadd.f32 %v767, %v863
      %v865 = vpop.f32.mrb[0].mxu0
      %v866 = vpop.f32.mrb[0].mxu0
      %v867 = vadd.f32 %v770, %v866
      %v868 = vpop.f32.mrb[0].mxu0
      %869 = vmatprep.mubr.bf16.mxu0 %v459
      %870 = vmatmul.mubr.bf16.gmra.mrb[0].mxu0 %v458
      %v871 = vpop.f32.mrb[0].mxu0
      %v872 = vadd.f32 %v775, %v871
      %v873 = vpop.f32.mrb[0].mxu0
      %v874 = vpop.f32.mrb[0].mxu0
      %v875 = vadd.f32 %v778, %v874
      %v876 = vpop.f32.mrb[0].mxu0
      %877 = vdwg.mxu0
      %878 = vst [vmem:[%s226] sm:$0xff] %v816
      %879 = vst [vmem:[%s226 + $0x8] sm:$0xff] %v819
      %880 = vst [vmem:[%s226 + $0x10] sm:$0xff] %v824
      %881 = vst [vmem:[%s226 + $0x18] sm:$0xff] %v827
      %882 = vst [vmem:[%s226 + $0x20] sm:$0xff] %v832
      %883 = vst [vmem:[%s226 + $0x28] sm:$0xff] %v835
      %884 = vst [vmem:[%s226 + $0x30] sm:$0xff] %v840
      %885 = vst [vmem:[%s226 + $0x38] sm:$0xff] %v843
      %886 = vst [vmem:[%s226 + $0x40] sm:$0xff] %v848
      %887 = vst [vmem:[%s226 + $0x48] sm:$0xff] %v851
      %888 = vst [vmem:[%s226 + $0x50] sm:$0xff] %v856
      %889 = vst [vmem:[%s226 + $0x58] sm:$0xff] %v859
      %890 = vst [vmem:[%s226 + $0x60] sm:$0xff] %v864
      %891 = vst [vmem:[%s226 + $0x68] sm:$0xff] %v867
      %892 = vst [vmem:[%s226 + $0x70] sm:$0xff] %v872
      %893 = vst [vmem:[%s226 + $0x78] sm:$0xff] %v875
      %s894 = smul.u32 16, %s18
      %p895 = scmp.lt.s32.totalorder %s894, 31
      %s896 = scalar_select %p895, %s894, 31
      %p897 = scmp.lt.s32.totalorder %s19, 0
      %s898 = scalar_select %p897, %s19, 0
      %s899 = sadd.s32 %s898, %s896
      %s900 = smul.addr %s899, 8
      %s901 = scalar_lea.vmem %s3, %s900
      // Predicated region
      $region33: #{_lambda_.40} parent=31 // pred_check
        %p902 = pneg %p124
      $region34: #{_lambda_.40} parent=31 // pred_check_branch
        %904 = sbr.rel (%p902) target = $region36
      $region35: #{_lambda_.40} parent=31 // pred_region
        %s905 = smul.u32 16, %s18
      $region36: #{_lambda_.40} parent=31 // pred_fallthru
        _
    $region32: #{_lambda_.40} parent=5 // pred_fallthru
      _
    %p906 = scmp.le.s32.totalorder 2, %s9
    // Predicated region
    $region37: #{_lambda_.40} parent=5 // pred_check
      %p907 = pneg %p906
    $region38: #{_lambda_.40} parent=5 // pred_check_branch
      %909 = sbr.rel (%p907) target = $region40
    $region39: #{_lambda_.40} parent=5 // pred_region
      %s910 = ssub.s32 %s9, 2
      // Predicated region
      $region41: #{_lambda_.40} parent=39 // pred_check
        %p911 = pneg %p130
      $region42: #{_lambda_.40} parent=39 // pred_check_branch
        %913 = sbr.rel (%p911) target = $region44
      $region43: #{_lambda_.40} parent=39 // pred_region
        %s914 = smul.u32 16, %s20
        %p915 = scmp.lt.s32.totalorder %s914, 31
        %s916 = scalar_select %p915, %s914, 31
        %p917 = scmp.lt.s32.totalorder %s21, 0
        %s918 = scalar_select %p917, %s21, 0
        %s919 = sadd.s32 %s918, %s916
        %s920 = smul.addr %s919, 8
        %s921 = scalar_lea.vmem %s3, %s920
      $region44: #{_lambda_.40} parent=39 // pred_fallthru
        _
    $region40: #{_lambda_.40} parent=5 // pred_fallthru
      _
  $region6: #{_lambda_.40} parent=0 // loop_footer
    %s13 = sadd.s32 1, %s9
  $region7: #{_lambda_.40} parent=0 // loop_footer_branch
    %8 = sbr.rel target = $region3
  $region8: #{_lambda_.40} parent=0 // loop_exit
    _

// kernel: _lambda_.41
$region0: #{_lambda_.41}
  #allocation0 [shape = 'u32[]', space=smem, size = 0x4, offset = 0x4, fixed_abs, tag = 'smem constant byte address 0x4 - core index']
  #allocation1 [shape = 'u32[144,128]{1,0:T(1,128)}', space=vmem, size = 0x12000, scoped, tag = 'internal scratch']
  %s0 = inlined_call_operand.vmem [shape: f32[8,128], index: 0, kind: input, shape index: {}]
  %s1 = inlined_call_operand.hbm [shape: f32[1,1], index: 1, kind: output, shape index: {}]
  %s2 = sld [smem:[#allocation0]]
  $region14: #{_lambda_.41} parent=0
    _
  %s4 = ssub.s32 1, %s2
  %s5 = scalar_select 0, %s4, %s2
  $region1: #{_lambda_.41} parent=0
    #allocation2 [shape = 'u8[512]{0}', space=vmem, size = 0x400, scoped, tag = 'output window, operand 0, single buffered']
    #allocation3 [shape = 's32[1]{0}', space=sflag, size = 0x4, scoped, tag = 'scoped memory for _lambda_.41']
    %6 = vsyncpa [#allocation3], 0
    // Predicated region
    $region2: #{_lambda_.41} parent=1 // pred_check
      _
    $region3: #{_lambda_.41} parent=1 // pred_check_branch
      %8 = sbr.rel (0) target = $region5
    $region4: #{_lambda_.41} parent=1 // pred_region
      _
    $region5: #{_lambda_.41} parent=1 // pred_fallthru
      _
    %v9 = vld [vmem:[%s0] sm:$0xff]
    %v10 = vsub.f32 %v9, 1.0
    %v11 = vmul.f32 %v10, %v10
    %12 = vadd.xlane.f32.xlu0 %v11
    %v13 = vpop.xlane.xlu0 %12
    %v14 = vrot.slane %v13, 4
    %v15 = vadd.f32 %v13, %v14
    %v16 = vrot.slane %v15, 2
    %v17 = vadd.f32 %v15, %v16
    %v18 = vrot.slane %v17, 1
    %v19 = vadd.f32 %v17, %v18
    %s20 = vtos %v19
    %v21 = vstv %s20
    %vm22 = vcmask 0
    %23 = vst.msk [vmem:[#allocation2] sm:$0x1] %vm22, %v21
    // Predicated region
    $region6: #{_lambda_.41} parent=1 // pred_check
      _
    $region7: #{_lambda_.41} parent=1 // pred_check_branch
      %25 = sbr.rel (0) target = $region9
    $region8: #{_lambda_.41} parent=1 // pred_region
      %s27 = ssub.s32 16, 16
      %28 = vsyncadd [#allocation3], %s27
      %s30 = sshll.u32 [#allocation2], 4
      %s31 = int_to_ptr.vmem [resolvable:$true] %s30
      %33 = dma.vmem_to_hbm [thread:$0]  %s31, 16, %s1, [#allocation3]
    $region9: #{_lambda_.41} parent=1 // pred_fallthru
      _
    // Predicated region
    $region10: #{_lambda_.41} parent=1 // pred_check
      _
    $region11: #{_lambda_.41} parent=1 // pred_check_branch
      %35 = sbr.rel (0) target = $region13
    $region12: #{_lambda_.41} parent=1 // pred_region
      %36 = dma.done [#allocation3], 16
    $region13: #{_lambda_.41} parent=1 // pred_fallthru
      _
    %37 = vsyncpa [#allocation3], 1

// kernel: _lambda_.35
$region0: #{_lambda_.35}
  #allocation0 [shape = 'u32[]', space=smem, size = 0x4, offset = 0x4, fixed_abs, tag = 'smem constant byte address 0x4 - core index']
  #allocation1 [shape = 'u32[144,128]{1,0:T(1,128)}', space=vmem, size = 0x12000, scoped, tag = 'internal scratch']
  %s0 = inlined_call_operand.vmem [shape: f32[8,128], index: 0, kind: input, shape index: {}]
  %s1 = inlined_call_operand.hbm [shape: f32[1,1], index: 1, kind: output, shape index: {}]
  %s2 = sld [smem:[#allocation0]]
  $region14: #{_lambda_.35} parent=0
    _
  %s4 = ssub.s32 1, %s2
  %s5 = scalar_select 0, %s4, %s2
  $region1: #{_lambda_.35} parent=0
    #allocation2 [shape = 'u8[512]{0}', space=vmem, size = 0x400, scoped, tag = 'output window, operand 0, single buffered']
    #allocation3 [shape = 's32[1]{0}', space=sflag, size = 0x4, scoped, tag = 'scoped memory for _lambda_.35']
    %6 = vsyncpa [#allocation3], 0
    // Predicated region
    $region2: #{_lambda_.35} parent=1 // pred_check
      _
    $region3: #{_lambda_.35} parent=1 // pred_check_branch
      %8 = sbr.rel (0) target = $region5
    $region4: #{_lambda_.35} parent=1 // pred_region
      _
    $region5: #{_lambda_.35} parent=1 // pred_fallthru
      _
    %v9 = vld [vmem:[%s0] sm:$0xff]
    %v10 = vmul.f32 %v9, %v9
    %11 = vadd.xlane.f32.xlu0 %v10
    %v12 = vpop.xlane.xlu0 %11
    %v13 = vrot.slane %v12, 4
    %v14 = vadd.f32 %v12, %v13
    %v15 = vrot.slane %v14, 2
    %v16 = vadd.f32 %v14, %v15
    %v17 = vrot.slane %v16, 1
    %v18 = vadd.f32 %v16, %v17
    %s19 = vtos %v18
    %v20 = vstv %s19
    %vm21 = vcmask 0
    %22 = vst.msk [vmem:[#allocation2] sm:$0x1] %vm21, %v20
    // Predicated region
    $region6: #{_lambda_.35} parent=1 // pred_check
      _
    $region7: #{_lambda_.35} parent=1 // pred_check_branch
      %24 = sbr.rel (0) target = $region9
    $region8: #{_lambda_.35} parent=1 // pred_region
      %s26 = ssub.s32 16, 16
      %27 = vsyncadd [#allocation3], %s26
      %s29 = sshll.u32 [#allocation2], 4
      %s30 = int_to_ptr.vmem [resolvable:$true] %s29
      %32 = dma.vmem_to_hbm [thread:$0]  %s30, 16, %s1, [#allocation3]
    $region9: #{_lambda_.35} parent=1 // pred_fallthru
      _
    // Predicated region
    $region10: #{_lambda_.35} parent=1 // pred_check
      _
    $region11: #{_lambda_.35} parent=1 // pred_check_branch
      %34 = sbr.rel (0) target = $region13
    $region12: #{_lambda_.35} parent=1 // pred_region
      %35 = dma.done [#allocation3], 16
    $region13: #{_lambda_.35} parent=1 // pred_fallthru
      _
    %36 = vsyncpa [#allocation3], 1

// kernel: _lambda_.45
$region0: #{_lambda_.45}
  #allocation0 [shape = 'u32[]', space=smem, size = 0x4, offset = 0x4, fixed_abs, tag = 'smem constant byte address 0x4 - core index']
  #allocation1 [shape = 'u32[144,128]{1,0:T(1,128)}', space=vmem, size = 0x12000, scoped, tag = 'internal scratch']
  %s0 = inlined_call_operand.vmem [shape: f32[48,128], index: 0, kind: input, shape index: {}]
  %s1 = inlined_call_operand.vmem [shape: f32[48,128], index: 1, kind: input, shape index: {}]
  %s2 = inlined_call_operand.hbm [shape: f32[1,1], index: 2, kind: output, shape index: {}]
  %s3 = sld [smem:[#allocation0]]
  $region18: #{_lambda_.45} parent=0
    _
  %s5 = ssub.s32 1, %s3
  %s6 = scalar_select 0, %s5, %s3
  $region1: #{_lambda_.45} parent=0
    #allocation2 [shape = 'u8[512]{0}', space=vmem, size = 0x400, scoped, tag = 'output window, operand 0, single buffered']
    #allocation3 [shape = 's32[1]{0}', space=sflag, size = 0x4, scoped, tag = 'scoped memory for _lambda_.45']
    %7 = vsyncpa [#allocation3], 0
    // Predicated region
    $region2: #{_lambda_.45} parent=1 // pred_check
      _
    $region3: #{_lambda_.45} parent=1 // pred_check_branch
      %9 = sbr.rel (0) target = $region5
    $region4: #{_lambda_.45} parent=1 // pred_region
      _
    $region5: #{_lambda_.45} parent=1 // pred_fallthru
      _
    // Predicated region
    $region6: #{_lambda_.45} parent=1 // pred_check
      _
    $region7: #{_lambda_.45} parent=1 // pred_check_branch
      %11 = sbr.rel (0) target = $region9
    $region8: #{_lambda_.45} parent=1 // pred_region
      _
    $region9: #{_lambda_.45} parent=1 // pred_fallthru
      _
    %v12 = vld [vmem:[%s0] sm:$0xff]
    %v13 = vld [vmem:[%s0 + $0x8] sm:$0xff]
    %v14 = vld [vmem:[%s0 + $0x10] sm:$0xff]
    %v15 = vld [vmem:[%s0 + $0x18] sm:$0xff]
    %v16 = vld [vmem:[%s0 + $0x20] sm:$0xff]
    %v17 = vld [vmem:[%s0 + $0x28] sm:$0xff]
    %v18 = vld [vmem:[%s1] sm:$0xff]
    %v19 = vld [vmem:[%s1 + $0x8] sm:$0xff]
    %v20 = vld [vmem:[%s1 + $0x10] sm:$0xff]
    %v21 = vld [vmem:[%s1 + $0x18] sm:$0xff]
    %v22 = vld [vmem:[%s1 + $0x20] sm:$0xff]
    %v23 = vld [vmem:[%s1 + $0x28] sm:$0xff]
    %v24 = vsub.f32 %v12, %v18
    %v25 = vsub.f32 %v13, %v19
    %v26 = vsub.f32 %v14, %v20
    %v27 = vsub.f32 %v15, %v21
    %v28 = vsub.f32 %v16, %v22
    %v29 = vsub.f32 %v17, %v23
    %v30 = vand.u32 2147483647, %v24
    %v31 = vand.u32 2147483647, %v25
    %v32 = vand.u32 2147483647, %v26
    %v33 = vand.u32 2147483647, %v27
    %v34 = vand.u32 2147483647, %v28
    %v35 = vand.u32 2147483647, %v29
    %v36 = vadd.f32 %v30, %v31
    %v37 = vadd.f32 %v36, %v32
    %v38 = vadd.f32 %v37, %v33
    %v39 = vadd.f32 %v38, %v34
    %v40 = vadd.f32 %v39, %v35
    %41 = vadd.xlane.f32.xlu0 %v40
    %v42 = vpop.xlane.xlu0 %41
    %v43 = vrot.slane %v42, 4
    %v44 = vadd.f32 %v42, %v43
    %v45 = vrot.slane %v44, 2
    %v46 = vadd.f32 %v44, %v45
    %v47 = vrot.slane %v46, 1
    %v48 = vadd.f32 %v46, %v47
    %s49 = vtos %v48
    %v50 = vstv %s49
    %vm51 = vcmask 0
    %52 = vst.msk [vmem:[#allocation2] sm:$0x1] %vm51, %v50
    // Predicated region
    $region10: #{_lambda_.45} parent=1 // pred_check
      _
    $region11: #{_lambda_.45} parent=1 // pred_check_branch
      %54 = sbr.rel (0) target = $region13
    $region12: #{_lambda_.45} parent=1 // pred_region
      %s56 = ssub.s32 16, 16
      %57 = vsyncadd [#allocation3], %s56
      %s59 = sshll.u32 [#allocation2], 4
      %s60 = int_to_ptr.vmem [resolvable:$true] %s59
      %62 = dma.vmem_to_hbm [thread:$0]  %s60, 16, %s2, [#allocation3]
    $region13: #{_lambda_.45} parent=1 // pred_fallthru
      _
    // Predicated region
    $region14: #{_lambda_.45} parent=1 // pred_check
      _
    $region15: #{_lambda_.45} parent=1 // pred_check_branch
      %64 = sbr.rel (0) target = $region17
    $region16: #{_lambda_.45} parent=1 // pred_region
      %65 = dma.done [#allocation3], 16
    $region17: #{_lambda_.45} parent=1 // pred_fallthru
      _
    %66 = vsyncpa [#allocation3], 1

</llo_original>
